<compile_context>
chip_gen: v6e
topology: v6e:2x2x1
jax: 0.10.0
libtpu: 0.0.40
codegen_flags: <defaults>
</compile_context>

<pallas_src>
import functools

import jax
import jax.numpy as jnp
from jax import lax
from jax.experimental import pallas as pl
from jax.experimental.pallas import tpu as pltpu


# ----------------------------------------------------------------------------
# Fused Pallas kernel: all conv3x3(+PReLU) layers for one batch element per
# grid step, activations resident in VMEM ping-pong buffers.
# ----------------------------------------------------------------------------
def _make_fused_kernel(H, W, cins, couts, has_act):
    L = len(cins)

    def kernel(*refs):
        # --- unpack refs: inputs, output, scratch ---------------------------
        idx = 0
        x_ref = refs[idx]; idx += 1
        layers = []
        for i in range(L):
            w_ref = refs[idx]; idx += 1
            b_ref = refs[idx]; idx += 1
            a_ref = None
            if has_act[i]:
                a_ref = refs[idx]; idx += 1
            layers.append((w_ref, b_ref, a_ref))
        o_ref = refs[idx]; idx += 1
        bufs = [refs[idx], refs[idx + 1]]
        lhs_ref = refs[idx + 2]

        # Zero both ping-pong buffers once: the 1-pixel halo stays zero for
        # every layer, which gives the pad=1 "same" conv for free.
        bufs[0][...] = jnp.zeros_like(bufs[0])
        bufs[1][...] = jnp.zeros_like(bufs[1])

        # Load this batch element into the interior of buffer 0.
        bufs[0][1:H + 1, 1:W + 1, :cins[0]] = x_ref[0].astype(bufs[0].dtype)

        cur = 0
        for li in range(L):
            w_ref, b_ref, a_ref = layers[li]
            cin, cout = cins[li], couts[li]
            src = bufs[cur]

            # im2col: gather the 9 shifted taps into a (H*W, 9*cin) LHS in
            # VMEM scratch, then ONE MXU matmul with K = 9*cin
            # (bf16 operands, f32 accumulation).
            for dy in range(3):
                for dx in range(3):
                    t = dy * 3 + dx
                    tap = src[dy:dy + H, dx:dx + W, :cin]
                    lhs_ref[:, t * cin:(t + 1) * cin] = tap.reshape(H * W, cin)
            lhs = lhs_ref[:, :9 * cin].astype(jnp.bfloat16)
            acc = jnp.dot(lhs, w_ref[...], preferred_element_type=jnp.float32)
            acc = acc + b_ref[...]                        # (1, cout) broadcast
            if a_ref is not None:                         # PReLU; statically
                alpha = a_ref[...]                        # skipped on last conv
                acc = jnp.where(acc >= 0.0, acc, alpha * acc)

            if li < L - 1:
                dst = bufs[1 - cur]
                dst[1:H + 1, 1:W + 1, :cout] = acc.reshape(H, W, cout)
                cur = 1 - cur
            else:
                o_ref[0] = acc.astype(o_ref.dtype)

    return kernel


# ----------------------------------------------------------------------------
# Parameter preparation (torch layout -> kernel layout)
# ----------------------------------------------------------------------------
def prepare_kernel_params(params, upscale, num_out_ch):
    """params: list of (w (3,3,cin,cout) f32, b (cout,) f32, alpha (cout,)|None).

    Returns list of (w (9*cin, cout) bf16, b (1, cout) f32, alpha (1, cout) f32|None).
    """
    del upscale, num_out_ch  # layout no longer depends on the shuffle factor
    prepped = []
    for (w, b, alpha) in params:
        _, _, cin, cout = w.shape
        w2 = w.reshape(9 * cin, cout).astype(jnp.bfloat16)
        b2 = b.reshape(1, cout).astype(jnp.float32)
        a2 = None if alpha is None else alpha.reshape(1, cout).astype(jnp.float32)
        prepped.append((w2, b2, a2))
    return prepped


# ----------------------------------------------------------------------------
# Full forward (NCHW in / NCHW out, like the PyTorch module)
# ----------------------------------------------------------------------------
@functools.partial(jax.jit,
                   static_argnames=("upscale", "num_out_ch", "learn_residual"))
def srvgg_forward(x_nchw, kparams, *, upscale, num_out_ch, learn_residual=True):
    N, Cin, H, W = x_nchw.shape
    r = upscale
    C = num_out_ch
    if learn_residual:
        assert Cin == C, "learn_residual requires num_in_ch == num_out_ch"

    x = jnp.transpose(x_nchw, (0, 2, 3, 1))              # NCHW -> NHWC

    cins = tuple(int(kp[0].shape[0]) // 9 for kp in kparams)
    couts = tuple(int(kp[0].shape[1]) for kp in kparams)
    has_act = tuple(kp[2] is not None for kp in kparams)
    Cmax = max(cins)
    Crr = couts[-1]

    kernel = _make_fused_kernel(H, W, cins, couts, has_act)

    inputs = [x]
    in_specs = [pl.BlockSpec((1, H, W, Cin), lambda n: (n, 0, 0, 0))]
    for (w, b, a) in kparams:
        inputs.append(w)
        in_specs.append(pl.BlockSpec(w.shape, lambda n: (0, 0)))
        inputs.append(b)
        in_specs.append(pl.BlockSpec(b.shape, lambda n: (0, 0)))
        if a is not None:
            inputs.append(a)
            in_specs.append(pl.BlockSpec(a.shape, lambda n: (0, 0)))

    flops = 2 * 9 * H * W * N * sum(ci * co for ci, co in zip(cins, couts))
    bytes_accessed = (N * H * W * Cin * x.dtype.itemsize
                      + N * H * W * Crr * 4
                      + sum(w.size * w.dtype.itemsize + b.size * 4
                            + (0 if a is None else a.size * 4)
                            for (w, b, a) in kparams))

    out_pre = pl.pallas_call(
        kernel,
        out_shape=jax.ShapeDtypeStruct((N, H * W, Crr), jnp.float32),
        grid_spec=pltpu.PrefetchScalarGridSpec(
            num_scalar_prefetch=0,
            grid=(N,),
            in_specs=in_specs,
            out_specs=pl.BlockSpec((1, H * W, Crr), lambda n: (n, 0, 0)),
            scratch_shapes=[
                pltpu.VMEM((H + 2, W + 2, Cmax), jnp.float32),   # ping
                pltpu.VMEM((H + 2, W + 2, Cmax), jnp.float32),   # pong
                pltpu.VMEM((H * W, 9 * Cmax), jnp.float32),      # im2col LHS
            ],
        ),
        compiler_params=pltpu.CompilerParams(
            dimension_semantics=("parallel",),
            vmem_limit_bytes=48 * 1024 * 1024,   # fits v7x (64 MiB) and v5e/v6e
        ),
        cost_estimate=pl.CostEstimate(
            flops=int(flops), transcendentals=0,
            bytes_accessed=int(bytes_accessed)),
    )(*inputs)

    # Epilogue outside the kernel, but in ONE XLA pass over the full-resolution
    # tensor: pixel-shuffle + NHWC->NCHW is a single fused transpose and the
    # nearest-upsample residual is a broadcast add fused into it.
    out = out_pre.reshape(N, H, W, C, r, r)               # k = c*r*r + i*r + j
    out = jnp.transpose(out, (0, 3, 1, 4, 2, 5))          # (N, C, H, i, W, j)
    out = out.reshape(N, C, H * r, W * r)
    if learn_residual:
        base = jnp.broadcast_to(x_nchw[:, :, :, None, :, None],
                                (N, C, H, r, W, r)).reshape(N, C, H * r, W * r)
        out = out + base
    return out


# ----------------------------------------------------------------------------
# Deterministic parameter construction (matches module __init__ shapes)
# ----------------------------------------------------------------------------
def init_params(key, num_in_ch, num_out_ch, num_feat, num_conv, upscale):
    cins = [num_in_ch] + [num_feat] * (num_conv + 1)
    couts = [num_feat] * (num_conv + 1) + [num_out_ch * upscale * upscale]
    params = []
    keys = jax.random.split(key, 2 * len(cins))
    for i, (cin, cout) in enumerate(zip(cins, couts)):
        w = jax.random.normal(keys[2 * i], (3, 3, cin, cout), jnp.float32)
        w = w * (1.0 / jnp.sqrt(9.0 * cin))
        b = 0.01 * jax.random.normal(keys[2 * i + 1], (cout,), jnp.float32)
        alpha = (jnp.full((cout,), 0.25, jnp.float32)       # PReLU default init
                 if i < len(cins) - 1 else None)            # no act on last conv
        params.append((w, b, alpha))
    return params


# ----------------------------------------------------------------------------
# Pure-JAX reference (NCHW) mirroring the kernel's bf16-operand MXU math
# ----------------------------------------------------------------------------
def srvgg_reference(x_nchw, params, upscale, num_out_ch, learn_residual=True):
    out = x_nchw
    for (w, b, alpha) in params:
        lhs = out.astype(jnp.bfloat16).astype(jnp.float32)
        wq = w.astype(jnp.bfloat16).astype(jnp.float32)
        w_oihw = jnp.transpose(wq, (3, 2, 0, 1))
        out = lax.conv_general_dilated(
            lhs, w_oihw, window_strides=(1, 1), padding="SAME",
            dimension_numbers=("NCHW", "OIHW", "NCHW"),
            precision=lax.Precision.HIGHEST)
        out = out + b[None, :, None, None]
        if alpha is not None:
            a = alpha[None, :, None, None]
            out = jnp.where(out >= 0.0, out, a * out)
    N, Crr, H, W = out.shape
    r = upscale
    C = num_out_ch
    out = out.reshape(N, C, r, r, H, W).transpose(0, 1, 4, 2, 5, 3)
    out = out.reshape(N, C, H * r, W * r)
    if learn_residual:
        base = jnp.repeat(jnp.repeat(x_nchw, r, axis=2), r, axis=3)
        out = out + base
    return out


# ----------------------------------------------------------------------------
if __name__ == "__main__":
    # Small, module-consistent configuration.
    num_in_ch, num_out_ch = 3, 3
    num_feat, num_conv, upscale = 16, 2, 2
    N, H, W = 2, 16, 16

    key = jax.random.PRNGKey(0)
    kx, kp = jax.random.split(key)
    x = jax.random.normal(kx, (N, num_in_ch, H, W), jnp.float32)   # NCHW
    params = init_params(kp, num_in_ch, num_out_ch, num_feat, num_conv, upscale)
    kparams = prepare_kernel_params(params, upscale, num_out_ch)

    out = srvgg_forward(x, kparams, upscale=upscale, num_out_ch=num_out_ch,
                        learn_residual=True)
    out = jax.block_until_ready(out)
    assert out.shape == (N, num_out_ch, H * upscale, W * upscale), out.shape

    ref = srvgg_reference(x, params, upscale, num_out_ch, learn_residual=True)
    max_err = float(jnp.max(jnp.abs(out - ref)))
    assert jnp.allclose(out, ref, rtol=5e-3, atol=5e-3), max_err

    print("KERNEL_OK")
</pallas_src>

<mosaic_0001>
module attributes {stable_mosaic.version = 11 : i64} {
  func.func @kernel(%arg0: i32, %arg1: memref<1x16x16x3xf32, #tpu.memory_space<vmem>>, %arg2: memref<27x16xbf16, #tpu.memory_space<vmem>>, %arg3: memref<1x16xf32, #tpu.memory_space<vmem>>, %arg4: memref<1x16xf32, #tpu.memory_space<vmem>>, %arg5: memref<144x16xbf16, #tpu.memory_space<vmem>>, %arg6: memref<1x16xf32, #tpu.memory_space<vmem>>, %arg7: memref<1x16xf32, #tpu.memory_space<vmem>>, %arg8: memref<144x16xbf16, #tpu.memory_space<vmem>>, %arg9: memref<1x16xf32, #tpu.memory_space<vmem>>, %arg10: memref<1x16xf32, #tpu.memory_space<vmem>>, %arg11: memref<144x12xbf16, #tpu.memory_space<vmem>>, %arg12: memref<1x12xf32, #tpu.memory_space<vmem>>, %arg13: memref<1x256x12xf32, #tpu.memory_space<vmem>>, %arg14: memref<18x18x16xf32, #tpu.memory_space<vmem>>, %arg15: memref<18x18x16xf32, #tpu.memory_space<vmem>>, %arg16: memref<256x144xf32, #tpu.memory_space<vmem>>) attributes {dimension_semantics = [#tpu.dimension_semantics<parallel>], iteration_bounds = array<i64: 2>, scalar_prefetch = 0 : i64, scratch_operands = 3 : i64, tpu.core_type = #tpu.core_type<tc>, window_params = [{transform_indices = @transform_0, window_bounds = array<i64: 1, 16, 16, 3>}, {pipeline_mode = #tpu.pipeline_mode<synchronous>, transform_indices = @transform_1, window_bounds = array<i64: 27, 16>}, {pipeline_mode = #tpu.pipeline_mode<synchronous>, transform_indices = @transform_2, window_bounds = array<i64: 1, 16>}, {pipeline_mode = #tpu.pipeline_mode<synchronous>, transform_indices = @transform_3, window_bounds = array<i64: 1, 16>}, {pipeline_mode = #tpu.pipeline_mode<synchronous>, transform_indices = @transform_4, window_bounds = array<i64: 144, 16>}, {pipeline_mode = #tpu.pipeline_mode<synchronous>, transform_indices = @transform_5, window_bounds = array<i64: 1, 16>}, {pipeline_mode = #tpu.pipeline_mode<synchronous>, transform_indices = @transform_6, window_bounds = array<i64: 1, 16>}, {pipeline_mode = #tpu.pipeline_mode<synchronous>, transform_indices = @transform_7, window_bounds = array<i64: 144, 16>}, {pipeline_mode = #tpu.pipeline_mode<synchronous>, transform_indices = @transform_8, window_bounds = array<i64: 1, 16>}, {pipeline_mode = #tpu.pipeline_mode<synchronous>, transform_indices = @transform_9, window_bounds = array<i64: 1, 16>}, {pipeline_mode = #tpu.pipeline_mode<synchronous>, transform_indices = @transform_10, window_bounds = array<i64: 144, 12>}, {pipeline_mode = #tpu.pipeline_mode<synchronous>, transform_indices = @transform_11, window_bounds = array<i64: 1, 12>}, {transform_indices = @transform_12, window_bounds = array<i64: 1, 256, 12>}]} {
    %cst = arith.constant 0.000000e+00 : f32
    %0 = vector.broadcast %cst : f32 to vector<18x18x16xf32>
    %c0 = arith.constant 0 : index
    %c0_0 = arith.constant 0 : index
    %c0_1 = arith.constant 0 : index
    %1 = vector.load %arg14[%c0, %c0_0, %c0_1] : memref<18x18x16xf32, #tpu.memory_space<vmem>>, vector<18x18x16xf32>
    tpu.vector_store %arg14[%c0, %c0_0, %c0_1], %0 {strides = array<i32>} : memref<18x18x16xf32, #tpu.memory_space<vmem>>, vector<18x18x16xf32>,
    %cst_2 = arith.constant 0.000000e+00 : f32
    %2 = vector.broadcast %cst_2 : f32 to vector<18x18x16xf32>
    %c0_3 = arith.constant 0 : index
    %c0_4 = arith.constant 0 : index
    %c0_5 = arith.constant 0 : index
    %3 = vector.load %arg15[%c0_3, %c0_4, %c0_5] : memref<18x18x16xf32, #tpu.memory_space<vmem>>, vector<18x18x16xf32>
    tpu.vector_store %arg15[%c0_3, %c0_4, %c0_5], %2 {strides = array<i32>} : memref<18x18x16xf32, #tpu.memory_space<vmem>>, vector<18x18x16xf32>,
    %c0_6 = arith.constant 0 : index
    %c0_7 = arith.constant 0 : index
    %c0_8 = arith.constant 0 : index
    %c0_9 = arith.constant 0 : index
    %4 = vector.load %arg1[%c0_6, %c0_7, %c0_8, %c0_9] : memref<1x16x16x3xf32, #tpu.memory_space<vmem>>, vector<1x16x16x3xf32>
    %5 = vector.shape_cast %4 : vector<1x16x16x3xf32> to vector<16x16x3xf32>
    %c1 = arith.constant 1 : index
    %c1_10 = arith.constant 1 : index
    %c0_11 = arith.constant 0 : index
    %6 = vector.load %arg14[%c1, %c1_10, %c0_11] : memref<18x18x16xf32, #tpu.memory_space<vmem>>, vector<16x16x3xf32>
    tpu.vector_store %arg14[%c1, %c1_10, %c0_11], %5 {strides = array<i32>} : memref<18x18x16xf32, #tpu.memory_space<vmem>>, vector<16x16x3xf32>,
    %c0_12 = arith.constant 0 : index
    %c0_13 = arith.constant 0 : index
    %c0_14 = arith.constant 0 : index
    %7 = vector.load %arg14[%c0_12, %c0_13, %c0_14] : memref<18x18x16xf32, #tpu.memory_space<vmem>>, vector<16x16x3xf32>
    %8 = vector.shape_cast %7 : vector<16x16x3xf32> to vector<256x3xf32>
    %c0_15 = arith.constant 0 : index
    %c0_16 = arith.constant 0 : index
    %9 = vector.load %arg16[%c0_15, %c0_16] : memref<256x144xf32, #tpu.memory_space<vmem>>, vector<256x3xf32>
    tpu.vector_store %arg16[%c0_15, %c0_16], %8 {strides = array<i32>} : memref<256x144xf32, #tpu.memory_space<vmem>>, vector<256x3xf32>,
    %c0_17 = arith.constant 0 : index
    %c1_18 = arith.constant 1 : index
    %c0_19 = arith.constant 0 : index
    %10 = vector.load %arg14[%c0_17, %c1_18, %c0_19] : memref<18x18x16xf32, #tpu.memory_space<vmem>>, vector<16x16x3xf32>
    %11 = vector.shape_cast %10 : vector<16x16x3xf32> to vector<256x3xf32>
    %c0_20 = arith.constant 0 : index
    %c3 = arith.constant 3 : index
    %12 = vector.load %arg16[%c0_20, %c3] : memref<256x144xf32, #tpu.memory_space<vmem>>, vector<256x3xf32>
    tpu.vector_store %arg16[%c0_20, %c3], %11 {strides = array<i32>} : memref<256x144xf32, #tpu.memory_space<vmem>>, vector<256x3xf32>,
    %c0_21 = arith.constant 0 : index
    %c2 = arith.constant 2 : index
    %c0_22 = arith.constant 0 : index
    %13 = vector.load %arg14[%c0_21, %c2, %c0_22] : memref<18x18x16xf32, #tpu.memory_space<vmem>>, vector<16x16x3xf32>
    %14 = vector.shape_cast %13 : vector<16x16x3xf32> to vector<256x3xf32>
    %c0_23 = arith.constant 0 : index
    %c6 = arith.constant 6 : index
    %15 = vector.load %arg16[%c0_23, %c6] : memref<256x144xf32, #tpu.memory_space<vmem>>, vector<256x3xf32>
    tpu.vector_store %arg16[%c0_23, %c6], %14 {strides = array<i32>} : memref<256x144xf32, #tpu.memory_space<vmem>>, vector<256x3xf32>,
    %c1_24 = arith.constant 1 : index
    %c0_25 = arith.constant 0 : index
    %c0_26 = arith.constant 0 : index
    %16 = vector.load %arg14[%c1_24, %c0_25, %c0_26] : memref<18x18x16xf32, #tpu.memory_space<vmem>>, vector<16x16x3xf32>
    %17 = vector.shape_cast %16 : vector<16x16x3xf32> to vector<256x3xf32>
    %c0_27 = arith.constant 0 : index
    %c9 = arith.constant 9 : index
    %18 = vector.load %arg16[%c0_27, %c9] : memref<256x144xf32, #tpu.memory_space<vmem>>, vector<256x3xf32>
    tpu.vector_store %arg16[%c0_27, %c9], %17 {strides = array<i32>} : memref<256x144xf32, #tpu.memory_space<vmem>>, vector<256x3xf32>,
    %c1_28 = arith.constant 1 : index
    %c1_29 = arith.constant 1 : index
    %c0_30 = arith.constant 0 : index
    %19 = vector.load %arg14[%c1_28, %c1_29, %c0_30] : memref<18x18x16xf32, #tpu.memory_space<vmem>>, vector<16x16x3xf32>
    %20 = vector.shape_cast %19 : vector<16x16x3xf32> to vector<256x3xf32>
    %c0_31 = arith.constant 0 : index
    %c12 = arith.constant 12 : index
    %21 = vector.load %arg16[%c0_31, %c12] : memref<256x144xf32, #tpu.memory_space<vmem>>, vector<256x3xf32>
    tpu.vector_store %arg16[%c0_31, %c12], %20 {strides = array<i32>} : memref<256x144xf32, #tpu.memory_space<vmem>>, vector<256x3xf32>,
    %c1_32 = arith.constant 1 : index
    %c2_33 = arith.constant 2 : index
    %c0_34 = arith.constant 0 : index
    %22 = vector.load %arg14[%c1_32, %c2_33, %c0_34] : memref<18x18x16xf32, #tpu.memory_space<vmem>>, vector<16x16x3xf32>
    %23 = vector.shape_cast %22 : vector<16x16x3xf32> to vector<256x3xf32>
    %c0_35 = arith.constant 0 : index
    %c15 = arith.constant 15 : index
    %24 = vector.load %arg16[%c0_35, %c15] : memref<256x144xf32, #tpu.memory_space<vmem>>, vector<256x3xf32>
    tpu.vector_store %arg16[%c0_35, %c15], %23 {strides = array<i32>} : memref<256x144xf32, #tpu.memory_space<vmem>>, vector<256x3xf32>,
    %c2_36 = arith.constant 2 : index
    %c0_37 = arith.constant 0 : index
    %c0_38 = arith.constant 0 : index
    %25 = vector.load %arg14[%c2_36, %c0_37, %c0_38] : memref<18x18x16xf32, #tpu.memory_space<vmem>>, vector<16x16x3xf32>
    %26 = vector.shape_cast %25 : vector<16x16x3xf32> to vector<256x3xf32>
    %c0_39 = arith.constant 0 : index
    %c18 = arith.constant 18 : index
    %27 = vector.load %arg16[%c0_39, %c18] : memref<256x144xf32, #tpu.memory_space<vmem>>, vector<256x3xf32>
    tpu.vector_store %arg16[%c0_39, %c18], %26 {strides = array<i32>} : memref<256x144xf32, #tpu.memory_space<vmem>>, vector<256x3xf32>,
    %c2_40 = arith.constant 2 : index
    %c1_41 = arith.constant 1 : index
    %c0_42 = arith.constant 0 : index
    %28 = vector.load %arg14[%c2_40, %c1_41, %c0_42] : memref<18x18x16xf32, #tpu.memory_space<vmem>>, vector<16x16x3xf32>
    %29 = vector.shape_cast %28 : vector<16x16x3xf32> to vector<256x3xf32>
    %c0_43 = arith.constant 0 : index
    %c21 = arith.constant 21 : index
    %30 = vector.load %arg16[%c0_43, %c21] : memref<256x144xf32, #tpu.memory_space<vmem>>, vector<256x3xf32>
    tpu.vector_store %arg16[%c0_43, %c21], %29 {strides = array<i32>} : memref<256x144xf32, #tpu.memory_space<vmem>>, vector<256x3xf32>,
    %c2_44 = arith.constant 2 : index
    %c2_45 = arith.constant 2 : index
    %c0_46 = arith.constant 0 : index
    %31 = vector.load %arg14[%c2_44, %c2_45, %c0_46] : memref<18x18x16xf32, #tpu.memory_space<vmem>>, vector<16x16x3xf32>
    %32 = vector.shape_cast %31 : vector<16x16x3xf32> to vector<256x3xf32>
    %c0_47 = arith.constant 0 : index
    %c24 = arith.constant 24 : index
    %33 = vector.load %arg16[%c0_47, %c24] : memref<256x144xf32, #tpu.memory_space<vmem>>, vector<256x3xf32>
    tpu.vector_store %arg16[%c0_47, %c24], %32 {strides = array<i32>} : memref<256x144xf32, #tpu.memory_space<vmem>>, vector<256x3xf32>,
    %c0_48 = arith.constant 0 : index
    %c0_49 = arith.constant 0 : index
    %34 = vector.load %arg16[%c0_48, %c0_49] : memref<256x144xf32, #tpu.memory_space<vmem>>, vector<256x27xf32>
    %35 = arith.truncf %34 : vector<256x27xf32> to vector<256x27xbf16>
    %c0_50 = arith.constant 0 : index
    %c0_51 = arith.constant 0 : index
    %36 = vector.load %arg2[%c0_50, %c0_51] : memref<27x16xbf16, #tpu.memory_space<vmem>>, vector<27x16xbf16>
    %cst_52 = arith.constant dense<0.000000e+00> : vector<256x16xf32>
    %37 = tpu.matmul %35, %36, %cst_52 {dimension_numbers = #tpu.dot_dimension_numbers<[1], [0], [0], [1], [0, 0, 1, 1], [], []>} : vector<256x27xbf16>, vector<27x16xbf16>, vector<256x16xf32> -> vector<256x16xf32>
    %c0_53 = arith.constant 0 : index
    %c0_54 = arith.constant 0 : index
    %38 = vector.load %arg3[%c0_53, %c0_54] : memref<1x16xf32, #tpu.memory_space<vmem>>, vector<1x16xf32>
    %39 = vector.broadcast %38 : vector<1x16xf32> to vector<256x16xf32>
    %40 = arith.addf %37, %39 : vector<256x16xf32>
    %c0_55 = arith.constant 0 : index
    %c0_56 = arith.constant 0 : index
    %41 = vector.load %arg4[%c0_55, %c0_56] : memref<1x16xf32, #tpu.memory_space<vmem>>, vector<1x16xf32>
    %cst_57 = arith.constant 0.000000e+00 : f32
    %42 = vector.broadcast %cst_57 : f32 to vector<256x16xf32>
    %43 = arith.cmpf oge, %40, %42 : vector<256x16xf32>
    %44 = vector.broadcast %41 : vector<1x16xf32> to vector<256x16xf32>
    %45 = arith.mulf %44, %40 : vector<256x16xf32>
    %46 = arith.select %43, %40, %45 : vector<256x16xi1>, vector<256x16xf32>
    %47 = vector.shape_cast %46 : vector<256x16xf32> to vector<16x16x16xf32>
    %c1_58 = arith.constant 1 : index
    %c1_59 = arith.constant 1 : index
    %c0_60 = arith.constant 0 : index
    %48 = vector.load %arg15[%c1_58, %c1_59, %c0_60] : memref<18x18x16xf32, #tpu.memory_space<vmem>>, vector<16x16x16xf32>
    tpu.vector_store %arg15[%c1_58, %c1_59, %c0_60], %47 {strides = array<i32>} : memref<18x18x16xf32, #tpu.memory_space<vmem>>, vector<16x16x16xf32>,
    %c0_61 = arith.constant 0 : index
    %c0_62 = arith.constant 0 : index
    %c0_63 = arith.constant 0 : index
    %49 = vector.load %arg15[%c0_61, %c0_62, %c0_63] : memref<18x18x16xf32, #tpu.memory_space<vmem>>, vector<16x16x16xf32>
    %50 = vector.shape_cast %49 : vector<16x16x16xf32> to vector<256x16xf32>
    %c0_64 = arith.constant 0 : index
    %c0_65 = arith.constant 0 : index
    %51 = vector.load %arg16[%c0_64, %c0_65] : memref<256x144xf32, #tpu.memory_space<vmem>>, vector<256x16xf32>
    tpu.vector_store %arg16[%c0_64, %c0_65], %50 {strides = array<i32>} : memref<256x144xf32, #tpu.memory_space<vmem>>, vector<256x16xf32>,
    %c0_66 = arith.constant 0 : index
    %c1_67 = arith.constant 1 : index
    %c0_68 = arith.constant 0 : index
    %52 = vector.load %arg15[%c0_66, %c1_67, %c0_68] : memref<18x18x16xf32, #tpu.memory_space<vmem>>, vector<16x16x16xf32>
    %53 = vector.shape_cast %52 : vector<16x16x16xf32> to vector<256x16xf32>
    %c0_69 = arith.constant 0 : index
    %c16 = arith.constant 16 : index
    %54 = vector.load %arg16[%c0_69, %c16] : memref<256x144xf32, #tpu.memory_space<vmem>>, vector<256x16xf32>
    tpu.vector_store %arg16[%c0_69, %c16], %53 {strides = array<i32>} : memref<256x144xf32, #tpu.memory_space<vmem>>, vector<256x16xf32>,
    %c0_70 = arith.constant 0 : index
    %c2_71 = arith.constant 2 : index
    %c0_72 = arith.constant 0 : index
    %55 = vector.load %arg15[%c0_70, %c2_71, %c0_72] : memref<18x18x16xf32, #tpu.memory_space<vmem>>, vector<16x16x16xf32>
    %56 = vector.shape_cast %55 : vector<16x16x16xf32> to vector<256x16xf32>
    %c0_73 = arith.constant 0 : index
    %c32 = arith.constant 32 : index
    %57 = vector.load %arg16[%c0_73, %c32] : memref<256x144xf32, #tpu.memory_space<vmem>>, vector<256x16xf32>
    tpu.vector_store %arg16[%c0_73, %c32], %56 {strides = array<i32>} : memref<256x144xf32, #tpu.memory_space<vmem>>, vector<256x16xf32>,
    %c1_74 = arith.constant 1 : index
    %c0_75 = arith.constant 0 : index
    %c0_76 = arith.constant 0 : index
    %58 = vector.load %arg15[%c1_74, %c0_75, %c0_76] : memref<18x18x16xf32, #tpu.memory_space<vmem>>, vector<16x16x16xf32>
    %59 = vector.shape_cast %58 : vector<16x16x16xf32> to vector<256x16xf32>
    %c0_77 = arith.constant 0 : index
    %c48 = arith.constant 48 : index
    %60 = vector.load %arg16[%c0_77, %c48] : memref<256x144xf32, #tpu.memory_space<vmem>>, vector<256x16xf32>
    tpu.vector_store %arg16[%c0_77, %c48], %59 {strides = array<i32>} : memref<256x144xf32, #tpu.memory_space<vmem>>, vector<256x16xf32>,
    %c1_78 = arith.constant 1 : index
    %c1_79 = arith.constant 1 : index
    %c0_80 = arith.constant 0 : index
    %61 = vector.load %arg15[%c1_78, %c1_79, %c0_80] : memref<18x18x16xf32, #tpu.memory_space<vmem>>, vector<16x16x16xf32>
    %62 = vector.shape_cast %61 : vector<16x16x16xf32> to vector<256x16xf32>
    %c0_81 = arith.constant 0 : index
    %c64 = arith.constant 64 : index
    %63 = vector.load %arg16[%c0_81, %c64] : memref<256x144xf32, #tpu.memory_space<vmem>>, vector<256x16xf32>
    tpu.vector_store %arg16[%c0_81, %c64], %62 {strides = array<i32>} : memref<256x144xf32, #tpu.memory_space<vmem>>, vector<256x16xf32>,
    %c1_82 = arith.constant 1 : index
    %c2_83 = arith.constant 2 : index
    %c0_84 = arith.constant 0 : index
    %64 = vector.load %arg15[%c1_82, %c2_83, %c0_84] : memref<18x18x16xf32, #tpu.memory_space<vmem>>, vector<16x16x16xf32>
    %65 = vector.shape_cast %64 : vector<16x16x16xf32> to vector<256x16xf32>
    %c0_85 = arith.constant 0 : index
    %c80 = arith.constant 80 : index
    %66 = vector.load %arg16[%c0_85, %c80] : memref<256x144xf32, #tpu.memory_space<vmem>>, vector<256x16xf32>
    tpu.vector_store %arg16[%c0_85, %c80], %65 {strides = array<i32>} : memref<256x144xf32, #tpu.memory_space<vmem>>, vector<256x16xf32>,
    %c2_86 = arith.constant 2 : index
    %c0_87 = arith.constant 0 : index
    %c0_88 = arith.constant 0 : index
    %67 = vector.load %arg15[%c2_86, %c0_87, %c0_88] : memref<18x18x16xf32, #tpu.memory_space<vmem>>, vector<16x16x16xf32>
    %68 = vector.shape_cast %67 : vector<16x16x16xf32> to vector<256x16xf32>
    %c0_89 = arith.constant 0 : index
    %c96 = arith.constant 96 : index
    %69 = vector.load %arg16[%c0_89, %c96] : memref<256x144xf32, #tpu.memory_space<vmem>>, vector<256x16xf32>
    tpu.vector_store %arg16[%c0_89, %c96], %68 {strides = array<i32>} : memref<256x144xf32, #tpu.memory_space<vmem>>, vector<256x16xf32>,
    %c2_90 = arith.constant 2 : index
    %c1_91 = arith.constant 1 : index
    %c0_92 = arith.constant 0 : index
    %70 = vector.load %arg15[%c2_90, %c1_91, %c0_92] : memref<18x18x16xf32, #tpu.memory_space<vmem>>, vector<16x16x16xf32>
    %71 = vector.shape_cast %70 : vector<16x16x16xf32> to vector<256x16xf32>
    %c0_93 = arith.constant 0 : index
    %c112 = arith.constant 112 : index
    %72 = vector.load %arg16[%c0_93, %c112] : memref<256x144xf32, #tpu.memory_space<vmem>>, vector<256x16xf32>
    tpu.vector_store %arg16[%c0_93, %c112], %71 {strides = array<i32>} : memref<256x144xf32, #tpu.memory_space<vmem>>, vector<256x16xf32>,
    %c2_94 = arith.constant 2 : index
    %c2_95 = arith.constant 2 : index
    %c0_96 = arith.constant 0 : index
    %73 = vector.load %arg15[%c2_94, %c2_95, %c0_96] : memref<18x18x16xf32, #tpu.memory_space<vmem>>, vector<16x16x16xf32>
    %74 = vector.shape_cast %73 : vector<16x16x16xf32> to vector<256x16xf32>
    %c0_97 = arith.constant 0 : index
    %c128 = arith.constant 128 : index
    %75 = vector.load %arg16[%c0_97, %c128] : memref<256x144xf32, #tpu.memory_space<vmem>>, vector<256x16xf32>
    tpu.vector_store %arg16[%c0_97, %c128], %74 {strides = array<i32>} : memref<256x144xf32, #tpu.memory_space<vmem>>, vector<256x16xf32>,
    %c0_98 = arith.constant 0 : index
    %c0_99 = arith.constant 0 : index
    %76 = vector.load %arg16[%c0_98, %c0_99] : memref<256x144xf32, #tpu.memory_space<vmem>>, vector<256x144xf32>
    %77 = arith.truncf %76 : vector<256x144xf32> to vector<256x144xbf16>
    %c0_100 = arith.constant 0 : index
    %c0_101 = arith.constant 0 : index
    %78 = vector.load %arg5[%c0_100, %c0_101] : memref<144x16xbf16, #tpu.memory_space<vmem>>, vector<144x16xbf16>
    %cst_102 = arith.constant dense<0.000000e+00> : vector<256x16xf32>
    %79 = tpu.matmul %77, %78, %cst_102 {dimension_numbers = #tpu.dot_dimension_numbers<[1], [0], [0], [1], [0, 0, 1, 1], [], []>} : vector<256x144xbf16>, vector<144x16xbf16>, vector<256x16xf32> -> vector<256x16xf32>
    %c0_103 = arith.constant 0 : index
    %c0_104 = arith.constant 0 : index
    %80 = vector.load %arg6[%c0_103, %c0_104] : memref<1x16xf32, #tpu.memory_space<vmem>>, vector<1x16xf32>
    %81 = vector.broadcast %80 : vector<1x16xf32> to vector<256x16xf32>
    %82 = arith.addf %79, %81 : vector<256x16xf32>
    %c0_105 = arith.constant 0 : index
    %c0_106 = arith.constant 0 : index
    %83 = vector.load %arg7[%c0_105, %c0_106] : memref<1x16xf32, #tpu.memory_space<vmem>>, vector<1x16xf32>
    %cst_107 = arith.constant 0.000000e+00 : f32
    %84 = vector.broadcast %cst_107 : f32 to vector<256x16xf32>
    %85 = arith.cmpf oge, %82, %84 : vector<256x16xf32>
    %86 = vector.broadcast %83 : vector<1x16xf32> to vector<256x16xf32>
    %87 = arith.mulf %86, %82 : vector<256x16xf32>
    %88 = arith.select %85, %82, %87 : vector<256x16xi1>, vector<256x16xf32>
    %89 = vector.shape_cast %88 : vector<256x16xf32> to vector<16x16x16xf32>
    %c1_108 = arith.constant 1 : index
    %c1_109 = arith.constant 1 : index
    %c0_110 = arith.constant 0 : index
    %90 = vector.load %arg14[%c1_108, %c1_109, %c0_110] : memref<18x18x16xf32, #tpu.memory_space<vmem>>, vector<16x16x16xf32>
    tpu.vector_store %arg14[%c1_108, %c1_109, %c0_110], %89 {strides = array<i32>} : memref<18x18x16xf32, #tpu.memory_space<vmem>>, vector<16x16x16xf32>,
    %c0_111 = arith.constant 0 : index
    %c0_112 = arith.constant 0 : index
    %c0_113 = arith.constant 0 : index
    %91 = vector.load %arg14[%c0_111, %c0_112, %c0_113] : memref<18x18x16xf32, #tpu.memory_space<vmem>>, vector<16x16x16xf32>
    %92 = vector.shape_cast %91 : vector<16x16x16xf32> to vector<256x16xf32>
    %c0_114 = arith.constant 0 : index
    %c0_115 = arith.constant 0 : index
    %93 = vector.load %arg16[%c0_114, %c0_115] : memref<256x144xf32, #tpu.memory_space<vmem>>, vector<256x16xf32>
    tpu.vector_store %arg16[%c0_114, %c0_115], %92 {strides = array<i32>} : memref<256x144xf32, #tpu.memory_space<vmem>>, vector<256x16xf32>,
    %c0_116 = arith.constant 0 : index
    %c1_117 = arith.constant 1 : index
    %c0_118 = arith.constant 0 : index
    %94 = vector.load %arg14[%c0_116, %c1_117, %c0_118] : memref<18x18x16xf32, #tpu.memory_space<vmem>>, vector<16x16x16xf32>
    %95 = vector.shape_cast %94 : vector<16x16x16xf32> to vector<256x16xf32>
    %c0_119 = arith.constant 0 : index
    %c16_120 = arith.constant 16 : index
    %96 = vector.load %arg16[%c0_119, %c16_120] : memref<256x144xf32, #tpu.memory_space<vmem>>, vector<256x16xf32>
    tpu.vector_store %arg16[%c0_119, %c16_120], %95 {strides = array<i32>} : memref<256x144xf32, #tpu.memory_space<vmem>>, vector<256x16xf32>,
    %c0_121 = arith.constant 0 : index
    %c2_122 = arith.constant 2 : index
    %c0_123 = arith.constant 0 : index
    %97 = vector.load %arg14[%c0_121, %c2_122, %c0_123] : memref<18x18x16xf32, #tpu.memory_space<vmem>>, vector<16x16x16xf32>
    %98 = vector.shape_cast %97 : vector<16x16x16xf32> to vector<256x16xf32>
    %c0_124 = arith.constant 0 : index
    %c32_125 = arith.constant 32 : index
    %99 = vector.load %arg16[%c0_124, %c32_125] : memref<256x144xf32, #tpu.memory_space<vmem>>, vector<256x16xf32>
    tpu.vector_store %arg16[%c0_124, %c32_125], %98 {strides = array<i32>} : memref<256x144xf32, #tpu.memory_space<vmem>>, vector<256x16xf32>,
    %c1_126 = arith.constant 1 : index
    %c0_127 = arith.constant 0 : index
    %c0_128 = arith.constant 0 : index
    %100 = vector.load %arg14[%c1_126, %c0_127, %c0_128] : memref<18x18x16xf32, #tpu.memory_space<vmem>>, vector<16x16x16xf32>
    %101 = vector.shape_cast %100 : vector<16x16x16xf32> to vector<256x16xf32>
    %c0_129 = arith.constant 0 : index
    %c48_130 = arith.constant 48 : index
    %102 = vector.load %arg16[%c0_129, %c48_130] : memref<256x144xf32, #tpu.memory_space<vmem>>, vector<256x16xf32>
    tpu.vector_store %arg16[%c0_129, %c48_130], %101 {strides = array<i32>} : memref<256x144xf32, #tpu.memory_space<vmem>>, vector<256x16xf32>,
    %c1_131 = arith.constant 1 : index
    %c1_132 = arith.constant 1 : index
    %c0_133 = arith.constant 0 : index
    %103 = vector.load %arg14[%c1_131, %c1_132, %c0_133] : memref<18x18x16xf32, #tpu.memory_space<vmem>>, vector<16x16x16xf32>
    %104 = vector.shape_cast %103 : vector<16x16x16xf32> to vector<256x16xf32>
    %c0_134 = arith.constant 0 : index
    %c64_135 = arith.constant 64 : index
    %105 = vector.load %arg16[%c0_134, %c64_135] : memref<256x144xf32, #tpu.memory_space<vmem>>, vector<256x16xf32>
    tpu.vector_store %arg16[%c0_134, %c64_135], %104 {strides = array<i32>} : memref<256x144xf32, #tpu.memory_space<vmem>>, vector<256x16xf32>,
    %c1_136 = arith.constant 1 : index
    %c2_137 = arith.constant 2 : index
    %c0_138 = arith.constant 0 : index
    %106 = vector.load %arg14[%c1_136, %c2_137, %c0_138] : memref<18x18x16xf32, #tpu.memory_space<vmem>>, vector<16x16x16xf32>
    %107 = vector.shape_cast %106 : vector<16x16x16xf32> to vector<256x16xf32>
    %c0_139 = arith.constant 0 : index
    %c80_140 = arith.constant 80 : index
    %108 = vector.load %arg16[%c0_139, %c80_140] : memref<256x144xf32, #tpu.memory_space<vmem>>, vector<256x16xf32>
    tpu.vector_store %arg16[%c0_139, %c80_140], %107 {strides = array<i32>} : memref<256x144xf32, #tpu.memory_space<vmem>>, vector<256x16xf32>,
    %c2_141 = arith.constant 2 : index
    %c0_142 = arith.constant 0 : index
    %c0_143 = arith.constant 0 : index
    %109 = vector.load %arg14[%c2_141, %c0_142, %c0_143] : memref<18x18x16xf32, #tpu.memory_space<vmem>>, vector<16x16x16xf32>
    %110 = vector.shape_cast %109 : vector<16x16x16xf32> to vector<256x16xf32>
    %c0_144 = arith.constant 0 : index
    %c96_145 = arith.constant 96 : index
    %111 = vector.load %arg16[%c0_144, %c96_145] : memref<256x144xf32, #tpu.memory_space<vmem>>, vector<256x16xf32>
    tpu.vector_store %arg16[%c0_144, %c96_145], %110 {strides = array<i32>} : memref<256x144xf32, #tpu.memory_space<vmem>>, vector<256x16xf32>,
    %c2_146 = arith.constant 2 : index
    %c1_147 = arith.constant 1 : index
    %c0_148 = arith.constant 0 : index
    %112 = vector.load %arg14[%c2_146, %c1_147, %c0_148] : memref<18x18x16xf32, #tpu.memory_space<vmem>>, vector<16x16x16xf32>
    %113 = vector.shape_cast %112 : vector<16x16x16xf32> to vector<256x16xf32>
    %c0_149 = arith.constant 0 : index
    %c112_150 = arith.constant 112 : index
    %114 = vector.load %arg16[%c0_149, %c112_150] : memref<256x144xf32, #tpu.memory_space<vmem>>, vector<256x16xf32>
    tpu.vector_store %arg16[%c0_149, %c112_150], %113 {strides = array<i32>} : memref<256x144xf32, #tpu.memory_space<vmem>>, vector<256x16xf32>,
    %c2_151 = arith.constant 2 : index
    %c2_152 = arith.constant 2 : index
    %c0_153 = arith.constant 0 : index
    %115 = vector.load %arg14[%c2_151, %c2_152, %c0_153] : memref<18x18x16xf32, #tpu.memory_space<vmem>>, vector<16x16x16xf32>
    %116 = vector.shape_cast %115 : vector<16x16x16xf32> to vector<256x16xf32>
    %c0_154 = arith.constant 0 : index
    %c128_155 = arith.constant 128 : index
    %117 = vector.load %arg16[%c0_154, %c128_155] : memref<256x144xf32, #tpu.memory_space<vmem>>, vector<256x16xf32>
    tpu.vector_store %arg16[%c0_154, %c128_155], %116 {strides = array<i32>} : memref<256x144xf32, #tpu.memory_space<vmem>>, vector<256x16xf32>,
    %c0_156 = arith.constant 0 : index
    %c0_157 = arith.constant 0 : index
    %118 = vector.load %arg16[%c0_156, %c0_157] : memref<256x144xf32, #tpu.memory_space<vmem>>, vector<256x144xf32>
    %119 = arith.truncf %118 : vector<256x144xf32> to vector<256x144xbf16>
    %c0_158 = arith.constant 0 : index
    %c0_159 = arith.constant 0 : index
    %120 = vector.load %arg8[%c0_158, %c0_159] : memref<144x16xbf16, #tpu.memory_space<vmem>>, vector<144x16xbf16>
    %cst_160 = arith.constant dense<0.000000e+00> : vector<256x16xf32>
    %121 = tpu.matmul %119, %120, %cst_160 {dimension_numbers = #tpu.dot_dimension_numbers<[1], [0], [0], [1], [0, 0, 1, 1], [], []>} : vector<256x144xbf16>, vector<144x16xbf16>, vector<256x16xf32> -> vector<256x16xf32>
    %c0_161 = arith.constant 0 : index
    %c0_162 = arith.constant 0 : index
    %122 = vector.load %arg9[%c0_161, %c0_162] : memref<1x16xf32, #tpu.memory_space<vmem>>, vector<1x16xf32>
    %123 = vector.broadcast %122 : vector<1x16xf32> to vector<256x16xf32>
    %124 = arith.addf %121, %123 : vector<256x16xf32>
    %c0_163 = arith.constant 0 : index
    %c0_164 = arith.constant 0 : index
    %125 = vector.load %arg10[%c0_163, %c0_164] : memref<1x16xf32, #tpu.memory_space<vmem>>, vector<1x16xf32>
    %cst_165 = arith.constant 0.000000e+00 : f32
    %126 = vector.broadcast %cst_165 : f32 to vector<256x16xf32>
    %127 = arith.cmpf oge, %124, %126 : vector<256x16xf32>
    %128 = vector.broadcast %125 : vector<1x16xf32> to vector<256x16xf32>
    %129 = arith.mulf %128, %124 : vector<256x16xf32>
    %130 = arith.select %127, %124, %129 : vector<256x16xi1>, vector<256x16xf32>
    %131 = vector.shape_cast %130 : vector<256x16xf32> to vector<16x16x16xf32>
    %c1_166 = arith.constant 1 : index
    %c1_167 = arith.constant 1 : index
    %c0_168 = arith.constant 0 : index
    %132 = vector.load %arg15[%c1_166, %c1_167, %c0_168] : memref<18x18x16xf32, #tpu.memory_space<vmem>>, vector<16x16x16xf32>
    tpu.vector_store %arg15[%c1_166, %c1_167, %c0_168], %131 {strides = array<i32>} : memref<18x18x16xf32, #tpu.memory_space<vmem>>, vector<16x16x16xf32>,
    %c0_169 = arith.constant 0 : index
    %c0_170 = arith.constant 0 : index
    %c0_171 = arith.constant 0 : index
    %133 = vector.load %arg15[%c0_169, %c0_170, %c0_171] : memref<18x18x16xf32, #tpu.memory_space<vmem>>, vector<16x16x16xf32>
    %134 = vector.shape_cast %133 : vector<16x16x16xf32> to vector<256x16xf32>
    %c0_172 = arith.constant 0 : index
    %c0_173 = arith.constant 0 : index
    %135 = vector.load %arg16[%c0_172, %c0_173] : memref<256x144xf32, #tpu.memory_space<vmem>>, vector<256x16xf32>
    tpu.vector_store %arg16[%c0_172, %c0_173], %134 {strides = array<i32>} : memref<256x144xf32, #tpu.memory_space<vmem>>, vector<256x16xf32>,
    %c0_174 = arith.constant 0 : index
    %c1_175 = arith.constant 1 : index
    %c0_176 = arith.constant 0 : index
    %136 = vector.load %arg15[%c0_174, %c1_175, %c0_176] : memref<18x18x16xf32, #tpu.memory_space<vmem>>, vector<16x16x16xf32>
    %137 = vector.shape_cast %136 : vector<16x16x16xf32> to vector<256x16xf32>
    %c0_177 = arith.constant 0 : index
    %c16_178 = arith.constant 16 : index
    %138 = vector.load %arg16[%c0_177, %c16_178] : memref<256x144xf32, #tpu.memory_space<vmem>>, vector<256x16xf32>
    tpu.vector_store %arg16[%c0_177, %c16_178], %137 {strides = array<i32>} : memref<256x144xf32, #tpu.memory_space<vmem>>, vector<256x16xf32>,
    %c0_179 = arith.constant 0 : index
    %c2_180 = arith.constant 2 : index
    %c0_181 = arith.constant 0 : index
    %139 = vector.load %arg15[%c0_179, %c2_180, %c0_181] : memref<18x18x16xf32, #tpu.memory_space<vmem>>, vector<16x16x16xf32>
    %140 = vector.shape_cast %139 : vector<16x16x16xf32> to vector<256x16xf32>
    %c0_182 = arith.constant 0 : index
    %c32_183 = arith.constant 32 : index
    %141 = vector.load %arg16[%c0_182, %c32_183] : memref<256x144xf32, #tpu.memory_space<vmem>>, vector<256x16xf32>
    tpu.vector_store %arg16[%c0_182, %c32_183], %140 {strides = array<i32>} : memref<256x144xf32, #tpu.memory_space<vmem>>, vector<256x16xf32>,
    %c1_184 = arith.constant 1 : index
    %c0_185 = arith.constant 0 : index
    %c0_186 = arith.constant 0 : index
    %142 = vector.load %arg15[%c1_184, %c0_185, %c0_186] : memref<18x18x16xf32, #tpu.memory_space<vmem>>, vector<16x16x16xf32>
    %143 = vector.shape_cast %142 : vector<16x16x16xf32> to vector<256x16xf32>
    %c0_187 = arith.constant 0 : index
    %c48_188 = arith.constant 48 : index
    %144 = vector.load %arg16[%c0_187, %c48_188] : memref<256x144xf32, #tpu.memory_space<vmem>>, vector<256x16xf32>
    tpu.vector_store %arg16[%c0_187, %c48_188], %143 {strides = array<i32>} : memref<256x144xf32, #tpu.memory_space<vmem>>, vector<256x16xf32>,
    %c1_189 = arith.constant 1 : index
    %c1_190 = arith.constant 1 : index
    %c0_191 = arith.constant 0 : index
    %145 = vector.load %arg15[%c1_189, %c1_190, %c0_191] : memref<18x18x16xf32, #tpu.memory_space<vmem>>, vector<16x16x16xf32>
    %146 = vector.shape_cast %145 : vector<16x16x16xf32> to vector<256x16xf32>
    %c0_192 = arith.constant 0 : index
    %c64_193 = arith.constant 64 : index
    %147 = vector.load %arg16[%c0_192, %c64_193] : memref<256x144xf32, #tpu.memory_space<vmem>>, vector<256x16xf32>
    tpu.vector_store %arg16[%c0_192, %c64_193], %146 {strides = array<i32>} : memref<256x144xf32, #tpu.memory_space<vmem>>, vector<256x16xf32>,
    %c1_194 = arith.constant 1 : index
    %c2_195 = arith.constant 2 : index
    %c0_196 = arith.constant 0 : index
    %148 = vector.load %arg15[%c1_194, %c2_195, %c0_196] : memref<18x18x16xf32, #tpu.memory_space<vmem>>, vector<16x16x16xf32>
    %149 = vector.shape_cast %148 : vector<16x16x16xf32> to vector<256x16xf32>
    %c0_197 = arith.constant 0 : index
    %c80_198 = arith.constant 80 : index
    %150 = vector.load %arg16[%c0_197, %c80_198] : memref<256x144xf32, #tpu.memory_space<vmem>>, vector<256x16xf32>
    tpu.vector_store %arg16[%c0_197, %c80_198], %149 {strides = array<i32>} : memref<256x144xf32, #tpu.memory_space<vmem>>, vector<256x16xf32>,
    %c2_199 = arith.constant 2 : index
    %c0_200 = arith.constant 0 : index
    %c0_201 = arith.constant 0 : index
    %151 = vector.load %arg15[%c2_199, %c0_200, %c0_201] : memref<18x18x16xf32, #tpu.memory_space<vmem>>, vector<16x16x16xf32>
    %152 = vector.shape_cast %151 : vector<16x16x16xf32> to vector<256x16xf32>
    %c0_202 = arith.constant 0 : index
    %c96_203 = arith.constant 96 : index
    %153 = vector.load %arg16[%c0_202, %c96_203] : memref<256x144xf32, #tpu.memory_space<vmem>>, vector<256x16xf32>
    tpu.vector_store %arg16[%c0_202, %c96_203], %152 {strides = array<i32>} : memref<256x144xf32, #tpu.memory_space<vmem>>, vector<256x16xf32>,
    %c2_204 = arith.constant 2 : index
    %c1_205 = arith.constant 1 : index
    %c0_206 = arith.constant 0 : index
    %154 = vector.load %arg15[%c2_204, %c1_205, %c0_206] : memref<18x18x16xf32, #tpu.memory_space<vmem>>, vector<16x16x16xf32>
    %155 = vector.shape_cast %154 : vector<16x16x16xf32> to vector<256x16xf32>
    %c0_207 = arith.constant 0 : index
    %c112_208 = arith.constant 112 : index
    %156 = vector.load %arg16[%c0_207, %c112_208] : memref<256x144xf32, #tpu.memory_space<vmem>>, vector<256x16xf32>
    tpu.vector_store %arg16[%c0_207, %c112_208], %155 {strides = array<i32>} : memref<256x144xf32, #tpu.memory_space<vmem>>, vector<256x16xf32>,
    %c2_209 = arith.constant 2 : index
    %c2_210 = arith.constant 2 : index
    %c0_211 = arith.constant 0 : index
    %157 = vector.load %arg15[%c2_209, %c2_210, %c0_211] : memref<18x18x16xf32, #tpu.memory_space<vmem>>, vector<16x16x16xf32>
    %158 = vector.shape_cast %157 : vector<16x16x16xf32> to vector<256x16xf32>
    %c0_212 = arith.constant 0 : index
    %c128_213 = arith.constant 128 : index
    %159 = vector.load %arg16[%c0_212, %c128_213] : memref<256x144xf32, #tpu.memory_space<vmem>>, vector<256x16xf32>
    tpu.vector_store %arg16[%c0_212, %c128_213], %158 {strides = array<i32>} : memref<256x144xf32, #tpu.memory_space<vmem>>, vector<256x16xf32>,
    %c0_214 = arith.constant 0 : index
    %c0_215 = arith.constant 0 : index
    %160 = vector.load %arg16[%c0_214, %c0_215] : memref<256x144xf32, #tpu.memory_space<vmem>>, vector<256x144xf32>
    %161 = arith.truncf %160 : vector<256x144xf32> to vector<256x144xbf16>
    %c0_216 = arith.constant 0 : index
    %c0_217 = arith.constant 0 : index
    %162 = vector.load %arg11[%c0_216, %c0_217] : memref<144x12xbf16, #tpu.memory_space<vmem>>, vector<144x12xbf16>
    %cst_218 = arith.constant dense<0.000000e+00> : vector<256x12xf32>
    %163 = tpu.matmul %161, %162, %cst_218 {dimension_numbers = #tpu.dot_dimension_numbers<[1], [0], [0], [1], [0, 0, 1, 1], [], []>} : vector<256x144xbf16>, vector<144x12xbf16>, vector<256x12xf32> -> vector<256x12xf32>
    %c0_219 = arith.constant 0 : index
    %c0_220 = arith.constant 0 : index
    %164 = vector.load %arg12[%c0_219, %c0_220] : memref<1x12xf32, #tpu.memory_space<vmem>>, vector<1x12xf32>
    %165 = vector.broadcast %164 : vector<1x12xf32> to vector<256x12xf32>
    %166 = arith.addf %163, %165 : vector<256x12xf32>
    %c0_221 = arith.constant 0 : index
    %c0_222 = arith.constant 0 : index
    %c0_223 = arith.constant 0 : index
    %167 = vector.load %arg13[%c0_221, %c0_222, %c0_223] : memref<1x256x12xf32, #tpu.memory_space<vmem>>, vector<1x256x12xf32>
    %168 = vector.shape_cast %167 : vector<1x256x12xf32> to vector<256x12xf32>
    %169 = vector.shape_cast %166 : vector<256x12xf32> to vector<1x256x12xf32>
    tpu.vector_store %arg13[%c0_221, %c0_222, %c0_223], %169 {strides = array<i32>} : memref<1x256x12xf32, #tpu.memory_space<vmem>>, vector<1x256x12xf32>,
    return
  }
  func.func @transform_0(%arg0: i32) -> (i32, i32, i32, i32) {
    %c0_i32 = arith.constant 0 : i32
    %c0_i32_0 = arith.constant 0 : i32
    %c0_i32_1 = arith.constant 0 : i32
    %c0_i32_2 = arith.constant 0 : i32
    return %arg0, %c0_i32, %c0_i32_0, %c0_i32_1 : i32, i32, i32, i32
  }
  func.func @transform_1(%arg0: i32) -> (i32, i32) {
    %c0_i32 = arith.constant 0 : i32
    %c0_i32_0 = arith.constant 0 : i32
    %c0_i32_1 = arith.constant 0 : i32
    return %c0_i32, %c0_i32_0 : i32, i32
  }
  func.func @transform_2(%arg0: i32) -> (i32, i32) {
    %c0_i32 = arith.constant 0 : i32
    %c0_i32_0 = arith.constant 0 : i32
    %c0_i32_1 = arith.constant 0 : i32
    return %c0_i32, %c0_i32_0 : i32, i32
  }
  func.func @transform_3(%arg0: i32) -> (i32, i32) {
    %c0_i32 = arith.constant 0 : i32
    %c0_i32_0 = arith.constant 0 : i32
    %c0_i32_1 = arith.constant 0 : i32
    return %c0_i32, %c0_i32_0 : i32, i32
  }
  func.func @transform_4(%arg0: i32) -> (i32, i32) {
    %c0_i32 = arith.constant 0 : i32
    %c0_i32_0 = arith.constant 0 : i32
    %c0_i32_1 = arith.constant 0 : i32
    return %c0_i32, %c0_i32_0 : i32, i32
  }
  func.func @transform_5(%arg0: i32) -> (i32, i32) {
    %c0_i32 = arith.constant 0 : i32
    %c0_i32_0 = arith.constant 0 : i32
    %c0_i32_1 = arith.constant 0 : i32
    return %c0_i32, %c0_i32_0 : i32, i32
  }
  func.func @transform_6(%arg0: i32) -> (i32, i32) {
    %c0_i32 = arith.constant 0 : i32
    %c0_i32_0 = arith.constant 0 : i32
    %c0_i32_1 = arith.constant 0 : i32
    return %c0_i32, %c0_i32_0 : i32, i32
  }
  func.func @transform_7(%arg0: i32) -> (i32, i32) {
    %c0_i32 = arith.constant 0 : i32
    %c0_i32_0 = arith.constant 0 : i32
    %c0_i32_1 = arith.constant 0 : i32
    return %c0_i32, %c0_i32_0 : i32, i32
  }
  func.func @transform_8(%arg0: i32) -> (i32, i32) {
    %c0_i32 = arith.constant 0 : i32
    %c0_i32_0 = arith.constant 0 : i32
    %c0_i32_1 = arith.constant 0 : i32
    return %c0_i32, %c0_i32_0 : i32, i32
  }
  func.func @transform_9(%arg0: i32) -> (i32, i32) {
    %c0_i32 = arith.constant 0 : i32
    %c0_i32_0 = arith.constant 0 : i32
    %c0_i32_1 = arith.constant 0 : i32
    return %c0_i32, %c0_i32_0 : i32, i32
  }
  func.func @transform_10(%arg0: i32) -> (i32, i32) {
    %c0_i32 = arith.constant 0 : i32
    %c0_i32_0 = arith.constant 0 : i32
    %c0_i32_1 = arith.constant 0 : i32
    return %c0_i32, %c0_i32_0 : i32, i32
  }
  func.func @transform_11(%arg0: i32) -> (i32, i32) {
    %c0_i32 = arith.constant 0 : i32
    %c0_i32_0 = arith.constant 0 : i32
    %c0_i32_1 = arith.constant 0 : i32
    return %c0_i32, %c0_i32_0 : i32, i32
  }
  func.func @transform_12(%arg0: i32) -> (i32, i32, i32) {
    %c0_i32 = arith.constant 0 : i32
    %c0_i32_0 = arith.constant 0 : i32
    %c0_i32_1 = arith.constant 0 : i32
    return %arg0, %c0_i32, %c0_i32_0 : i32, i32, i32
  }
}

</mosaic_0001>

<llo_original>
// kernel: srvgg_forward.1
$region0: #{srvgg_forward.1}
  #allocation0 [shape = 'u32[]', space=smem, size = 0x4, offset = 0x4, fixed_abs, tag = 'smem constant byte address 0x4 - core index']
  #allocation1 [shape = 'u32[144,128]{1,0:T(1,128)}', space=vmem, size = 0x12000, scoped, tag = 'internal scratch']
  #allocation2 [shape = 'f32[18,18,16]{2,1,0:T(8,128)}', space=vmem, size = 0x36000, scoped, tag = 'scratch operand']
  #allocation3 [shape = 'f32[18,18,16]{2,1,0:T(8,128)}', space=vmem, size = 0x36000, scoped, tag = 'scratch operand']
  #allocation4 [shape = 'f32[256,144]{1,0:T(8,128)}', space=vmem, size = 0x40000, scoped, tag = 'scratch operand']
  %s0 = inlined_call_operand.vmem [shape: f32[2,16,16,3], index: 0, kind: input, shape index: {}]
  %s1 = inlined_call_operand.vmem [shape: bf16[27,16], index: 1, kind: input, shape index: {}]
  %s2 = inlined_call_operand.hbm [shape: f32[1,16], index: 2, kind: input, shape index: {}]
  %s3 = inlined_call_operand.hbm [shape: f32[1,16], index: 3, kind: input, shape index: {}]
  %s4 = inlined_call_operand.vmem [shape: bf16[144,16], index: 4, kind: input, shape index: {}]
  %s5 = inlined_call_operand.hbm [shape: f32[1,16], index: 5, kind: input, shape index: {}]
  %s6 = inlined_call_operand.hbm [shape: f32[1,16], index: 6, kind: input, shape index: {}]
  %s7 = inlined_call_operand.vmem [shape: bf16[144,16], index: 7, kind: input, shape index: {}]
  %s8 = inlined_call_operand.hbm [shape: f32[1,16], index: 8, kind: input, shape index: {}]
  %s9 = inlined_call_operand.hbm [shape: f32[1,16], index: 9, kind: input, shape index: {}]
  %s10 = inlined_call_operand.vmem [shape: bf16[144,12], index: 10, kind: input, shape index: {}]
  %s11 = inlined_call_operand.hbm [shape: f32[1,12], index: 11, kind: input, shape index: {}]
  %s12 = inlined_call_operand.vmem [shape: f32[2,256,12], index: 12, kind: output, shape index: {}]
  %s13 = sld [smem:[#allocation0]]
  $region109: #{srvgg_forward.1} parent=0
    _
  %s15 = ssub.s32 1, %s13
  %s16 = scalar_select 0, %s15, %s13
  $region1: #{srvgg_forward.1} parent=0
    #allocation5 [shape = 'u8[512]{0}', space=vmem, size = 0x400, scoped, tag = 'input window, operand 2, single buffered']
    #allocation6 [shape = 's32[2]{0}', space=sflag, size = 0x8, scoped, tag = 'scoped memory for srvgg_forward.1']
    #allocation7 [shape = 'u8[512]{0}', space=vmem, size = 0x400, scoped, tag = 'input window, operand 3, single buffered']
    #allocation8 [shape = 's32[1]{0}', space=sflag, size = 0x4, scoped, tag = 'scoped memory for srvgg_forward.1']
    #allocation9 [shape = 'u8[512]{0}', space=vmem, size = 0x400, scoped, tag = 'input window, operand 5, single buffered']
    #allocation10 [shape = 'u8[512]{0}', space=vmem, size = 0x400, scoped, tag = 'input window, operand 6, single buffered']
    #allocation11 [shape = 's32[1]{0}', space=sflag, size = 0x4, scoped, tag = 'scoped memory for srvgg_forward.1']
    #allocation12 [shape = 'u8[512]{0}', space=vmem, size = 0x400, scoped, tag = 'input window, operand 8, single buffered']
    #allocation13 [shape = 'u8[512]{0}', space=vmem, size = 0x400, scoped, tag = 'input window, operand 9, single buffered']
    #allocation14 [shape = 's32[1]{0}', space=sflag, size = 0x4, scoped, tag = 'scoped memory for srvgg_forward.1']
    #allocation15 [shape = 'u8[512]{0}', space=vmem, size = 0x400, scoped, tag = 'input window, operand 11, single buffered']
    %17 = vsyncpa [#allocation6], 0
    %18 = vsyncpa [#allocation8], 0
    %19 = vsyncpa [#allocation11], 0
    %20 = vsyncpa [#allocation14], 0
    loop: start=0, step=1, limit=4
    $region2: #{srvgg_forward.1} parent=1 // loop_pre_header
      _
    $region3: #{srvgg_forward.1} parent=1 // loop_header
      %s22 = sphi 0, %s26
      %p23 = scmp.ge.s32.totalorder %s22, 4
      %s32 = sphi 0, %s34
      %s35 = sphi 0, %s32
      %s36 = sphi 0, %s35
      %s52 = sphi 0, %s36
      %s56 = sphi 0, %s56
      %s58 = sphi 0, %s56
      %s59 = sphi 0, %s58
      %s73 = sphi 0, %s59
      %s77 = sphi 0, %s77
      %s79 = sphi 0, %s77
      %s80 = sphi 0, %s79
      %s94 = sphi 0, %s80
      %s98 = sphi 0, %s98
      %s100 = sphi 0, %s98
      %s101 = sphi 0, %s100
      %s115 = sphi 0, %s101
      %s119 = sphi 0, %s119
      %s121 = sphi 0, %s119
      %s122 = sphi 0, %s121
      %s136 = sphi 0, %s122
      %s140 = sphi 0, %s140
      %s142 = sphi 0, %s140
      %s143 = sphi 0, %s142
      %s157 = sphi 0, %s143
      %s161 = sphi 0, %s161
      %s163 = sphi 0, %s161
      %s164 = sphi 0, %s163
      %s178 = sphi 0, %s164
      %s182 = sphi 0, %s182
      %s184 = sphi 0, %s182
      %s185 = sphi 0, %s184
      %s199 = sphi 0, %s185
      %s203 = sphi 0, %s203
      %s205 = sphi 0, %s203
      %s206 = sphi 0, %s205
      %s220 = sphi 0, %s206
      %s224 = sphi 0, %s224
      %s226 = sphi 0, %s224
      %s227 = sphi 0, %s226
      %s241 = sphi 0, %s227
      %s245 = sphi 0, %s245
      %s247 = sphi 0, %s245
      %s248 = sphi 0, %s247
      %s262 = sphi 0, %s248
      %s266 = sphi 0, %s266
      %s268 = sphi 0, %s266
      %s269 = sphi 0, %s268
      %s283 = sphi 0, %s269
      %s289 = sphi 0, %s291
      %s292 = sphi 0, %s289
      %s293 = sphi 0, %s292
      %s309 = sphi 0, %s293
    $region4: #{srvgg_forward.1} parent=1 // loop_header_branch
      %25 = sbr.rel (%p23) target = $region8
    $region5: #{srvgg_forward.1} parent=1 // loop_body
      %s27 = ssub.s32 %s22, 1
      %s28 = ssub.s32 %s22, 2
      %s29 = sadd.s32 %s22, 1
      %s30 = ssub.s32 %s22, %s29
      %p31 = scmp.eq.s32.totalorder %s30, 0
      %s33 = sadd.s32 %s32, 1
      %s34 = scalar_select %p31, %s32, %s33
      %p37 = pneg %p31
      %p38 = scmp.eq.s32.totalorder %s22, 1
      %p39 = por %p37, %p38
      %p40 = scmp.ne.s32.totalorder %s32, %s35
      %p41 = scmp.eq.s32.totalorder %s22, 0
      %p42 = por %p40, %p41
      %p43 = scmp.ne.s32.totalorder %s32, %s35
      %p44 = scmp.eq.s32.totalorder %s27, 1
      %p45 = por %p43, %p44
      %p46 = scmp.ne.s32.totalorder %s35, %s36
      %p47 = scmp.eq.s32.totalorder %s27, 0
      %p48 = por %p46, %p47
      %p49 = scmp.ne.s32.totalorder %s35, %s36
      %p50 = scmp.eq.s32.totalorder %s28, 1
      %p51 = por %p49, %p50
      %p53 = scmp.ne.s32.totalorder %s36, %s52
      %p54 = scmp.eq.s32.totalorder %s28, 0
      %p55 = por %p53, %p54
      %s57 = sadd.s32 %s56, 1
      %p60 = scmp.eq.s32.totalorder %s22, 1
      %p61 = scmp.ne.s32.totalorder %s56, %s58
      %p62 = scmp.eq.s32.totalorder %s22, 0
      %p63 = por %p61, %p62
      %p64 = scmp.ne.s32.totalorder %s56, %s58
      %p65 = scmp.eq.s32.totalorder %s27, 1
      %p66 = por %p64, %p65
      %p67 = scmp.ne.s32.totalorder %s58, %s59
      %p68 = scmp.eq.s32.totalorder %s27, 0
      %p69 = por %p67, %p68
      %p70 = scmp.ne.s32.totalorder %s58, %s59
      %p71 = scmp.eq.s32.totalorder %s28, 1
      %p72 = por %p70, %p71
      %p74 = scmp.ne.s32.totalorder %s59, %s73
      %p75 = scmp.eq.s32.totalorder %s28, 0
      %p76 = por %p74, %p75
      %s78 = sadd.s32 %s77, 1
      %p81 = scmp.eq.s32.totalorder %s22, 1
      %p82 = scmp.ne.s32.totalorder %s77, %s79
      %p83 = scmp.eq.s32.totalorder %s22, 0
      %p84 = por %p82, %p83
      %p85 = scmp.ne.s32.totalorder %s77, %s79
      %p86 = scmp.eq.s32.totalorder %s27, 1
      %p87 = por %p85, %p86
      %p88 = scmp.ne.s32.totalorder %s79, %s80
      %p89 = scmp.eq.s32.totalorder %s27, 0
      %p90 = por %p88, %p89
      %p91 = scmp.ne.s32.totalorder %s79, %s80
      %p92 = scmp.eq.s32.totalorder %s28, 1
      %p93 = por %p91, %p92
      %p95 = scmp.ne.s32.totalorder %s80, %s94
      %p96 = scmp.eq.s32.totalorder %s28, 0
      %p97 = por %p95, %p96
      %s99 = sadd.s32 %s98, 1
      %p102 = scmp.eq.s32.totalorder %s22, 1
      %p103 = scmp.ne.s32.totalorder %s98, %s100
      %p104 = scmp.eq.s32.totalorder %s22, 0
      %p105 = por %p103, %p104
      %p106 = scmp.ne.s32.totalorder %s98, %s100
      %p107 = scmp.eq.s32.totalorder %s27, 1
      %p108 = por %p106, %p107
      %p109 = scmp.ne.s32.totalorder %s100, %s101
      %p110 = scmp.eq.s32.totalorder %s27, 0
      %p111 = por %p109, %p110
      %p112 = scmp.ne.s32.totalorder %s100, %s101
      %p113 = scmp.eq.s32.totalorder %s28, 1
      %p114 = por %p112, %p113
      %p116 = scmp.ne.s32.totalorder %s101, %s115
      %p117 = scmp.eq.s32.totalorder %s28, 0
      %p118 = por %p116, %p117
      %s120 = sadd.s32 %s119, 1
      %p123 = scmp.eq.s32.totalorder %s22, 1
      %p124 = scmp.ne.s32.totalorder %s119, %s121
      %p125 = scmp.eq.s32.totalorder %s22, 0
      %p126 = por %p124, %p125
      %p127 = scmp.ne.s32.totalorder %s119, %s121
      %p128 = scmp.eq.s32.totalorder %s27, 1
      %p129 = por %p127, %p128
      %p130 = scmp.ne.s32.totalorder %s121, %s122
      %p131 = scmp.eq.s32.totalorder %s27, 0
      %p132 = por %p130, %p131
      %p133 = scmp.ne.s32.totalorder %s121, %s122
      %p134 = scmp.eq.s32.totalorder %s28, 1
      %p135 = por %p133, %p134
      %p137 = scmp.ne.s32.totalorder %s122, %s136
      %p138 = scmp.eq.s32.totalorder %s28, 0
      %p139 = por %p137, %p138
      %s141 = sadd.s32 %s140, 1
      %p144 = scmp.eq.s32.totalorder %s22, 1
      %p145 = scmp.ne.s32.totalorder %s140, %s142
      %p146 = scmp.eq.s32.totalorder %s22, 0
      %p147 = por %p145, %p146
      %p148 = scmp.ne.s32.totalorder %s140, %s142
      %p149 = scmp.eq.s32.totalorder %s27, 1
      %p150 = por %p148, %p149
      %p151 = scmp.ne.s32.totalorder %s142, %s143
      %p152 = scmp.eq.s32.totalorder %s27, 0
      %p153 = por %p151, %p152
      %p154 = scmp.ne.s32.totalorder %s142, %s143
      %p155 = scmp.eq.s32.totalorder %s28, 1
      %p156 = por %p154, %p155
      %p158 = scmp.ne.s32.totalorder %s143, %s157
      %p159 = scmp.eq.s32.totalorder %s28, 0
      %p160 = por %p158, %p159
      %s162 = sadd.s32 %s161, 1
      %p165 = scmp.eq.s32.totalorder %s22, 1
      %p166 = scmp.ne.s32.totalorder %s161, %s163
      %p167 = scmp.eq.s32.totalorder %s22, 0
      %p168 = por %p166, %p167
      %p169 = scmp.ne.s32.totalorder %s161, %s163
      %p170 = scmp.eq.s32.totalorder %s27, 1
      %p171 = por %p169, %p170
      %p172 = scmp.ne.s32.totalorder %s163, %s164
      %p173 = scmp.eq.s32.totalorder %s27, 0
      %p174 = por %p172, %p173
      %p175 = scmp.ne.s32.totalorder %s163, %s164
      %p176 = scmp.eq.s32.totalorder %s28, 1
      %p177 = por %p175, %p176
      %p179 = scmp.ne.s32.totalorder %s164, %s178
      %p180 = scmp.eq.s32.totalorder %s28, 0
      %p181 = por %p179, %p180
      %s183 = sadd.s32 %s182, 1
      %p186 = scmp.eq.s32.totalorder %s22, 1
      %p187 = scmp.ne.s32.totalorder %s182, %s184
      %p188 = scmp.eq.s32.totalorder %s22, 0
      %p189 = por %p187, %p188
      %p190 = scmp.ne.s32.totalorder %s182, %s184
      %p191 = scmp.eq.s32.totalorder %s27, 1
      %p192 = por %p190, %p191
      %p193 = scmp.ne.s32.totalorder %s184, %s185
      %p194 = scmp.eq.s32.totalorder %s27, 0
      %p195 = por %p193, %p194
      %p196 = scmp.ne.s32.totalorder %s184, %s185
      %p197 = scmp.eq.s32.totalorder %s28, 1
      %p198 = por %p196, %p197
      %p200 = scmp.ne.s32.totalorder %s185, %s199
      %p201 = scmp.eq.s32.totalorder %s28, 0
      %p202 = por %p200, %p201
      %s204 = sadd.s32 %s203, 1
      %p207 = scmp.eq.s32.totalorder %s22, 1
      %p208 = scmp.ne.s32.totalorder %s203, %s205
      %p209 = scmp.eq.s32.totalorder %s22, 0
      %p210 = por %p208, %p209
      %p211 = scmp.ne.s32.totalorder %s203, %s205
      %p212 = scmp.eq.s32.totalorder %s27, 1
      %p213 = por %p211, %p212
      %p214 = scmp.ne.s32.totalorder %s205, %s206
      %p215 = scmp.eq.s32.totalorder %s27, 0
      %p216 = por %p214, %p215
      %p217 = scmp.ne.s32.totalorder %s205, %s206
      %p218 = scmp.eq.s32.totalorder %s28, 1
      %p219 = por %p217, %p218
      %p221 = scmp.ne.s32.totalorder %s206, %s220
      %p222 = scmp.eq.s32.totalorder %s28, 0
      %p223 = por %p221, %p222
      %s225 = sadd.s32 %s224, 1
      %p228 = scmp.eq.s32.totalorder %s22, 1
      %p229 = scmp.ne.s32.totalorder %s224, %s226
      %p230 = scmp.eq.s32.totalorder %s22, 0
      %p231 = por %p229, %p230
      %p232 = scmp.ne.s32.totalorder %s224, %s226
      %p233 = scmp.eq.s32.totalorder %s27, 1
      %p234 = por %p232, %p233
      %p235 = scmp.ne.s32.totalorder %s226, %s227
      %p236 = scmp.eq.s32.totalorder %s27, 0
      %p237 = por %p235, %p236
      %p238 = scmp.ne.s32.totalorder %s226, %s227
      %p239 = scmp.eq.s32.totalorder %s28, 1
      %p240 = por %p238, %p239
      %p242 = scmp.ne.s32.totalorder %s227, %s241
      %p243 = scmp.eq.s32.totalorder %s28, 0
      %p244 = por %p242, %p243
      %s246 = sadd.s32 %s245, 1
      %p249 = scmp.eq.s32.totalorder %s22, 1
      %p250 = scmp.ne.s32.totalorder %s245, %s247
      %p251 = scmp.eq.s32.totalorder %s22, 0
      %p252 = por %p250, %p251
      %p253 = scmp.ne.s32.totalorder %s245, %s247
      %p254 = scmp.eq.s32.totalorder %s27, 1
      %p255 = por %p253, %p254
      %p256 = scmp.ne.s32.totalorder %s247, %s248
      %p257 = scmp.eq.s32.totalorder %s27, 0
      %p258 = por %p256, %p257
      %p259 = scmp.ne.s32.totalorder %s247, %s248
      %p260 = scmp.eq.s32.totalorder %s28, 1
      %p261 = por %p259, %p260
      %p263 = scmp.ne.s32.totalorder %s248, %s262
      %p264 = scmp.eq.s32.totalorder %s28, 0
      %p265 = por %p263, %p264
      %s267 = sadd.s32 %s266, 1
      %p270 = scmp.eq.s32.totalorder %s22, 1
      %p271 = scmp.ne.s32.totalorder %s266, %s268
      %p272 = scmp.eq.s32.totalorder %s22, 0
      %p273 = por %p271, %p272
      %p274 = scmp.ne.s32.totalorder %s266, %s268
      %p275 = scmp.eq.s32.totalorder %s27, 1
      %p276 = por %p274, %p275
      %p277 = scmp.ne.s32.totalorder %s268, %s269
      %p278 = scmp.eq.s32.totalorder %s27, 0
      %p279 = por %p277, %p278
      %p280 = scmp.ne.s32.totalorder %s268, %s269
      %p281 = scmp.eq.s32.totalorder %s28, 1
      %p282 = por %p280, %p281
      %p284 = scmp.ne.s32.totalorder %s269, %s283
      %p285 = scmp.eq.s32.totalorder %s28, 0
      %p286 = por %p284, %p285
      %s287 = ssub.s32 %s22, %s29
      %p288 = scmp.eq.s32.totalorder %s287, 0
      %s290 = sadd.s32 %s289, 1
      %s291 = scalar_select %p288, %s289, %s290
      %p294 = pneg %p288
      %p295 = scmp.eq.s32.totalorder %s22, 1
      %p296 = por %p294, %p295
      %p297 = scmp.ne.s32.totalorder %s289, %s292
      %p298 = scmp.eq.s32.totalorder %s22, 0
      %p299 = por %p297, %p298
      %p300 = scmp.ne.s32.totalorder %s289, %s292
      %p301 = scmp.eq.s32.totalorder %s27, 1
      %p302 = por %p300, %p301
      %p303 = scmp.ne.s32.totalorder %s292, %s293
      %p304 = scmp.eq.s32.totalorder %s27, 0
      %p305 = por %p303, %p304
      %p306 = scmp.ne.s32.totalorder %s292, %s293
      %p307 = scmp.eq.s32.totalorder %s28, 1
      %p308 = por %p306, %p307
      %p310 = scmp.ne.s32.totalorder %s293, %s309
      %p311 = scmp.eq.s32.totalorder %s28, 0
      %p312 = por %p310, %p311
      %p313 = scmp.le.s32.totalorder 1, %s22
      %p314 = scmp.lt.s32.totalorder %s22, 3
      %p315 = pnand %p313, %p314
      %p316 = pneg %p315
      // Predicated region
      $region9: #{srvgg_forward.1} parent=5 // pred_check
        _
      $region10: #{srvgg_forward.1} parent=5 // pred_check_branch
        %318 = sbr.rel (%p315) target = $region12
      $region11: #{srvgg_forward.1} parent=5 // pred_region
        %s319 = ssub.s32 %s22, 1
        // Predicated region
        $region13: #{srvgg_forward.1} parent=11 // pred_check
          %p320 = pneg %p69
        $region14: #{srvgg_forward.1} parent=11 // pred_check_branch
          %322 = sbr.rel (%p320) target = $region16
        $region15: #{srvgg_forward.1} parent=11 // pred_region
          _
        $region16: #{srvgg_forward.1} parent=11 // pred_fallthru
          _
        // Predicated region
        $region17: #{srvgg_forward.1} parent=11 // pred_check
          %p323 = pneg %p90
        $region18: #{srvgg_forward.1} parent=11 // pred_check_branch
          %325 = sbr.rel (%p323) target = $region20
        $region19: #{srvgg_forward.1} parent=11 // pred_region
          %s327 = ssub.s32 16, 16
          %328 = vsyncadd [#allocation6], %s327
          %s330 = sshll.u32 [#allocation5], 4
          %s331 = int_to_ptr.vmem [resolvable:$true] %s330
          %333 = dma.hbm_to_vmem [thread:$0]  %s2, 16, %s331, [#allocation6]
        $region20: #{srvgg_forward.1} parent=11 // pred_fallthru
          _
        // Predicated region
        $region21: #{srvgg_forward.1} parent=11 // pred_check
          %p334 = pneg %p111
        $region22: #{srvgg_forward.1} parent=11 // pred_check_branch
          %336 = sbr.rel (%p334) target = $region24
        $region23: #{srvgg_forward.1} parent=11 // pred_region
          %s338 = ssub.s32 16, 16
          %339 = vsyncadd [#allocation8], %s338
          %s341 = sshll.u32 [#allocation7], 4
          %s342 = int_to_ptr.vmem [resolvable:$true] %s341
          %344 = dma.hbm_to_vmem [thread:$0]  %s3, 16, %s342, [#allocation8]
        $region24: #{srvgg_forward.1} parent=11 // pred_fallthru
          _
        // Predicated region
        $region25: #{srvgg_forward.1} parent=11 // pred_check
          %p345 = pneg %p132
        $region26: #{srvgg_forward.1} parent=11 // pred_check_branch
          %347 = sbr.rel (%p345) target = $region28
        $region27: #{srvgg_forward.1} parent=11 // pred_region
          _
        $region28: #{srvgg_forward.1} parent=11 // pred_fallthru
          _
        // Predicated region
        $region29: #{srvgg_forward.1} parent=11 // pred_check
          %p348 = pneg %p153
        $region30: #{srvgg_forward.1} parent=11 // pred_check_branch
          %350 = sbr.rel (%p348) target = $region32
        $region31: #{srvgg_forward.1} parent=11 // pred_region
          %s352 = ssub.s32 16, 16
          %353 = vsyncadd [#allocation8], %s352
          %s355 = sshll.u32 [#allocation9], 4
          %s356 = int_to_ptr.vmem [resolvable:$true] %s355
          %358 = dma.hbm_to_vmem [thread:$0]  %s5, 16, %s356, [#allocation8]
        $region32: #{srvgg_forward.1} parent=11 // pred_fallthru
          _
        // Predicated region
        $region33: #{srvgg_forward.1} parent=11 // pred_check
          %p359 = pneg %p174
        $region34: #{srvgg_forward.1} parent=11 // pred_check_branch
          %361 = sbr.rel (%p359) target = $region36
        $region35: #{srvgg_forward.1} parent=11 // pred_region
          %s363 = ssub.s32 16, 16
          %364 = vsyncadd [#allocation11], %s363
          %s366 = sshll.u32 [#allocation10], 4
          %s367 = int_to_ptr.vmem [resolvable:$true] %s366
          %369 = dma.hbm_to_vmem [thread:$0]  %s6, 16, %s367, [#allocation11]
        $region36: #{srvgg_forward.1} parent=11 // pred_fallthru
          _
        // Predicated region
        $region37: #{srvgg_forward.1} parent=11 // pred_check
          %p370 = pneg %p195
        $region38: #{srvgg_forward.1} parent=11 // pred_check_branch
          %372 = sbr.rel (%p370) target = $region40
        $region39: #{srvgg_forward.1} parent=11 // pred_region
          _
        $region40: #{srvgg_forward.1} parent=11 // pred_fallthru
          _
        // Predicated region
        $region41: #{srvgg_forward.1} parent=11 // pred_check
          %p373 = pneg %p216
        $region42: #{srvgg_forward.1} parent=11 // pred_check_branch
          %375 = sbr.rel (%p373) target = $region44
        $region43: #{srvgg_forward.1} parent=11 // pred_region
          %s377 = ssub.s32 16, 16
          %378 = vsyncadd [#allocation11], %s377
          %s380 = sshll.u32 [#allocation12], 4
          %s381 = int_to_ptr.vmem [resolvable:$true] %s380
          %383 = dma.hbm_to_vmem [thread:$0]  %s8, 16, %s381, [#allocation11]
        $region44: #{srvgg_forward.1} parent=11 // pred_fallthru
          _
        // Predicated region
        $region45: #{srvgg_forward.1} parent=11 // pred_check
          %p384 = pneg %p237
        $region46: #{srvgg_forward.1} parent=11 // pred_check_branch
          %386 = sbr.rel (%p384) target = $region48
        $region47: #{srvgg_forward.1} parent=11 // pred_region
          %s388 = ssub.s32 16, 16
          %389 = vsyncadd [#allocation14], %s388
          %s391 = sshll.u32 [#allocation13], 4
          %s392 = int_to_ptr.vmem [resolvable:$true] %s391
          %394 = dma.hbm_to_vmem [thread:$0]  %s9, 16, %s392, [#allocation14]
        $region48: #{srvgg_forward.1} parent=11 // pred_fallthru
          _
        // Predicated region
        $region49: #{srvgg_forward.1} parent=11 // pred_check
          %p395 = pneg %p258
        $region50: #{srvgg_forward.1} parent=11 // pred_check_branch
          %397 = sbr.rel (%p395) target = $region52
        $region51: #{srvgg_forward.1} parent=11 // pred_region
          _
        $region52: #{srvgg_forward.1} parent=11 // pred_fallthru
          _
        // Predicated region
        $region53: #{srvgg_forward.1} parent=11 // pred_check
          %p398 = pneg %p279
        $region54: #{srvgg_forward.1} parent=11 // pred_check_branch
          %400 = sbr.rel (%p398) target = $region56
        $region55: #{srvgg_forward.1} parent=11 // pred_region
          %s402 = ssub.s32 16, 16
          %403 = vsyncadd [#allocation14], %s402
          %s405 = sshll.u32 [#allocation15], 4
          %s406 = int_to_ptr.vmem [resolvable:$true] %s405
          %408 = dma.hbm_to_vmem [thread:$0]  %s11, 16, %s406, [#allocation14]
        $region56: #{srvgg_forward.1} parent=11 // pred_fallthru
          _
      $region12: #{srvgg_forward.1} parent=5 // pred_fallthru
        _
      %p409 = scmp.lt.s32.totalorder %s22, 2
      // Predicated region
      $region57: #{srvgg_forward.1} parent=5 // pred_check
        %p410 = pneg %p409
      $region58: #{srvgg_forward.1} parent=5 // pred_check_branch
        %412 = sbr.rel (%p410) target = $region60
      $region59: #{srvgg_forward.1} parent=5 // pred_region
        // Predicated region
        $region61: #{srvgg_forward.1} parent=59 // pred_check
          %p413 = pneg %p42
        $region62: #{srvgg_forward.1} parent=59 // pred_check_branch
          %415 = sbr.rel (%p413) target = $region64
        $region63: #{srvgg_forward.1} parent=59 // pred_region
          %p416 = scmp.lt.s32.totalorder %s22, 1
          %s417 = scalar_select %p416, %s22, 1
          %s418 = smul.addr %s417, 32
          %s419 = smul.addr %s418, 8
          %s420 = scalar_lea.vmem %s0, %s419
        $region64: #{srvgg_forward.1} parent=59 // pred_fallthru
          _
      $region60: #{srvgg_forward.1} parent=5 // pred_fallthru
        _
      %p421 = scmp.le.s32.totalorder 1, %s22
      %p422 = scmp.lt.s32.totalorder %s22, 3
      %p423 = pnand %p421, %p422
      %p424 = pneg %p423
      // Predicated region
      $region65: #{srvgg_forward.1} parent=5 // pred_check
        _
      $region66: #{srvgg_forward.1} parent=5 // pred_check_branch
        %426 = sbr.rel (%p423) target = $region68
      $region67: #{srvgg_forward.1} parent=5 // pred_region
        %s427 = ssub.s32 %s22, 1
        // Predicated region
        $region69: #{srvgg_forward.1} parent=67 // pred_check
          %p428 = pneg %p90
        $region70: #{srvgg_forward.1} parent=67 // pred_check_branch
          %430 = sbr.rel (%p428) target = $region72
        $region71: #{srvgg_forward.1} parent=67 // pred_region
          %431 = dma.done [#allocation6], 16
        $region72: #{srvgg_forward.1} parent=67 // pred_fallthru
          _
        // Predicated region
        $region73: #{srvgg_forward.1} parent=67 // pred_check
          %p432 = pneg %p111
        $region74: #{srvgg_forward.1} parent=67 // pred_check_branch
          %434 = sbr.rel (%p432) target = $region76
        $region75: #{srvgg_forward.1} parent=67 // pred_region
          %435 = dma.done [#allocation8], 16
        $region76: #{srvgg_forward.1} parent=67 // pred_fallthru
          _
        // Predicated region
        $region77: #{srvgg_forward.1} parent=67 // pred_check
          %p436 = pneg %p153
        $region78: #{srvgg_forward.1} parent=67 // pred_check_branch
          %438 = sbr.rel (%p436) target = $region80
        $region79: #{srvgg_forward.1} parent=67 // pred_region
          %439 = dma.done [#allocation8], 16
        $region80: #{srvgg_forward.1} parent=67 // pred_fallthru
          _
        // Predicated region
        $region81: #{srvgg_forward.1} parent=67 // pred_check
          %p440 = pneg %p174
        $region82: #{srvgg_forward.1} parent=67 // pred_check_branch
          %442 = sbr.rel (%p440) target = $region84
        $region83: #{srvgg_forward.1} parent=67 // pred_region
          %443 = dma.done [#allocation11], 16
        $region84: #{srvgg_forward.1} parent=67 // pred_fallthru
          _
        // Predicated region
        $region85: #{srvgg_forward.1} parent=67 // pred_check
          %p444 = pneg %p216
        $region86: #{srvgg_forward.1} parent=67 // pred_check_branch
          %446 = sbr.rel (%p444) target = $region88
        $region87: #{srvgg_forward.1} parent=67 // pred_region
          %447 = dma.done [#allocation11], 16
        $region88: #{srvgg_forward.1} parent=67 // pred_fallthru
          _
        // Predicated region
        $region89: #{srvgg_forward.1} parent=67 // pred_check
          %p448 = pneg %p237
        $region90: #{srvgg_forward.1} parent=67 // pred_check_branch
          %450 = sbr.rel (%p448) target = $region92
        $region91: #{srvgg_forward.1} parent=67 // pred_region
          %451 = dma.done [#allocation14], 16
        $region92: #{srvgg_forward.1} parent=67 // pred_fallthru
          _
        // Predicated region
        $region93: #{srvgg_forward.1} parent=67 // pred_check
          %p452 = pneg %p279
        $region94: #{srvgg_forward.1} parent=67 // pred_check_branch
          %454 = sbr.rel (%p452) target = $region96
        $region95: #{srvgg_forward.1} parent=67 // pred_region
          %455 = dma.done [#allocation14], 16
        $region96: #{srvgg_forward.1} parent=67 // pred_fallthru
          _
        %p456 = scmp.lt.s32.totalorder %s27, 1
        %s457 = scalar_select %p456, %s27, 1
        %s458 = smul.addr %s457, 32
        %s459 = smul.addr %s458, 8
        %s460 = scalar_lea.vmem %s0, %s459
        %p461 = pneg %p48
        %p462 = pneg %p45
        %p463 = pneg %p69
        %p464 = pneg %p66
        %p465 = pneg %p90
        %p466 = pneg %p87
        %p467 = pneg %p111
        %p468 = pneg %p108
        %p469 = pneg %p132
        %p470 = pneg %p129
        %p471 = pneg %p153
        %p472 = pneg %p150
        %p473 = pneg %p174
        %p474 = pneg %p171
        %p475 = pneg %p195
        %p476 = pneg %p192
        %p477 = pneg %p216
        %p478 = pneg %p213
        %p479 = pneg %p237
        %p480 = pneg %p234
        %p481 = pneg %p258
        %p482 = pneg %p255
        %p483 = pneg %p279
        %p484 = pneg %p276
        %p485 = pneg %p305
        %p486 = pneg %p302
        %p487 = scmp.lt.s32.totalorder %s27, 1
        %s488 = scalar_select %p487, %s27, 1
        %s489 = smul.addr %s488, 32
        %s490 = smul.addr %s489, 8
        %s491 = scalar_lea.vmem %s12, %s490
        %p492 = scmp.lt.s32.totalorder %s27, 1
        %s493 = scalar_select %p492, %s27, 1
        %s494 = smul.addr %s493, 32
        %s495 = smul.addr %s494, 8
        %s496 = scalar_lea.vmem %s0, %s495
        %p497 = scmp.lt.s32.totalorder %s27, 1
        %s498 = scalar_select %p497, %s27, 1
        %s499 = smul.addr %s498, 32
        %s500 = smul.addr %s499, 8
        %s501 = scalar_lea.vmem %s12, %s500
        %vm503 = vcmask 130048
        %504 = vst.msk [vmem:[#allocation2] sm:$0xff] %vm503, 0.0
        %505 = vst.msk [vmem:[#allocation2 + $0x8] sm:$0xff] %vm503, 0.0
        %vm506 = vcmask 123904
        %507 = vst.msk [vmem:[#allocation2 + $0x10] sm:$0x3] %vm506, 0.0
        %508 = vst.msk [vmem:[#allocation2 + $0x18] sm:$0xff] %vm503, 0.0
        %509 = vst.msk [vmem:[#allocation2 + $0x20] sm:$0xff] %vm503, 0.0
        %510 = vst.msk [vmem:[#allocation2 + $0x28] sm:$0x3] %vm506, 0.0
        %511 = vst.msk [vmem:[#allocation2 + $0x30] sm:$0xff] %vm503, 0.0
        %512 = vst.msk [vmem:[#allocation2 + $0x38] sm:$0xff] %vm503, 0.0
        %513 = vst.msk [vmem:[#allocation2 + $0x40] sm:$0x3] %vm506, 0.0
        %514 = vst.msk [vmem:[#allocation2 + $0x48] sm:$0xff] %vm503, 0.0
        %515 = vst.msk [vmem:[#allocation2 + $0x50] sm:$0xff] %vm503, 0.0
        %516 = vst.msk [vmem:[#allocation2 + $0x58] sm:$0x3] %vm506, 0.0
        %517 = vst.msk [vmem:[#allocation2 + $0x60] sm:$0xff] %vm503, 0.0
        %518 = vst.msk [vmem:[#allocation2 + $0x68] sm:$0xff] %vm503, 0.0
        %519 = vst.msk [vmem:[#allocation2 + $0x70] sm:$0x3] %vm506, 0.0
        %520 = vst.msk [vmem:[#allocation2 + $0x78] sm:$0xff] %vm503, 0.0
        %521 = vst.msk [vmem:[#allocation2 + $0x80] sm:$0xff] %vm503, 0.0
        %522 = vst.msk [vmem:[#allocation2 + $0x88] sm:$0x3] %vm506, 0.0
        %523 = vst.msk [vmem:[#allocation2 + $0x90] sm:$0xff] %vm503, 0.0
        %524 = vst.msk [vmem:[#allocation2 + $0x98] sm:$0xff] %vm503, 0.0
        %525 = vst.msk [vmem:[#allocation2 + $0xa0] sm:$0x3] %vm506, 0.0
        %526 = vst.msk [vmem:[#allocation2 + $0xa8] sm:$0xff] %vm503, 0.0
        %527 = vst.msk [vmem:[#allocation2 + $0xb0] sm:$0xff] %vm503, 0.0
        %528 = vst.msk [vmem:[#allocation2 + $0xb8] sm:$0x3] %vm506, 0.0
        %529 = vst.msk [vmem:[#allocation2 + $0xc0] sm:$0xff] %vm503, 0.0
        %530 = vst.msk [vmem:[#allocation2 + $0xc8] sm:$0xff] %vm503, 0.0
        %531 = vst.msk [vmem:[#allocation2 + $0xd0] sm:$0x3] %vm506, 0.0
        %532 = vst.msk [vmem:[#allocation2 + $0xd8] sm:$0xff] %vm503, 0.0
        %533 = vst.msk [vmem:[#allocation2 + $0xe0] sm:$0xff] %vm503, 0.0
        %534 = vst.msk [vmem:[#allocation2 + $0xe8] sm:$0x3] %vm506, 0.0
        %535 = vst.msk [vmem:[#allocation2 + $0xf0] sm:$0xff] %vm503, 0.0
        %536 = vst.msk [vmem:[#allocation2 + $0xf8] sm:$0xff] %vm503, 0.0
        %537 = vst.msk [vmem:[#allocation2 + $0x100] sm:$0x3] %vm506, 0.0
        %538 = vst.msk [vmem:[#allocation2 + $0x108] sm:$0xff] %vm503, 0.0
        %539 = vst.msk [vmem:[#allocation2 + $0x110] sm:$0xff] %vm503, 0.0
        %540 = vst.msk [vmem:[#allocation2 + $0x118] sm:$0x3] %vm506, 0.0
        %541 = vst.msk [vmem:[#allocation2 + $0x120] sm:$0xff] %vm503, 0.0
        %542 = vst.msk [vmem:[#allocation2 + $0x128] sm:$0xff] %vm503, 0.0
        %543 = vst.msk [vmem:[#allocation2 + $0x130] sm:$0x3] %vm506, 0.0
        %544 = vst.msk [vmem:[#allocation2 + $0x138] sm:$0xff] %vm503, 0.0
        %545 = vst.msk [vmem:[#allocation2 + $0x140] sm:$0xff] %vm503, 0.0
        %546 = vst.msk [vmem:[#allocation2 + $0x148] sm:$0x3] %vm506, 0.0
        %547 = vst.msk [vmem:[#allocation2 + $0x150] sm:$0xff] %vm503, 0.0
        %548 = vst.msk [vmem:[#allocation2 + $0x158] sm:$0xff] %vm503, 0.0
        %549 = vst.msk [vmem:[#allocation2 + $0x160] sm:$0x3] %vm506, 0.0
        %550 = vst.msk [vmem:[#allocation2 + $0x168] sm:$0xff] %vm503, 0.0
        %551 = vst.msk [vmem:[#allocation2 + $0x170] sm:$0xff] %vm503, 0.0
        %552 = vst.msk [vmem:[#allocation2 + $0x178] sm:$0x3] %vm506, 0.0
        %553 = vst.msk [vmem:[#allocation2 + $0x180] sm:$0xff] %vm503, 0.0
        %554 = vst.msk [vmem:[#allocation2 + $0x188] sm:$0xff] %vm503, 0.0
        %555 = vst.msk [vmem:[#allocation2 + $0x190] sm:$0x3] %vm506, 0.0
        %556 = vst.msk [vmem:[#allocation2 + $0x198] sm:$0xff] %vm503, 0.0
        %557 = vst.msk [vmem:[#allocation2 + $0x1a0] sm:$0xff] %vm503, 0.0
        %558 = vst.msk [vmem:[#allocation2 + $0x1a8] sm:$0x3] %vm506, 0.0
        %559 = vst.msk [vmem:[#allocation3] sm:$0xff] %vm503, 0.0
        %560 = vst.msk [vmem:[#allocation3 + $0x8] sm:$0xff] %vm503, 0.0
        %561 = vst.msk [vmem:[#allocation3 + $0x10] sm:$0x3] %vm506, 0.0
        %562 = vst.msk [vmem:[#allocation3 + $0x18] sm:$0xff] %vm503, 0.0
        %563 = vst.msk [vmem:[#allocation3 + $0x20] sm:$0xff] %vm503, 0.0
        %564 = vst.msk [vmem:[#allocation3 + $0x28] sm:$0x3] %vm506, 0.0
        %565 = vst.msk [vmem:[#allocation3 + $0x30] sm:$0xff] %vm503, 0.0
        %566 = vst.msk [vmem:[#allocation3 + $0x38] sm:$0xff] %vm503, 0.0
        %567 = vst.msk [vmem:[#allocation3 + $0x40] sm:$0x3] %vm506, 0.0
        %568 = vst.msk [vmem:[#allocation3 + $0x48] sm:$0xff] %vm503, 0.0
        %569 = vst.msk [vmem:[#allocation3 + $0x50] sm:$0xff] %vm503, 0.0
        %570 = vst.msk [vmem:[#allocation3 + $0x58] sm:$0x3] %vm506, 0.0
        %571 = vst.msk [vmem:[#allocation3 + $0x60] sm:$0xff] %vm503, 0.0
        %572 = vst.msk [vmem:[#allocation3 + $0x68] sm:$0xff] %vm503, 0.0
        %573 = vst.msk [vmem:[#allocation3 + $0x70] sm:$0x3] %vm506, 0.0
        %574 = vst.msk [vmem:[#allocation3 + $0x78] sm:$0xff] %vm503, 0.0
        %575 = vst.msk [vmem:[#allocation3 + $0x80] sm:$0xff] %vm503, 0.0
        %576 = vst.msk [vmem:[#allocation3 + $0x88] sm:$0x3] %vm506, 0.0
        %577 = vst.msk [vmem:[#allocation3 + $0x90] sm:$0xff] %vm503, 0.0
        %578 = vst.msk [vmem:[#allocation3 + $0x98] sm:$0xff] %vm503, 0.0
        %579 = vst.msk [vmem:[#allocation3 + $0xa0] sm:$0x3] %vm506, 0.0
        %580 = vst.msk [vmem:[#allocation3 + $0xa8] sm:$0xff] %vm503, 0.0
        %581 = vst.msk [vmem:[#allocation3 + $0xb0] sm:$0xff] %vm503, 0.0
        %582 = vst.msk [vmem:[#allocation3 + $0xb8] sm:$0x3] %vm506, 0.0
        %583 = vst.msk [vmem:[#allocation3 + $0xc0] sm:$0xff] %vm503, 0.0
        %584 = vst.msk [vmem:[#allocation3 + $0xc8] sm:$0xff] %vm503, 0.0
        %585 = vst.msk [vmem:[#allocation3 + $0xd0] sm:$0x3] %vm506, 0.0
        %586 = vst.msk [vmem:[#allocation3 + $0xd8] sm:$0xff] %vm503, 0.0
        %587 = vst.msk [vmem:[#allocation3 + $0xe0] sm:$0xff] %vm503, 0.0
        %588 = vst.msk [vmem:[#allocation3 + $0xe8] sm:$0x3] %vm506, 0.0
        %589 = vst.msk [vmem:[#allocation3 + $0xf0] sm:$0xff] %vm503, 0.0
        %590 = vst.msk [vmem:[#allocation3 + $0xf8] sm:$0xff] %vm503, 0.0
        %591 = vst.msk [vmem:[#allocation3 + $0x100] sm:$0x3] %vm506, 0.0
        %592 = vst.msk [vmem:[#allocation3 + $0x108] sm:$0xff] %vm503, 0.0
        %593 = vst.msk [vmem:[#allocation3 + $0x110] sm:$0xff] %vm503, 0.0
        %594 = vst.msk [vmem:[#allocation3 + $0x118] sm:$0x3] %vm506, 0.0
        %595 = vst.msk [vmem:[#allocation3 + $0x120] sm:$0xff] %vm503, 0.0
        %596 = vst.msk [vmem:[#allocation3 + $0x128] sm:$0xff] %vm503, 0.0
        %597 = vst.msk [vmem:[#allocation3 + $0x130] sm:$0x3] %vm506, 0.0
        %598 = vst.msk [vmem:[#allocation3 + $0x138] sm:$0xff] %vm503, 0.0
        %599 = vst.msk [vmem:[#allocation3 + $0x140] sm:$0xff] %vm503, 0.0
        %600 = vst.msk [vmem:[#allocation3 + $0x148] sm:$0x3] %vm506, 0.0
        %601 = vst.msk [vmem:[#allocation3 + $0x150] sm:$0xff] %vm503, 0.0
        %602 = vst.msk [vmem:[#allocation3 + $0x158] sm:$0xff] %vm503, 0.0
        %603 = vst.msk [vmem:[#allocation3 + $0x160] sm:$0x3] %vm506, 0.0
        %604 = vst.msk [vmem:[#allocation3 + $0x168] sm:$0xff] %vm503, 0.0
        %605 = vst.msk [vmem:[#allocation3 + $0x170] sm:$0xff] %vm503, 0.0
        %606 = vst.msk [vmem:[#allocation3 + $0x178] sm:$0x3] %vm506, 0.0
        %607 = vst.msk [vmem:[#allocation3 + $0x180] sm:$0xff] %vm503, 0.0
        %608 = vst.msk [vmem:[#allocation3 + $0x188] sm:$0xff] %vm503, 0.0
        %609 = vst.msk [vmem:[#allocation3 + $0x190] sm:$0x3] %vm506, 0.0
        %610 = vst.msk [vmem:[#allocation3 + $0x198] sm:$0xff] %vm503, 0.0
        %611 = vst.msk [vmem:[#allocation3 + $0x1a0] sm:$0xff] %vm503, 0.0
        %612 = vst.msk [vmem:[#allocation3 + $0x1a8] sm:$0x3] %vm506, 0.0
        %v613 = vld [vmem:[%s496] sm:$0xff]
        %v614 = vld [vmem:[%s496 + $0x8] sm:$0xff]
        %v615 = vld [vmem:[%s496 + $0x10] sm:$0xff]
        %v616 = vld [vmem:[%s496 + $0x18] sm:$0xff]
        %v617 = vld [vmem:[%s496 + $0x20] sm:$0xff]
        %v618 = vld [vmem:[%s496 + $0x28] sm:$0xff]
        %v619 = vld [vmem:[%s496 + $0x30] sm:$0xff]
        %v620 = vld [vmem:[%s496 + $0x38] sm:$0xff]
        %v621 = vld [vmem:[%s496 + $0x40] sm:$0xff]
        %v622 = vld [vmem:[%s496 + $0x48] sm:$0xff]
        %v623 = vld [vmem:[%s496 + $0x50] sm:$0xff]
        %v624 = vld [vmem:[%s496 + $0x58] sm:$0xff]
        %v625 = vld [vmem:[%s496 + $0x60] sm:$0xff]
        %v626 = vld [vmem:[%s496 + $0x68] sm:$0xff]
        %v627 = vld [vmem:[%s496 + $0x70] sm:$0xff]
        %v628 = vld [vmem:[%s496 + $0x78] sm:$0xff]
        %v629 = vld [vmem:[%s496 + $0x80] sm:$0xff]
        %v630 = vld [vmem:[%s496 + $0x88] sm:$0xff]
        %v631 = vld [vmem:[%s496 + $0x90] sm:$0xff]
        %v632 = vld [vmem:[%s496 + $0x98] sm:$0xff]
        %v633 = vld [vmem:[%s496 + $0xa0] sm:$0xff]
        %v634 = vld [vmem:[%s496 + $0xa8] sm:$0xff]
        %v635 = vld [vmem:[%s496 + $0xb0] sm:$0xff]
        %v636 = vld [vmem:[%s496 + $0xb8] sm:$0xff]
        %v637 = vld [vmem:[%s496 + $0xc0] sm:$0xff]
        %v638 = vld [vmem:[%s496 + $0xc8] sm:$0xff]
        %v639 = vld [vmem:[%s496 + $0xd0] sm:$0xff]
        %v640 = vld [vmem:[%s496 + $0xd8] sm:$0xff]
        %v641 = vld [vmem:[%s496 + $0xe0] sm:$0xff]
        %v642 = vld [vmem:[%s496 + $0xe8] sm:$0xff]
        %v643 = vld [vmem:[%s496 + $0xf0] sm:$0xff]
        %v644 = vld [vmem:[%s496 + $0xf8] sm:$0xff]
        %s645 = scalar_lea.vmem [#allocation2], 24
        %vm646 = vcmask 23552
        %647 = vst.msk [vmem:[%s645 + $0x1] sm:$0xff] %vm646, %v613
        %648 = vst.msk [vmem:[%s645 + $0x9] sm:$0xff] %vm646, %v614
        %649 = vst.msk [vmem:[%s645 + $0x19] sm:$0xff] %vm646, %v615
        %650 = vst.msk [vmem:[%s645 + $0x21] sm:$0xff] %vm646, %v616
        %651 = vst.msk [vmem:[%s645 + $0x31] sm:$0xff] %vm646, %v617
        %652 = vst.msk [vmem:[%s645 + $0x39] sm:$0xff] %vm646, %v618
        %653 = vst.msk [vmem:[%s645 + $0x49] sm:$0xff] %vm646, %v619
        %654 = vst.msk [vmem:[%s645 + $0x51] sm:$0xff] %vm646, %v620
        %655 = vst.msk [vmem:[%s645 + $0x61] sm:$0xff] %vm646, %v621
        %656 = vst.msk [vmem:[%s645 + $0x69] sm:$0xff] %vm646, %v622
        %657 = vst.msk [vmem:[%s645 + $0x79] sm:$0xff] %vm646, %v623
        %658 = vst.msk [vmem:[%s645 + $0x81] sm:$0xff] %vm646, %v624
        %659 = vst.msk [vmem:[%s645 + $0x91] sm:$0xff] %vm646, %v625
        %660 = vst.msk [vmem:[%s645 + $0x99] sm:$0xff] %vm646, %v626
        %661 = vst.msk [vmem:[%s645 + $0xa9] sm:$0xff] %vm646, %v627
        %662 = vst.msk [vmem:[%s645 + $0xb1] sm:$0xff] %vm646, %v628
        %663 = vst.msk [vmem:[%s645 + $0xc1] sm:$0xff] %vm646, %v629
        %664 = vst.msk [vmem:[%s645 + $0xc9] sm:$0xff] %vm646, %v630
        %665 = vst.msk [vmem:[%s645 + $0xd9] sm:$0xff] %vm646, %v631
        %666 = vst.msk [vmem:[%s645 + $0xe1] sm:$0xff] %vm646, %v632
        %667 = vst.msk [vmem:[%s645 + $0xf1] sm:$0xff] %vm646, %v633
        %668 = vst.msk [vmem:[%s645 + $0xf9] sm:$0xff] %vm646, %v634
        %669 = vst.msk [vmem:[%s645 + $0x109] sm:$0xff] %vm646, %v635
        %670 = vst.msk [vmem:[%s645 + $0x111] sm:$0xff] %vm646, %v636
        %671 = vst.msk [vmem:[%s645 + $0x121] sm:$0xff] %vm646, %v637
        %672 = vst.msk [vmem:[%s645 + $0x129] sm:$0xff] %vm646, %v638
        %673 = vst.msk [vmem:[%s645 + $0x139] sm:$0xff] %vm646, %v639
        %674 = vst.msk [vmem:[%s645 + $0x141] sm:$0xff] %vm646, %v640
        %675 = vst.msk [vmem:[%s645 + $0x151] sm:$0xff] %vm646, %v641
        %676 = vst.msk [vmem:[%s645 + $0x159] sm:$0xff] %vm646, %v642
        %677 = vst.msk [vmem:[%s645 + $0x169] sm:$0xff] %vm646, %v643
        %678 = vst.msk [vmem:[%s645 + $0x171] sm:$0xff] %vm646, %v644
        %v679 = vld [vmem:[#allocation2] sm:$0xff]
        %v680 = vld [vmem:[#allocation2 + $0x8] sm:$0xff]
        %v681 = vld [vmem:[#allocation2 + $0x18] sm:$0xff]
        %v682 = vld [vmem:[#allocation2 + $0x20] sm:$0xff]
        %v683 = vld [vmem:[#allocation2 + $0x30] sm:$0xff]
        %v684 = vld [vmem:[#allocation2 + $0x38] sm:$0xff]
        %v685 = vld [vmem:[#allocation2 + $0x48] sm:$0xff]
        %v686 = vld [vmem:[#allocation2 + $0x50] sm:$0xff]
        %v687 = vld [vmem:[#allocation2 + $0x60] sm:$0xff]
        %v688 = vld [vmem:[#allocation2 + $0x68] sm:$0xff]
        %v689 = vld [vmem:[#allocation2 + $0x78] sm:$0xff]
        %v690 = vld [vmem:[#allocation2 + $0x80] sm:$0xff]
        %v691 = vld [vmem:[#allocation2 + $0x90] sm:$0xff]
        %v692 = vld [vmem:[#allocation2 + $0x98] sm:$0xff]
        %v693 = vld [vmem:[#allocation2 + $0xa8] sm:$0xff]
        %v694 = vld [vmem:[#allocation2 + $0xb0] sm:$0xff]
        %v695 = vld [vmem:[#allocation2 + $0xc0] sm:$0xff]
        %v696 = vld [vmem:[#allocation2 + $0xc8] sm:$0xff]
        %v697 = vld [vmem:[#allocation2 + $0xd8] sm:$0xff]
        %v698 = vld [vmem:[#allocation2 + $0xe0] sm:$0xff]
        %v699 = vld [vmem:[#allocation2 + $0xf0] sm:$0xff]
        %v700 = vld [vmem:[#allocation2 + $0xf8] sm:$0xff]
        %v701 = vld [vmem:[#allocation2 + $0x108] sm:$0xff]
        %v702 = vld [vmem:[#allocation2 + $0x110] sm:$0xff]
        %v703 = vld [vmem:[#allocation2 + $0x120] sm:$0xff]
        %v704 = vld [vmem:[#allocation2 + $0x128] sm:$0xff]
        %v705 = vld [vmem:[#allocation2 + $0x138] sm:$0xff]
        %v706 = vld [vmem:[#allocation2 + $0x140] sm:$0xff]
        %v707 = vld [vmem:[#allocation2 + $0x150] sm:$0xff]
        %v708 = vld [vmem:[#allocation2 + $0x158] sm:$0xff]
        %v709 = vld [vmem:[#allocation2 + $0x168] sm:$0xff]
        %v710 = vld [vmem:[#allocation2 + $0x170] sm:$0xff]
        %711 = vst.msk [vmem:[#allocation4] sm:$0xff] %vm646, %v679
        %712 = vst.msk [vmem:[#allocation4 + $0x10] sm:$0xff] %vm646, %v680
        %713 = vst.msk [vmem:[#allocation4 + $0x20] sm:$0xff] %vm646, %v681
        %714 = vst.msk [vmem:[#allocation4 + $0x30] sm:$0xff] %vm646, %v682
        %715 = vst.msk [vmem:[#allocation4 + $0x40] sm:$0xff] %vm646, %v683
        %716 = vst.msk [vmem:[#allocation4 + $0x50] sm:$0xff] %vm646, %v684
        %717 = vst.msk [vmem:[#allocation4 + $0x60] sm:$0xff] %vm646, %v685
        %718 = vst.msk [vmem:[#allocation4 + $0x70] sm:$0xff] %vm646, %v686
        %719 = vst.msk [vmem:[#allocation4 + $0x80] sm:$0xff] %vm646, %v687
        %720 = vst.msk [vmem:[#allocation4 + $0x90] sm:$0xff] %vm646, %v688
        %721 = vst.msk [vmem:[#allocation4 + $0xa0] sm:$0xff] %vm646, %v689
        %722 = vst.msk [vmem:[#allocation4 + $0xb0] sm:$0xff] %vm646, %v690
        %723 = vst.msk [vmem:[#allocation4 + $0xc0] sm:$0xff] %vm646, %v691
        %724 = vst.msk [vmem:[#allocation4 + $0xd0] sm:$0xff] %vm646, %v692
        %725 = vst.msk [vmem:[#allocation4 + $0xe0] sm:$0xff] %vm646, %v693
        %726 = vst.msk [vmem:[#allocation4 + $0xf0] sm:$0xff] %vm646, %v694
        %727 = vst.msk [vmem:[#allocation4 + $0x100] sm:$0xff] %vm646, %v695
        %728 = vst.msk [vmem:[#allocation4 + $0x110] sm:$0xff] %vm646, %v696
        %729 = vst.msk [vmem:[#allocation4 + $0x120] sm:$0xff] %vm646, %v697
        %730 = vst.msk [vmem:[#allocation4 + $0x130] sm:$0xff] %vm646, %v698
        %731 = vst.msk [vmem:[#allocation4 + $0x140] sm:$0xff] %vm646, %v699
        %732 = vst.msk [vmem:[#allocation4 + $0x150] sm:$0xff] %vm646, %v700
        %733 = vst.msk [vmem:[#allocation4 + $0x160] sm:$0xff] %vm646, %v701
        %734 = vst.msk [vmem:[#allocation4 + $0x170] sm:$0xff] %vm646, %v702
        %735 = vst.msk [vmem:[#allocation4 + $0x180] sm:$0xff] %vm646, %v703
        %736 = vst.msk [vmem:[#allocation4 + $0x190] sm:$0xff] %vm646, %v704
        %737 = vst.msk [vmem:[#allocation4 + $0x1a0] sm:$0xff] %vm646, %v705
        %738 = vst.msk [vmem:[#allocation4 + $0x1b0] sm:$0xff] %vm646, %v706
        %739 = vst.msk [vmem:[#allocation4 + $0x1c0] sm:$0xff] %vm646, %v707
        %740 = vst.msk [vmem:[#allocation4 + $0x1d0] sm:$0xff] %vm646, %v708
        %741 = vst.msk [vmem:[#allocation4 + $0x1e0] sm:$0xff] %vm646, %v709
        %742 = vst.msk [vmem:[#allocation4 + $0x1f0] sm:$0xff] %vm646, %v710
        %v743 = vld [vmem:[#allocation2 + $0x1] sm:$0xff]
        %v744 = vld [vmem:[#allocation2 + $0x9] sm:$0xff]
        %v745 = vld [vmem:[#allocation2 + $0x19] sm:$0xff]
        %v746 = vld [vmem:[#allocation2 + $0x21] sm:$0xff]
        %v747 = vld [vmem:[#allocation2 + $0x31] sm:$0xff]
        %v748 = vld [vmem:[#allocation2 + $0x39] sm:$0xff]
        %v749 = vld [vmem:[#allocation2 + $0x49] sm:$0xff]
        %v750 = vld [vmem:[#allocation2 + $0x51] sm:$0xff]
        %v751 = vld [vmem:[#allocation2 + $0x61] sm:$0xff]
        %v752 = vld [vmem:[#allocation2 + $0x69] sm:$0xff]
        %v753 = vld [vmem:[#allocation2 + $0x79] sm:$0xff]
        %v754 = vld [vmem:[#allocation2 + $0x81] sm:$0xff]
        %v755 = vld [vmem:[#allocation2 + $0x91] sm:$0xff]
        %v756 = vld [vmem:[#allocation2 + $0x99] sm:$0xff]
        %v757 = vld [vmem:[#allocation2 + $0xa9] sm:$0xff]
        %v758 = vld [vmem:[#allocation2 + $0xb1] sm:$0xff]
        %v759 = vld [vmem:[#allocation2 + $0xc1] sm:$0xff]
        %v760 = vld [vmem:[#allocation2 + $0xc9] sm:$0xff]
        %v761 = vld [vmem:[#allocation2 + $0xd9] sm:$0xff]
        %v762 = vld [vmem:[#allocation2 + $0xe1] sm:$0xff]
        %v763 = vld [vmem:[#allocation2 + $0xf1] sm:$0xff]
        %v764 = vld [vmem:[#allocation2 + $0xf9] sm:$0xff]
        %v765 = vld [vmem:[#allocation2 + $0x109] sm:$0xff]
        %v766 = vld [vmem:[#allocation2 + $0x111] sm:$0xff]
        %v767 = vld [vmem:[#allocation2 + $0x121] sm:$0xff]
        %v768 = vld [vmem:[#allocation2 + $0x129] sm:$0xff]
        %v769 = vld [vmem:[#allocation2 + $0x139] sm:$0xff]
        %v770 = vld [vmem:[#allocation2 + $0x141] sm:$0xff]
        %v771 = vld [vmem:[#allocation2 + $0x151] sm:$0xff]
        %v772 = vld [vmem:[#allocation2 + $0x159] sm:$0xff]
        %v773 = vld [vmem:[#allocation2 + $0x169] sm:$0xff]
        %v774 = vld [vmem:[#allocation2 + $0x171] sm:$0xff]
        %807 = vrot.lane.b32.xlu0 %v743, 3
        %v808 = vpop.permute.xlu0 %807
        %809 = vrot.lane.b32.xlu0 %v744, 3
        %v810 = vpop.permute.xlu0 %809
        %811 = vrot.lane.b32.xlu0 %v745, 3
        %v812 = vpop.permute.xlu0 %811
        %813 = vrot.lane.b32.xlu0 %v746, 3
        %v814 = vpop.permute.xlu0 %813
        %815 = vrot.lane.b32.xlu0 %v747, 3
        %v816 = vpop.permute.xlu0 %815
        %817 = vrot.lane.b32.xlu0 %v748, 3
        %v818 = vpop.permute.xlu0 %817
        %819 = vrot.lane.b32.xlu0 %v749, 3
        %v820 = vpop.permute.xlu0 %819
        %821 = vrot.lane.b32.xlu0 %v750, 3
        %v822 = vpop.permute.xlu0 %821
        %823 = vrot.lane.b32.xlu0 %v751, 3
        %v824 = vpop.permute.xlu0 %823
        %825 = vrot.lane.b32.xlu0 %v752, 3
        %v826 = vpop.permute.xlu0 %825
        %827 = vrot.lane.b32.xlu0 %v753, 3
        %v828 = vpop.permute.xlu0 %827
        %829 = vrot.lane.b32.xlu0 %v754, 3
        %v830 = vpop.permute.xlu0 %829
        %831 = vrot.lane.b32.xlu0 %v755, 3
        %v832 = vpop.permute.xlu0 %831
        %833 = vrot.lane.b32.xlu0 %v756, 3
        %v834 = vpop.permute.xlu0 %833
        %835 = vrot.lane.b32.xlu0 %v757, 3
        %v836 = vpop.permute.xlu0 %835
        %837 = vrot.lane.b32.xlu0 %v758, 3
        %v838 = vpop.permute.xlu0 %837
        %839 = vrot.lane.b32.xlu0 %v759, 3
        %v840 = vpop.permute.xlu0 %839
        %841 = vrot.lane.b32.xlu0 %v760, 3
        %v842 = vpop.permute.xlu0 %841
        %843 = vrot.lane.b32.xlu0 %v761, 3
        %v844 = vpop.permute.xlu0 %843
        %845 = vrot.lane.b32.xlu0 %v762, 3
        %v846 = vpop.permute.xlu0 %845
        %847 = vrot.lane.b32.xlu0 %v763, 3
        %v848 = vpop.permute.xlu0 %847
        %849 = vrot.lane.b32.xlu0 %v764, 3
        %v850 = vpop.permute.xlu0 %849
        %851 = vrot.lane.b32.xlu0 %v765, 3
        %v852 = vpop.permute.xlu0 %851
        %853 = vrot.lane.b32.xlu0 %v766, 3
        %v854 = vpop.permute.xlu0 %853
        %855 = vrot.lane.b32.xlu0 %v767, 3
        %v856 = vpop.permute.xlu0 %855
        %857 = vrot.lane.b32.xlu0 %v768, 3
        %v858 = vpop.permute.xlu0 %857
        %859 = vrot.lane.b32.xlu0 %v769, 3
        %v860 = vpop.permute.xlu0 %859
        %861 = vrot.lane.b32.xlu0 %v770, 3
        %v862 = vpop.permute.xlu0 %861
        %863 = vrot.lane.b32.xlu0 %v771, 3
        %v864 = vpop.permute.xlu0 %863
        %865 = vrot.lane.b32.xlu0 %v772, 3
        %v866 = vpop.permute.xlu0 %865
        %867 = vrot.lane.b32.xlu0 %v773, 3
        %v868 = vpop.permute.xlu0 %867
        %869 = vrot.lane.b32.xlu0 %v774, 3
        %v870 = vpop.permute.xlu0 %869
        %vm903 = vcmask 48152
        %904 = vst.msk [vmem:[#allocation4] sm:$0xff] %vm903, %v808
        %905 = vst.msk [vmem:[#allocation4 + $0x10] sm:$0xff] %vm903, %v810
        %906 = vst.msk [vmem:[#allocation4 + $0x20] sm:$0xff] %vm903, %v812
        %907 = vst.msk [vmem:[#allocation4 + $0x30] sm:$0xff] %vm903, %v814
        %908 = vst.msk [vmem:[#allocation4 + $0x40] sm:$0xff] %vm903, %v816
        %909 = vst.msk [vmem:[#allocation4 + $0x50] sm:$0xff] %vm903, %v818
        %910 = vst.msk [vmem:[#allocation4 + $0x60] sm:$0xff] %vm903, %v820
        %911 = vst.msk [vmem:[#allocation4 + $0x70] sm:$0xff] %vm903, %v822
        %912 = vst.msk [vmem:[#allocation4 + $0x80] sm:$0xff] %vm903, %v824
        %913 = vst.msk [vmem:[#allocation4 + $0x90] sm:$0xff] %vm903, %v826
        %914 = vst.msk [vmem:[#allocation4 + $0xa0] sm:$0xff] %vm903, %v828
        %915 = vst.msk [vmem:[#allocation4 + $0xb0] sm:$0xff] %vm903, %v830
        %916 = vst.msk [vmem:[#allocation4 + $0xc0] sm:$0xff] %vm903, %v832
        %917 = vst.msk [vmem:[#allocation4 + $0xd0] sm:$0xff] %vm903, %v834
        %918 = vst.msk [vmem:[#allocation4 + $0xe0] sm:$0xff] %vm903, %v836
        %919 = vst.msk [vmem:[#allocation4 + $0xf0] sm:$0xff] %vm903, %v838
        %920 = vst.msk [vmem:[#allocation4 + $0x100] sm:$0xff] %vm903, %v840
        %921 = vst.msk [vmem:[#allocation4 + $0x110] sm:$0xff] %vm903, %v842
        %922 = vst.msk [vmem:[#allocation4 + $0x120] sm:$0xff] %vm903, %v844
        %923 = vst.msk [vmem:[#allocation4 + $0x130] sm:$0xff] %vm903, %v846
        %924 = vst.msk [vmem:[#allocation4 + $0x140] sm:$0xff] %vm903, %v848
        %925 = vst.msk [vmem:[#allocation4 + $0x150] sm:$0xff] %vm903, %v850
        %926 = vst.msk [vmem:[#allocation4 + $0x160] sm:$0xff] %vm903, %v852
        %927 = vst.msk [vmem:[#allocation4 + $0x170] sm:$0xff] %vm903, %v854
        %928 = vst.msk [vmem:[#allocation4 + $0x180] sm:$0xff] %vm903, %v856
        %929 = vst.msk [vmem:[#allocation4 + $0x190] sm:$0xff] %vm903, %v858
        %930 = vst.msk [vmem:[#allocation4 + $0x1a0] sm:$0xff] %vm903, %v860
        %931 = vst.msk [vmem:[#allocation4 + $0x1b0] sm:$0xff] %vm903, %v862
        %932 = vst.msk [vmem:[#allocation4 + $0x1c0] sm:$0xff] %vm903, %v864
        %933 = vst.msk [vmem:[#allocation4 + $0x1d0] sm:$0xff] %vm903, %v866
        %934 = vst.msk [vmem:[#allocation4 + $0x1e0] sm:$0xff] %vm903, %v868
        %935 = vst.msk [vmem:[#allocation4 + $0x1f0] sm:$0xff] %vm903, %v870
        %v936 = vld [vmem:[#allocation2 + $0x2] sm:$0xff]
        %v937 = vld [vmem:[#allocation2 + $0xa] sm:$0xff]
        %v938 = vld [vmem:[#allocation2 + $0x1a] sm:$0xff]
        %v939 = vld [vmem:[#allocation2 + $0x22] sm:$0xff]
        %v940 = vld [vmem:[#allocation2 + $0x32] sm:$0xff]
        %v941 = vld [vmem:[#allocation2 + $0x3a] sm:$0xff]
        %v942 = vld [vmem:[#allocation2 + $0x4a] sm:$0xff]
        %v943 = vld [vmem:[#allocation2 + $0x52] sm:$0xff]
        %v944 = vld [vmem:[#allocation2 + $0x62] sm:$0xff]
        %v945 = vld [vmem:[#allocation2 + $0x6a] sm:$0xff]
        %v946 = vld [vmem:[#allocation2 + $0x7a] sm:$0xff]
        %v947 = vld [vmem:[#allocation2 + $0x82] sm:$0xff]
        %v948 = vld [vmem:[#allocation2 + $0x92] sm:$0xff]
        %v949 = vld [vmem:[#allocation2 + $0x9a] sm:$0xff]
        %v950 = vld [vmem:[#allocation2 + $0xaa] sm:$0xff]
        %v951 = vld [vmem:[#allocation2 + $0xb2] sm:$0xff]
        %v952 = vld [vmem:[#allocation2 + $0xc2] sm:$0xff]
        %v953 = vld [vmem:[#allocation2 + $0xca] sm:$0xff]
        %v954 = vld [vmem:[#allocation2 + $0xda] sm:$0xff]
        %v955 = vld [vmem:[#allocation2 + $0xe2] sm:$0xff]
        %v956 = vld [vmem:[#allocation2 + $0xf2] sm:$0xff]
        %v957 = vld [vmem:[#allocation2 + $0xfa] sm:$0xff]
        %v958 = vld [vmem:[#allocation2 + $0x10a] sm:$0xff]
        %v959 = vld [vmem:[#allocation2 + $0x112] sm:$0xff]
        %v960 = vld [vmem:[#allocation2 + $0x122] sm:$0xff]
        %v961 = vld [vmem:[#allocation2 + $0x12a] sm:$0xff]
        %v962 = vld [vmem:[#allocation2 + $0x13a] sm:$0xff]
        %v963 = vld [vmem:[#allocation2 + $0x142] sm:$0xff]
        %v964 = vld [vmem:[#allocation2 + $0x152] sm:$0xff]
        %v965 = vld [vmem:[#allocation2 + $0x15a] sm:$0xff]
        %v966 = vld [vmem:[#allocation2 + $0x16a] sm:$0xff]
        %v967 = vld [vmem:[#allocation2 + $0x172] sm:$0xff]
        %1000 = vrot.lane.b32.xlu0 %v936, 6
        %v1001 = vpop.permute.xlu0 %1000
        %1002 = vrot.lane.b32.xlu0 %v937, 6
        %v1003 = vpop.permute.xlu0 %1002
        %1004 = vrot.lane.b32.xlu0 %v938, 6
        %v1005 = vpop.permute.xlu0 %1004
        %1006 = vrot.lane.b32.xlu0 %v939, 6
        %v1007 = vpop.permute.xlu0 %1006
        %1008 = vrot.lane.b32.xlu0 %v940, 6
        %v1009 = vpop.permute.xlu0 %1008
        %1010 = vrot.lane.b32.xlu0 %v941, 6
        %v1011 = vpop.permute.xlu0 %1010
        %1012 = vrot.lane.b32.xlu0 %v942, 6
        %v1013 = vpop.permute.xlu0 %1012
        %1014 = vrot.lane.b32.xlu0 %v943, 6
        %v1015 = vpop.permute.xlu0 %1014
        %1016 = vrot.lane.b32.xlu0 %v944, 6
        %v1017 = vpop.permute.xlu0 %1016
        %1018 = vrot.lane.b32.xlu0 %v945, 6
        %v1019 = vpop.permute.xlu0 %1018
        %1020 = vrot.lane.b32.xlu0 %v946, 6
        %v1021 = vpop.permute.xlu0 %1020
        %1022 = vrot.lane.b32.xlu0 %v947, 6
        %v1023 = vpop.permute.xlu0 %1022
        %1024 = vrot.lane.b32.xlu0 %v948, 6
        %v1025 = vpop.permute.xlu0 %1024
        %1026 = vrot.lane.b32.xlu0 %v949, 6
        %v1027 = vpop.permute.xlu0 %1026
        %1028 = vrot.lane.b32.xlu0 %v950, 6
        %v1029 = vpop.permute.xlu0 %1028
        %1030 = vrot.lane.b32.xlu0 %v951, 6
        %v1031 = vpop.permute.xlu0 %1030
        %1032 = vrot.lane.b32.xlu0 %v952, 6
        %v1033 = vpop.permute.xlu0 %1032
        %1034 = vrot.lane.b32.xlu0 %v953, 6
        %v1035 = vpop.permute.xlu0 %1034
        %1036 = vrot.lane.b32.xlu0 %v954, 6
        %v1037 = vpop.permute.xlu0 %1036
        %1038 = vrot.lane.b32.xlu0 %v955, 6
        %v1039 = vpop.permute.xlu0 %1038
        %1040 = vrot.lane.b32.xlu0 %v956, 6
        %v1041 = vpop.permute.xlu0 %1040
        %1042 = vrot.lane.b32.xlu0 %v957, 6
        %v1043 = vpop.permute.xlu0 %1042
        %1044 = vrot.lane.b32.xlu0 %v958, 6
        %v1045 = vpop.permute.xlu0 %1044
        %1046 = vrot.lane.b32.xlu0 %v959, 6
        %v1047 = vpop.permute.xlu0 %1046
        %1048 = vrot.lane.b32.xlu0 %v960, 6
        %v1049 = vpop.permute.xlu0 %1048
        %1050 = vrot.lane.b32.xlu0 %v961, 6
        %v1051 = vpop.permute.xlu0 %1050
        %1052 = vrot.lane.b32.xlu0 %v962, 6
        %v1053 = vpop.permute.xlu0 %1052
        %1054 = vrot.lane.b32.xlu0 %v963, 6
        %v1055 = vpop.permute.xlu0 %1054
        %1056 = vrot.lane.b32.xlu0 %v964, 6
        %v1057 = vpop.permute.xlu0 %1056
        %1058 = vrot.lane.b32.xlu0 %v965, 6
        %v1059 = vpop.permute.xlu0 %1058
        %1060 = vrot.lane.b32.xlu0 %v966, 6
        %v1061 = vpop.permute.xlu0 %1060
        %1062 = vrot.lane.b32.xlu0 %v967, 6
        %v1063 = vpop.permute.xlu0 %1062
        %vm1096 = vcmask 72752
        %1097 = vst.msk [vmem:[#allocation4] sm:$0xff] %vm1096, %v1001
        %1098 = vst.msk [vmem:[#allocation4 + $0x10] sm:$0xff] %vm1096, %v1003
        %1099 = vst.msk [vmem:[#allocation4 + $0x20] sm:$0xff] %vm1096, %v1005
        %1100 = vst.msk [vmem:[#allocation4 + $0x30] sm:$0xff] %vm1096, %v1007
        %1101 = vst.msk [vmem:[#allocation4 + $0x40] sm:$0xff] %vm1096, %v1009
        %1102 = vst.msk [vmem:[#allocation4 + $0x50] sm:$0xff] %vm1096, %v1011
        %1103 = vst.msk [vmem:[#allocation4 + $0x60] sm:$0xff] %vm1096, %v1013
        %1104 = vst.msk [vmem:[#allocation4 + $0x70] sm:$0xff] %vm1096, %v1015
        %1105 = vst.msk [vmem:[#allocation4 + $0x80] sm:$0xff] %vm1096, %v1017
        %1106 = vst.msk [vmem:[#allocation4 + $0x90] sm:$0xff] %vm1096, %v1019
        %1107 = vst.msk [vmem:[#allocation4 + $0xa0] sm:$0xff] %vm1096, %v1021
        %1108 = vst.msk [vmem:[#allocation4 + $0xb0] sm:$0xff] %vm1096, %v1023
        %1109 = vst.msk [vmem:[#allocation4 + $0xc0] sm:$0xff] %vm1096, %v1025
        %1110 = vst.msk [vmem:[#allocation4 + $0xd0] sm:$0xff] %vm1096, %v1027
        %1111 = vst.msk [vmem:[#allocation4 + $0xe0] sm:$0xff] %vm1096, %v1029
        %1112 = vst.msk [vmem:[#allocation4 + $0xf0] sm:$0xff] %vm1096, %v1031
        %1113 = vst.msk [vmem:[#allocation4 + $0x100] sm:$0xff] %vm1096, %v1033
        %1114 = vst.msk [vmem:[#allocation4 + $0x110] sm:$0xff] %vm1096, %v1035
        %1115 = vst.msk [vmem:[#allocation4 + $0x120] sm:$0xff] %vm1096, %v1037
        %1116 = vst.msk [vmem:[#allocation4 + $0x130] sm:$0xff] %vm1096, %v1039
        %1117 = vst.msk [vmem:[#allocation4 + $0x140] sm:$0xff] %vm1096, %v1041
        %1118 = vst.msk [vmem:[#allocation4 + $0x150] sm:$0xff] %vm1096, %v1043
        %1119 = vst.msk [vmem:[#allocation4 + $0x160] sm:$0xff] %vm1096, %v1045
        %1120 = vst.msk [vmem:[#allocation4 + $0x170] sm:$0xff] %vm1096, %v1047
        %1121 = vst.msk [vmem:[#allocation4 + $0x180] sm:$0xff] %vm1096, %v1049
        %1122 = vst.msk [vmem:[#allocation4 + $0x190] sm:$0xff] %vm1096, %v1051
        %1123 = vst.msk [vmem:[#allocation4 + $0x1a0] sm:$0xff] %vm1096, %v1053
        %1124 = vst.msk [vmem:[#allocation4 + $0x1b0] sm:$0xff] %vm1096, %v1055
        %1125 = vst.msk [vmem:[#allocation4 + $0x1c0] sm:$0xff] %vm1096, %v1057
        %1126 = vst.msk [vmem:[#allocation4 + $0x1d0] sm:$0xff] %vm1096, %v1059
        %1127 = vst.msk [vmem:[#allocation4 + $0x1e0] sm:$0xff] %vm1096, %v1061
        %1128 = vst.msk [vmem:[#allocation4 + $0x1f0] sm:$0xff] %vm1096, %v1063
        %v1129 = vld [vmem:[%s645] sm:$0xff]
        %v1130 = vld [vmem:[%s645 + $0x8] sm:$0xff]
        %v1131 = vld [vmem:[%s645 + $0x18] sm:$0xff]
        %v1132 = vld [vmem:[%s645 + $0x20] sm:$0xff]
        %v1133 = vld [vmem:[%s645 + $0x30] sm:$0xff]
        %v1134 = vld [vmem:[%s645 + $0x38] sm:$0xff]
        %v1135 = vld [vmem:[%s645 + $0x48] sm:$0xff]
        %v1136 = vld [vmem:[%s645 + $0x50] sm:$0xff]
        %v1137 = vld [vmem:[%s645 + $0x60] sm:$0xff]
        %v1138 = vld [vmem:[%s645 + $0x68] sm:$0xff]
        %v1139 = vld [vmem:[%s645 + $0x78] sm:$0xff]
        %v1140 = vld [vmem:[%s645 + $0x80] sm:$0xff]
        %v1141 = vld [vmem:[%s645 + $0x90] sm:$0xff]
        %v1142 = vld [vmem:[%s645 + $0x98] sm:$0xff]
        %v1143 = vld [vmem:[%s645 + $0xa8] sm:$0xff]
        %v1144 = vld [vmem:[%s645 + $0xb0] sm:$0xff]
        %v1145 = vld [vmem:[%s645 + $0xc0] sm:$0xff]
        %v1146 = vld [vmem:[%s645 + $0xc8] sm:$0xff]
        %v1147 = vld [vmem:[%s645 + $0xd8] sm:$0xff]
        %v1148 = vld [vmem:[%s645 + $0xe0] sm:$0xff]
        %v1149 = vld [vmem:[%s645 + $0xf0] sm:$0xff]
        %v1150 = vld [vmem:[%s645 + $0xf8] sm:$0xff]
        %v1151 = vld [vmem:[%s645 + $0x108] sm:$0xff]
        %v1152 = vld [vmem:[%s645 + $0x110] sm:$0xff]
        %v1153 = vld [vmem:[%s645 + $0x120] sm:$0xff]
        %v1154 = vld [vmem:[%s645 + $0x128] sm:$0xff]
        %v1155 = vld [vmem:[%s645 + $0x138] sm:$0xff]
        %v1156 = vld [vmem:[%s645 + $0x140] sm:$0xff]
        %v1157 = vld [vmem:[%s645 + $0x150] sm:$0xff]
        %v1158 = vld [vmem:[%s645 + $0x158] sm:$0xff]
        %v1159 = vld [vmem:[%s645 + $0x168] sm:$0xff]
        %v1160 = vld [vmem:[%s645 + $0x170] sm:$0xff]
        %1193 = vrot.lane.b32.xlu0 %v1129, 9
        %v1194 = vpop.permute.xlu0 %1193
        %1195 = vrot.lane.b32.xlu0 %v1130, 9
        %v1196 = vpop.permute.xlu0 %1195
        %1197 = vrot.lane.b32.xlu0 %v1131, 9
        %v1198 = vpop.permute.xlu0 %1197
        %1199 = vrot.lane.b32.xlu0 %v1132, 9
        %v1200 = vpop.permute.xlu0 %1199
        %1201 = vrot.lane.b32.xlu0 %v1133, 9
        %v1202 = vpop.permute.xlu0 %1201
        %1203 = vrot.lane.b32.xlu0 %v1134, 9
        %v1204 = vpop.permute.xlu0 %1203
        %1205 = vrot.lane.b32.xlu0 %v1135, 9
        %v1206 = vpop.permute.xlu0 %1205
        %1207 = vrot.lane.b32.xlu0 %v1136, 9
        %v1208 = vpop.permute.xlu0 %1207
        %1209 = vrot.lane.b32.xlu0 %v1137, 9
        %v1210 = vpop.permute.xlu0 %1209
        %1211 = vrot.lane.b32.xlu0 %v1138, 9
        %v1212 = vpop.permute.xlu0 %1211
        %1213 = vrot.lane.b32.xlu0 %v1139, 9
        %v1214 = vpop.permute.xlu0 %1213
        %1215 = vrot.lane.b32.xlu0 %v1140, 9
        %v1216 = vpop.permute.xlu0 %1215
        %1217 = vrot.lane.b32.xlu0 %v1141, 9
        %v1218 = vpop.permute.xlu0 %1217
        %1219 = vrot.lane.b32.xlu0 %v1142, 9
        %v1220 = vpop.permute.xlu0 %1219
        %1221 = vrot.lane.b32.xlu0 %v1143, 9
        %v1222 = vpop.permute.xlu0 %1221
        %1223 = vrot.lane.b32.xlu0 %v1144, 9
        %v1224 = vpop.permute.xlu0 %1223
        %1225 = vrot.lane.b32.xlu0 %v1145, 9
        %v1226 = vpop.permute.xlu0 %1225
        %1227 = vrot.lane.b32.xlu0 %v1146, 9
        %v1228 = vpop.permute.xlu0 %1227
        %1229 = vrot.lane.b32.xlu0 %v1147, 9
        %v1230 = vpop.permute.xlu0 %1229
        %1231 = vrot.lane.b32.xlu0 %v1148, 9
        %v1232 = vpop.permute.xlu0 %1231
        %1233 = vrot.lane.b32.xlu0 %v1149, 9
        %v1234 = vpop.permute.xlu0 %1233
        %1235 = vrot.lane.b32.xlu0 %v1150, 9
        %v1236 = vpop.permute.xlu0 %1235
        %1237 = vrot.lane.b32.xlu0 %v1151, 9
        %v1238 = vpop.permute.xlu0 %1237
        %1239 = vrot.lane.b32.xlu0 %v1152, 9
        %v1240 = vpop.permute.xlu0 %1239
        %1241 = vrot.lane.b32.xlu0 %v1153, 9
        %v1242 = vpop.permute.xlu0 %1241
        %1243 = vrot.lane.b32.xlu0 %v1154, 9
        %v1244 = vpop.permute.xlu0 %1243
        %1245 = vrot.lane.b32.xlu0 %v1155, 9
        %v1246 = vpop.permute.xlu0 %1245
        %1247 = vrot.lane.b32.xlu0 %v1156, 9
        %v1248 = vpop.permute.xlu0 %1247
        %1249 = vrot.lane.b32.xlu0 %v1157, 9
        %v1250 = vpop.permute.xlu0 %1249
        %1251 = vrot.lane.b32.xlu0 %v1158, 9
        %v1252 = vpop.permute.xlu0 %1251
        %1253 = vrot.lane.b32.xlu0 %v1159, 9
        %v1254 = vpop.permute.xlu0 %1253
        %1255 = vrot.lane.b32.xlu0 %v1160, 9
        %v1256 = vpop.permute.xlu0 %1255
        %vm1289 = vcmask 97352
        %1290 = vst.msk [vmem:[#allocation4] sm:$0xff] %vm1289, %v1194
        %1291 = vst.msk [vmem:[#allocation4 + $0x10] sm:$0xff] %vm1289, %v1196
        %1292 = vst.msk [vmem:[#allocation4 + $0x20] sm:$0xff] %vm1289, %v1198
        %1293 = vst.msk [vmem:[#allocation4 + $0x30] sm:$0xff] %vm1289, %v1200
        %1294 = vst.msk [vmem:[#allocation4 + $0x40] sm:$0xff] %vm1289, %v1202
        %1295 = vst.msk [vmem:[#allocation4 + $0x50] sm:$0xff] %vm1289, %v1204
        %1296 = vst.msk [vmem:[#allocation4 + $0x60] sm:$0xff] %vm1289, %v1206
        %1297 = vst.msk [vmem:[#allocation4 + $0x70] sm:$0xff] %vm1289, %v1208
        %1298 = vst.msk [vmem:[#allocation4 + $0x80] sm:$0xff] %vm1289, %v1210
        %1299 = vst.msk [vmem:[#allocation4 + $0x90] sm:$0xff] %vm1289, %v1212
        %1300 = vst.msk [vmem:[#allocation4 + $0xa0] sm:$0xff] %vm1289, %v1214
        %1301 = vst.msk [vmem:[#allocation4 + $0xb0] sm:$0xff] %vm1289, %v1216
        %1302 = vst.msk [vmem:[#allocation4 + $0xc0] sm:$0xff] %vm1289, %v1218
        %1303 = vst.msk [vmem:[#allocation4 + $0xd0] sm:$0xff] %vm1289, %v1220
        %1304 = vst.msk [vmem:[#allocation4 + $0xe0] sm:$0xff] %vm1289, %v1222
        %1305 = vst.msk [vmem:[#allocation4 + $0xf0] sm:$0xff] %vm1289, %v1224
        %1306 = vst.msk [vmem:[#allocation4 + $0x100] sm:$0xff] %vm1289, %v1226
        %1307 = vst.msk [vmem:[#allocation4 + $0x110] sm:$0xff] %vm1289, %v1228
        %1308 = vst.msk [vmem:[#allocation4 + $0x120] sm:$0xff] %vm1289, %v1230
        %1309 = vst.msk [vmem:[#allocation4 + $0x130] sm:$0xff] %vm1289, %v1232
        %1310 = vst.msk [vmem:[#allocation4 + $0x140] sm:$0xff] %vm1289, %v1234
        %1311 = vst.msk [vmem:[#allocation4 + $0x150] sm:$0xff] %vm1289, %v1236
        %1312 = vst.msk [vmem:[#allocation4 + $0x160] sm:$0xff] %vm1289, %v1238
        %1313 = vst.msk [vmem:[#allocation4 + $0x170] sm:$0xff] %vm1289, %v1240
        %1314 = vst.msk [vmem:[#allocation4 + $0x180] sm:$0xff] %vm1289, %v1242
        %1315 = vst.msk [vmem:[#allocation4 + $0x190] sm:$0xff] %vm1289, %v1244
        %1316 = vst.msk [vmem:[#allocation4 + $0x1a0] sm:$0xff] %vm1289, %v1246
        %1317 = vst.msk [vmem:[#allocation4 + $0x1b0] sm:$0xff] %vm1289, %v1248
        %1318 = vst.msk [vmem:[#allocation4 + $0x1c0] sm:$0xff] %vm1289, %v1250
        %1319 = vst.msk [vmem:[#allocation4 + $0x1d0] sm:$0xff] %vm1289, %v1252
        %1320 = vst.msk [vmem:[#allocation4 + $0x1e0] sm:$0xff] %vm1289, %v1254
        %1321 = vst.msk [vmem:[#allocation4 + $0x1f0] sm:$0xff] %vm1289, %v1256
        %v1322 = vld [vmem:[%s645 + $0x1] sm:$0xff]
        %v1323 = vld [vmem:[%s645 + $0x9] sm:$0xff]
        %v1324 = vld [vmem:[%s645 + $0x19] sm:$0xff]
        %v1325 = vld [vmem:[%s645 + $0x21] sm:$0xff]
        %v1326 = vld [vmem:[%s645 + $0x31] sm:$0xff]
        %v1327 = vld [vmem:[%s645 + $0x39] sm:$0xff]
        %v1328 = vld [vmem:[%s645 + $0x49] sm:$0xff]
        %v1329 = vld [vmem:[%s645 + $0x51] sm:$0xff]
        %v1330 = vld [vmem:[%s645 + $0x61] sm:$0xff]
        %v1331 = vld [vmem:[%s645 + $0x69] sm:$0xff]
        %v1332 = vld [vmem:[%s645 + $0x79] sm:$0xff]
        %v1333 = vld [vmem:[%s645 + $0x81] sm:$0xff]
        %v1334 = vld [vmem:[%s645 + $0x91] sm:$0xff]
        %v1335 = vld [vmem:[%s645 + $0x99] sm:$0xff]
        %v1336 = vld [vmem:[%s645 + $0xa9] sm:$0xff]
        %v1337 = vld [vmem:[%s645 + $0xb1] sm:$0xff]
        %v1338 = vld [vmem:[%s645 + $0xc1] sm:$0xff]
        %v1339 = vld [vmem:[%s645 + $0xc9] sm:$0xff]
        %v1340 = vld [vmem:[%s645 + $0xd9] sm:$0xff]
        %v1341 = vld [vmem:[%s645 + $0xe1] sm:$0xff]
        %v1342 = vld [vmem:[%s645 + $0xf1] sm:$0xff]
        %v1343 = vld [vmem:[%s645 + $0xf9] sm:$0xff]
        %v1344 = vld [vmem:[%s645 + $0x109] sm:$0xff]
        %v1345 = vld [vmem:[%s645 + $0x111] sm:$0xff]
        %v1346 = vld [vmem:[%s645 + $0x121] sm:$0xff]
        %v1347 = vld [vmem:[%s645 + $0x129] sm:$0xff]
        %v1348 = vld [vmem:[%s645 + $0x139] sm:$0xff]
        %v1349 = vld [vmem:[%s645 + $0x141] sm:$0xff]
        %v1350 = vld [vmem:[%s645 + $0x151] sm:$0xff]
        %v1351 = vld [vmem:[%s645 + $0x159] sm:$0xff]
        %v1352 = vld [vmem:[%s645 + $0x169] sm:$0xff]
        %v1353 = vld [vmem:[%s645 + $0x171] sm:$0xff]
        %1386 = vrot.lane.b32.xlu0 %v1322, 12
        %v1387 = vpop.permute.xlu0 %1386
        %1388 = vrot.lane.b32.xlu0 %v1323, 12
        %v1389 = vpop.permute.xlu0 %1388
        %1390 = vrot.lane.b32.xlu0 %v1324, 12
        %v1391 = vpop.permute.xlu0 %1390
        %1392 = vrot.lane.b32.xlu0 %v1325, 12
        %v1393 = vpop.permute.xlu0 %1392
        %1394 = vrot.lane.b32.xlu0 %v1326, 12
        %v1395 = vpop.permute.xlu0 %1394
        %1396 = vrot.lane.b32.xlu0 %v1327, 12
        %v1397 = vpop.permute.xlu0 %1396
        %1398 = vrot.lane.b32.xlu0 %v1328, 12
        %v1399 = vpop.permute.xlu0 %1398
        %1400 = vrot.lane.b32.xlu0 %v1329, 12
        %v1401 = vpop.permute.xlu0 %1400
        %1402 = vrot.lane.b32.xlu0 %v1330, 12
        %v1403 = vpop.permute.xlu0 %1402
        %1404 = vrot.lane.b32.xlu0 %v1331, 12
        %v1405 = vpop.permute.xlu0 %1404
        %1406 = vrot.lane.b32.xlu0 %v1332, 12
        %v1407 = vpop.permute.xlu0 %1406
        %1408 = vrot.lane.b32.xlu0 %v1333, 12
        %v1409 = vpop.permute.xlu0 %1408
        %1410 = vrot.lane.b32.xlu0 %v1334, 12
        %v1411 = vpop.permute.xlu0 %1410
        %1412 = vrot.lane.b32.xlu0 %v1335, 12
        %v1413 = vpop.permute.xlu0 %1412
        %1414 = vrot.lane.b32.xlu0 %v1336, 12
        %v1415 = vpop.permute.xlu0 %1414
        %1416 = vrot.lane.b32.xlu0 %v1337, 12
        %v1417 = vpop.permute.xlu0 %1416
        %1418 = vrot.lane.b32.xlu0 %v1338, 12
        %v1419 = vpop.permute.xlu0 %1418
        %1420 = vrot.lane.b32.xlu0 %v1339, 12
        %v1421 = vpop.permute.xlu0 %1420
        %1422 = vrot.lane.b32.xlu0 %v1340, 12
        %v1423 = vpop.permute.xlu0 %1422
        %1424 = vrot.lane.b32.xlu0 %v1341, 12
        %v1425 = vpop.permute.xlu0 %1424
        %1426 = vrot.lane.b32.xlu0 %v1342, 12
        %v1427 = vpop.permute.xlu0 %1426
        %1428 = vrot.lane.b32.xlu0 %v1343, 12
        %v1429 = vpop.permute.xlu0 %1428
        %1430 = vrot.lane.b32.xlu0 %v1344, 12
        %v1431 = vpop.permute.xlu0 %1430
        %1432 = vrot.lane.b32.xlu0 %v1345, 12
        %v1433 = vpop.permute.xlu0 %1432
        %1434 = vrot.lane.b32.xlu0 %v1346, 12
        %v1435 = vpop.permute.xlu0 %1434
        %1436 = vrot.lane.b32.xlu0 %v1347, 12
        %v1437 = vpop.permute.xlu0 %1436
        %1438 = vrot.lane.b32.xlu0 %v1348, 12
        %v1439 = vpop.permute.xlu0 %1438
        %1440 = vrot.lane.b32.xlu0 %v1349, 12
        %v1441 = vpop.permute.xlu0 %1440
        %1442 = vrot.lane.b32.xlu0 %v1350, 12
        %v1443 = vpop.permute.xlu0 %1442
        %1444 = vrot.lane.b32.xlu0 %v1351, 12
        %v1445 = vpop.permute.xlu0 %1444
        %1446 = vrot.lane.b32.xlu0 %v1352, 12
        %v1447 = vpop.permute.xlu0 %1446
        %1448 = vrot.lane.b32.xlu0 %v1353, 12
        %v1449 = vpop.permute.xlu0 %1448
        %vm1482 = vcmask 121952
        %1483 = vst.msk [vmem:[#allocation4] sm:$0xff] %vm1482, %v1387
        %1484 = vst.msk [vmem:[#allocation4 + $0x10] sm:$0xff] %vm1482, %v1389
        %1485 = vst.msk [vmem:[#allocation4 + $0x20] sm:$0xff] %vm1482, %v1391
        %1486 = vst.msk [vmem:[#allocation4 + $0x30] sm:$0xff] %vm1482, %v1393
        %1487 = vst.msk [vmem:[#allocation4 + $0x40] sm:$0xff] %vm1482, %v1395
        %1488 = vst.msk [vmem:[#allocation4 + $0x50] sm:$0xff] %vm1482, %v1397
        %1489 = vst.msk [vmem:[#allocation4 + $0x60] sm:$0xff] %vm1482, %v1399
        %1490 = vst.msk [vmem:[#allocation4 + $0x70] sm:$0xff] %vm1482, %v1401
        %1491 = vst.msk [vmem:[#allocation4 + $0x80] sm:$0xff] %vm1482, %v1403
        %1492 = vst.msk [vmem:[#allocation4 + $0x90] sm:$0xff] %vm1482, %v1405
        %1493 = vst.msk [vmem:[#allocation4 + $0xa0] sm:$0xff] %vm1482, %v1407
        %1494 = vst.msk [vmem:[#allocation4 + $0xb0] sm:$0xff] %vm1482, %v1409
        %1495 = vst.msk [vmem:[#allocation4 + $0xc0] sm:$0xff] %vm1482, %v1411
        %1496 = vst.msk [vmem:[#allocation4 + $0xd0] sm:$0xff] %vm1482, %v1413
        %1497 = vst.msk [vmem:[#allocation4 + $0xe0] sm:$0xff] %vm1482, %v1415
        %1498 = vst.msk [vmem:[#allocation4 + $0xf0] sm:$0xff] %vm1482, %v1417
        %1499 = vst.msk [vmem:[#allocation4 + $0x100] sm:$0xff] %vm1482, %v1419
        %1500 = vst.msk [vmem:[#allocation4 + $0x110] sm:$0xff] %vm1482, %v1421
        %1501 = vst.msk [vmem:[#allocation4 + $0x120] sm:$0xff] %vm1482, %v1423
        %1502 = vst.msk [vmem:[#allocation4 + $0x130] sm:$0xff] %vm1482, %v1425
        %1503 = vst.msk [vmem:[#allocation4 + $0x140] sm:$0xff] %vm1482, %v1427
        %1504 = vst.msk [vmem:[#allocation4 + $0x150] sm:$0xff] %vm1482, %v1429
        %1505 = vst.msk [vmem:[#allocation4 + $0x160] sm:$0xff] %vm1482, %v1431
        %1506 = vst.msk [vmem:[#allocation4 + $0x170] sm:$0xff] %vm1482, %v1433
        %1507 = vst.msk [vmem:[#allocation4 + $0x180] sm:$0xff] %vm1482, %v1435
        %1508 = vst.msk [vmem:[#allocation4 + $0x190] sm:$0xff] %vm1482, %v1437
        %1509 = vst.msk [vmem:[#allocation4 + $0x1a0] sm:$0xff] %vm1482, %v1439
        %1510 = vst.msk [vmem:[#allocation4 + $0x1b0] sm:$0xff] %vm1482, %v1441
        %1511 = vst.msk [vmem:[#allocation4 + $0x1c0] sm:$0xff] %vm1482, %v1443
        %1512 = vst.msk [vmem:[#allocation4 + $0x1d0] sm:$0xff] %vm1482, %v1445
        %1513 = vst.msk [vmem:[#allocation4 + $0x1e0] sm:$0xff] %vm1482, %v1447
        %1514 = vst.msk [vmem:[#allocation4 + $0x1f0] sm:$0xff] %vm1482, %v1449
        %v1515 = vld [vmem:[%s645 + $0x2] sm:$0xff]
        %v1516 = vld [vmem:[%s645 + $0xa] sm:$0xff]
        %v1517 = vld [vmem:[%s645 + $0x1a] sm:$0xff]
        %v1518 = vld [vmem:[%s645 + $0x22] sm:$0xff]
        %v1519 = vld [vmem:[%s645 + $0x32] sm:$0xff]
        %v1520 = vld [vmem:[%s645 + $0x3a] sm:$0xff]
        %v1521 = vld [vmem:[%s645 + $0x4a] sm:$0xff]
        %v1522 = vld [vmem:[%s645 + $0x52] sm:$0xff]
        %v1523 = vld [vmem:[%s645 + $0x62] sm:$0xff]
        %v1524 = vld [vmem:[%s645 + $0x6a] sm:$0xff]
        %v1525 = vld [vmem:[%s645 + $0x7a] sm:$0xff]
        %v1526 = vld [vmem:[%s645 + $0x82] sm:$0xff]
        %v1527 = vld [vmem:[%s645 + $0x92] sm:$0xff]
        %v1528 = vld [vmem:[%s645 + $0x9a] sm:$0xff]
        %v1529 = vld [vmem:[%s645 + $0xaa] sm:$0xff]
        %v1530 = vld [vmem:[%s645 + $0xb2] sm:$0xff]
        %v1531 = vld [vmem:[%s645 + $0xc2] sm:$0xff]
        %v1532 = vld [vmem:[%s645 + $0xca] sm:$0xff]
        %v1533 = vld [vmem:[%s645 + $0xda] sm:$0xff]
        %v1534 = vld [vmem:[%s645 + $0xe2] sm:$0xff]
        %v1535 = vld [vmem:[%s645 + $0xf2] sm:$0xff]
        %v1536 = vld [vmem:[%s645 + $0xfa] sm:$0xff]
        %v1537 = vld [vmem:[%s645 + $0x10a] sm:$0xff]
        %v1538 = vld [vmem:[%s645 + $0x112] sm:$0xff]
        %v1539 = vld [vmem:[%s645 + $0x122] sm:$0xff]
        %v1540 = vld [vmem:[%s645 + $0x12a] sm:$0xff]
        %v1541 = vld [vmem:[%s645 + $0x13a] sm:$0xff]
        %v1542 = vld [vmem:[%s645 + $0x142] sm:$0xff]
        %v1543 = vld [vmem:[%s645 + $0x152] sm:$0xff]
        %v1544 = vld [vmem:[%s645 + $0x15a] sm:$0xff]
        %v1545 = vld [vmem:[%s645 + $0x16a] sm:$0xff]
        %v1546 = vld [vmem:[%s645 + $0x172] sm:$0xff]
        %1579 = vrot.lane.b32.xlu0 %v1515, 15
        %v1580 = vpop.permute.xlu0 %1579
        %1581 = vrot.lane.b32.xlu0 %v1516, 15
        %v1582 = vpop.permute.xlu0 %1581
        %1583 = vrot.lane.b32.xlu0 %v1517, 15
        %v1584 = vpop.permute.xlu0 %1583
        %1585 = vrot.lane.b32.xlu0 %v1518, 15
        %v1586 = vpop.permute.xlu0 %1585
        %1587 = vrot.lane.b32.xlu0 %v1519, 15
        %v1588 = vpop.permute.xlu0 %1587
        %1589 = vrot.lane.b32.xlu0 %v1520, 15
        %v1590 = vpop.permute.xlu0 %1589
        %1591 = vrot.lane.b32.xlu0 %v1521, 15
        %v1592 = vpop.permute.xlu0 %1591
        %1593 = vrot.lane.b32.xlu0 %v1522, 15
        %v1594 = vpop.permute.xlu0 %1593
        %1595 = vrot.lane.b32.xlu0 %v1523, 15
        %v1596 = vpop.permute.xlu0 %1595
        %1597 = vrot.lane.b32.xlu0 %v1524, 15
        %v1598 = vpop.permute.xlu0 %1597
        %1599 = vrot.lane.b32.xlu0 %v1525, 15
        %v1600 = vpop.permute.xlu0 %1599
        %1601 = vrot.lane.b32.xlu0 %v1526, 15
        %v1602 = vpop.permute.xlu0 %1601
        %1603 = vrot.lane.b32.xlu0 %v1527, 15
        %v1604 = vpop.permute.xlu0 %1603
        %1605 = vrot.lane.b32.xlu0 %v1528, 15
        %v1606 = vpop.permute.xlu0 %1605
        %1607 = vrot.lane.b32.xlu0 %v1529, 15
        %v1608 = vpop.permute.xlu0 %1607
        %1609 = vrot.lane.b32.xlu0 %v1530, 15
        %v1610 = vpop.permute.xlu0 %1609
        %1611 = vrot.lane.b32.xlu0 %v1531, 15
        %v1612 = vpop.permute.xlu0 %1611
        %1613 = vrot.lane.b32.xlu0 %v1532, 15
        %v1614 = vpop.permute.xlu0 %1613
        %1615 = vrot.lane.b32.xlu0 %v1533, 15
        %v1616 = vpop.permute.xlu0 %1615
        %1617 = vrot.lane.b32.xlu0 %v1534, 15
        %v1618 = vpop.permute.xlu0 %1617
        %1619 = vrot.lane.b32.xlu0 %v1535, 15
        %v1620 = vpop.permute.xlu0 %1619
        %1621 = vrot.lane.b32.xlu0 %v1536, 15
        %v1622 = vpop.permute.xlu0 %1621
        %1623 = vrot.lane.b32.xlu0 %v1537, 15
        %v1624 = vpop.permute.xlu0 %1623
        %1625 = vrot.lane.b32.xlu0 %v1538, 15
        %v1626 = vpop.permute.xlu0 %1625
        %1627 = vrot.lane.b32.xlu0 %v1539, 15
        %v1628 = vpop.permute.xlu0 %1627
        %1629 = vrot.lane.b32.xlu0 %v1540, 15
        %v1630 = vpop.permute.xlu0 %1629
        %1631 = vrot.lane.b32.xlu0 %v1541, 15
        %v1632 = vpop.permute.xlu0 %1631
        %1633 = vrot.lane.b32.xlu0 %v1542, 15
        %v1634 = vpop.permute.xlu0 %1633
        %1635 = vrot.lane.b32.xlu0 %v1543, 15
        %v1636 = vpop.permute.xlu0 %1635
        %1637 = vrot.lane.b32.xlu0 %v1544, 15
        %v1638 = vpop.permute.xlu0 %1637
        %1639 = vrot.lane.b32.xlu0 %v1545, 15
        %v1640 = vpop.permute.xlu0 %1639
        %1641 = vrot.lane.b32.xlu0 %v1546, 15
        %v1642 = vpop.permute.xlu0 %1641
        %vm1675 = vcmask 146552
        %1676 = vst.msk [vmem:[#allocation4] sm:$0xff] %vm1675, %v1580
        %1677 = vst.msk [vmem:[#allocation4 + $0x10] sm:$0xff] %vm1675, %v1582
        %1678 = vst.msk [vmem:[#allocation4 + $0x20] sm:$0xff] %vm1675, %v1584
        %1679 = vst.msk [vmem:[#allocation4 + $0x30] sm:$0xff] %vm1675, %v1586
        %1680 = vst.msk [vmem:[#allocation4 + $0x40] sm:$0xff] %vm1675, %v1588
        %1681 = vst.msk [vmem:[#allocation4 + $0x50] sm:$0xff] %vm1675, %v1590
        %1682 = vst.msk [vmem:[#allocation4 + $0x60] sm:$0xff] %vm1675, %v1592
        %1683 = vst.msk [vmem:[#allocation4 + $0x70] sm:$0xff] %vm1675, %v1594
        %1684 = vst.msk [vmem:[#allocation4 + $0x80] sm:$0xff] %vm1675, %v1596
        %1685 = vst.msk [vmem:[#allocation4 + $0x90] sm:$0xff] %vm1675, %v1598
        %1686 = vst.msk [vmem:[#allocation4 + $0xa0] sm:$0xff] %vm1675, %v1600
        %1687 = vst.msk [vmem:[#allocation4 + $0xb0] sm:$0xff] %vm1675, %v1602
        %1688 = vst.msk [vmem:[#allocation4 + $0xc0] sm:$0xff] %vm1675, %v1604
        %1689 = vst.msk [vmem:[#allocation4 + $0xd0] sm:$0xff] %vm1675, %v1606
        %1690 = vst.msk [vmem:[#allocation4 + $0xe0] sm:$0xff] %vm1675, %v1608
        %1691 = vst.msk [vmem:[#allocation4 + $0xf0] sm:$0xff] %vm1675, %v1610
        %1692 = vst.msk [vmem:[#allocation4 + $0x100] sm:$0xff] %vm1675, %v1612
        %1693 = vst.msk [vmem:[#allocation4 + $0x110] sm:$0xff] %vm1675, %v1614
        %1694 = vst.msk [vmem:[#allocation4 + $0x120] sm:$0xff] %vm1675, %v1616
        %1695 = vst.msk [vmem:[#allocation4 + $0x130] sm:$0xff] %vm1675, %v1618
        %1696 = vst.msk [vmem:[#allocation4 + $0x140] sm:$0xff] %vm1675, %v1620
        %1697 = vst.msk [vmem:[#allocation4 + $0x150] sm:$0xff] %vm1675, %v1622
        %1698 = vst.msk [vmem:[#allocation4 + $0x160] sm:$0xff] %vm1675, %v1624
        %1699 = vst.msk [vmem:[#allocation4 + $0x170] sm:$0xff] %vm1675, %v1626
        %1700 = vst.msk [vmem:[#allocation4 + $0x180] sm:$0xff] %vm1675, %v1628
        %1701 = vst.msk [vmem:[#allocation4 + $0x190] sm:$0xff] %vm1675, %v1630
        %1702 = vst.msk [vmem:[#allocation4 + $0x1a0] sm:$0xff] %vm1675, %v1632
        %1703 = vst.msk [vmem:[#allocation4 + $0x1b0] sm:$0xff] %vm1675, %v1634
        %1704 = vst.msk [vmem:[#allocation4 + $0x1c0] sm:$0xff] %vm1675, %v1636
        %1705 = vst.msk [vmem:[#allocation4 + $0x1d0] sm:$0xff] %vm1675, %v1638
        %1706 = vst.msk [vmem:[#allocation4 + $0x1e0] sm:$0xff] %vm1675, %v1640
        %1707 = vst.msk [vmem:[#allocation4 + $0x1f0] sm:$0xff] %vm1675, %v1642
        %s1708 = scalar_lea.vmem [#allocation2], 48
        %v1709 = vld [vmem:[%s1708] sm:$0xff]
        %v1710 = vld [vmem:[%s1708 + $0x8] sm:$0xff]
        %v1711 = vld [vmem:[%s1708 + $0x18] sm:$0xff]
        %v1712 = vld [vmem:[%s1708 + $0x20] sm:$0xff]
        %v1713 = vld [vmem:[%s1708 + $0x30] sm:$0xff]
        %v1714 = vld [vmem:[%s1708 + $0x38] sm:$0xff]
        %v1715 = vld [vmem:[%s1708 + $0x48] sm:$0xff]
        %v1716 = vld [vmem:[%s1708 + $0x50] sm:$0xff]
        %v1717 = vld [vmem:[%s1708 + $0x60] sm:$0xff]
        %v1718 = vld [vmem:[%s1708 + $0x68] sm:$0xff]
        %v1719 = vld [vmem:[%s1708 + $0x78] sm:$0xff]
        %v1720 = vld [vmem:[%s1708 + $0x80] sm:$0xff]
        %v1721 = vld [vmem:[%s1708 + $0x90] sm:$0xff]
        %v1722 = vld [vmem:[%s1708 + $0x98] sm:$0xff]
        %v1723 = vld [vmem:[%s1708 + $0xa8] sm:$0xff]
        %v1724 = vld [vmem:[%s1708 + $0xb0] sm:$0xff]
        %v1725 = vld [vmem:[%s1708 + $0xc0] sm:$0xff]
        %v1726 = vld [vmem:[%s1708 + $0xc8] sm:$0xff]
        %v1727 = vld [vmem:[%s1708 + $0xd8] sm:$0xff]
        %v1728 = vld [vmem:[%s1708 + $0xe0] sm:$0xff]
        %v1729 = vld [vmem:[%s1708 + $0xf0] sm:$0xff]
        %v1730 = vld [vmem:[%s1708 + $0xf8] sm:$0xff]
        %v1731 = vld [vmem:[%s1708 + $0x108] sm:$0xff]
        %v1732 = vld [vmem:[%s1708 + $0x110] sm:$0xff]
        %v1733 = vld [vmem:[%s1708 + $0x120] sm:$0xff]
        %v1734 = vld [vmem:[%s1708 + $0x128] sm:$0xff]
        %v1735 = vld [vmem:[%s1708 + $0x138] sm:$0xff]
        %v1736 = vld [vmem:[%s1708 + $0x140] sm:$0xff]
        %v1737 = vld [vmem:[%s1708 + $0x150] sm:$0xff]
        %v1738 = vld [vmem:[%s1708 + $0x158] sm:$0xff]
        %v1739 = vld [vmem:[%s1708 + $0x168] sm:$0xff]
        %v1740 = vld [vmem:[%s1708 + $0x170] sm:$0xff]
        %1773 = vrot.lane.b32.xlu0 %v1709, 18
        %v1774 = vpop.permute.xlu0 %1773
        %1775 = vrot.lane.b32.xlu0 %v1710, 18
        %v1776 = vpop.permute.xlu0 %1775
        %1777 = vrot.lane.b32.xlu0 %v1711, 18
        %v1778 = vpop.permute.xlu0 %1777
        %1779 = vrot.lane.b32.xlu0 %v1712, 18
        %v1780 = vpop.permute.xlu0 %1779
        %1781 = vrot.lane.b32.xlu0 %v1713, 18
        %v1782 = vpop.permute.xlu0 %1781
        %1783 = vrot.lane.b32.xlu0 %v1714, 18
        %v1784 = vpop.permute.xlu0 %1783
        %1785 = vrot.lane.b32.xlu0 %v1715, 18
        %v1786 = vpop.permute.xlu0 %1785
        %1787 = vrot.lane.b32.xlu0 %v1716, 18
        %v1788 = vpop.permute.xlu0 %1787
        %1789 = vrot.lane.b32.xlu0 %v1717, 18
        %v1790 = vpop.permute.xlu0 %1789
        %1791 = vrot.lane.b32.xlu0 %v1718, 18
        %v1792 = vpop.permute.xlu0 %1791
        %1793 = vrot.lane.b32.xlu0 %v1719, 18
        %v1794 = vpop.permute.xlu0 %1793
        %1795 = vrot.lane.b32.xlu0 %v1720, 18
        %v1796 = vpop.permute.xlu0 %1795
        %1797 = vrot.lane.b32.xlu0 %v1721, 18
        %v1798 = vpop.permute.xlu0 %1797
        %1799 = vrot.lane.b32.xlu0 %v1722, 18
        %v1800 = vpop.permute.xlu0 %1799
        %1801 = vrot.lane.b32.xlu0 %v1723, 18
        %v1802 = vpop.permute.xlu0 %1801
        %1803 = vrot.lane.b32.xlu0 %v1724, 18
        %v1804 = vpop.permute.xlu0 %1803
        %1805 = vrot.lane.b32.xlu0 %v1725, 18
        %v1806 = vpop.permute.xlu0 %1805
        %1807 = vrot.lane.b32.xlu0 %v1726, 18
        %v1808 = vpop.permute.xlu0 %1807
        %1809 = vrot.lane.b32.xlu0 %v1727, 18
        %v1810 = vpop.permute.xlu0 %1809
        %1811 = vrot.lane.b32.xlu0 %v1728, 18
        %v1812 = vpop.permute.xlu0 %1811
        %1813 = vrot.lane.b32.xlu0 %v1729, 18
        %v1814 = vpop.permute.xlu0 %1813
        %1815 = vrot.lane.b32.xlu0 %v1730, 18
        %v1816 = vpop.permute.xlu0 %1815
        %1817 = vrot.lane.b32.xlu0 %v1731, 18
        %v1818 = vpop.permute.xlu0 %1817
        %1819 = vrot.lane.b32.xlu0 %v1732, 18
        %v1820 = vpop.permute.xlu0 %1819
        %1821 = vrot.lane.b32.xlu0 %v1733, 18
        %v1822 = vpop.permute.xlu0 %1821
        %1823 = vrot.lane.b32.xlu0 %v1734, 18
        %v1824 = vpop.permute.xlu0 %1823
        %1825 = vrot.lane.b32.xlu0 %v1735, 18
        %v1826 = vpop.permute.xlu0 %1825
        %1827 = vrot.lane.b32.xlu0 %v1736, 18
        %v1828 = vpop.permute.xlu0 %1827
        %1829 = vrot.lane.b32.xlu0 %v1737, 18
        %v1830 = vpop.permute.xlu0 %1829
        %1831 = vrot.lane.b32.xlu0 %v1738, 18
        %v1832 = vpop.permute.xlu0 %1831
        %1833 = vrot.lane.b32.xlu0 %v1739, 18
        %v1834 = vpop.permute.xlu0 %1833
        %1835 = vrot.lane.b32.xlu0 %v1740, 18
        %v1836 = vpop.permute.xlu0 %1835
        %vm1869 = vcmask 171152
        %1870 = vst.msk [vmem:[#allocation4] sm:$0xff] %vm1869, %v1774
        %1871 = vst.msk [vmem:[#allocation4 + $0x10] sm:$0xff] %vm1869, %v1776
        %1872 = vst.msk [vmem:[#allocation4 + $0x20] sm:$0xff] %vm1869, %v1778
        %1873 = vst.msk [vmem:[#allocation4 + $0x30] sm:$0xff] %vm1869, %v1780
        %1874 = vst.msk [vmem:[#allocation4 + $0x40] sm:$0xff] %vm1869, %v1782
        %1875 = vst.msk [vmem:[#allocation4 + $0x50] sm:$0xff] %vm1869, %v1784
        %1876 = vst.msk [vmem:[#allocation4 + $0x60] sm:$0xff] %vm1869, %v1786
        %1877 = vst.msk [vmem:[#allocation4 + $0x70] sm:$0xff] %vm1869, %v1788
        %1878 = vst.msk [vmem:[#allocation4 + $0x80] sm:$0xff] %vm1869, %v1790
        %1879 = vst.msk [vmem:[#allocation4 + $0x90] sm:$0xff] %vm1869, %v1792
        %1880 = vst.msk [vmem:[#allocation4 + $0xa0] sm:$0xff] %vm1869, %v1794
        %1881 = vst.msk [vmem:[#allocation4 + $0xb0] sm:$0xff] %vm1869, %v1796
        %1882 = vst.msk [vmem:[#allocation4 + $0xc0] sm:$0xff] %vm1869, %v1798
        %1883 = vst.msk [vmem:[#allocation4 + $0xd0] sm:$0xff] %vm1869, %v1800
        %1884 = vst.msk [vmem:[#allocation4 + $0xe0] sm:$0xff] %vm1869, %v1802
        %1885 = vst.msk [vmem:[#allocation4 + $0xf0] sm:$0xff] %vm1869, %v1804
        %1886 = vst.msk [vmem:[#allocation4 + $0x100] sm:$0xff] %vm1869, %v1806
        %1887 = vst.msk [vmem:[#allocation4 + $0x110] sm:$0xff] %vm1869, %v1808
        %1888 = vst.msk [vmem:[#allocation4 + $0x120] sm:$0xff] %vm1869, %v1810
        %1889 = vst.msk [vmem:[#allocation4 + $0x130] sm:$0xff] %vm1869, %v1812
        %1890 = vst.msk [vmem:[#allocation4 + $0x140] sm:$0xff] %vm1869, %v1814
        %1891 = vst.msk [vmem:[#allocation4 + $0x150] sm:$0xff] %vm1869, %v1816
        %1892 = vst.msk [vmem:[#allocation4 + $0x160] sm:$0xff] %vm1869, %v1818
        %1893 = vst.msk [vmem:[#allocation4 + $0x170] sm:$0xff] %vm1869, %v1820
        %1894 = vst.msk [vmem:[#allocation4 + $0x180] sm:$0xff] %vm1869, %v1822
        %1895 = vst.msk [vmem:[#allocation4 + $0x190] sm:$0xff] %vm1869, %v1824
        %1896 = vst.msk [vmem:[#allocation4 + $0x1a0] sm:$0xff] %vm1869, %v1826
        %1897 = vst.msk [vmem:[#allocation4 + $0x1b0] sm:$0xff] %vm1869, %v1828
        %1898 = vst.msk [vmem:[#allocation4 + $0x1c0] sm:$0xff] %vm1869, %v1830
        %1899 = vst.msk [vmem:[#allocation4 + $0x1d0] sm:$0xff] %vm1869, %v1832
        %1900 = vst.msk [vmem:[#allocation4 + $0x1e0] sm:$0xff] %vm1869, %v1834
        %1901 = vst.msk [vmem:[#allocation4 + $0x1f0] sm:$0xff] %vm1869, %v1836
        %v1902 = vld [vmem:[%s1708 + $0x1] sm:$0xff]
        %v1903 = vld [vmem:[%s1708 + $0x9] sm:$0xff]
        %v1904 = vld [vmem:[%s1708 + $0x19] sm:$0xff]
        %v1905 = vld [vmem:[%s1708 + $0x21] sm:$0xff]
        %v1906 = vld [vmem:[%s1708 + $0x31] sm:$0xff]
        %v1907 = vld [vmem:[%s1708 + $0x39] sm:$0xff]
        %v1908 = vld [vmem:[%s1708 + $0x49] sm:$0xff]
        %v1909 = vld [vmem:[%s1708 + $0x51] sm:$0xff]
        %v1910 = vld [vmem:[%s1708 + $0x61] sm:$0xff]
        %v1911 = vld [vmem:[%s1708 + $0x69] sm:$0xff]
        %v1912 = vld [vmem:[%s1708 + $0x79] sm:$0xff]
        %v1913 = vld [vmem:[%s1708 + $0x81] sm:$0xff]
        %v1914 = vld [vmem:[%s1708 + $0x91] sm:$0xff]
        %v1915 = vld [vmem:[%s1708 + $0x99] sm:$0xff]
        %v1916 = vld [vmem:[%s1708 + $0xa9] sm:$0xff]
        %v1917 = vld [vmem:[%s1708 + $0xb1] sm:$0xff]
        %v1918 = vld [vmem:[%s1708 + $0xc1] sm:$0xff]
        %v1919 = vld [vmem:[%s1708 + $0xc9] sm:$0xff]
        %v1920 = vld [vmem:[%s1708 + $0xd9] sm:$0xff]
        %v1921 = vld [vmem:[%s1708 + $0xe1] sm:$0xff]
        %v1922 = vld [vmem:[%s1708 + $0xf1] sm:$0xff]
        %v1923 = vld [vmem:[%s1708 + $0xf9] sm:$0xff]
        %v1924 = vld [vmem:[%s1708 + $0x109] sm:$0xff]
        %v1925 = vld [vmem:[%s1708 + $0x111] sm:$0xff]
        %v1926 = vld [vmem:[%s1708 + $0x121] sm:$0xff]
        %v1927 = vld [vmem:[%s1708 + $0x129] sm:$0xff]
        %v1928 = vld [vmem:[%s1708 + $0x139] sm:$0xff]
        %v1929 = vld [vmem:[%s1708 + $0x141] sm:$0xff]
        %v1930 = vld [vmem:[%s1708 + $0x151] sm:$0xff]
        %v1931 = vld [vmem:[%s1708 + $0x159] sm:$0xff]
        %v1932 = vld [vmem:[%s1708 + $0x169] sm:$0xff]
        %v1933 = vld [vmem:[%s1708 + $0x171] sm:$0xff]
        %1966 = vrot.lane.b32.xlu0 %v1902, 21
        %v1967 = vpop.permute.xlu0 %1966
        %1968 = vrot.lane.b32.xlu0 %v1903, 21
        %v1969 = vpop.permute.xlu0 %1968
        %1970 = vrot.lane.b32.xlu0 %v1904, 21
        %v1971 = vpop.permute.xlu0 %1970
        %1972 = vrot.lane.b32.xlu0 %v1905, 21
        %v1973 = vpop.permute.xlu0 %1972
        %1974 = vrot.lane.b32.xlu0 %v1906, 21
        %v1975 = vpop.permute.xlu0 %1974
        %1976 = vrot.lane.b32.xlu0 %v1907, 21
        %v1977 = vpop.permute.xlu0 %1976
        %1978 = vrot.lane.b32.xlu0 %v1908, 21
        %v1979 = vpop.permute.xlu0 %1978
        %1980 = vrot.lane.b32.xlu0 %v1909, 21
        %v1981 = vpop.permute.xlu0 %1980
        %1982 = vrot.lane.b32.xlu0 %v1910, 21
        %v1983 = vpop.permute.xlu0 %1982
        %1984 = vrot.lane.b32.xlu0 %v1911, 21
        %v1985 = vpop.permute.xlu0 %1984
        %1986 = vrot.lane.b32.xlu0 %v1912, 21
        %v1987 = vpop.permute.xlu0 %1986
        %1988 = vrot.lane.b32.xlu0 %v1913, 21
        %v1989 = vpop.permute.xlu0 %1988
        %1990 = vrot.lane.b32.xlu0 %v1914, 21
        %v1991 = vpop.permute.xlu0 %1990
        %1992 = vrot.lane.b32.xlu0 %v1915, 21
        %v1993 = vpop.permute.xlu0 %1992
        %1994 = vrot.lane.b32.xlu0 %v1916, 21
        %v1995 = vpop.permute.xlu0 %1994
        %1996 = vrot.lane.b32.xlu0 %v1917, 21
        %v1997 = vpop.permute.xlu0 %1996
        %1998 = vrot.lane.b32.xlu0 %v1918, 21
        %v1999 = vpop.permute.xlu0 %1998
        %2000 = vrot.lane.b32.xlu0 %v1919, 21
        %v2001 = vpop.permute.xlu0 %2000
        %2002 = vrot.lane.b32.xlu0 %v1920, 21
        %v2003 = vpop.permute.xlu0 %2002
        %2004 = vrot.lane.b32.xlu0 %v1921, 21
        %v2005 = vpop.permute.xlu0 %2004
        %2006 = vrot.lane.b32.xlu0 %v1922, 21
        %v2007 = vpop.permute.xlu0 %2006
        %2008 = vrot.lane.b32.xlu0 %v1923, 21
        %v2009 = vpop.permute.xlu0 %2008
        %2010 = vrot.lane.b32.xlu0 %v1924, 21
        %v2011 = vpop.permute.xlu0 %2010
        %2012 = vrot.lane.b32.xlu0 %v1925, 21
        %v2013 = vpop.permute.xlu0 %2012
        %2014 = vrot.lane.b32.xlu0 %v1926, 21
        %v2015 = vpop.permute.xlu0 %2014
        %2016 = vrot.lane.b32.xlu0 %v1927, 21
        %v2017 = vpop.permute.xlu0 %2016
        %2018 = vrot.lane.b32.xlu0 %v1928, 21
        %v2019 = vpop.permute.xlu0 %2018
        %2020 = vrot.lane.b32.xlu0 %v1929, 21
        %v2021 = vpop.permute.xlu0 %2020
        %2022 = vrot.lane.b32.xlu0 %v1930, 21
        %v2023 = vpop.permute.xlu0 %2022
        %2024 = vrot.lane.b32.xlu0 %v1931, 21
        %v2025 = vpop.permute.xlu0 %2024
        %2026 = vrot.lane.b32.xlu0 %v1932, 21
        %v2027 = vpop.permute.xlu0 %2026
        %2028 = vrot.lane.b32.xlu0 %v1933, 21
        %v2029 = vpop.permute.xlu0 %2028
        %vm2062 = vcmask 195752
        %2063 = vst.msk [vmem:[#allocation4] sm:$0xff] %vm2062, %v1967
        %2064 = vst.msk [vmem:[#allocation4 + $0x10] sm:$0xff] %vm2062, %v1969
        %2065 = vst.msk [vmem:[#allocation4 + $0x20] sm:$0xff] %vm2062, %v1971
        %2066 = vst.msk [vmem:[#allocation4 + $0x30] sm:$0xff] %vm2062, %v1973
        %2067 = vst.msk [vmem:[#allocation4 + $0x40] sm:$0xff] %vm2062, %v1975
        %2068 = vst.msk [vmem:[#allocation4 + $0x50] sm:$0xff] %vm2062, %v1977
        %2069 = vst.msk [vmem:[#allocation4 + $0x60] sm:$0xff] %vm2062, %v1979
        %2070 = vst.msk [vmem:[#allocation4 + $0x70] sm:$0xff] %vm2062, %v1981
        %2071 = vst.msk [vmem:[#allocation4 + $0x80] sm:$0xff] %vm2062, %v1983
        %2072 = vst.msk [vmem:[#allocation4 + $0x90] sm:$0xff] %vm2062, %v1985
        %2073 = vst.msk [vmem:[#allocation4 + $0xa0] sm:$0xff] %vm2062, %v1987
        %2074 = vst.msk [vmem:[#allocation4 + $0xb0] sm:$0xff] %vm2062, %v1989
        %2075 = vst.msk [vmem:[#allocation4 + $0xc0] sm:$0xff] %vm2062, %v1991
        %2076 = vst.msk [vmem:[#allocation4 + $0xd0] sm:$0xff] %vm2062, %v1993
        %2077 = vst.msk [vmem:[#allocation4 + $0xe0] sm:$0xff] %vm2062, %v1995
        %2078 = vst.msk [vmem:[#allocation4 + $0xf0] sm:$0xff] %vm2062, %v1997
        %2079 = vst.msk [vmem:[#allocation4 + $0x100] sm:$0xff] %vm2062, %v1999
        %2080 = vst.msk [vmem:[#allocation4 + $0x110] sm:$0xff] %vm2062, %v2001
        %2081 = vst.msk [vmem:[#allocation4 + $0x120] sm:$0xff] %vm2062, %v2003
        %2082 = vst.msk [vmem:[#allocation4 + $0x130] sm:$0xff] %vm2062, %v2005
        %2083 = vst.msk [vmem:[#allocation4 + $0x140] sm:$0xff] %vm2062, %v2007
        %2084 = vst.msk [vmem:[#allocation4 + $0x150] sm:$0xff] %vm2062, %v2009
        %2085 = vst.msk [vmem:[#allocation4 + $0x160] sm:$0xff] %vm2062, %v2011
        %2086 = vst.msk [vmem:[#allocation4 + $0x170] sm:$0xff] %vm2062, %v2013
        %2087 = vst.msk [vmem:[#allocation4 + $0x180] sm:$0xff] %vm2062, %v2015
        %2088 = vst.msk [vmem:[#allocation4 + $0x190] sm:$0xff] %vm2062, %v2017
        %2089 = vst.msk [vmem:[#allocation4 + $0x1a0] sm:$0xff] %vm2062, %v2019
        %2090 = vst.msk [vmem:[#allocation4 + $0x1b0] sm:$0xff] %vm2062, %v2021
        %2091 = vst.msk [vmem:[#allocation4 + $0x1c0] sm:$0xff] %vm2062, %v2023
        %2092 = vst.msk [vmem:[#allocation4 + $0x1d0] sm:$0xff] %vm2062, %v2025
        %2093 = vst.msk [vmem:[#allocation4 + $0x1e0] sm:$0xff] %vm2062, %v2027
        %2094 = vst.msk [vmem:[#allocation4 + $0x1f0] sm:$0xff] %vm2062, %v2029
        %v2095 = vld [vmem:[%s1708 + $0x2] sm:$0xff]
        %v2096 = vld [vmem:[%s1708 + $0xa] sm:$0xff]
        %v2097 = vld [vmem:[%s1708 + $0x1a] sm:$0xff]
        %v2098 = vld [vmem:[%s1708 + $0x22] sm:$0xff]
        %v2099 = vld [vmem:[%s1708 + $0x32] sm:$0xff]
        %v2100 = vld [vmem:[%s1708 + $0x3a] sm:$0xff]
        %v2101 = vld [vmem:[%s1708 + $0x4a] sm:$0xff]
        %v2102 = vld [vmem:[%s1708 + $0x52] sm:$0xff]
        %v2103 = vld [vmem:[%s1708 + $0x62] sm:$0xff]
        %v2104 = vld [vmem:[%s1708 + $0x6a] sm:$0xff]
        %v2105 = vld [vmem:[%s1708 + $0x7a] sm:$0xff]
        %v2106 = vld [vmem:[%s1708 + $0x82] sm:$0xff]
        %v2107 = vld [vmem:[%s1708 + $0x92] sm:$0xff]
        %v2108 = vld [vmem:[%s1708 + $0x9a] sm:$0xff]
        %v2109 = vld [vmem:[%s1708 + $0xaa] sm:$0xff]
        %v2110 = vld [vmem:[%s1708 + $0xb2] sm:$0xff]
        %v2111 = vld [vmem:[%s1708 + $0xc2] sm:$0xff]
        %v2112 = vld [vmem:[%s1708 + $0xca] sm:$0xff]
        %v2113 = vld [vmem:[%s1708 + $0xda] sm:$0xff]
        %v2114 = vld [vmem:[%s1708 + $0xe2] sm:$0xff]
        %v2115 = vld [vmem:[%s1708 + $0xf2] sm:$0xff]
        %v2116 = vld [vmem:[%s1708 + $0xfa] sm:$0xff]
        %v2117 = vld [vmem:[%s1708 + $0x10a] sm:$0xff]
        %v2118 = vld [vmem:[%s1708 + $0x112] sm:$0xff]
        %v2119 = vld [vmem:[%s1708 + $0x122] sm:$0xff]
        %v2120 = vld [vmem:[%s1708 + $0x12a] sm:$0xff]
        %v2121 = vld [vmem:[%s1708 + $0x13a] sm:$0xff]
        %v2122 = vld [vmem:[%s1708 + $0x142] sm:$0xff]
        %v2123 = vld [vmem:[%s1708 + $0x152] sm:$0xff]
        %v2124 = vld [vmem:[%s1708 + $0x15a] sm:$0xff]
        %v2125 = vld [vmem:[%s1708 + $0x16a] sm:$0xff]
        %v2126 = vld [vmem:[%s1708 + $0x172] sm:$0xff]
        %2159 = vrot.lane.b32.xlu0 %v2095, 24
        %v2160 = vpop.permute.xlu0 %2159
        %2161 = vrot.lane.b32.xlu0 %v2096, 24
        %v2162 = vpop.permute.xlu0 %2161
        %2163 = vrot.lane.b32.xlu0 %v2097, 24
        %v2164 = vpop.permute.xlu0 %2163
        %2165 = vrot.lane.b32.xlu0 %v2098, 24
        %v2166 = vpop.permute.xlu0 %2165
        %2167 = vrot.lane.b32.xlu0 %v2099, 24
        %v2168 = vpop.permute.xlu0 %2167
        %2169 = vrot.lane.b32.xlu0 %v2100, 24
        %v2170 = vpop.permute.xlu0 %2169
        %2171 = vrot.lane.b32.xlu0 %v2101, 24
        %v2172 = vpop.permute.xlu0 %2171
        %2173 = vrot.lane.b32.xlu0 %v2102, 24
        %v2174 = vpop.permute.xlu0 %2173
        %2175 = vrot.lane.b32.xlu0 %v2103, 24
        %v2176 = vpop.permute.xlu0 %2175
        %2177 = vrot.lane.b32.xlu0 %v2104, 24
        %v2178 = vpop.permute.xlu0 %2177
        %2179 = vrot.lane.b32.xlu0 %v2105, 24
        %v2180 = vpop.permute.xlu0 %2179
        %2181 = vrot.lane.b32.xlu0 %v2106, 24
        %v2182 = vpop.permute.xlu0 %2181
        %2183 = vrot.lane.b32.xlu0 %v2107, 24
        %v2184 = vpop.permute.xlu0 %2183
        %2185 = vrot.lane.b32.xlu0 %v2108, 24
        %v2186 = vpop.permute.xlu0 %2185
        %2187 = vrot.lane.b32.xlu0 %v2109, 24
        %v2188 = vpop.permute.xlu0 %2187
        %2189 = vrot.lane.b32.xlu0 %v2110, 24
        %v2190 = vpop.permute.xlu0 %2189
        %2191 = vrot.lane.b32.xlu0 %v2111, 24
        %v2192 = vpop.permute.xlu0 %2191
        %2193 = vrot.lane.b32.xlu0 %v2112, 24
        %v2194 = vpop.permute.xlu0 %2193
        %2195 = vrot.lane.b32.xlu0 %v2113, 24
        %v2196 = vpop.permute.xlu0 %2195
        %2197 = vrot.lane.b32.xlu0 %v2114, 24
        %v2198 = vpop.permute.xlu0 %2197
        %2199 = vrot.lane.b32.xlu0 %v2115, 24
        %v2200 = vpop.permute.xlu0 %2199
        %2201 = vrot.lane.b32.xlu0 %v2116, 24
        %v2202 = vpop.permute.xlu0 %2201
        %2203 = vrot.lane.b32.xlu0 %v2117, 24
        %v2204 = vpop.permute.xlu0 %2203
        %2205 = vrot.lane.b32.xlu0 %v2118, 24
        %v2206 = vpop.permute.xlu0 %2205
        %2207 = vrot.lane.b32.xlu0 %v2119, 24
        %v2208 = vpop.permute.xlu0 %2207
        %2209 = vrot.lane.b32.xlu0 %v2120, 24
        %v2210 = vpop.permute.xlu0 %2209
        %2211 = vrot.lane.b32.xlu0 %v2121, 24
        %v2212 = vpop.permute.xlu0 %2211
        %2213 = vrot.lane.b32.xlu0 %v2122, 24
        %v2214 = vpop.permute.xlu0 %2213
        %2215 = vrot.lane.b32.xlu0 %v2123, 24
        %v2216 = vpop.permute.xlu0 %2215
        %2217 = vrot.lane.b32.xlu0 %v2124, 24
        %v2218 = vpop.permute.xlu0 %2217
        %2219 = vrot.lane.b32.xlu0 %v2125, 24
        %v2220 = vpop.permute.xlu0 %2219
        %2221 = vrot.lane.b32.xlu0 %v2126, 24
        %v2222 = vpop.permute.xlu0 %2221
        %vm2255 = vcmask 220352
        %2256 = vst.msk [vmem:[#allocation4] sm:$0xff] %vm2255, %v2160
        %2257 = vst.msk [vmem:[#allocation4 + $0x10] sm:$0xff] %vm2255, %v2162
        %2258 = vst.msk [vmem:[#allocation4 + $0x20] sm:$0xff] %vm2255, %v2164
        %2259 = vst.msk [vmem:[#allocation4 + $0x30] sm:$0xff] %vm2255, %v2166
        %2260 = vst.msk [vmem:[#allocation4 + $0x40] sm:$0xff] %vm2255, %v2168
        %2261 = vst.msk [vmem:[#allocation4 + $0x50] sm:$0xff] %vm2255, %v2170
        %2262 = vst.msk [vmem:[#allocation4 + $0x60] sm:$0xff] %vm2255, %v2172
        %2263 = vst.msk [vmem:[#allocation4 + $0x70] sm:$0xff] %vm2255, %v2174
        %2264 = vst.msk [vmem:[#allocation4 + $0x80] sm:$0xff] %vm2255, %v2176
        %2265 = vst.msk [vmem:[#allocation4 + $0x90] sm:$0xff] %vm2255, %v2178
        %2266 = vst.msk [vmem:[#allocation4 + $0xa0] sm:$0xff] %vm2255, %v2180
        %2267 = vst.msk [vmem:[#allocation4 + $0xb0] sm:$0xff] %vm2255, %v2182
        %2268 = vst.msk [vmem:[#allocation4 + $0xc0] sm:$0xff] %vm2255, %v2184
        %2269 = vst.msk [vmem:[#allocation4 + $0xd0] sm:$0xff] %vm2255, %v2186
        %2270 = vst.msk [vmem:[#allocation4 + $0xe0] sm:$0xff] %vm2255, %v2188
        %2271 = vst.msk [vmem:[#allocation4 + $0xf0] sm:$0xff] %vm2255, %v2190
        %2272 = vst.msk [vmem:[#allocation4 + $0x100] sm:$0xff] %vm2255, %v2192
        %2273 = vst.msk [vmem:[#allocation4 + $0x110] sm:$0xff] %vm2255, %v2194
        %2274 = vst.msk [vmem:[#allocation4 + $0x120] sm:$0xff] %vm2255, %v2196
        %2275 = vst.msk [vmem:[#allocation4 + $0x130] sm:$0xff] %vm2255, %v2198
        %2276 = vst.msk [vmem:[#allocation4 + $0x140] sm:$0xff] %vm2255, %v2200
        %2277 = vst.msk [vmem:[#allocation4 + $0x150] sm:$0xff] %vm2255, %v2202
        %2278 = vst.msk [vmem:[#allocation4 + $0x160] sm:$0xff] %vm2255, %v2204
        %2279 = vst.msk [vmem:[#allocation4 + $0x170] sm:$0xff] %vm2255, %v2206
        %2280 = vst.msk [vmem:[#allocation4 + $0x180] sm:$0xff] %vm2255, %v2208
        %2281 = vst.msk [vmem:[#allocation4 + $0x190] sm:$0xff] %vm2255, %v2210
        %2282 = vst.msk [vmem:[#allocation4 + $0x1a0] sm:$0xff] %vm2255, %v2212
        %2283 = vst.msk [vmem:[#allocation4 + $0x1b0] sm:$0xff] %vm2255, %v2214
        %2284 = vst.msk [vmem:[#allocation4 + $0x1c0] sm:$0xff] %vm2255, %v2216
        %2285 = vst.msk [vmem:[#allocation4 + $0x1d0] sm:$0xff] %vm2255, %v2218
        %2286 = vst.msk [vmem:[#allocation4 + $0x1e0] sm:$0xff] %vm2255, %v2220
        %2287 = vst.msk [vmem:[#allocation4 + $0x1f0] sm:$0xff] %vm2255, %v2222
        %v2288 = vld [vmem:[#allocation4] sm:$0xff]
        %v2289 = vld [vmem:[#allocation4 + $0x10] sm:$0xff]
        %v2290 = vld [vmem:[#allocation4 + $0x20] sm:$0xff]
        %v2291 = vld [vmem:[#allocation4 + $0x30] sm:$0xff]
        %v2292 = vld [vmem:[#allocation4 + $0x40] sm:$0xff]
        %v2293 = vld [vmem:[#allocation4 + $0x50] sm:$0xff]
        %v2294 = vld [vmem:[#allocation4 + $0x60] sm:$0xff]
        %v2295 = vld [vmem:[#allocation4 + $0x70] sm:$0xff]
        %v2296 = vld [vmem:[#allocation4 + $0x80] sm:$0xff]
        %v2297 = vld [vmem:[#allocation4 + $0x90] sm:$0xff]
        %v2298 = vld [vmem:[#allocation4 + $0xa0] sm:$0xff]
        %v2299 = vld [vmem:[#allocation4 + $0xb0] sm:$0xff]
        %v2300 = vld [vmem:[#allocation4 + $0xc0] sm:$0xff]
        %v2301 = vld [vmem:[#allocation4 + $0xd0] sm:$0xff]
        %v2302 = vld [vmem:[#allocation4 + $0xe0] sm:$0xff]
        %v2303 = vld [vmem:[#allocation4 + $0xf0] sm:$0xff]
        %v2304 = vld [vmem:[#allocation4 + $0x100] sm:$0xff]
        %v2305 = vld [vmem:[#allocation4 + $0x110] sm:$0xff]
        %v2306 = vld [vmem:[#allocation4 + $0x120] sm:$0xff]
        %v2307 = vld [vmem:[#allocation4 + $0x130] sm:$0xff]
        %v2308 = vld [vmem:[#allocation4 + $0x140] sm:$0xff]
        %v2309 = vld [vmem:[#allocation4 + $0x150] sm:$0xff]
        %v2310 = vld [vmem:[#allocation4 + $0x160] sm:$0xff]
        %v2311 = vld [vmem:[#allocation4 + $0x170] sm:$0xff]
        %v2312 = vld [vmem:[#allocation4 + $0x180] sm:$0xff]
        %v2313 = vld [vmem:[#allocation4 + $0x190] sm:$0xff]
        %v2314 = vld [vmem:[#allocation4 + $0x1a0] sm:$0xff]
        %v2315 = vld [vmem:[#allocation4 + $0x1b0] sm:$0xff]
        %v2316 = vld [vmem:[#allocation4 + $0x1c0] sm:$0xff]
        %v2317 = vld [vmem:[#allocation4 + $0x1d0] sm:$0xff]
        %v2318 = vld [vmem:[#allocation4 + $0x1e0] sm:$0xff]
        %v2319 = vld [vmem:[#allocation4 + $0x1f0] sm:$0xff]
        %v2320 = vpack.c.bf16 %v2289, %v2288
        %v2321 = vpack.c.bf16 %v2291, %v2290
        %v2322 = vpack.c.bf16 %v2293, %v2292
        %v2323 = vpack.c.bf16 %v2295, %v2294
        %v2324 = vpack.c.bf16 %v2297, %v2296
        %v2325 = vpack.c.bf16 %v2299, %v2298
        %v2326 = vpack.c.bf16 %v2301, %v2300
        %v2327 = vpack.c.bf16 %v2303, %v2302
        %v2328 = vpack.c.bf16 %v2305, %v2304
        %v2329 = vpack.c.bf16 %v2307, %v2306
        %v2330 = vpack.c.bf16 %v2309, %v2308
        %v2331 = vpack.c.bf16 %v2311, %v2310
        %v2332 = vpack.c.bf16 %v2313, %v2312
        %v2333 = vpack.c.bf16 %v2315, %v2314
        %v2334 = vpack.c.bf16 %v2317, %v2316
        %v2335 = vpack.c.bf16 %v2319, %v2318
        %v2336 = vld [vmem:[%s1] sm:$0xf]
        %v2337 = vld [vmem:[%s1 + $0x4] sm:$0xf]
        %v2338 = vld [vmem:[%s1 + $0x8] sm:$0xf]
        %v2339 = vld [vmem:[%s1 + $0xc] sm:$0x3]
        %v2340 = vld [vmem:[#allocation5] sm:$0x1]
        %v2342 = vlaneseq
        %v2343 = vshrl.u32 %v2342, 7
        %v2344 = vsub.s32 0, %v2343
        %v2345 = vrot.slane %v2340, %v2344
        %v2351 = vunpack.c.l.b16 %v2336
        %v2352 = vunpack.c.l.b16 %v2337
        %v2353 = vunpack.c.l.b16 %v2338
        %v2354 = vunpack.c.l.b16 %v2339
        %v2355 = vpack.c.b16 %v2352, %v2351
        %v2356 = vpack.c.b16 %v2354, %v2353
        %vm2358 = vcmask 220160
        %v2360 = vsel %vm2358, %v2320, 0
        %v2363 = vsel %vm2358, %v2321, 0
        %v2366 = vsel %vm2358, %v2322, 0
        %v2369 = vsel %vm2358, %v2323, 0
        %v2372 = vsel %vm2358, %v2324, 0
        %v2375 = vsel %vm2358, %v2325, 0
        %v2378 = vsel %vm2358, %v2326, 0
        %v2381 = vsel %vm2358, %v2327, 0
        %v2384 = vsel %vm2358, %v2328, 0
        %v2387 = vsel %vm2358, %v2329, 0
        %v2390 = vsel %vm2358, %v2330, 0
        %v2393 = vsel %vm2358, %v2331, 0
        %v2396 = vsel %vm2358, %v2332, 0
        %v2399 = vsel %vm2358, %v2333, 0
        %v2402 = vsel %vm2358, %v2334, 0
        %v2405 = vsel %vm2358, %v2335, 0
        %vm2407 = vcmask 1044480
        %vm2408 = vcmask 1045504
        %v2409 = vsel %vm2407, 4294967295, 65535
        %v2410 = vsel %vm2408, %v2409, 0
        %v2412 = vand.u32 %v2356, %v2410
        %2414 = vmatprep.subr.bf16.mxu0 0
        %2415 = vmatpush1.bf16.msra.mxu0 0
        %2416 = vmatprep.subr.bf16.mxu0 0
        %2417 = vmatpush1.bf16.msra.mxu0 0
        %2418 = vmatprep.subr.bf16.mxu0 0
        %2419 = vmatpush1.bf16.msra.mxu0 0
        %2420 = vmatprep.subr.bf16.mxu0 0
        %2421 = vmatpush1.bf16.msra.mxu0 0
        %2422 = vmatprep.subr.bf16.mxu0 0
        %2423 = vmatpush1.bf16.msra.mxu0 0
        %2424 = vmatprep.subr.bf16.mxu0 0
        %2425 = vmatpush1.bf16.msra.mxu0 0
        %2426 = vmatprep.subr.bf16.mxu0 0
        %2427 = vmatpush1.bf16.msra.mxu0 %v2412
        %2428 = vmatprep.subr.bf16.mxu0 0
        %2429 = vmatpush1.bf16.msra.mxu0 %v2355
        %2430 = vmatprep.subr.bf16.mxu0 0
        %2431 = vmatpush2.bf16.msra.mxu0 0
        %2432 = vmatprep.subr.bf16.mxu0 0
        %2433 = vmatpush2.bf16.msra.mxu0 0
        %2434 = vmatprep.subr.bf16.mxu0 0
        %2435 = vmatpush2.bf16.msra.mxu0 0
        %2436 = vmatprep.subr.bf16.mxu0 0
        %2437 = vmatpush2.bf16.msra.mxu0 0
        %2438 = vmatprep.subr.bf16.mxu0 0
        %2439 = vmatpush2.bf16.msra.mxu0 0
        %2440 = vmatprep.subr.bf16.mxu0 0
        %2441 = vmatpush2.bf16.msra.mxu0 0
        %2442 = vmatprep.subr.bf16.mxu0 0
        %2443 = vmatpush2.bf16.msra.mxu0 0
        %2444 = vmatprep.subr.bf16.mxu0 0
        %2445 = vmatpush2.bf16.msra.mxu0 0
        %2446 = vmatprep.mubr.bf16.mxu0 0
        %2447 = vmatmul.mubr.bf16.gmra.mxu0 %v2360
        %v2448 = vpop.f32.mrf.mxu0
        %v2449 = vadd.f32 %v2345, %v2448
        %v2450 = vpop.f32.mrf.mxu0
        %v2451 = vpop.f32.mrf.mxu0
        %v2452 = vadd.f32 %v2345, %v2451
        %v2453 = vpop.f32.mrf.mxu0
        %2454 = vmatprep.mubr.bf16.mxu0 0
        %2455 = vmatmul.mubr.bf16.gmra.mxu0 %v2363
        %v2456 = vpop.f32.mrf.mxu0
        %v2457 = vadd.f32 %v2345, %v2456
        %v2458 = vpop.f32.mrf.mxu0
        %v2459 = vpop.f32.mrf.mxu0
        %v2460 = vadd.f32 %v2345, %v2459
        %v2461 = vpop.f32.mrf.mxu0
        %2462 = vmatprep.mubr.bf16.mxu0 0
        %2463 = vmatmul.mubr.bf16.gmra.mxu0 %v2366
        %v2464 = vpop.f32.mrf.mxu0
        %v2465 = vadd.f32 %v2345, %v2464
        %v2466 = vpop.f32.mrf.mxu0
        %v2467 = vpop.f32.mrf.mxu0
        %v2468 = vadd.f32 %v2345, %v2467
        %v2469 = vpop.f32.mrf.mxu0
        %2470 = vmatprep.mubr.bf16.mxu0 0
        %2471 = vmatmul.mubr.bf16.gmra.mxu0 %v2369
        %v2472 = vpop.f32.mrf.mxu0
        %v2473 = vadd.f32 %v2345, %v2472
        %v2474 = vpop.f32.mrf.mxu0
        %v2475 = vpop.f32.mrf.mxu0
        %v2476 = vadd.f32 %v2345, %v2475
        %v2477 = vpop.f32.mrf.mxu0
        %2478 = vmatprep.mubr.bf16.mxu0 0
        %2479 = vmatmul.mubr.bf16.gmra.mxu0 %v2372
        %v2480 = vpop.f32.mrf.mxu0
        %v2481 = vadd.f32 %v2345, %v2480
        %v2482 = vpop.f32.mrf.mxu0
        %v2483 = vpop.f32.mrf.mxu0
        %v2484 = vadd.f32 %v2345, %v2483
        %v2485 = vpop.f32.mrf.mxu0
        %2486 = vmatprep.mubr.bf16.mxu0 0
        %2487 = vmatmul.mubr.bf16.gmra.mxu0 %v2375
        %v2488 = vpop.f32.mrf.mxu0
        %v2489 = vadd.f32 %v2345, %v2488
        %v2490 = vpop.f32.mrf.mxu0
        %v2491 = vpop.f32.mrf.mxu0
        %v2492 = vadd.f32 %v2345, %v2491
        %v2493 = vpop.f32.mrf.mxu0
        %2494 = vmatprep.mubr.bf16.mxu0 0
        %2495 = vmatmul.mubr.bf16.gmra.mxu0 %v2378
        %v2496 = vpop.f32.mrf.mxu0
        %v2497 = vadd.f32 %v2345, %v2496
        %v2498 = vpop.f32.mrf.mxu0
        %v2499 = vpop.f32.mrf.mxu0
        %v2500 = vadd.f32 %v2345, %v2499
        %v2501 = vpop.f32.mrf.mxu0
        %2502 = vmatprep.mubr.bf16.mxu0 0
        %2503 = vmatmul.mubr.bf16.gmra.mxu0 %v2381
        %v2504 = vpop.f32.mrf.mxu0
        %v2505 = vadd.f32 %v2345, %v2504
        %v2506 = vpop.f32.mrf.mxu0
        %v2507 = vpop.f32.mrf.mxu0
        %v2508 = vadd.f32 %v2345, %v2507
        %v2509 = vpop.f32.mrf.mxu0
        %2510 = vmatprep.mubr.bf16.mxu0 0
        %2511 = vmatmul.mubr.bf16.gmra.mxu0 %v2384
        %v2512 = vpop.f32.mrf.mxu0
        %v2513 = vadd.f32 %v2345, %v2512
        %v2514 = vpop.f32.mrf.mxu0
        %v2515 = vpop.f32.mrf.mxu0
        %v2516 = vadd.f32 %v2345, %v2515
        %v2517 = vpop.f32.mrf.mxu0
        %2518 = vmatprep.mubr.bf16.mxu0 0
        %2519 = vmatmul.mubr.bf16.gmra.mxu0 %v2387
        %v2520 = vpop.f32.mrf.mxu0
        %v2521 = vadd.f32 %v2345, %v2520
        %v2522 = vpop.f32.mrf.mxu0
        %v2523 = vpop.f32.mrf.mxu0
        %v2524 = vadd.f32 %v2345, %v2523
        %v2525 = vpop.f32.mrf.mxu0
        %2526 = vmatprep.mubr.bf16.mxu0 0
        %2527 = vmatmul.mubr.bf16.gmra.mxu0 %v2390
        %v2528 = vpop.f32.mrf.mxu0
        %v2529 = vadd.f32 %v2345, %v2528
        %v2530 = vpop.f32.mrf.mxu0
        %v2531 = vpop.f32.mrf.mxu0
        %v2532 = vadd.f32 %v2345, %v2531
        %v2533 = vpop.f32.mrf.mxu0
        %2534 = vmatprep.mubr.bf16.mxu0 0
        %2535 = vmatmul.mubr.bf16.gmra.mxu0 %v2393
        %v2536 = vpop.f32.mrf.mxu0
        %v2537 = vadd.f32 %v2345, %v2536
        %v2538 = vpop.f32.mrf.mxu0
        %v2539 = vpop.f32.mrf.mxu0
        %v2540 = vadd.f32 %v2345, %v2539
        %v2541 = vpop.f32.mrf.mxu0
        %2542 = vmatprep.mubr.bf16.mxu0 0
        %2543 = vmatmul.mubr.bf16.gmra.mxu0 %v2396
        %v2544 = vpop.f32.mrf.mxu0
        %v2545 = vadd.f32 %v2345, %v2544
        %v2546 = vpop.f32.mrf.mxu0
        %v2547 = vpop.f32.mrf.mxu0
        %v2548 = vadd.f32 %v2345, %v2547
        %v2549 = vpop.f32.mrf.mxu0
        %2550 = vmatprep.mubr.bf16.mxu0 0
        %2551 = vmatmul.mubr.bf16.gmra.mxu0 %v2399
        %v2552 = vpop.f32.mrf.mxu0
        %v2553 = vadd.f32 %v2345, %v2552
        %v2554 = vpop.f32.mrf.mxu0
        %v2555 = vpop.f32.mrf.mxu0
        %v2556 = vadd.f32 %v2345, %v2555
        %v2557 = vpop.f32.mrf.mxu0
        %2558 = vmatprep.mubr.bf16.mxu0 0
        %2559 = vmatmul.mubr.bf16.gmra.mxu0 %v2402
        %v2560 = vpop.f32.mrf.mxu0
        %v2561 = vadd.f32 %v2345, %v2560
        %v2562 = vpop.f32.mrf.mxu0
        %v2563 = vpop.f32.mrf.mxu0
        %v2564 = vadd.f32 %v2345, %v2563
        %v2565 = vpop.f32.mrf.mxu0
        %2566 = vmatprep.mubr.bf16.mxu0 0
        %2567 = vmatmul.mubr.bf16.gmra.mxu0 %v2405
        %v2568 = vpop.f32.mrf.mxu0
        %v2569 = vadd.f32 %v2345, %v2568
        %v2570 = vpop.f32.mrf.mxu0
        %v2571 = vpop.f32.mrf.mxu0
        %v2572 = vadd.f32 %v2345, %v2571
        %v2573 = vpop.f32.mrf.mxu0
        %2574 = vdwg.mxu0
        %v2575 = vld [vmem:[#allocation7] sm:$0x1]
        %vm2576 = vcmp.ge.f32.partialorder %v2449, 0.0
        %vm2577 = vcmp.ge.f32.partialorder %v2452, 0.0
        %vm2578 = vcmp.ge.f32.partialorder %v2457, 0.0
        %vm2579 = vcmp.ge.f32.partialorder %v2460, 0.0
        %vm2580 = vcmp.ge.f32.partialorder %v2465, 0.0
        %vm2581 = vcmp.ge.f32.partialorder %v2468, 0.0
        %vm2582 = vcmp.ge.f32.partialorder %v2473, 0.0
        %vm2583 = vcmp.ge.f32.partialorder %v2476, 0.0
        %vm2584 = vcmp.ge.f32.partialorder %v2481, 0.0
        %vm2585 = vcmp.ge.f32.partialorder %v2484, 0.0
        %vm2586 = vcmp.ge.f32.partialorder %v2489, 0.0
        %vm2587 = vcmp.ge.f32.partialorder %v2492, 0.0
        %vm2588 = vcmp.ge.f32.partialorder %v2497, 0.0
        %vm2589 = vcmp.ge.f32.partialorder %v2500, 0.0
        %vm2590 = vcmp.ge.f32.partialorder %v2505, 0.0
        %vm2591 = vcmp.ge.f32.partialorder %v2508, 0.0
        %vm2592 = vcmp.ge.f32.partialorder %v2513, 0.0
        %vm2593 = vcmp.ge.f32.partialorder %v2516, 0.0
        %vm2594 = vcmp.ge.f32.partialorder %v2521, 0.0
        %vm2595 = vcmp.ge.f32.partialorder %v2524, 0.0
        %vm2596 = vcmp.ge.f32.partialorder %v2529, 0.0
        %vm2597 = vcmp.ge.f32.partialorder %v2532, 0.0
        %vm2598 = vcmp.ge.f32.partialorder %v2537, 0.0
        %vm2599 = vcmp.ge.f32.partialorder %v2540, 0.0
        %vm2600 = vcmp.ge.f32.partialorder %v2545, 0.0
        %vm2601 = vcmp.ge.f32.partialorder %v2548, 0.0
        %vm2602 = vcmp.ge.f32.partialorder %v2553, 0.0
        %vm2603 = vcmp.ge.f32.partialorder %v2556, 0.0
        %vm2604 = vcmp.ge.f32.partialorder %v2561, 0.0
        %vm2605 = vcmp.ge.f32.partialorder %v2564, 0.0
        %vm2606 = vcmp.ge.f32.partialorder %v2569, 0.0
        %vm2607 = vcmp.ge.f32.partialorder %v2572, 0.0
        %v2609 = vlaneseq
        %v2610 = vshrl.u32 %v2609, 7
        %v2611 = vsub.s32 0, %v2610
        %v2612 = vrot.slane %v2575, %v2611
        %v2614 = vmul.f32 %v2612, %v2449
        %v2615 = vmul.f32 %v2612, %v2452
        %v2616 = vmul.f32 %v2612, %v2457
        %v2617 = vmul.f32 %v2612, %v2460
        %v2618 = vmul.f32 %v2612, %v2465
        %v2619 = vmul.f32 %v2612, %v2468
        %v2620 = vmul.f32 %v2612, %v2473
        %v2621 = vmul.f32 %v2612, %v2476
        %v2622 = vmul.f32 %v2612, %v2481
        %v2623 = vmul.f32 %v2612, %v2484
        %v2624 = vmul.f32 %v2612, %v2489
        %v2625 = vmul.f32 %v2612, %v2492
        %v2626 = vmul.f32 %v2612, %v2497
        %v2627 = vmul.f32 %v2612, %v2500
        %v2628 = vmul.f32 %v2612, %v2505
        %v2629 = vmul.f32 %v2612, %v2508
        %v2630 = vmul.f32 %v2612, %v2513
        %v2631 = vmul.f32 %v2612, %v2516
        %v2632 = vmul.f32 %v2612, %v2521
        %v2633 = vmul.f32 %v2612, %v2524
        %v2634 = vmul.f32 %v2612, %v2529
        %v2635 = vmul.f32 %v2612, %v2532
        %v2636 = vmul.f32 %v2612, %v2537
        %v2637 = vmul.f32 %v2612, %v2540
        %v2638 = vmul.f32 %v2612, %v2545
        %v2639 = vmul.f32 %v2612, %v2548
        %v2640 = vmul.f32 %v2612, %v2553
        %v2641 = vmul.f32 %v2612, %v2556
        %v2642 = vmul.f32 %v2612, %v2561
        %v2643 = vmul.f32 %v2612, %v2564
        %v2644 = vmul.f32 %v2612, %v2569
        %v2645 = vmul.f32 %v2612, %v2572
        %v2646 = vsel %vm2576, %v2449, %v2614
        %v2647 = vsel %vm2577, %v2452, %v2615
        %v2648 = vsel %vm2578, %v2457, %v2616
        %v2649 = vsel %vm2579, %v2460, %v2617
        %v2650 = vsel %vm2580, %v2465, %v2618
        %v2651 = vsel %vm2581, %v2468, %v2619
        %v2652 = vsel %vm2582, %v2473, %v2620
        %v2653 = vsel %vm2583, %v2476, %v2621
        %v2654 = vsel %vm2584, %v2481, %v2622
        %v2655 = vsel %vm2585, %v2484, %v2623
        %v2656 = vsel %vm2586, %v2489, %v2624
        %v2657 = vsel %vm2587, %v2492, %v2625
        %v2658 = vsel %vm2588, %v2497, %v2626
        %v2659 = vsel %vm2589, %v2500, %v2627
        %v2660 = vsel %vm2590, %v2505, %v2628
        %v2661 = vsel %vm2591, %v2508, %v2629
        %v2662 = vsel %vm2592, %v2513, %v2630
        %v2663 = vsel %vm2593, %v2516, %v2631
        %v2664 = vsel %vm2594, %v2521, %v2632
        %v2665 = vsel %vm2595, %v2524, %v2633
        %v2666 = vsel %vm2596, %v2529, %v2634
        %v2667 = vsel %vm2597, %v2532, %v2635
        %v2668 = vsel %vm2598, %v2537, %v2636
        %v2669 = vsel %vm2599, %v2540, %v2637
        %v2670 = vsel %vm2600, %v2545, %v2638
        %v2671 = vsel %vm2601, %v2548, %v2639
        %v2672 = vsel %vm2602, %v2553, %v2640
        %v2673 = vsel %vm2603, %v2556, %v2641
        %v2674 = vsel %vm2604, %v2561, %v2642
        %v2675 = vsel %vm2605, %v2564, %v2643
        %v2676 = vsel %vm2606, %v2569, %v2644
        %v2677 = vsel %vm2607, %v2572, %v2645
        %s2678 = scalar_lea.vmem [#allocation3], 24
        %2679 = vst.msk [vmem:[%s2678 + $0x1] sm:$0xff] %vm503, %v2646
        %2680 = vst.msk [vmem:[%s2678 + $0x9] sm:$0xff] %vm503, %v2647
        %2681 = vst.msk [vmem:[%s2678 + $0x19] sm:$0xff] %vm503, %v2648
        %2682 = vst.msk [vmem:[%s2678 + $0x21] sm:$0xff] %vm503, %v2649
        %2683 = vst.msk [vmem:[%s2678 + $0x31] sm:$0xff] %vm503, %v2650
        %2684 = vst.msk [vmem:[%s2678 + $0x39] sm:$0xff] %vm503, %v2651
        %2685 = vst.msk [vmem:[%s2678 + $0x49] sm:$0xff] %vm503, %v2652
        %2686 = vst.msk [vmem:[%s2678 + $0x51] sm:$0xff] %vm503, %v2653
        %2687 = vst.msk [vmem:[%s2678 + $0x61] sm:$0xff] %vm503, %v2654
        %2688 = vst.msk [vmem:[%s2678 + $0x69] sm:$0xff] %vm503, %v2655
        %2689 = vst.msk [vmem:[%s2678 + $0x79] sm:$0xff] %vm503, %v2656
        %2690 = vst.msk [vmem:[%s2678 + $0x81] sm:$0xff] %vm503, %v2657
        %2691 = vst.msk [vmem:[%s2678 + $0x91] sm:$0xff] %vm503, %v2658
        %2692 = vst.msk [vmem:[%s2678 + $0x99] sm:$0xff] %vm503, %v2659
        %2693 = vst.msk [vmem:[%s2678 + $0xa9] sm:$0xff] %vm503, %v2660
        %2694 = vst.msk [vmem:[%s2678 + $0xb1] sm:$0xff] %vm503, %v2661
        %2695 = vst.msk [vmem:[%s2678 + $0xc1] sm:$0xff] %vm503, %v2662
        %2696 = vst.msk [vmem:[%s2678 + $0xc9] sm:$0xff] %vm503, %v2663
        %2697 = vst.msk [vmem:[%s2678 + $0xd9] sm:$0xff] %vm503, %v2664
        %2698 = vst.msk [vmem:[%s2678 + $0xe1] sm:$0xff] %vm503, %v2665
        %2699 = vst.msk [vmem:[%s2678 + $0xf1] sm:$0xff] %vm503, %v2666
        %2700 = vst.msk [vmem:[%s2678 + $0xf9] sm:$0xff] %vm503, %v2667
        %2701 = vst.msk [vmem:[%s2678 + $0x109] sm:$0xff] %vm503, %v2668
        %2702 = vst.msk [vmem:[%s2678 + $0x111] sm:$0xff] %vm503, %v2669
        %2703 = vst.msk [vmem:[%s2678 + $0x121] sm:$0xff] %vm503, %v2670
        %2704 = vst.msk [vmem:[%s2678 + $0x129] sm:$0xff] %vm503, %v2671
        %2705 = vst.msk [vmem:[%s2678 + $0x139] sm:$0xff] %vm503, %v2672
        %2706 = vst.msk [vmem:[%s2678 + $0x141] sm:$0xff] %vm503, %v2673
        %2707 = vst.msk [vmem:[%s2678 + $0x151] sm:$0xff] %vm503, %v2674
        %2708 = vst.msk [vmem:[%s2678 + $0x159] sm:$0xff] %vm503, %v2675
        %2709 = vst.msk [vmem:[%s2678 + $0x169] sm:$0xff] %vm503, %v2676
        %2710 = vst.msk [vmem:[%s2678 + $0x171] sm:$0xff] %vm503, %v2677
        %v2711 = vld [vmem:[#allocation3] sm:$0xff]
        %v2712 = vld [vmem:[#allocation3 + $0x8] sm:$0xff]
        %v2713 = vld [vmem:[#allocation3 + $0x18] sm:$0xff]
        %v2714 = vld [vmem:[#allocation3 + $0x20] sm:$0xff]
        %v2715 = vld [vmem:[#allocation3 + $0x30] sm:$0xff]
        %v2716 = vld [vmem:[#allocation3 + $0x38] sm:$0xff]
        %v2717 = vld [vmem:[#allocation3 + $0x48] sm:$0xff]
        %v2718 = vld [vmem:[#allocation3 + $0x50] sm:$0xff]
        %v2719 = vld [vmem:[#allocation3 + $0x60] sm:$0xff]
        %v2720 = vld [vmem:[#allocation3 + $0x68] sm:$0xff]
        %v2721 = vld [vmem:[#allocation3 + $0x78] sm:$0xff]
        %v2722 = vld [vmem:[#allocation3 + $0x80] sm:$0xff]
        %v2723 = vld [vmem:[#allocation3 + $0x90] sm:$0xff]
        %v2724 = vld [vmem:[#allocation3 + $0x98] sm:$0xff]
        %v2725 = vld [vmem:[#allocation3 + $0xa8] sm:$0xff]
        %v2726 = vld [vmem:[#allocation3 + $0xb0] sm:$0xff]
        %v2727 = vld [vmem:[#allocation3 + $0xc0] sm:$0xff]
        %v2728 = vld [vmem:[#allocation3 + $0xc8] sm:$0xff]
        %v2729 = vld [vmem:[#allocation3 + $0xd8] sm:$0xff]
        %v2730 = vld [vmem:[#allocation3 + $0xe0] sm:$0xff]
        %v2731 = vld [vmem:[#allocation3 + $0xf0] sm:$0xff]
        %v2732 = vld [vmem:[#allocation3 + $0xf8] sm:$0xff]
        %v2733 = vld [vmem:[#allocation3 + $0x108] sm:$0xff]
        %v2734 = vld [vmem:[#allocation3 + $0x110] sm:$0xff]
        %v2735 = vld [vmem:[#allocation3 + $0x120] sm:$0xff]
        %v2736 = vld [vmem:[#allocation3 + $0x128] sm:$0xff]
        %v2737 = vld [vmem:[#allocation3 + $0x138] sm:$0xff]
        %v2738 = vld [vmem:[#allocation3 + $0x140] sm:$0xff]
        %v2739 = vld [vmem:[#allocation3 + $0x150] sm:$0xff]
        %v2740 = vld [vmem:[#allocation3 + $0x158] sm:$0xff]
        %v2741 = vld [vmem:[#allocation3 + $0x168] sm:$0xff]
        %v2742 = vld [vmem:[#allocation3 + $0x170] sm:$0xff]
        %2743 = vst.msk [vmem:[#allocation4] sm:$0xff] %vm503, %v2711
        %2744 = vst.msk [vmem:[#allocation4 + $0x10] sm:$0xff] %vm503, %v2712
        %2745 = vst.msk [vmem:[#allocation4 + $0x20] sm:$0xff] %vm503, %v2713
        %2746 = vst.msk [vmem:[#allocation4 + $0x30] sm:$0xff] %vm503, %v2714
        %2747 = vst.msk [vmem:[#allocation4 + $0x40] sm:$0xff] %vm503, %v2715
        %2748 = vst.msk [vmem:[#allocation4 + $0x50] sm:$0xff] %vm503, %v2716
        %2749 = vst.msk [vmem:[#allocation4 + $0x60] sm:$0xff] %vm503, %v2717
        %2750 = vst.msk [vmem:[#allocation4 + $0x70] sm:$0xff] %vm503, %v2718
        %2751 = vst.msk [vmem:[#allocation4 + $0x80] sm:$0xff] %vm503, %v2719
        %2752 = vst.msk [vmem:[#allocation4 + $0x90] sm:$0xff] %vm503, %v2720
        %2753 = vst.msk [vmem:[#allocation4 + $0xa0] sm:$0xff] %vm503, %v2721
        %2754 = vst.msk [vmem:[#allocation4 + $0xb0] sm:$0xff] %vm503, %v2722
        %2755 = vst.msk [vmem:[#allocation4 + $0xc0] sm:$0xff] %vm503, %v2723
        %2756 = vst.msk [vmem:[#allocation4 + $0xd0] sm:$0xff] %vm503, %v2724
        %2757 = vst.msk [vmem:[#allocation4 + $0xe0] sm:$0xff] %vm503, %v2725
        %2758 = vst.msk [vmem:[#allocation4 + $0xf0] sm:$0xff] %vm503, %v2726
        %2759 = vst.msk [vmem:[#allocation4 + $0x100] sm:$0xff] %vm503, %v2727
        %2760 = vst.msk [vmem:[#allocation4 + $0x110] sm:$0xff] %vm503, %v2728
        %2761 = vst.msk [vmem:[#allocation4 + $0x120] sm:$0xff] %vm503, %v2729
        %2762 = vst.msk [vmem:[#allocation4 + $0x130] sm:$0xff] %vm503, %v2730
        %2763 = vst.msk [vmem:[#allocation4 + $0x140] sm:$0xff] %vm503, %v2731
        %2764 = vst.msk [vmem:[#allocation4 + $0x150] sm:$0xff] %vm503, %v2732
        %2765 = vst.msk [vmem:[#allocation4 + $0x160] sm:$0xff] %vm503, %v2733
        %2766 = vst.msk [vmem:[#allocation4 + $0x170] sm:$0xff] %vm503, %v2734
        %2767 = vst.msk [vmem:[#allocation4 + $0x180] sm:$0xff] %vm503, %v2735
        %2768 = vst.msk [vmem:[#allocation4 + $0x190] sm:$0xff] %vm503, %v2736
        %2769 = vst.msk [vmem:[#allocation4 + $0x1a0] sm:$0xff] %vm503, %v2737
        %2770 = vst.msk [vmem:[#allocation4 + $0x1b0] sm:$0xff] %vm503, %v2738
        %2771 = vst.msk [vmem:[#allocation4 + $0x1c0] sm:$0xff] %vm503, %v2739
        %2772 = vst.msk [vmem:[#allocation4 + $0x1d0] sm:$0xff] %vm503, %v2740
        %2773 = vst.msk [vmem:[#allocation4 + $0x1e0] sm:$0xff] %vm503, %v2741
        %2774 = vst.msk [vmem:[#allocation4 + $0x1f0] sm:$0xff] %vm503, %v2742
        %v2775 = vld [vmem:[#allocation3 + $0x1] sm:$0xff]
        %v2776 = vld [vmem:[#allocation3 + $0x9] sm:$0xff]
        %v2777 = vld [vmem:[#allocation3 + $0x19] sm:$0xff]
        %v2778 = vld [vmem:[#allocation3 + $0x21] sm:$0xff]
        %v2779 = vld [vmem:[#allocation3 + $0x31] sm:$0xff]
        %v2780 = vld [vmem:[#allocation3 + $0x39] sm:$0xff]
        %v2781 = vld [vmem:[#allocation3 + $0x49] sm:$0xff]
        %v2782 = vld [vmem:[#allocation3 + $0x51] sm:$0xff]
        %v2783 = vld [vmem:[#allocation3 + $0x61] sm:$0xff]
        %v2784 = vld [vmem:[#allocation3 + $0x69] sm:$0xff]
        %v2785 = vld [vmem:[#allocation3 + $0x79] sm:$0xff]
        %v2786 = vld [vmem:[#allocation3 + $0x81] sm:$0xff]
        %v2787 = vld [vmem:[#allocation3 + $0x91] sm:$0xff]
        %v2788 = vld [vmem:[#allocation3 + $0x99] sm:$0xff]
        %v2789 = vld [vmem:[#allocation3 + $0xa9] sm:$0xff]
        %v2790 = vld [vmem:[#allocation3 + $0xb1] sm:$0xff]
        %v2791 = vld [vmem:[#allocation3 + $0xc1] sm:$0xff]
        %v2792 = vld [vmem:[#allocation3 + $0xc9] sm:$0xff]
        %v2793 = vld [vmem:[#allocation3 + $0xd9] sm:$0xff]
        %v2794 = vld [vmem:[#allocation3 + $0xe1] sm:$0xff]
        %v2795 = vld [vmem:[#allocation3 + $0xf1] sm:$0xff]
        %v2796 = vld [vmem:[#allocation3 + $0xf9] sm:$0xff]
        %v2797 = vld [vmem:[#allocation3 + $0x109] sm:$0xff]
        %v2798 = vld [vmem:[#allocation3 + $0x111] sm:$0xff]
        %v2799 = vld [vmem:[#allocation3 + $0x121] sm:$0xff]
        %v2800 = vld [vmem:[#allocation3 + $0x129] sm:$0xff]
        %v2801 = vld [vmem:[#allocation3 + $0x139] sm:$0xff]
        %v2802 = vld [vmem:[#allocation3 + $0x141] sm:$0xff]
        %v2803 = vld [vmem:[#allocation3 + $0x151] sm:$0xff]
        %v2804 = vld [vmem:[#allocation3 + $0x159] sm:$0xff]
        %v2805 = vld [vmem:[#allocation3 + $0x169] sm:$0xff]
        %v2806 = vld [vmem:[#allocation3 + $0x171] sm:$0xff]
        %2839 = vrot.lane.b32.xlu0 %v2775, 16
        %v2840 = vpop.permute.xlu0 %2839
        %2841 = vrot.lane.b32.xlu0 %v2776, 16
        %v2842 = vpop.permute.xlu0 %2841
        %2843 = vrot.lane.b32.xlu0 %v2777, 16
        %v2844 = vpop.permute.xlu0 %2843
        %2845 = vrot.lane.b32.xlu0 %v2778, 16
        %v2846 = vpop.permute.xlu0 %2845
        %2847 = vrot.lane.b32.xlu0 %v2779, 16
        %v2848 = vpop.permute.xlu0 %2847
        %2849 = vrot.lane.b32.xlu0 %v2780, 16
        %v2850 = vpop.permute.xlu0 %2849
        %2851 = vrot.lane.b32.xlu0 %v2781, 16
        %v2852 = vpop.permute.xlu0 %2851
        %2853 = vrot.lane.b32.xlu0 %v2782, 16
        %v2854 = vpop.permute.xlu0 %2853
        %2855 = vrot.lane.b32.xlu0 %v2783, 16
        %v2856 = vpop.permute.xlu0 %2855
        %2857 = vrot.lane.b32.xlu0 %v2784, 16
        %v2858 = vpop.permute.xlu0 %2857
        %2859 = vrot.lane.b32.xlu0 %v2785, 16
        %v2860 = vpop.permute.xlu0 %2859
        %2861 = vrot.lane.b32.xlu0 %v2786, 16
        %v2862 = vpop.permute.xlu0 %2861
        %2863 = vrot.lane.b32.xlu0 %v2787, 16
        %v2864 = vpop.permute.xlu0 %2863
        %2865 = vrot.lane.b32.xlu0 %v2788, 16
        %v2866 = vpop.permute.xlu0 %2865
        %2867 = vrot.lane.b32.xlu0 %v2789, 16
        %v2868 = vpop.permute.xlu0 %2867
        %2869 = vrot.lane.b32.xlu0 %v2790, 16
        %v2870 = vpop.permute.xlu0 %2869
        %2871 = vrot.lane.b32.xlu0 %v2791, 16
        %v2872 = vpop.permute.xlu0 %2871
        %2873 = vrot.lane.b32.xlu0 %v2792, 16
        %v2874 = vpop.permute.xlu0 %2873
        %2875 = vrot.lane.b32.xlu0 %v2793, 16
        %v2876 = vpop.permute.xlu0 %2875
        %2877 = vrot.lane.b32.xlu0 %v2794, 16
        %v2878 = vpop.permute.xlu0 %2877
        %2879 = vrot.lane.b32.xlu0 %v2795, 16
        %v2880 = vpop.permute.xlu0 %2879
        %2881 = vrot.lane.b32.xlu0 %v2796, 16
        %v2882 = vpop.permute.xlu0 %2881
        %2883 = vrot.lane.b32.xlu0 %v2797, 16
        %v2884 = vpop.permute.xlu0 %2883
        %2885 = vrot.lane.b32.xlu0 %v2798, 16
        %v2886 = vpop.permute.xlu0 %2885
        %2887 = vrot.lane.b32.xlu0 %v2799, 16
        %v2888 = vpop.permute.xlu0 %2887
        %2889 = vrot.lane.b32.xlu0 %v2800, 16
        %v2890 = vpop.permute.xlu0 %2889
        %2891 = vrot.lane.b32.xlu0 %v2801, 16
        %v2892 = vpop.permute.xlu0 %2891
        %2893 = vrot.lane.b32.xlu0 %v2802, 16
        %v2894 = vpop.permute.xlu0 %2893
        %2895 = vrot.lane.b32.xlu0 %v2803, 16
        %v2896 = vpop.permute.xlu0 %2895
        %2897 = vrot.lane.b32.xlu0 %v2804, 16
        %v2898 = vpop.permute.xlu0 %2897
        %2899 = vrot.lane.b32.xlu0 %v2805, 16
        %v2900 = vpop.permute.xlu0 %2899
        %2901 = vrot.lane.b32.xlu0 %v2806, 16
        %v2902 = vpop.permute.xlu0 %2901
        %vm2935 = vcmask 261248
        %2936 = vst.msk [vmem:[#allocation4] sm:$0xff] %vm2935, %v2840
        %2937 = vst.msk [vmem:[#allocation4 + $0x10] sm:$0xff] %vm2935, %v2842
        %2938 = vst.msk [vmem:[#allocation4 + $0x20] sm:$0xff] %vm2935, %v2844
        %2939 = vst.msk [vmem:[#allocation4 + $0x30] sm:$0xff] %vm2935, %v2846
        %2940 = vst.msk [vmem:[#allocation4 + $0x40] sm:$0xff] %vm2935, %v2848
        %2941 = vst.msk [vmem:[#allocation4 + $0x50] sm:$0xff] %vm2935, %v2850
        %2942 = vst.msk [vmem:[#allocation4 + $0x60] sm:$0xff] %vm2935, %v2852
        %2943 = vst.msk [vmem:[#allocation4 + $0x70] sm:$0xff] %vm2935, %v2854
        %2944 = vst.msk [vmem:[#allocation4 + $0x80] sm:$0xff] %vm2935, %v2856
        %2945 = vst.msk [vmem:[#allocation4 + $0x90] sm:$0xff] %vm2935, %v2858
        %2946 = vst.msk [vmem:[#allocation4 + $0xa0] sm:$0xff] %vm2935, %v2860
        %2947 = vst.msk [vmem:[#allocation4 + $0xb0] sm:$0xff] %vm2935, %v2862
        %2948 = vst.msk [vmem:[#allocation4 + $0xc0] sm:$0xff] %vm2935, %v2864
        %2949 = vst.msk [vmem:[#allocation4 + $0xd0] sm:$0xff] %vm2935, %v2866
        %2950 = vst.msk [vmem:[#allocation4 + $0xe0] sm:$0xff] %vm2935, %v2868
        %2951 = vst.msk [vmem:[#allocation4 + $0xf0] sm:$0xff] %vm2935, %v2870
        %2952 = vst.msk [vmem:[#allocation4 + $0x100] sm:$0xff] %vm2935, %v2872
        %2953 = vst.msk [vmem:[#allocation4 + $0x110] sm:$0xff] %vm2935, %v2874
        %2954 = vst.msk [vmem:[#allocation4 + $0x120] sm:$0xff] %vm2935, %v2876
        %2955 = vst.msk [vmem:[#allocation4 + $0x130] sm:$0xff] %vm2935, %v2878
        %2956 = vst.msk [vmem:[#allocation4 + $0x140] sm:$0xff] %vm2935, %v2880
        %2957 = vst.msk [vmem:[#allocation4 + $0x150] sm:$0xff] %vm2935, %v2882
        %2958 = vst.msk [vmem:[#allocation4 + $0x160] sm:$0xff] %vm2935, %v2884
        %2959 = vst.msk [vmem:[#allocation4 + $0x170] sm:$0xff] %vm2935, %v2886
        %2960 = vst.msk [vmem:[#allocation4 + $0x180] sm:$0xff] %vm2935, %v2888
        %2961 = vst.msk [vmem:[#allocation4 + $0x190] sm:$0xff] %vm2935, %v2890
        %2962 = vst.msk [vmem:[#allocation4 + $0x1a0] sm:$0xff] %vm2935, %v2892
        %2963 = vst.msk [vmem:[#allocation4 + $0x1b0] sm:$0xff] %vm2935, %v2894
        %2964 = vst.msk [vmem:[#allocation4 + $0x1c0] sm:$0xff] %vm2935, %v2896
        %2965 = vst.msk [vmem:[#allocation4 + $0x1d0] sm:$0xff] %vm2935, %v2898
        %2966 = vst.msk [vmem:[#allocation4 + $0x1e0] sm:$0xff] %vm2935, %v2900
        %2967 = vst.msk [vmem:[#allocation4 + $0x1f0] sm:$0xff] %vm2935, %v2902
        %v2968 = vld [vmem:[#allocation3 + $0x2] sm:$0xff]
        %v2969 = vld [vmem:[#allocation3 + $0xa] sm:$0xff]
        %v2970 = vld [vmem:[#allocation3 + $0x1a] sm:$0xff]
        %v2971 = vld [vmem:[#allocation3 + $0x22] sm:$0xff]
        %v2972 = vld [vmem:[#allocation3 + $0x32] sm:$0xff]
        %v2973 = vld [vmem:[#allocation3 + $0x3a] sm:$0xff]
        %v2974 = vld [vmem:[#allocation3 + $0x4a] sm:$0xff]
        %v2975 = vld [vmem:[#allocation3 + $0x52] sm:$0xff]
        %v2976 = vld [vmem:[#allocation3 + $0x62] sm:$0xff]
        %v2977 = vld [vmem:[#allocation3 + $0x6a] sm:$0xff]
        %v2978 = vld [vmem:[#allocation3 + $0x7a] sm:$0xff]
        %v2979 = vld [vmem:[#allocation3 + $0x82] sm:$0xff]
        %v2980 = vld [vmem:[#allocation3 + $0x92] sm:$0xff]
        %v2981 = vld [vmem:[#allocation3 + $0x9a] sm:$0xff]
        %v2982 = vld [vmem:[#allocation3 + $0xaa] sm:$0xff]
        %v2983 = vld [vmem:[#allocation3 + $0xb2] sm:$0xff]
        %v2984 = vld [vmem:[#allocation3 + $0xc2] sm:$0xff]
        %v2985 = vld [vmem:[#allocation3 + $0xca] sm:$0xff]
        %v2986 = vld [vmem:[#allocation3 + $0xda] sm:$0xff]
        %v2987 = vld [vmem:[#allocation3 + $0xe2] sm:$0xff]
        %v2988 = vld [vmem:[#allocation3 + $0xf2] sm:$0xff]
        %v2989 = vld [vmem:[#allocation3 + $0xfa] sm:$0xff]
        %v2990 = vld [vmem:[#allocation3 + $0x10a] sm:$0xff]
        %v2991 = vld [vmem:[#allocation3 + $0x112] sm:$0xff]
        %v2992 = vld [vmem:[#allocation3 + $0x122] sm:$0xff]
        %v2993 = vld [vmem:[#allocation3 + $0x12a] sm:$0xff]
        %v2994 = vld [vmem:[#allocation3 + $0x13a] sm:$0xff]
        %v2995 = vld [vmem:[#allocation3 + $0x142] sm:$0xff]
        %v2996 = vld [vmem:[#allocation3 + $0x152] sm:$0xff]
        %v2997 = vld [vmem:[#allocation3 + $0x15a] sm:$0xff]
        %v2998 = vld [vmem:[#allocation3 + $0x16a] sm:$0xff]
        %v2999 = vld [vmem:[#allocation3 + $0x172] sm:$0xff]
        %3032 = vrot.lane.b32.xlu0 %v2968, 32
        %v3033 = vpop.permute.xlu0 %3032
        %3034 = vrot.lane.b32.xlu0 %v2969, 32
        %v3035 = vpop.permute.xlu0 %3034
        %3036 = vrot.lane.b32.xlu0 %v2970, 32
        %v3037 = vpop.permute.xlu0 %3036
        %3038 = vrot.lane.b32.xlu0 %v2971, 32
        %v3039 = vpop.permute.xlu0 %3038
        %3040 = vrot.lane.b32.xlu0 %v2972, 32
        %v3041 = vpop.permute.xlu0 %3040
        %3042 = vrot.lane.b32.xlu0 %v2973, 32
        %v3043 = vpop.permute.xlu0 %3042
        %3044 = vrot.lane.b32.xlu0 %v2974, 32
        %v3045 = vpop.permute.xlu0 %3044
        %3046 = vrot.lane.b32.xlu0 %v2975, 32
        %v3047 = vpop.permute.xlu0 %3046
        %3048 = vrot.lane.b32.xlu0 %v2976, 32
        %v3049 = vpop.permute.xlu0 %3048
        %3050 = vrot.lane.b32.xlu0 %v2977, 32
        %v3051 = vpop.permute.xlu0 %3050
        %3052 = vrot.lane.b32.xlu0 %v2978, 32
        %v3053 = vpop.permute.xlu0 %3052
        %3054 = vrot.lane.b32.xlu0 %v2979, 32
        %v3055 = vpop.permute.xlu0 %3054
        %3056 = vrot.lane.b32.xlu0 %v2980, 32
        %v3057 = vpop.permute.xlu0 %3056
        %3058 = vrot.lane.b32.xlu0 %v2981, 32
        %v3059 = vpop.permute.xlu0 %3058
        %3060 = vrot.lane.b32.xlu0 %v2982, 32
        %v3061 = vpop.permute.xlu0 %3060
        %3062 = vrot.lane.b32.xlu0 %v2983, 32
        %v3063 = vpop.permute.xlu0 %3062
        %3064 = vrot.lane.b32.xlu0 %v2984, 32
        %v3065 = vpop.permute.xlu0 %3064
        %3066 = vrot.lane.b32.xlu0 %v2985, 32
        %v3067 = vpop.permute.xlu0 %3066
        %3068 = vrot.lane.b32.xlu0 %v2986, 32
        %v3069 = vpop.permute.xlu0 %3068
        %3070 = vrot.lane.b32.xlu0 %v2987, 32
        %v3071 = vpop.permute.xlu0 %3070
        %3072 = vrot.lane.b32.xlu0 %v2988, 32
        %v3073 = vpop.permute.xlu0 %3072
        %3074 = vrot.lane.b32.xlu0 %v2989, 32
        %v3075 = vpop.permute.xlu0 %3074
        %3076 = vrot.lane.b32.xlu0 %v2990, 32
        %v3077 = vpop.permute.xlu0 %3076
        %3078 = vrot.lane.b32.xlu0 %v2991, 32
        %v3079 = vpop.permute.xlu0 %3078
        %3080 = vrot.lane.b32.xlu0 %v2992, 32
        %v3081 = vpop.permute.xlu0 %3080
        %3082 = vrot.lane.b32.xlu0 %v2993, 32
        %v3083 = vpop.permute.xlu0 %3082
        %3084 = vrot.lane.b32.xlu0 %v2994, 32
        %v3085 = vpop.permute.xlu0 %3084
        %3086 = vrot.lane.b32.xlu0 %v2995, 32
        %v3087 = vpop.permute.xlu0 %3086
        %3088 = vrot.lane.b32.xlu0 %v2996, 32
        %v3089 = vpop.permute.xlu0 %3088
        %3090 = vrot.lane.b32.xlu0 %v2997, 32
        %v3091 = vpop.permute.xlu0 %3090
        %3092 = vrot.lane.b32.xlu0 %v2998, 32
        %v3093 = vpop.permute.xlu0 %3092
        %3094 = vrot.lane.b32.xlu0 %v2999, 32
        %v3095 = vpop.permute.xlu0 %3094
        %vm3128 = vcmask 392448
        %3129 = vst.msk [vmem:[#allocation4] sm:$0xff] %vm3128, %v3033
        %3130 = vst.msk [vmem:[#allocation4 + $0x10] sm:$0xff] %vm3128, %v3035
        %3131 = vst.msk [vmem:[#allocation4 + $0x20] sm:$0xff] %vm3128, %v3037
        %3132 = vst.msk [vmem:[#allocation4 + $0x30] sm:$0xff] %vm3128, %v3039
        %3133 = vst.msk [vmem:[#allocation4 + $0x40] sm:$0xff] %vm3128, %v3041
        %3134 = vst.msk [vmem:[#allocation4 + $0x50] sm:$0xff] %vm3128, %v3043
        %3135 = vst.msk [vmem:[#allocation4 + $0x60] sm:$0xff] %vm3128, %v3045
        %3136 = vst.msk [vmem:[#allocation4 + $0x70] sm:$0xff] %vm3128, %v3047
        %3137 = vst.msk [vmem:[#allocation4 + $0x80] sm:$0xff] %vm3128, %v3049
        %3138 = vst.msk [vmem:[#allocation4 + $0x90] sm:$0xff] %vm3128, %v3051
        %3139 = vst.msk [vmem:[#allocation4 + $0xa0] sm:$0xff] %vm3128, %v3053
        %3140 = vst.msk [vmem:[#allocation4 + $0xb0] sm:$0xff] %vm3128, %v3055
        %3141 = vst.msk [vmem:[#allocation4 + $0xc0] sm:$0xff] %vm3128, %v3057
        %3142 = vst.msk [vmem:[#allocation4 + $0xd0] sm:$0xff] %vm3128, %v3059
        %3143 = vst.msk [vmem:[#allocation4 + $0xe0] sm:$0xff] %vm3128, %v3061
        %3144 = vst.msk [vmem:[#allocation4 + $0xf0] sm:$0xff] %vm3128, %v3063
        %3145 = vst.msk [vmem:[#allocation4 + $0x100] sm:$0xff] %vm3128, %v3065
        %3146 = vst.msk [vmem:[#allocation4 + $0x110] sm:$0xff] %vm3128, %v3067
        %3147 = vst.msk [vmem:[#allocation4 + $0x120] sm:$0xff] %vm3128, %v3069
        %3148 = vst.msk [vmem:[#allocation4 + $0x130] sm:$0xff] %vm3128, %v3071
        %3149 = vst.msk [vmem:[#allocation4 + $0x140] sm:$0xff] %vm3128, %v3073
        %3150 = vst.msk [vmem:[#allocation4 + $0x150] sm:$0xff] %vm3128, %v3075
        %3151 = vst.msk [vmem:[#allocation4 + $0x160] sm:$0xff] %vm3128, %v3077
        %3152 = vst.msk [vmem:[#allocation4 + $0x170] sm:$0xff] %vm3128, %v3079
        %3153 = vst.msk [vmem:[#allocation4 + $0x180] sm:$0xff] %vm3128, %v3081
        %3154 = vst.msk [vmem:[#allocation4 + $0x190] sm:$0xff] %vm3128, %v3083
        %3155 = vst.msk [vmem:[#allocation4 + $0x1a0] sm:$0xff] %vm3128, %v3085
        %3156 = vst.msk [vmem:[#allocation4 + $0x1b0] sm:$0xff] %vm3128, %v3087
        %3157 = vst.msk [vmem:[#allocation4 + $0x1c0] sm:$0xff] %vm3128, %v3089
        %3158 = vst.msk [vmem:[#allocation4 + $0x1d0] sm:$0xff] %vm3128, %v3091
        %3159 = vst.msk [vmem:[#allocation4 + $0x1e0] sm:$0xff] %vm3128, %v3093
        %3160 = vst.msk [vmem:[#allocation4 + $0x1f0] sm:$0xff] %vm3128, %v3095
        %v3161 = vld [vmem:[%s2678] sm:$0xff]
        %v3162 = vld [vmem:[%s2678 + $0x8] sm:$0xff]
        %v3163 = vld [vmem:[%s2678 + $0x18] sm:$0xff]
        %v3164 = vld [vmem:[%s2678 + $0x20] sm:$0xff]
        %v3165 = vld [vmem:[%s2678 + $0x30] sm:$0xff]
        %v3166 = vld [vmem:[%s2678 + $0x38] sm:$0xff]
        %v3167 = vld [vmem:[%s2678 + $0x48] sm:$0xff]
        %v3168 = vld [vmem:[%s2678 + $0x50] sm:$0xff]
        %v3169 = vld [vmem:[%s2678 + $0x60] sm:$0xff]
        %v3170 = vld [vmem:[%s2678 + $0x68] sm:$0xff]
        %v3171 = vld [vmem:[%s2678 + $0x78] sm:$0xff]
        %v3172 = vld [vmem:[%s2678 + $0x80] sm:$0xff]
        %v3173 = vld [vmem:[%s2678 + $0x90] sm:$0xff]
        %v3174 = vld [vmem:[%s2678 + $0x98] sm:$0xff]
        %v3175 = vld [vmem:[%s2678 + $0xa8] sm:$0xff]
        %v3176 = vld [vmem:[%s2678 + $0xb0] sm:$0xff]
        %v3177 = vld [vmem:[%s2678 + $0xc0] sm:$0xff]
        %v3178 = vld [vmem:[%s2678 + $0xc8] sm:$0xff]
        %v3179 = vld [vmem:[%s2678 + $0xd8] sm:$0xff]
        %v3180 = vld [vmem:[%s2678 + $0xe0] sm:$0xff]
        %v3181 = vld [vmem:[%s2678 + $0xf0] sm:$0xff]
        %v3182 = vld [vmem:[%s2678 + $0xf8] sm:$0xff]
        %v3183 = vld [vmem:[%s2678 + $0x108] sm:$0xff]
        %v3184 = vld [vmem:[%s2678 + $0x110] sm:$0xff]
        %v3185 = vld [vmem:[%s2678 + $0x120] sm:$0xff]
        %v3186 = vld [vmem:[%s2678 + $0x128] sm:$0xff]
        %v3187 = vld [vmem:[%s2678 + $0x138] sm:$0xff]
        %v3188 = vld [vmem:[%s2678 + $0x140] sm:$0xff]
        %v3189 = vld [vmem:[%s2678 + $0x150] sm:$0xff]
        %v3190 = vld [vmem:[%s2678 + $0x158] sm:$0xff]
        %v3191 = vld [vmem:[%s2678 + $0x168] sm:$0xff]
        %v3192 = vld [vmem:[%s2678 + $0x170] sm:$0xff]
        %3225 = vrot.lane.b32.xlu0 %v3161, 48
        %v3226 = vpop.permute.xlu0 %3225
        %3227 = vrot.lane.b32.xlu0 %v3162, 48
        %v3228 = vpop.permute.xlu0 %3227
        %3229 = vrot.lane.b32.xlu0 %v3163, 48
        %v3230 = vpop.permute.xlu0 %3229
        %3231 = vrot.lane.b32.xlu0 %v3164, 48
        %v3232 = vpop.permute.xlu0 %3231
        %3233 = vrot.lane.b32.xlu0 %v3165, 48
        %v3234 = vpop.permute.xlu0 %3233
        %3235 = vrot.lane.b32.xlu0 %v3166, 48
        %v3236 = vpop.permute.xlu0 %3235
        %3237 = vrot.lane.b32.xlu0 %v3167, 48
        %v3238 = vpop.permute.xlu0 %3237
        %3239 = vrot.lane.b32.xlu0 %v3168, 48
        %v3240 = vpop.permute.xlu0 %3239
        %3241 = vrot.lane.b32.xlu0 %v3169, 48
        %v3242 = vpop.permute.xlu0 %3241
        %3243 = vrot.lane.b32.xlu0 %v3170, 48
        %v3244 = vpop.permute.xlu0 %3243
        %3245 = vrot.lane.b32.xlu0 %v3171, 48
        %v3246 = vpop.permute.xlu0 %3245
        %3247 = vrot.lane.b32.xlu0 %v3172, 48
        %v3248 = vpop.permute.xlu0 %3247
        %3249 = vrot.lane.b32.xlu0 %v3173, 48
        %v3250 = vpop.permute.xlu0 %3249
        %3251 = vrot.lane.b32.xlu0 %v3174, 48
        %v3252 = vpop.permute.xlu0 %3251
        %3253 = vrot.lane.b32.xlu0 %v3175, 48
        %v3254 = vpop.permute.xlu0 %3253
        %3255 = vrot.lane.b32.xlu0 %v3176, 48
        %v3256 = vpop.permute.xlu0 %3255
        %3257 = vrot.lane.b32.xlu0 %v3177, 48
        %v3258 = vpop.permute.xlu0 %3257
        %3259 = vrot.lane.b32.xlu0 %v3178, 48
        %v3260 = vpop.permute.xlu0 %3259
        %3261 = vrot.lane.b32.xlu0 %v3179, 48
        %v3262 = vpop.permute.xlu0 %3261
        %3263 = vrot.lane.b32.xlu0 %v3180, 48
        %v3264 = vpop.permute.xlu0 %3263
        %3265 = vrot.lane.b32.xlu0 %v3181, 48
        %v3266 = vpop.permute.xlu0 %3265
        %3267 = vrot.lane.b32.xlu0 %v3182, 48
        %v3268 = vpop.permute.xlu0 %3267
        %3269 = vrot.lane.b32.xlu0 %v3183, 48
        %v3270 = vpop.permute.xlu0 %3269
        %3271 = vrot.lane.b32.xlu0 %v3184, 48
        %v3272 = vpop.permute.xlu0 %3271
        %3273 = vrot.lane.b32.xlu0 %v3185, 48
        %v3274 = vpop.permute.xlu0 %3273
        %3275 = vrot.lane.b32.xlu0 %v3186, 48
        %v3276 = vpop.permute.xlu0 %3275
        %3277 = vrot.lane.b32.xlu0 %v3187, 48
        %v3278 = vpop.permute.xlu0 %3277
        %3279 = vrot.lane.b32.xlu0 %v3188, 48
        %v3280 = vpop.permute.xlu0 %3279
        %3281 = vrot.lane.b32.xlu0 %v3189, 48
        %v3282 = vpop.permute.xlu0 %3281
        %3283 = vrot.lane.b32.xlu0 %v3190, 48
        %v3284 = vpop.permute.xlu0 %3283
        %3285 = vrot.lane.b32.xlu0 %v3191, 48
        %v3286 = vpop.permute.xlu0 %3285
        %3287 = vrot.lane.b32.xlu0 %v3192, 48
        %v3288 = vpop.permute.xlu0 %3287
        %vm3321 = vcmask 523648
        %3322 = vst.msk [vmem:[#allocation4] sm:$0xff] %vm3321, %v3226
        %3323 = vst.msk [vmem:[#allocation4 + $0x10] sm:$0xff] %vm3321, %v3228
        %3324 = vst.msk [vmem:[#allocation4 + $0x20] sm:$0xff] %vm3321, %v3230
        %3325 = vst.msk [vmem:[#allocation4 + $0x30] sm:$0xff] %vm3321, %v3232
        %3326 = vst.msk [vmem:[#allocation4 + $0x40] sm:$0xff] %vm3321, %v3234
        %3327 = vst.msk [vmem:[#allocation4 + $0x50] sm:$0xff] %vm3321, %v3236
        %3328 = vst.msk [vmem:[#allocation4 + $0x60] sm:$0xff] %vm3321, %v3238
        %3329 = vst.msk [vmem:[#allocation4 + $0x70] sm:$0xff] %vm3321, %v3240
        %3330 = vst.msk [vmem:[#allocation4 + $0x80] sm:$0xff] %vm3321, %v3242
        %3331 = vst.msk [vmem:[#allocation4 + $0x90] sm:$0xff] %vm3321, %v3244
        %3332 = vst.msk [vmem:[#allocation4 + $0xa0] sm:$0xff] %vm3321, %v3246
        %3333 = vst.msk [vmem:[#allocation4 + $0xb0] sm:$0xff] %vm3321, %v3248
        %3334 = vst.msk [vmem:[#allocation4 + $0xc0] sm:$0xff] %vm3321, %v3250
        %3335 = vst.msk [vmem:[#allocation4 + $0xd0] sm:$0xff] %vm3321, %v3252
        %3336 = vst.msk [vmem:[#allocation4 + $0xe0] sm:$0xff] %vm3321, %v3254
        %3337 = vst.msk [vmem:[#allocation4 + $0xf0] sm:$0xff] %vm3321, %v3256
        %3338 = vst.msk [vmem:[#allocation4 + $0x100] sm:$0xff] %vm3321, %v3258
        %3339 = vst.msk [vmem:[#allocation4 + $0x110] sm:$0xff] %vm3321, %v3260
        %3340 = vst.msk [vmem:[#allocation4 + $0x120] sm:$0xff] %vm3321, %v3262
        %3341 = vst.msk [vmem:[#allocation4 + $0x130] sm:$0xff] %vm3321, %v3264
        %3342 = vst.msk [vmem:[#allocation4 + $0x140] sm:$0xff] %vm3321, %v3266
        %3343 = vst.msk [vmem:[#allocation4 + $0x150] sm:$0xff] %vm3321, %v3268
        %3344 = vst.msk [vmem:[#allocation4 + $0x160] sm:$0xff] %vm3321, %v3270
        %3345 = vst.msk [vmem:[#allocation4 + $0x170] sm:$0xff] %vm3321, %v3272
        %3346 = vst.msk [vmem:[#allocation4 + $0x180] sm:$0xff] %vm3321, %v3274
        %3347 = vst.msk [vmem:[#allocation4 + $0x190] sm:$0xff] %vm3321, %v3276
        %3348 = vst.msk [vmem:[#allocation4 + $0x1a0] sm:$0xff] %vm3321, %v3278
        %3349 = vst.msk [vmem:[#allocation4 + $0x1b0] sm:$0xff] %vm3321, %v3280
        %3350 = vst.msk [vmem:[#allocation4 + $0x1c0] sm:$0xff] %vm3321, %v3282
        %3351 = vst.msk [vmem:[#allocation4 + $0x1d0] sm:$0xff] %vm3321, %v3284
        %3352 = vst.msk [vmem:[#allocation4 + $0x1e0] sm:$0xff] %vm3321, %v3286
        %3353 = vst.msk [vmem:[#allocation4 + $0x1f0] sm:$0xff] %vm3321, %v3288
        %v3354 = vld [vmem:[%s2678 + $0x1] sm:$0xff]
        %v3355 = vld [vmem:[%s2678 + $0x9] sm:$0xff]
        %v3356 = vld [vmem:[%s2678 + $0x19] sm:$0xff]
        %v3357 = vld [vmem:[%s2678 + $0x21] sm:$0xff]
        %v3358 = vld [vmem:[%s2678 + $0x31] sm:$0xff]
        %v3359 = vld [vmem:[%s2678 + $0x39] sm:$0xff]
        %v3360 = vld [vmem:[%s2678 + $0x49] sm:$0xff]
        %v3361 = vld [vmem:[%s2678 + $0x51] sm:$0xff]
        %v3362 = vld [vmem:[%s2678 + $0x61] sm:$0xff]
        %v3363 = vld [vmem:[%s2678 + $0x69] sm:$0xff]
        %v3364 = vld [vmem:[%s2678 + $0x79] sm:$0xff]
        %v3365 = vld [vmem:[%s2678 + $0x81] sm:$0xff]
        %v3366 = vld [vmem:[%s2678 + $0x91] sm:$0xff]
        %v3367 = vld [vmem:[%s2678 + $0x99] sm:$0xff]
        %v3368 = vld [vmem:[%s2678 + $0xa9] sm:$0xff]
        %v3369 = vld [vmem:[%s2678 + $0xb1] sm:$0xff]
        %v3370 = vld [vmem:[%s2678 + $0xc1] sm:$0xff]
        %v3371 = vld [vmem:[%s2678 + $0xc9] sm:$0xff]
        %v3372 = vld [vmem:[%s2678 + $0xd9] sm:$0xff]
        %v3373 = vld [vmem:[%s2678 + $0xe1] sm:$0xff]
        %v3374 = vld [vmem:[%s2678 + $0xf1] sm:$0xff]
        %v3375 = vld [vmem:[%s2678 + $0xf9] sm:$0xff]
        %v3376 = vld [vmem:[%s2678 + $0x109] sm:$0xff]
        %v3377 = vld [vmem:[%s2678 + $0x111] sm:$0xff]
        %v3378 = vld [vmem:[%s2678 + $0x121] sm:$0xff]
        %v3379 = vld [vmem:[%s2678 + $0x129] sm:$0xff]
        %v3380 = vld [vmem:[%s2678 + $0x139] sm:$0xff]
        %v3381 = vld [vmem:[%s2678 + $0x141] sm:$0xff]
        %v3382 = vld [vmem:[%s2678 + $0x151] sm:$0xff]
        %v3383 = vld [vmem:[%s2678 + $0x159] sm:$0xff]
        %v3384 = vld [vmem:[%s2678 + $0x169] sm:$0xff]
        %v3385 = vld [vmem:[%s2678 + $0x171] sm:$0xff]
        %3418 = vrot.lane.b32.xlu0 %v3354, 64
        %v3419 = vpop.permute.xlu0 %3418
        %3420 = vrot.lane.b32.xlu0 %v3355, 64
        %v3421 = vpop.permute.xlu0 %3420
        %3422 = vrot.lane.b32.xlu0 %v3356, 64
        %v3423 = vpop.permute.xlu0 %3422
        %3424 = vrot.lane.b32.xlu0 %v3357, 64
        %v3425 = vpop.permute.xlu0 %3424
        %3426 = vrot.lane.b32.xlu0 %v3358, 64
        %v3427 = vpop.permute.xlu0 %3426
        %3428 = vrot.lane.b32.xlu0 %v3359, 64
        %v3429 = vpop.permute.xlu0 %3428
        %3430 = vrot.lane.b32.xlu0 %v3360, 64
        %v3431 = vpop.permute.xlu0 %3430
        %3432 = vrot.lane.b32.xlu0 %v3361, 64
        %v3433 = vpop.permute.xlu0 %3432
        %3434 = vrot.lane.b32.xlu0 %v3362, 64
        %v3435 = vpop.permute.xlu0 %3434
        %3436 = vrot.lane.b32.xlu0 %v3363, 64
        %v3437 = vpop.permute.xlu0 %3436
        %3438 = vrot.lane.b32.xlu0 %v3364, 64
        %v3439 = vpop.permute.xlu0 %3438
        %3440 = vrot.lane.b32.xlu0 %v3365, 64
        %v3441 = vpop.permute.xlu0 %3440
        %3442 = vrot.lane.b32.xlu0 %v3366, 64
        %v3443 = vpop.permute.xlu0 %3442
        %3444 = vrot.lane.b32.xlu0 %v3367, 64
        %v3445 = vpop.permute.xlu0 %3444
        %3446 = vrot.lane.b32.xlu0 %v3368, 64
        %v3447 = vpop.permute.xlu0 %3446
        %3448 = vrot.lane.b32.xlu0 %v3369, 64
        %v3449 = vpop.permute.xlu0 %3448
        %3450 = vrot.lane.b32.xlu0 %v3370, 64
        %v3451 = vpop.permute.xlu0 %3450
        %3452 = vrot.lane.b32.xlu0 %v3371, 64
        %v3453 = vpop.permute.xlu0 %3452
        %3454 = vrot.lane.b32.xlu0 %v3372, 64
        %v3455 = vpop.permute.xlu0 %3454
        %3456 = vrot.lane.b32.xlu0 %v3373, 64
        %v3457 = vpop.permute.xlu0 %3456
        %3458 = vrot.lane.b32.xlu0 %v3374, 64
        %v3459 = vpop.permute.xlu0 %3458
        %3460 = vrot.lane.b32.xlu0 %v3375, 64
        %v3461 = vpop.permute.xlu0 %3460
        %3462 = vrot.lane.b32.xlu0 %v3376, 64
        %v3463 = vpop.permute.xlu0 %3462
        %3464 = vrot.lane.b32.xlu0 %v3377, 64
        %v3465 = vpop.permute.xlu0 %3464
        %3466 = vrot.lane.b32.xlu0 %v3378, 64
        %v3467 = vpop.permute.xlu0 %3466
        %3468 = vrot.lane.b32.xlu0 %v3379, 64
        %v3469 = vpop.permute.xlu0 %3468
        %3470 = vrot.lane.b32.xlu0 %v3380, 64
        %v3471 = vpop.permute.xlu0 %3470
        %3472 = vrot.lane.b32.xlu0 %v3381, 64
        %v3473 = vpop.permute.xlu0 %3472
        %3474 = vrot.lane.b32.xlu0 %v3382, 64
        %v3475 = vpop.permute.xlu0 %3474
        %3476 = vrot.lane.b32.xlu0 %v3383, 64
        %v3477 = vpop.permute.xlu0 %3476
        %3478 = vrot.lane.b32.xlu0 %v3384, 64
        %v3479 = vpop.permute.xlu0 %3478
        %3480 = vrot.lane.b32.xlu0 %v3385, 64
        %v3481 = vpop.permute.xlu0 %3480
        %vm3514 = vcmask 654848
        %3515 = vst.msk [vmem:[#allocation4] sm:$0xff] %vm3514, %v3419
        %3516 = vst.msk [vmem:[#allocation4 + $0x10] sm:$0xff] %vm3514, %v3421
        %3517 = vst.msk [vmem:[#allocation4 + $0x20] sm:$0xff] %vm3514, %v3423
        %3518 = vst.msk [vmem:[#allocation4 + $0x30] sm:$0xff] %vm3514, %v3425
        %3519 = vst.msk [vmem:[#allocation4 + $0x40] sm:$0xff] %vm3514, %v3427
        %3520 = vst.msk [vmem:[#allocation4 + $0x50] sm:$0xff] %vm3514, %v3429
        %3521 = vst.msk [vmem:[#allocation4 + $0x60] sm:$0xff] %vm3514, %v3431
        %3522 = vst.msk [vmem:[#allocation4 + $0x70] sm:$0xff] %vm3514, %v3433
        %3523 = vst.msk [vmem:[#allocation4 + $0x80] sm:$0xff] %vm3514, %v3435
        %3524 = vst.msk [vmem:[#allocation4 + $0x90] sm:$0xff] %vm3514, %v3437
        %3525 = vst.msk [vmem:[#allocation4 + $0xa0] sm:$0xff] %vm3514, %v3439
        %3526 = vst.msk [vmem:[#allocation4 + $0xb0] sm:$0xff] %vm3514, %v3441
        %3527 = vst.msk [vmem:[#allocation4 + $0xc0] sm:$0xff] %vm3514, %v3443
        %3528 = vst.msk [vmem:[#allocation4 + $0xd0] sm:$0xff] %vm3514, %v3445
        %3529 = vst.msk [vmem:[#allocation4 + $0xe0] sm:$0xff] %vm3514, %v3447
        %3530 = vst.msk [vmem:[#allocation4 + $0xf0] sm:$0xff] %vm3514, %v3449
        %3531 = vst.msk [vmem:[#allocation4 + $0x100] sm:$0xff] %vm3514, %v3451
        %3532 = vst.msk [vmem:[#allocation4 + $0x110] sm:$0xff] %vm3514, %v3453
        %3533 = vst.msk [vmem:[#allocation4 + $0x120] sm:$0xff] %vm3514, %v3455
        %3534 = vst.msk [vmem:[#allocation4 + $0x130] sm:$0xff] %vm3514, %v3457
        %3535 = vst.msk [vmem:[#allocation4 + $0x140] sm:$0xff] %vm3514, %v3459
        %3536 = vst.msk [vmem:[#allocation4 + $0x150] sm:$0xff] %vm3514, %v3461
        %3537 = vst.msk [vmem:[#allocation4 + $0x160] sm:$0xff] %vm3514, %v3463
        %3538 = vst.msk [vmem:[#allocation4 + $0x170] sm:$0xff] %vm3514, %v3465
        %3539 = vst.msk [vmem:[#allocation4 + $0x180] sm:$0xff] %vm3514, %v3467
        %3540 = vst.msk [vmem:[#allocation4 + $0x190] sm:$0xff] %vm3514, %v3469
        %3541 = vst.msk [vmem:[#allocation4 + $0x1a0] sm:$0xff] %vm3514, %v3471
        %3542 = vst.msk [vmem:[#allocation4 + $0x1b0] sm:$0xff] %vm3514, %v3473
        %3543 = vst.msk [vmem:[#allocation4 + $0x1c0] sm:$0xff] %vm3514, %v3475
        %3544 = vst.msk [vmem:[#allocation4 + $0x1d0] sm:$0xff] %vm3514, %v3477
        %3545 = vst.msk [vmem:[#allocation4 + $0x1e0] sm:$0xff] %vm3514, %v3479
        %3546 = vst.msk [vmem:[#allocation4 + $0x1f0] sm:$0xff] %vm3514, %v3481
        %v3547 = vld [vmem:[%s2678 + $0x2] sm:$0xff]
        %v3548 = vld [vmem:[%s2678 + $0xa] sm:$0xff]
        %v3549 = vld [vmem:[%s2678 + $0x1a] sm:$0xff]
        %v3550 = vld [vmem:[%s2678 + $0x22] sm:$0xff]
        %v3551 = vld [vmem:[%s2678 + $0x32] sm:$0xff]
        %v3552 = vld [vmem:[%s2678 + $0x3a] sm:$0xff]
        %v3553 = vld [vmem:[%s2678 + $0x4a] sm:$0xff]
        %v3554 = vld [vmem:[%s2678 + $0x52] sm:$0xff]
        %v3555 = vld [vmem:[%s2678 + $0x62] sm:$0xff]
        %v3556 = vld [vmem:[%s2678 + $0x6a] sm:$0xff]
        %v3557 = vld [vmem:[%s2678 + $0x7a] sm:$0xff]
        %v3558 = vld [vmem:[%s2678 + $0x82] sm:$0xff]
        %v3559 = vld [vmem:[%s2678 + $0x92] sm:$0xff]
        %v3560 = vld [vmem:[%s2678 + $0x9a] sm:$0xff]
        %v3561 = vld [vmem:[%s2678 + $0xaa] sm:$0xff]
        %v3562 = vld [vmem:[%s2678 + $0xb2] sm:$0xff]
        %v3563 = vld [vmem:[%s2678 + $0xc2] sm:$0xff]
        %v3564 = vld [vmem:[%s2678 + $0xca] sm:$0xff]
        %v3565 = vld [vmem:[%s2678 + $0xda] sm:$0xff]
        %v3566 = vld [vmem:[%s2678 + $0xe2] sm:$0xff]
        %v3567 = vld [vmem:[%s2678 + $0xf2] sm:$0xff]
        %v3568 = vld [vmem:[%s2678 + $0xfa] sm:$0xff]
        %v3569 = vld [vmem:[%s2678 + $0x10a] sm:$0xff]
        %v3570 = vld [vmem:[%s2678 + $0x112] sm:$0xff]
        %v3571 = vld [vmem:[%s2678 + $0x122] sm:$0xff]
        %v3572 = vld [vmem:[%s2678 + $0x12a] sm:$0xff]
        %v3573 = vld [vmem:[%s2678 + $0x13a] sm:$0xff]
        %v3574 = vld [vmem:[%s2678 + $0x142] sm:$0xff]
        %v3575 = vld [vmem:[%s2678 + $0x152] sm:$0xff]
        %v3576 = vld [vmem:[%s2678 + $0x15a] sm:$0xff]
        %v3577 = vld [vmem:[%s2678 + $0x16a] sm:$0xff]
        %v3578 = vld [vmem:[%s2678 + $0x172] sm:$0xff]
        %3611 = vrot.lane.b32.xlu0 %v3547, 80
        %v3612 = vpop.permute.xlu0 %3611
        %3613 = vrot.lane.b32.xlu0 %v3548, 80
        %v3614 = vpop.permute.xlu0 %3613
        %3615 = vrot.lane.b32.xlu0 %v3549, 80
        %v3616 = vpop.permute.xlu0 %3615
        %3617 = vrot.lane.b32.xlu0 %v3550, 80
        %v3618 = vpop.permute.xlu0 %3617
        %3619 = vrot.lane.b32.xlu0 %v3551, 80
        %v3620 = vpop.permute.xlu0 %3619
        %3621 = vrot.lane.b32.xlu0 %v3552, 80
        %v3622 = vpop.permute.xlu0 %3621
        %3623 = vrot.lane.b32.xlu0 %v3553, 80
        %v3624 = vpop.permute.xlu0 %3623
        %3625 = vrot.lane.b32.xlu0 %v3554, 80
        %v3626 = vpop.permute.xlu0 %3625
        %3627 = vrot.lane.b32.xlu0 %v3555, 80
        %v3628 = vpop.permute.xlu0 %3627
        %3629 = vrot.lane.b32.xlu0 %v3556, 80
        %v3630 = vpop.permute.xlu0 %3629
        %3631 = vrot.lane.b32.xlu0 %v3557, 80
        %v3632 = vpop.permute.xlu0 %3631
        %3633 = vrot.lane.b32.xlu0 %v3558, 80
        %v3634 = vpop.permute.xlu0 %3633
        %3635 = vrot.lane.b32.xlu0 %v3559, 80
        %v3636 = vpop.permute.xlu0 %3635
        %3637 = vrot.lane.b32.xlu0 %v3560, 80
        %v3638 = vpop.permute.xlu0 %3637
        %3639 = vrot.lane.b32.xlu0 %v3561, 80
        %v3640 = vpop.permute.xlu0 %3639
        %3641 = vrot.lane.b32.xlu0 %v3562, 80
        %v3642 = vpop.permute.xlu0 %3641
        %3643 = vrot.lane.b32.xlu0 %v3563, 80
        %v3644 = vpop.permute.xlu0 %3643
        %3645 = vrot.lane.b32.xlu0 %v3564, 80
        %v3646 = vpop.permute.xlu0 %3645
        %3647 = vrot.lane.b32.xlu0 %v3565, 80
        %v3648 = vpop.permute.xlu0 %3647
        %3649 = vrot.lane.b32.xlu0 %v3566, 80
        %v3650 = vpop.permute.xlu0 %3649
        %3651 = vrot.lane.b32.xlu0 %v3567, 80
        %v3652 = vpop.permute.xlu0 %3651
        %3653 = vrot.lane.b32.xlu0 %v3568, 80
        %v3654 = vpop.permute.xlu0 %3653
        %3655 = vrot.lane.b32.xlu0 %v3569, 80
        %v3656 = vpop.permute.xlu0 %3655
        %3657 = vrot.lane.b32.xlu0 %v3570, 80
        %v3658 = vpop.permute.xlu0 %3657
        %3659 = vrot.lane.b32.xlu0 %v3571, 80
        %v3660 = vpop.permute.xlu0 %3659
        %3661 = vrot.lane.b32.xlu0 %v3572, 80
        %v3662 = vpop.permute.xlu0 %3661
        %3663 = vrot.lane.b32.xlu0 %v3573, 80
        %v3664 = vpop.permute.xlu0 %3663
        %3665 = vrot.lane.b32.xlu0 %v3574, 80
        %v3666 = vpop.permute.xlu0 %3665
        %3667 = vrot.lane.b32.xlu0 %v3575, 80
        %v3668 = vpop.permute.xlu0 %3667
        %3669 = vrot.lane.b32.xlu0 %v3576, 80
        %v3670 = vpop.permute.xlu0 %3669
        %3671 = vrot.lane.b32.xlu0 %v3577, 80
        %v3672 = vpop.permute.xlu0 %3671
        %3673 = vrot.lane.b32.xlu0 %v3578, 80
        %v3674 = vpop.permute.xlu0 %3673
        %vm3707 = vcmask 786048
        %3708 = vst.msk [vmem:[#allocation4] sm:$0xff] %vm3707, %v3612
        %3709 = vst.msk [vmem:[#allocation4 + $0x10] sm:$0xff] %vm3707, %v3614
        %3710 = vst.msk [vmem:[#allocation4 + $0x20] sm:$0xff] %vm3707, %v3616
        %3711 = vst.msk [vmem:[#allocation4 + $0x30] sm:$0xff] %vm3707, %v3618
        %3712 = vst.msk [vmem:[#allocation4 + $0x40] sm:$0xff] %vm3707, %v3620
        %3713 = vst.msk [vmem:[#allocation4 + $0x50] sm:$0xff] %vm3707, %v3622
        %3714 = vst.msk [vmem:[#allocation4 + $0x60] sm:$0xff] %vm3707, %v3624
        %3715 = vst.msk [vmem:[#allocation4 + $0x70] sm:$0xff] %vm3707, %v3626
        %3716 = vst.msk [vmem:[#allocation4 + $0x80] sm:$0xff] %vm3707, %v3628
        %3717 = vst.msk [vmem:[#allocation4 + $0x90] sm:$0xff] %vm3707, %v3630
        %3718 = vst.msk [vmem:[#allocation4 + $0xa0] sm:$0xff] %vm3707, %v3632
        %3719 = vst.msk [vmem:[#allocation4 + $0xb0] sm:$0xff] %vm3707, %v3634
        %3720 = vst.msk [vmem:[#allocation4 + $0xc0] sm:$0xff] %vm3707, %v3636
        %3721 = vst.msk [vmem:[#allocation4 + $0xd0] sm:$0xff] %vm3707, %v3638
        %3722 = vst.msk [vmem:[#allocation4 + $0xe0] sm:$0xff] %vm3707, %v3640
        %3723 = vst.msk [vmem:[#allocation4 + $0xf0] sm:$0xff] %vm3707, %v3642
        %3724 = vst.msk [vmem:[#allocation4 + $0x100] sm:$0xff] %vm3707, %v3644
        %3725 = vst.msk [vmem:[#allocation4 + $0x110] sm:$0xff] %vm3707, %v3646
        %3726 = vst.msk [vmem:[#allocation4 + $0x120] sm:$0xff] %vm3707, %v3648
        %3727 = vst.msk [vmem:[#allocation4 + $0x130] sm:$0xff] %vm3707, %v3650
        %3728 = vst.msk [vmem:[#allocation4 + $0x140] sm:$0xff] %vm3707, %v3652
        %3729 = vst.msk [vmem:[#allocation4 + $0x150] sm:$0xff] %vm3707, %v3654
        %3730 = vst.msk [vmem:[#allocation4 + $0x160] sm:$0xff] %vm3707, %v3656
        %3731 = vst.msk [vmem:[#allocation4 + $0x170] sm:$0xff] %vm3707, %v3658
        %3732 = vst.msk [vmem:[#allocation4 + $0x180] sm:$0xff] %vm3707, %v3660
        %3733 = vst.msk [vmem:[#allocation4 + $0x190] sm:$0xff] %vm3707, %v3662
        %3734 = vst.msk [vmem:[#allocation4 + $0x1a0] sm:$0xff] %vm3707, %v3664
        %3735 = vst.msk [vmem:[#allocation4 + $0x1b0] sm:$0xff] %vm3707, %v3666
        %3736 = vst.msk [vmem:[#allocation4 + $0x1c0] sm:$0xff] %vm3707, %v3668
        %3737 = vst.msk [vmem:[#allocation4 + $0x1d0] sm:$0xff] %vm3707, %v3670
        %3738 = vst.msk [vmem:[#allocation4 + $0x1e0] sm:$0xff] %vm3707, %v3672
        %3739 = vst.msk [vmem:[#allocation4 + $0x1f0] sm:$0xff] %vm3707, %v3674
        %s3740 = scalar_lea.vmem [#allocation3], 48
        %v3741 = vld [vmem:[%s3740] sm:$0xff]
        %v3742 = vld [vmem:[%s3740 + $0x8] sm:$0xff]
        %v3743 = vld [vmem:[%s3740 + $0x18] sm:$0xff]
        %v3744 = vld [vmem:[%s3740 + $0x20] sm:$0xff]
        %v3745 = vld [vmem:[%s3740 + $0x30] sm:$0xff]
        %v3746 = vld [vmem:[%s3740 + $0x38] sm:$0xff]
        %v3747 = vld [vmem:[%s3740 + $0x48] sm:$0xff]
        %v3748 = vld [vmem:[%s3740 + $0x50] sm:$0xff]
        %v3749 = vld [vmem:[%s3740 + $0x60] sm:$0xff]
        %v3750 = vld [vmem:[%s3740 + $0x68] sm:$0xff]
        %v3751 = vld [vmem:[%s3740 + $0x78] sm:$0xff]
        %v3752 = vld [vmem:[%s3740 + $0x80] sm:$0xff]
        %v3753 = vld [vmem:[%s3740 + $0x90] sm:$0xff]
        %v3754 = vld [vmem:[%s3740 + $0x98] sm:$0xff]
        %v3755 = vld [vmem:[%s3740 + $0xa8] sm:$0xff]
        %v3756 = vld [vmem:[%s3740 + $0xb0] sm:$0xff]
        %v3757 = vld [vmem:[%s3740 + $0xc0] sm:$0xff]
        %v3758 = vld [vmem:[%s3740 + $0xc8] sm:$0xff]
        %v3759 = vld [vmem:[%s3740 + $0xd8] sm:$0xff]
        %v3760 = vld [vmem:[%s3740 + $0xe0] sm:$0xff]
        %v3761 = vld [vmem:[%s3740 + $0xf0] sm:$0xff]
        %v3762 = vld [vmem:[%s3740 + $0xf8] sm:$0xff]
        %v3763 = vld [vmem:[%s3740 + $0x108] sm:$0xff]
        %v3764 = vld [vmem:[%s3740 + $0x110] sm:$0xff]
        %v3765 = vld [vmem:[%s3740 + $0x120] sm:$0xff]
        %v3766 = vld [vmem:[%s3740 + $0x128] sm:$0xff]
        %v3767 = vld [vmem:[%s3740 + $0x138] sm:$0xff]
        %v3768 = vld [vmem:[%s3740 + $0x140] sm:$0xff]
        %v3769 = vld [vmem:[%s3740 + $0x150] sm:$0xff]
        %v3770 = vld [vmem:[%s3740 + $0x158] sm:$0xff]
        %v3771 = vld [vmem:[%s3740 + $0x168] sm:$0xff]
        %v3772 = vld [vmem:[%s3740 + $0x170] sm:$0xff]
        %3805 = vrot.lane.b32.xlu0 %v3741, 96
        %v3806 = vpop.permute.xlu0 %3805
        %3807 = vrot.lane.b32.xlu0 %v3742, 96
        %v3808 = vpop.permute.xlu0 %3807
        %3809 = vrot.lane.b32.xlu0 %v3743, 96
        %v3810 = vpop.permute.xlu0 %3809
        %3811 = vrot.lane.b32.xlu0 %v3744, 96
        %v3812 = vpop.permute.xlu0 %3811
        %3813 = vrot.lane.b32.xlu0 %v3745, 96
        %v3814 = vpop.permute.xlu0 %3813
        %3815 = vrot.lane.b32.xlu0 %v3746, 96
        %v3816 = vpop.permute.xlu0 %3815
        %3817 = vrot.lane.b32.xlu0 %v3747, 96
        %v3818 = vpop.permute.xlu0 %3817
        %3819 = vrot.lane.b32.xlu0 %v3748, 96
        %v3820 = vpop.permute.xlu0 %3819
        %3821 = vrot.lane.b32.xlu0 %v3749, 96
        %v3822 = vpop.permute.xlu0 %3821
        %3823 = vrot.lane.b32.xlu0 %v3750, 96
        %v3824 = vpop.permute.xlu0 %3823
        %3825 = vrot.lane.b32.xlu0 %v3751, 96
        %v3826 = vpop.permute.xlu0 %3825
        %3827 = vrot.lane.b32.xlu0 %v3752, 96
        %v3828 = vpop.permute.xlu0 %3827
        %3829 = vrot.lane.b32.xlu0 %v3753, 96
        %v3830 = vpop.permute.xlu0 %3829
        %3831 = vrot.lane.b32.xlu0 %v3754, 96
        %v3832 = vpop.permute.xlu0 %3831
        %3833 = vrot.lane.b32.xlu0 %v3755, 96
        %v3834 = vpop.permute.xlu0 %3833
        %3835 = vrot.lane.b32.xlu0 %v3756, 96
        %v3836 = vpop.permute.xlu0 %3835
        %3837 = vrot.lane.b32.xlu0 %v3757, 96
        %v3838 = vpop.permute.xlu0 %3837
        %3839 = vrot.lane.b32.xlu0 %v3758, 96
        %v3840 = vpop.permute.xlu0 %3839
        %3841 = vrot.lane.b32.xlu0 %v3759, 96
        %v3842 = vpop.permute.xlu0 %3841
        %3843 = vrot.lane.b32.xlu0 %v3760, 96
        %v3844 = vpop.permute.xlu0 %3843
        %3845 = vrot.lane.b32.xlu0 %v3761, 96
        %v3846 = vpop.permute.xlu0 %3845
        %3847 = vrot.lane.b32.xlu0 %v3762, 96
        %v3848 = vpop.permute.xlu0 %3847
        %3849 = vrot.lane.b32.xlu0 %v3763, 96
        %v3850 = vpop.permute.xlu0 %3849
        %3851 = vrot.lane.b32.xlu0 %v3764, 96
        %v3852 = vpop.permute.xlu0 %3851
        %3853 = vrot.lane.b32.xlu0 %v3765, 96
        %v3854 = vpop.permute.xlu0 %3853
        %3855 = vrot.lane.b32.xlu0 %v3766, 96
        %v3856 = vpop.permute.xlu0 %3855
        %3857 = vrot.lane.b32.xlu0 %v3767, 96
        %v3858 = vpop.permute.xlu0 %3857
        %3859 = vrot.lane.b32.xlu0 %v3768, 96
        %v3860 = vpop.permute.xlu0 %3859
        %3861 = vrot.lane.b32.xlu0 %v3769, 96
        %v3862 = vpop.permute.xlu0 %3861
        %3863 = vrot.lane.b32.xlu0 %v3770, 96
        %v3864 = vpop.permute.xlu0 %3863
        %3865 = vrot.lane.b32.xlu0 %v3771, 96
        %v3866 = vpop.permute.xlu0 %3865
        %3867 = vrot.lane.b32.xlu0 %v3772, 96
        %v3868 = vpop.permute.xlu0 %3867
        %vm3901 = vcmask 917248
        %3902 = vst.msk [vmem:[#allocation4] sm:$0xff] %vm3901, %v3806
        %3903 = vst.msk [vmem:[#allocation4 + $0x10] sm:$0xff] %vm3901, %v3808
        %3904 = vst.msk [vmem:[#allocation4 + $0x20] sm:$0xff] %vm3901, %v3810
        %3905 = vst.msk [vmem:[#allocation4 + $0x30] sm:$0xff] %vm3901, %v3812
        %3906 = vst.msk [vmem:[#allocation4 + $0x40] sm:$0xff] %vm3901, %v3814
        %3907 = vst.msk [vmem:[#allocation4 + $0x50] sm:$0xff] %vm3901, %v3816
        %3908 = vst.msk [vmem:[#allocation4 + $0x60] sm:$0xff] %vm3901, %v3818
        %3909 = vst.msk [vmem:[#allocation4 + $0x70] sm:$0xff] %vm3901, %v3820
        %3910 = vst.msk [vmem:[#allocation4 + $0x80] sm:$0xff] %vm3901, %v3822
        %3911 = vst.msk [vmem:[#allocation4 + $0x90] sm:$0xff] %vm3901, %v3824
        %3912 = vst.msk [vmem:[#allocation4 + $0xa0] sm:$0xff] %vm3901, %v3826
        %3913 = vst.msk [vmem:[#allocation4 + $0xb0] sm:$0xff] %vm3901, %v3828
        %3914 = vst.msk [vmem:[#allocation4 + $0xc0] sm:$0xff] %vm3901, %v3830
        %3915 = vst.msk [vmem:[#allocation4 + $0xd0] sm:$0xff] %vm3901, %v3832
        %3916 = vst.msk [vmem:[#allocation4 + $0xe0] sm:$0xff] %vm3901, %v3834
        %3917 = vst.msk [vmem:[#allocation4 + $0xf0] sm:$0xff] %vm3901, %v3836
        %3918 = vst.msk [vmem:[#allocation4 + $0x100] sm:$0xff] %vm3901, %v3838
        %3919 = vst.msk [vmem:[#allocation4 + $0x110] sm:$0xff] %vm3901, %v3840
        %3920 = vst.msk [vmem:[#allocation4 + $0x120] sm:$0xff] %vm3901, %v3842
        %3921 = vst.msk [vmem:[#allocation4 + $0x130] sm:$0xff] %vm3901, %v3844
        %3922 = vst.msk [vmem:[#allocation4 + $0x140] sm:$0xff] %vm3901, %v3846
        %3923 = vst.msk [vmem:[#allocation4 + $0x150] sm:$0xff] %vm3901, %v3848
        %3924 = vst.msk [vmem:[#allocation4 + $0x160] sm:$0xff] %vm3901, %v3850
        %3925 = vst.msk [vmem:[#allocation4 + $0x170] sm:$0xff] %vm3901, %v3852
        %3926 = vst.msk [vmem:[#allocation4 + $0x180] sm:$0xff] %vm3901, %v3854
        %3927 = vst.msk [vmem:[#allocation4 + $0x190] sm:$0xff] %vm3901, %v3856
        %3928 = vst.msk [vmem:[#allocation4 + $0x1a0] sm:$0xff] %vm3901, %v3858
        %3929 = vst.msk [vmem:[#allocation4 + $0x1b0] sm:$0xff] %vm3901, %v3860
        %3930 = vst.msk [vmem:[#allocation4 + $0x1c0] sm:$0xff] %vm3901, %v3862
        %3931 = vst.msk [vmem:[#allocation4 + $0x1d0] sm:$0xff] %vm3901, %v3864
        %3932 = vst.msk [vmem:[#allocation4 + $0x1e0] sm:$0xff] %vm3901, %v3866
        %3933 = vst.msk [vmem:[#allocation4 + $0x1f0] sm:$0xff] %vm3901, %v3868
        %v3934 = vld [vmem:[%s3740 + $0x1] sm:$0xff]
        %v3935 = vld [vmem:[%s3740 + $0x9] sm:$0xff]
        %v3936 = vld [vmem:[%s3740 + $0x19] sm:$0xff]
        %v3937 = vld [vmem:[%s3740 + $0x21] sm:$0xff]
        %v3938 = vld [vmem:[%s3740 + $0x31] sm:$0xff]
        %v3939 = vld [vmem:[%s3740 + $0x39] sm:$0xff]
        %v3940 = vld [vmem:[%s3740 + $0x49] sm:$0xff]
        %v3941 = vld [vmem:[%s3740 + $0x51] sm:$0xff]
        %v3942 = vld [vmem:[%s3740 + $0x61] sm:$0xff]
        %v3943 = vld [vmem:[%s3740 + $0x69] sm:$0xff]
        %v3944 = vld [vmem:[%s3740 + $0x79] sm:$0xff]
        %v3945 = vld [vmem:[%s3740 + $0x81] sm:$0xff]
        %v3946 = vld [vmem:[%s3740 + $0x91] sm:$0xff]
        %v3947 = vld [vmem:[%s3740 + $0x99] sm:$0xff]
        %v3948 = vld [vmem:[%s3740 + $0xa9] sm:$0xff]
        %v3949 = vld [vmem:[%s3740 + $0xb1] sm:$0xff]
        %v3950 = vld [vmem:[%s3740 + $0xc1] sm:$0xff]
        %v3951 = vld [vmem:[%s3740 + $0xc9] sm:$0xff]
        %v3952 = vld [vmem:[%s3740 + $0xd9] sm:$0xff]
        %v3953 = vld [vmem:[%s3740 + $0xe1] sm:$0xff]
        %v3954 = vld [vmem:[%s3740 + $0xf1] sm:$0xff]
        %v3955 = vld [vmem:[%s3740 + $0xf9] sm:$0xff]
        %v3956 = vld [vmem:[%s3740 + $0x109] sm:$0xff]
        %v3957 = vld [vmem:[%s3740 + $0x111] sm:$0xff]
        %v3958 = vld [vmem:[%s3740 + $0x121] sm:$0xff]
        %v3959 = vld [vmem:[%s3740 + $0x129] sm:$0xff]
        %v3960 = vld [vmem:[%s3740 + $0x139] sm:$0xff]
        %v3961 = vld [vmem:[%s3740 + $0x141] sm:$0xff]
        %v3962 = vld [vmem:[%s3740 + $0x151] sm:$0xff]
        %v3963 = vld [vmem:[%s3740 + $0x159] sm:$0xff]
        %v3964 = vld [vmem:[%s3740 + $0x169] sm:$0xff]
        %v3965 = vld [vmem:[%s3740 + $0x171] sm:$0xff]
        %3998 = vrot.lane.b32.xlu0 %v3934, 112
        %v3999 = vpop.permute.xlu0 %3998
        %4000 = vrot.lane.b32.xlu0 %v3935, 112
        %v4001 = vpop.permute.xlu0 %4000
        %4002 = vrot.lane.b32.xlu0 %v3936, 112
        %v4003 = vpop.permute.xlu0 %4002
        %4004 = vrot.lane.b32.xlu0 %v3937, 112
        %v4005 = vpop.permute.xlu0 %4004
        %4006 = vrot.lane.b32.xlu0 %v3938, 112
        %v4007 = vpop.permute.xlu0 %4006
        %4008 = vrot.lane.b32.xlu0 %v3939, 112
        %v4009 = vpop.permute.xlu0 %4008
        %4010 = vrot.lane.b32.xlu0 %v3940, 112
        %v4011 = vpop.permute.xlu0 %4010
        %4012 = vrot.lane.b32.xlu0 %v3941, 112
        %v4013 = vpop.permute.xlu0 %4012
        %4014 = vrot.lane.b32.xlu0 %v3942, 112
        %v4015 = vpop.permute.xlu0 %4014
        %4016 = vrot.lane.b32.xlu0 %v3943, 112
        %v4017 = vpop.permute.xlu0 %4016
        %4018 = vrot.lane.b32.xlu0 %v3944, 112
        %v4019 = vpop.permute.xlu0 %4018
        %4020 = vrot.lane.b32.xlu0 %v3945, 112
        %v4021 = vpop.permute.xlu0 %4020
        %4022 = vrot.lane.b32.xlu0 %v3946, 112
        %v4023 = vpop.permute.xlu0 %4022
        %4024 = vrot.lane.b32.xlu0 %v3947, 112
        %v4025 = vpop.permute.xlu0 %4024
        %4026 = vrot.lane.b32.xlu0 %v3948, 112
        %v4027 = vpop.permute.xlu0 %4026
        %4028 = vrot.lane.b32.xlu0 %v3949, 112
        %v4029 = vpop.permute.xlu0 %4028
        %4030 = vrot.lane.b32.xlu0 %v3950, 112
        %v4031 = vpop.permute.xlu0 %4030
        %4032 = vrot.lane.b32.xlu0 %v3951, 112
        %v4033 = vpop.permute.xlu0 %4032
        %4034 = vrot.lane.b32.xlu0 %v3952, 112
        %v4035 = vpop.permute.xlu0 %4034
        %4036 = vrot.lane.b32.xlu0 %v3953, 112
        %v4037 = vpop.permute.xlu0 %4036
        %4038 = vrot.lane.b32.xlu0 %v3954, 112
        %v4039 = vpop.permute.xlu0 %4038
        %4040 = vrot.lane.b32.xlu0 %v3955, 112
        %v4041 = vpop.permute.xlu0 %4040
        %4042 = vrot.lane.b32.xlu0 %v3956, 112
        %v4043 = vpop.permute.xlu0 %4042
        %4044 = vrot.lane.b32.xlu0 %v3957, 112
        %v4045 = vpop.permute.xlu0 %4044
        %4046 = vrot.lane.b32.xlu0 %v3958, 112
        %v4047 = vpop.permute.xlu0 %4046
        %4048 = vrot.lane.b32.xlu0 %v3959, 112
        %v4049 = vpop.permute.xlu0 %4048
        %4050 = vrot.lane.b32.xlu0 %v3960, 112
        %v4051 = vpop.permute.xlu0 %4050
        %4052 = vrot.lane.b32.xlu0 %v3961, 112
        %v4053 = vpop.permute.xlu0 %4052
        %4054 = vrot.lane.b32.xlu0 %v3962, 112
        %v4055 = vpop.permute.xlu0 %4054
        %4056 = vrot.lane.b32.xlu0 %v3963, 112
        %v4057 = vpop.permute.xlu0 %4056
        %4058 = vrot.lane.b32.xlu0 %v3964, 112
        %v4059 = vpop.permute.xlu0 %4058
        %4060 = vrot.lane.b32.xlu0 %v3965, 112
        %v4061 = vpop.permute.xlu0 %4060
        %vm4094 = vcmask 1048448
        %4095 = vst.msk [vmem:[#allocation4] sm:$0xff] %vm4094, %v3999
        %4096 = vst.msk [vmem:[#allocation4 + $0x10] sm:$0xff] %vm4094, %v4001
        %4097 = vst.msk [vmem:[#allocation4 + $0x20] sm:$0xff] %vm4094, %v4003
        %4098 = vst.msk [vmem:[#allocation4 + $0x30] sm:$0xff] %vm4094, %v4005
        %4099 = vst.msk [vmem:[#allocation4 + $0x40] sm:$0xff] %vm4094, %v4007
        %4100 = vst.msk [vmem:[#allocation4 + $0x50] sm:$0xff] %vm4094, %v4009
        %4101 = vst.msk [vmem:[#allocation4 + $0x60] sm:$0xff] %vm4094, %v4011
        %4102 = vst.msk [vmem:[#allocation4 + $0x70] sm:$0xff] %vm4094, %v4013
        %4103 = vst.msk [vmem:[#allocation4 + $0x80] sm:$0xff] %vm4094, %v4015
        %4104 = vst.msk [vmem:[#allocation4 + $0x90] sm:$0xff] %vm4094, %v4017
        %4105 = vst.msk [vmem:[#allocation4 + $0xa0] sm:$0xff] %vm4094, %v4019
        %4106 = vst.msk [vmem:[#allocation4 + $0xb0] sm:$0xff] %vm4094, %v4021
        %4107 = vst.msk [vmem:[#allocation4 + $0xc0] sm:$0xff] %vm4094, %v4023
        %4108 = vst.msk [vmem:[#allocation4 + $0xd0] sm:$0xff] %vm4094, %v4025
        %4109 = vst.msk [vmem:[#allocation4 + $0xe0] sm:$0xff] %vm4094, %v4027
        %4110 = vst.msk [vmem:[#allocation4 + $0xf0] sm:$0xff] %vm4094, %v4029
        %4111 = vst.msk [vmem:[#allocation4 + $0x100] sm:$0xff] %vm4094, %v4031
        %4112 = vst.msk [vmem:[#allocation4 + $0x110] sm:$0xff] %vm4094, %v4033
        %4113 = vst.msk [vmem:[#allocation4 + $0x120] sm:$0xff] %vm4094, %v4035
        %4114 = vst.msk [vmem:[#allocation4 + $0x130] sm:$0xff] %vm4094, %v4037
        %4115 = vst.msk [vmem:[#allocation4 + $0x140] sm:$0xff] %vm4094, %v4039
        %4116 = vst.msk [vmem:[#allocation4 + $0x150] sm:$0xff] %vm4094, %v4041
        %4117 = vst.msk [vmem:[#allocation4 + $0x160] sm:$0xff] %vm4094, %v4043
        %4118 = vst.msk [vmem:[#allocation4 + $0x170] sm:$0xff] %vm4094, %v4045
        %4119 = vst.msk [vmem:[#allocation4 + $0x180] sm:$0xff] %vm4094, %v4047
        %4120 = vst.msk [vmem:[#allocation4 + $0x190] sm:$0xff] %vm4094, %v4049
        %4121 = vst.msk [vmem:[#allocation4 + $0x1a0] sm:$0xff] %vm4094, %v4051
        %4122 = vst.msk [vmem:[#allocation4 + $0x1b0] sm:$0xff] %vm4094, %v4053
        %4123 = vst.msk [vmem:[#allocation4 + $0x1c0] sm:$0xff] %vm4094, %v4055
        %4124 = vst.msk [vmem:[#allocation4 + $0x1d0] sm:$0xff] %vm4094, %v4057
        %4125 = vst.msk [vmem:[#allocation4 + $0x1e0] sm:$0xff] %vm4094, %v4059
        %4126 = vst.msk [vmem:[#allocation4 + $0x1f0] sm:$0xff] %vm4094, %v4061
        %v4127 = vld [vmem:[%s3740 + $0x2] sm:$0xff]
        %v4128 = vld [vmem:[%s3740 + $0xa] sm:$0xff]
        %v4129 = vld [vmem:[%s3740 + $0x1a] sm:$0xff]
        %v4130 = vld [vmem:[%s3740 + $0x22] sm:$0xff]
        %v4131 = vld [vmem:[%s3740 + $0x32] sm:$0xff]
        %v4132 = vld [vmem:[%s3740 + $0x3a] sm:$0xff]
        %v4133 = vld [vmem:[%s3740 + $0x4a] sm:$0xff]
        %v4134 = vld [vmem:[%s3740 + $0x52] sm:$0xff]
        %v4135 = vld [vmem:[%s3740 + $0x62] sm:$0xff]
        %v4136 = vld [vmem:[%s3740 + $0x6a] sm:$0xff]
        %v4137 = vld [vmem:[%s3740 + $0x7a] sm:$0xff]
        %v4138 = vld [vmem:[%s3740 + $0x82] sm:$0xff]
        %v4139 = vld [vmem:[%s3740 + $0x92] sm:$0xff]
        %v4140 = vld [vmem:[%s3740 + $0x9a] sm:$0xff]
        %v4141 = vld [vmem:[%s3740 + $0xaa] sm:$0xff]
        %v4142 = vld [vmem:[%s3740 + $0xb2] sm:$0xff]
        %v4143 = vld [vmem:[%s3740 + $0xc2] sm:$0xff]
        %v4144 = vld [vmem:[%s3740 + $0xca] sm:$0xff]
        %v4145 = vld [vmem:[%s3740 + $0xda] sm:$0xff]
        %v4146 = vld [vmem:[%s3740 + $0xe2] sm:$0xff]
        %v4147 = vld [vmem:[%s3740 + $0xf2] sm:$0xff]
        %v4148 = vld [vmem:[%s3740 + $0xfa] sm:$0xff]
        %v4149 = vld [vmem:[%s3740 + $0x10a] sm:$0xff]
        %v4150 = vld [vmem:[%s3740 + $0x112] sm:$0xff]
        %v4151 = vld [vmem:[%s3740 + $0x122] sm:$0xff]
        %v4152 = vld [vmem:[%s3740 + $0x12a] sm:$0xff]
        %v4153 = vld [vmem:[%s3740 + $0x13a] sm:$0xff]
        %v4154 = vld [vmem:[%s3740 + $0x142] sm:$0xff]
        %v4155 = vld [vmem:[%s3740 + $0x152] sm:$0xff]
        %v4156 = vld [vmem:[%s3740 + $0x15a] sm:$0xff]
        %v4157 = vld [vmem:[%s3740 + $0x16a] sm:$0xff]
        %v4158 = vld [vmem:[%s3740 + $0x172] sm:$0xff]
        %4159 = vst.msk [vmem:[#allocation4 + $0x8] sm:$0xff] %vm503, %v4127
        %4160 = vst.msk [vmem:[#allocation4 + $0x18] sm:$0xff] %vm503, %v4128
        %4161 = vst.msk [vmem:[#allocation4 + $0x28] sm:$0xff] %vm503, %v4129
        %4162 = vst.msk [vmem:[#allocation4 + $0x38] sm:$0xff] %vm503, %v4130
        %4163 = vst.msk [vmem:[#allocation4 + $0x48] sm:$0xff] %vm503, %v4131
        %4164 = vst.msk [vmem:[#allocation4 + $0x58] sm:$0xff] %vm503, %v4132
        %4165 = vst.msk [vmem:[#allocation4 + $0x68] sm:$0xff] %vm503, %v4133
        %4166 = vst.msk [vmem:[#allocation4 + $0x78] sm:$0xff] %vm503, %v4134
        %4167 = vst.msk [vmem:[#allocation4 + $0x88] sm:$0xff] %vm503, %v4135
        %4168 = vst.msk [vmem:[#allocation4 + $0x98] sm:$0xff] %vm503, %v4136
        %4169 = vst.msk [vmem:[#allocation4 + $0xa8] sm:$0xff] %vm503, %v4137
        %4170 = vst.msk [vmem:[#allocation4 + $0xb8] sm:$0xff] %vm503, %v4138
        %4171 = vst.msk [vmem:[#allocation4 + $0xc8] sm:$0xff] %vm503, %v4139
        %4172 = vst.msk [vmem:[#allocation4 + $0xd8] sm:$0xff] %vm503, %v4140
        %4173 = vst.msk [vmem:[#allocation4 + $0xe8] sm:$0xff] %vm503, %v4141
        %4174 = vst.msk [vmem:[#allocation4 + $0xf8] sm:$0xff] %vm503, %v4142
        %4175 = vst.msk [vmem:[#allocation4 + $0x108] sm:$0xff] %vm503, %v4143
        %4176 = vst.msk [vmem:[#allocation4 + $0x118] sm:$0xff] %vm503, %v4144
        %4177 = vst.msk [vmem:[#allocation4 + $0x128] sm:$0xff] %vm503, %v4145
        %4178 = vst.msk [vmem:[#allocation4 + $0x138] sm:$0xff] %vm503, %v4146
        %4179 = vst.msk [vmem:[#allocation4 + $0x148] sm:$0xff] %vm503, %v4147
        %4180 = vst.msk [vmem:[#allocation4 + $0x158] sm:$0xff] %vm503, %v4148
        %4181 = vst.msk [vmem:[#allocation4 + $0x168] sm:$0xff] %vm503, %v4149
        %4182 = vst.msk [vmem:[#allocation4 + $0x178] sm:$0xff] %vm503, %v4150
        %4183 = vst.msk [vmem:[#allocation4 + $0x188] sm:$0xff] %vm503, %v4151
        %4184 = vst.msk [vmem:[#allocation4 + $0x198] sm:$0xff] %vm503, %v4152
        %4185 = vst.msk [vmem:[#allocation4 + $0x1a8] sm:$0xff] %vm503, %v4153
        %4186 = vst.msk [vmem:[#allocation4 + $0x1b8] sm:$0xff] %vm503, %v4154
        %4187 = vst.msk [vmem:[#allocation4 + $0x1c8] sm:$0xff] %vm503, %v4155
        %4188 = vst.msk [vmem:[#allocation4 + $0x1d8] sm:$0xff] %vm503, %v4156
        %4189 = vst.msk [vmem:[#allocation4 + $0x1e8] sm:$0xff] %vm503, %v4157
        %4190 = vst.msk [vmem:[#allocation4 + $0x1f8] sm:$0xff] %vm503, %v4158
        %v4191 = vld [vmem:[#allocation4] sm:$0xff]
        %v4192 = vld [vmem:[#allocation4 + $0x8] sm:$0xff]
        %v4193 = vld [vmem:[#allocation4 + $0x10] sm:$0xff]
        %v4194 = vld [vmem:[#allocation4 + $0x18] sm:$0xff]
        %v4195 = vld [vmem:[#allocation4 + $0x20] sm:$0xff]
        %v4196 = vld [vmem:[#allocation4 + $0x28] sm:$0xff]
        %v4197 = vld [vmem:[#allocation4 + $0x30] sm:$0xff]
        %v4198 = vld [vmem:[#allocation4 + $0x38] sm:$0xff]
        %v4199 = vld [vmem:[#allocation4 + $0x40] sm:$0xff]
        %v4200 = vld [vmem:[#allocation4 + $0x48] sm:$0xff]
        %v4201 = vld [vmem:[#allocation4 + $0x50] sm:$0xff]
        %v4202 = vld [vmem:[#allocation4 + $0x58] sm:$0xff]
        %v4203 = vld [vmem:[#allocation4 + $0x60] sm:$0xff]
        %v4204 = vld [vmem:[#allocation4 + $0x68] sm:$0xff]
        %v4205 = vld [vmem:[#allocation4 + $0x70] sm:$0xff]
        %v4206 = vld [vmem:[#allocation4 + $0x78] sm:$0xff]
        %v4207 = vld [vmem:[#allocation4 + $0x80] sm:$0xff]
        %v4208 = vld [vmem:[#allocation4 + $0x88] sm:$0xff]
        %v4209 = vld [vmem:[#allocation4 + $0x90] sm:$0xff]
        %v4210 = vld [vmem:[#allocation4 + $0x98] sm:$0xff]
        %v4211 = vld [vmem:[#allocation4 + $0xa0] sm:$0xff]
        %v4212 = vld [vmem:[#allocation4 + $0xa8] sm:$0xff]
        %v4213 = vld [vmem:[#allocation4 + $0xb0] sm:$0xff]
        %v4214 = vld [vmem:[#allocation4 + $0xb8] sm:$0xff]
        %v4215 = vld [vmem:[#allocation4 + $0xc0] sm:$0xff]
        %v4216 = vld [vmem:[#allocation4 + $0xc8] sm:$0xff]
        %v4217 = vld [vmem:[#allocation4 + $0xd0] sm:$0xff]
        %v4218 = vld [vmem:[#allocation4 + $0xd8] sm:$0xff]
        %v4219 = vld [vmem:[#allocation4 + $0xe0] sm:$0xff]
        %v4220 = vld [vmem:[#allocation4 + $0xe8] sm:$0xff]
        %v4221 = vld [vmem:[#allocation4 + $0xf0] sm:$0xff]
        %v4222 = vld [vmem:[#allocation4 + $0xf8] sm:$0xff]
        %v4223 = vld [vmem:[#allocation4 + $0x100] sm:$0xff]
        %v4224 = vld [vmem:[#allocation4 + $0x108] sm:$0xff]
        %v4225 = vld [vmem:[#allocation4 + $0x110] sm:$0xff]
        %v4226 = vld [vmem:[#allocation4 + $0x118] sm:$0xff]
        %v4227 = vld [vmem:[#allocation4 + $0x120] sm:$0xff]
        %v4228 = vld [vmem:[#allocation4 + $0x128] sm:$0xff]
        %v4229 = vld [vmem:[#allocation4 + $0x130] sm:$0xff]
        %v4230 = vld [vmem:[#allocation4 + $0x138] sm:$0xff]
        %v4231 = vld [vmem:[#allocation4 + $0x140] sm:$0xff]
        %v4232 = vld [vmem:[#allocation4 + $0x148] sm:$0xff]
        %v4233 = vld [vmem:[#allocation4 + $0x150] sm:$0xff]
        %v4234 = vld [vmem:[#allocation4 + $0x158] sm:$0xff]
        %v4235 = vld [vmem:[#allocation4 + $0x160] sm:$0xff]
        %v4236 = vld [vmem:[#allocation4 + $0x168] sm:$0xff]
        %v4237 = vld [vmem:[#allocation4 + $0x170] sm:$0xff]
        %v4238 = vld [vmem:[#allocation4 + $0x178] sm:$0xff]
        %v4239 = vld [vmem:[#allocation4 + $0x180] sm:$0xff]
        %v4240 = vld [vmem:[#allocation4 + $0x188] sm:$0xff]
        %v4241 = vld [vmem:[#allocation4 + $0x190] sm:$0xff]
        %v4242 = vld [vmem:[#allocation4 + $0x198] sm:$0xff]
        %v4243 = vld [vmem:[#allocation4 + $0x1a0] sm:$0xff]
        %v4244 = vld [vmem:[#allocation4 + $0x1a8] sm:$0xff]
        %v4245 = vld [vmem:[#allocation4 + $0x1b0] sm:$0xff]
        %v4246 = vld [vmem:[#allocation4 + $0x1b8] sm:$0xff]
        %v4247 = vld [vmem:[#allocation4 + $0x1c0] sm:$0xff]
        %v4248 = vld [vmem:[#allocation4 + $0x1c8] sm:$0xff]
        %v4249 = vld [vmem:[#allocation4 + $0x1d0] sm:$0xff]
        %v4250 = vld [vmem:[#allocation4 + $0x1d8] sm:$0xff]
        %v4251 = vld [vmem:[#allocation4 + $0x1e0] sm:$0xff]
        %v4252 = vld [vmem:[#allocation4 + $0x1e8] sm:$0xff]
        %v4253 = vld [vmem:[#allocation4 + $0x1f0] sm:$0xff]
        %v4254 = vld [vmem:[#allocation4 + $0x1f8] sm:$0xff]
        %v4255 = vpack.c.bf16 %v4193, %v4191
        %v4256 = vpack.c.bf16 %v4194, %v4192
        %v4257 = vpack.c.bf16 %v4197, %v4195
        %v4258 = vpack.c.bf16 %v4198, %v4196
        %v4259 = vpack.c.bf16 %v4201, %v4199
        %v4260 = vpack.c.bf16 %v4202, %v4200
        %v4261 = vpack.c.bf16 %v4205, %v4203
        %v4262 = vpack.c.bf16 %v4206, %v4204
        %v4263 = vpack.c.bf16 %v4209, %v4207
        %v4264 = vpack.c.bf16 %v4210, %v4208
        %v4265 = vpack.c.bf16 %v4213, %v4211
        %v4266 = vpack.c.bf16 %v4214, %v4212
        %v4267 = vpack.c.bf16 %v4217, %v4215
        %v4268 = vpack.c.bf16 %v4218, %v4216
        %v4269 = vpack.c.bf16 %v4221, %v4219
        %v4270 = vpack.c.bf16 %v4222, %v4220
        %v4271 = vpack.c.bf16 %v4225, %v4223
        %v4272 = vpack.c.bf16 %v4226, %v4224
        %v4273 = vpack.c.bf16 %v4229, %v4227
        %v4274 = vpack.c.bf16 %v4230, %v4228
        %v4275 = vpack.c.bf16 %v4233, %v4231
        %v4276 = vpack.c.bf16 %v4234, %v4232
        %v4277 = vpack.c.bf16 %v4237, %v4235
        %v4278 = vpack.c.bf16 %v4238, %v4236
        %v4279 = vpack.c.bf16 %v4241, %v4239
        %v4280 = vpack.c.bf16 %v4242, %v4240
        %v4281 = vpack.c.bf16 %v4245, %v4243
        %v4282 = vpack.c.bf16 %v4246, %v4244
        %v4283 = vpack.c.bf16 %v4249, %v4247
        %v4284 = vpack.c.bf16 %v4250, %v4248
        %v4285 = vpack.c.bf16 %v4253, %v4251
        %v4286 = vpack.c.bf16 %v4254, %v4252
        %v4287 = vld [vmem:[%s4] sm:$0xf]
        %v4288 = vld [vmem:[%s4 + $0x4] sm:$0xf]
        %v4289 = vld [vmem:[%s4 + $0x8] sm:$0xf]
        %v4290 = vld [vmem:[%s4 + $0xc] sm:$0xf]
        %v4291 = vld [vmem:[%s4 + $0x10] sm:$0xf]
        %v4292 = vld [vmem:[%s4 + $0x14] sm:$0xf]
        %v4293 = vld [vmem:[%s4 + $0x18] sm:$0xf]
        %v4294 = vld [vmem:[%s4 + $0x1c] sm:$0xf]
        %v4295 = vld [vmem:[%s4 + $0x20] sm:$0xf]
        %v4296 = vld [vmem:[%s4 + $0x24] sm:$0xf]
        %v4297 = vld [vmem:[%s4 + $0x28] sm:$0xf]
        %v4298 = vld [vmem:[%s4 + $0x2c] sm:$0xf]
        %v4299 = vld [vmem:[%s4 + $0x30] sm:$0xf]
        %v4300 = vld [vmem:[%s4 + $0x34] sm:$0xf]
        %v4301 = vld [vmem:[%s4 + $0x38] sm:$0xf]
        %v4302 = vld [vmem:[%s4 + $0x3c] sm:$0xf]
        %v4303 = vld [vmem:[%s4 + $0x40] sm:$0xf]
        %v4304 = vld [vmem:[%s4 + $0x44] sm:$0xf]
        %v4305 = vld [vmem:[#allocation9] sm:$0x1]
        %v4307 = vlaneseq
        %v4308 = vshrl.u32 %v4307, 7
        %v4309 = vsub.s32 0, %v4308
        %v4310 = vrot.slane %v4305, %v4309
        %v4330 = vunpack.c.l.b16 %v4287
        %v4331 = vunpack.c.l.b16 %v4288
        %v4332 = vunpack.c.l.b16 %v4289
        %v4333 = vunpack.c.l.b16 %v4290
        %v4334 = vunpack.c.l.b16 %v4291
        %v4335 = vunpack.c.l.b16 %v4292
        %v4336 = vunpack.c.l.b16 %v4293
        %v4337 = vunpack.c.l.b16 %v4294
        %v4338 = vunpack.c.l.b16 %v4295
        %v4339 = vunpack.c.l.b16 %v4296
        %v4340 = vunpack.c.l.b16 %v4297
        %v4341 = vunpack.c.l.b16 %v4298
        %v4342 = vunpack.c.l.b16 %v4299
        %v4343 = vunpack.c.l.b16 %v4300
        %v4344 = vunpack.c.l.b16 %v4301
        %v4345 = vunpack.c.l.b16 %v4302
        %v4346 = vunpack.c.l.b16 %v4303
        %v4347 = vunpack.c.l.b16 %v4304
        %v4348 = vpack.c.b16 %v4331, %v4330
        %v4349 = vpack.c.b16 %v4333, %v4332
        %v4350 = vpack.c.b16 %v4335, %v4334
        %v4351 = vpack.c.b16 %v4337, %v4336
        %v4352 = vpack.c.b16 %v4339, %v4338
        %v4353 = vpack.c.b16 %v4341, %v4340
        %v4354 = vpack.c.b16 %v4343, %v4342
        %v4355 = vpack.c.b16 %v4345, %v4344
        %v4356 = vpack.c.b16 %v4347, %v4346
        %v4367 = vsel %vm503, %v4256, 0
        %v4370 = vsel %vm503, %v4258, 0
        %v4373 = vsel %vm503, %v4260, 0
        %v4376 = vsel %vm503, %v4262, 0
        %v4379 = vsel %vm503, %v4264, 0
        %v4382 = vsel %vm503, %v4266, 0
        %v4385 = vsel %vm503, %v4268, 0
        %v4388 = vsel %vm503, %v4270, 0
        %v4391 = vsel %vm503, %v4272, 0
        %v4394 = vsel %vm503, %v4274, 0
        %v4397 = vsel %vm503, %v4276, 0
        %v4400 = vsel %vm503, %v4278, 0
        %v4403 = vsel %vm503, %v4280, 0
        %v4406 = vsel %vm503, %v4282, 0
        %v4409 = vsel %vm503, %v4284, 0
        %v4412 = vsel %vm503, %v4286, 0
        %4414 = vmatprep.subr.bf16.mxu0 0
        %4415 = vmatpush1.bf16.msra.mxu0 %v4355
        %4416 = vmatprep.subr.bf16.mxu0 0
        %4417 = vmatpush1.bf16.msra.mxu0 %v4354
        %4418 = vmatprep.subr.bf16.mxu0 0
        %4419 = vmatpush1.bf16.msra.mxu0 %v4353
        %4420 = vmatprep.subr.bf16.mxu0 0
        %4421 = vmatpush1.bf16.msra.mxu0 %v4352
        %4422 = vmatprep.subr.bf16.mxu0 0
        %4423 = vmatpush1.bf16.msra.mxu0 %v4351
        %4424 = vmatprep.subr.bf16.mxu0 0
        %4425 = vmatpush1.bf16.msra.mxu0 %v4350
        %4426 = vmatprep.subr.bf16.mxu0 0
        %4427 = vmatpush1.bf16.msra.mxu0 %v4349
        %4428 = vmatprep.subr.bf16.mxu0 0
        %4429 = vmatpush1.bf16.msra.mxu0 %v4348
        %4430 = vmatprep.subr.bf16.mxu0 0
        %4431 = vmatpush2.bf16.msra.mxu0 0
        %4432 = vmatprep.subr.bf16.mxu0 0
        %4433 = vmatpush2.bf16.msra.mxu0 0
        %4434 = vmatprep.subr.bf16.mxu0 0
        %4435 = vmatpush2.bf16.msra.mxu0 0
        %4436 = vmatprep.subr.bf16.mxu0 0
        %4437 = vmatpush2.bf16.msra.mxu0 0
        %4438 = vmatprep.subr.bf16.mxu0 0
        %4439 = vmatpush2.bf16.msra.mxu0 0
        %4440 = vmatprep.subr.bf16.mxu0 0
        %4441 = vmatpush2.bf16.msra.mxu0 0
        %4442 = vmatprep.subr.bf16.mxu0 0
        %4443 = vmatpush2.bf16.msra.mxu0 0
        %4444 = vmatprep.subr.bf16.mxu0 0
        %4445 = vmatpush2.bf16.msra.mxu0 %v4356
        %4446 = vmatprep.mubr.bf16.mxu0 %v4367
        %4447 = vmatmul.mubr.bf16.gmra.mxu0 %v4255
        %v4448 = vpop.f32.mrf.mxu0
        %v4449 = vadd.f32 %v4310, %v4448
        %v4450 = vpop.f32.mrf.mxu0
        %v4451 = vpop.f32.mrf.mxu0
        %v4452 = vadd.f32 %v4310, %v4451
        %v4453 = vpop.f32.mrf.mxu0
        %4454 = vmatprep.mubr.bf16.mxu0 %v4370
        %4455 = vmatmul.mubr.bf16.gmra.mxu0 %v4257
        %v4456 = vpop.f32.mrf.mxu0
        %v4457 = vadd.f32 %v4310, %v4456
        %v4458 = vpop.f32.mrf.mxu0
        %v4459 = vpop.f32.mrf.mxu0
        %v4460 = vadd.f32 %v4310, %v4459
        %v4461 = vpop.f32.mrf.mxu0
        %4462 = vmatprep.mubr.bf16.mxu0 %v4373
        %4463 = vmatmul.mubr.bf16.gmra.mxu0 %v4259
        %v4464 = vpop.f32.mrf.mxu0
        %v4465 = vadd.f32 %v4310, %v4464
        %v4466 = vpop.f32.mrf.mxu0
        %v4467 = vpop.f32.mrf.mxu0
        %v4468 = vadd.f32 %v4310, %v4467
        %v4469 = vpop.f32.mrf.mxu0
        %4470 = vmatprep.mubr.bf16.mxu0 %v4376
        %4471 = vmatmul.mubr.bf16.gmra.mxu0 %v4261
        %v4472 = vpop.f32.mrf.mxu0
        %v4473 = vadd.f32 %v4310, %v4472
        %v4474 = vpop.f32.mrf.mxu0
        %v4475 = vpop.f32.mrf.mxu0
        %v4476 = vadd.f32 %v4310, %v4475
        %v4477 = vpop.f32.mrf.mxu0
        %4478 = vmatprep.mubr.bf16.mxu0 %v4379
        %4479 = vmatmul.mubr.bf16.gmra.mxu0 %v4263
        %v4480 = vpop.f32.mrf.mxu0
        %v4481 = vadd.f32 %v4310, %v4480
        %v4482 = vpop.f32.mrf.mxu0
        %v4483 = vpop.f32.mrf.mxu0
        %v4484 = vadd.f32 %v4310, %v4483
        %v4485 = vpop.f32.mrf.mxu0
        %4486 = vmatprep.mubr.bf16.mxu0 %v4382
        %4487 = vmatmul.mubr.bf16.gmra.mxu0 %v4265
        %v4488 = vpop.f32.mrf.mxu0
        %v4489 = vadd.f32 %v4310, %v4488
        %v4490 = vpop.f32.mrf.mxu0
        %v4491 = vpop.f32.mrf.mxu0
        %v4492 = vadd.f32 %v4310, %v4491
        %v4493 = vpop.f32.mrf.mxu0
        %4494 = vmatprep.mubr.bf16.mxu0 %v4385
        %4495 = vmatmul.mubr.bf16.gmra.mxu0 %v4267
        %v4496 = vpop.f32.mrf.mxu0
        %v4497 = vadd.f32 %v4310, %v4496
        %v4498 = vpop.f32.mrf.mxu0
        %v4499 = vpop.f32.mrf.mxu0
        %v4500 = vadd.f32 %v4310, %v4499
        %v4501 = vpop.f32.mrf.mxu0
        %4502 = vmatprep.mubr.bf16.mxu0 %v4388
        %4503 = vmatmul.mubr.bf16.gmra.mxu0 %v4269
        %v4504 = vpop.f32.mrf.mxu0
        %v4505 = vadd.f32 %v4310, %v4504
        %v4506 = vpop.f32.mrf.mxu0
        %v4507 = vpop.f32.mrf.mxu0
        %v4508 = vadd.f32 %v4310, %v4507
        %v4509 = vpop.f32.mrf.mxu0
        %4510 = vmatprep.mubr.bf16.mxu0 %v4391
        %4511 = vmatmul.mubr.bf16.gmra.mxu0 %v4271
        %v4512 = vpop.f32.mrf.mxu0
        %v4513 = vadd.f32 %v4310, %v4512
        %v4514 = vpop.f32.mrf.mxu0
        %v4515 = vpop.f32.mrf.mxu0
        %v4516 = vadd.f32 %v4310, %v4515
        %v4517 = vpop.f32.mrf.mxu0
        %4518 = vmatprep.mubr.bf16.mxu0 %v4394
        %4519 = vmatmul.mubr.bf16.gmra.mxu0 %v4273
        %v4520 = vpop.f32.mrf.mxu0
        %v4521 = vadd.f32 %v4310, %v4520
        %v4522 = vpop.f32.mrf.mxu0
        %v4523 = vpop.f32.mrf.mxu0
        %v4524 = vadd.f32 %v4310, %v4523
        %v4525 = vpop.f32.mrf.mxu0
        %4526 = vmatprep.mubr.bf16.mxu0 %v4397
        %4527 = vmatmul.mubr.bf16.gmra.mxu0 %v4275
        %v4528 = vpop.f32.mrf.mxu0
        %v4529 = vadd.f32 %v4310, %v4528
        %v4530 = vpop.f32.mrf.mxu0
        %v4531 = vpop.f32.mrf.mxu0
        %v4532 = vadd.f32 %v4310, %v4531
        %v4533 = vpop.f32.mrf.mxu0
        %4534 = vmatprep.mubr.bf16.mxu0 %v4400
        %4535 = vmatmul.mubr.bf16.gmra.mxu0 %v4277
        %v4536 = vpop.f32.mrf.mxu0
        %v4537 = vadd.f32 %v4310, %v4536
        %v4538 = vpop.f32.mrf.mxu0
        %v4539 = vpop.f32.mrf.mxu0
        %v4540 = vadd.f32 %v4310, %v4539
        %v4541 = vpop.f32.mrf.mxu0
        %4542 = vmatprep.mubr.bf16.mxu0 %v4403
        %4543 = vmatmul.mubr.bf16.gmra.mxu0 %v4279
        %v4544 = vpop.f32.mrf.mxu0
        %v4545 = vadd.f32 %v4310, %v4544
        %v4546 = vpop.f32.mrf.mxu0
        %v4547 = vpop.f32.mrf.mxu0
        %v4548 = vadd.f32 %v4310, %v4547
        %v4549 = vpop.f32.mrf.mxu0
        %4550 = vmatprep.mubr.bf16.mxu0 %v4406
        %4551 = vmatmul.mubr.bf16.gmra.mxu0 %v4281
        %v4552 = vpop.f32.mrf.mxu0
        %v4553 = vadd.f32 %v4310, %v4552
        %v4554 = vpop.f32.mrf.mxu0
        %v4555 = vpop.f32.mrf.mxu0
        %v4556 = vadd.f32 %v4310, %v4555
        %v4557 = vpop.f32.mrf.mxu0
        %4558 = vmatprep.mubr.bf16.mxu0 %v4409
        %4559 = vmatmul.mubr.bf16.gmra.mxu0 %v4283
        %v4560 = vpop.f32.mrf.mxu0
        %v4561 = vadd.f32 %v4310, %v4560
        %v4562 = vpop.f32.mrf.mxu0
        %v4563 = vpop.f32.mrf.mxu0
        %v4564 = vadd.f32 %v4310, %v4563
        %v4565 = vpop.f32.mrf.mxu0
        %4566 = vmatprep.mubr.bf16.mxu0 %v4412
        %4567 = vmatmul.mubr.bf16.gmra.mxu0 %v4285
        %v4568 = vpop.f32.mrf.mxu0
        %v4569 = vadd.f32 %v4310, %v4568
        %v4570 = vpop.f32.mrf.mxu0
        %v4571 = vpop.f32.mrf.mxu0
        %v4572 = vadd.f32 %v4310, %v4571
        %v4573 = vpop.f32.mrf.mxu0
        %4574 = vdwg.mxu0
        %v4575 = vld [vmem:[#allocation10] sm:$0x1]
        %vm4576 = vcmp.ge.f32.partialorder %v4449, 0.0
        %vm4577 = vcmp.ge.f32.partialorder %v4452, 0.0
        %vm4578 = vcmp.ge.f32.partialorder %v4457, 0.0
        %vm4579 = vcmp.ge.f32.partialorder %v4460, 0.0
        %vm4580 = vcmp.ge.f32.partialorder %v4465, 0.0
        %vm4581 = vcmp.ge.f32.partialorder %v4468, 0.0
        %vm4582 = vcmp.ge.f32.partialorder %v4473, 0.0
        %vm4583 = vcmp.ge.f32.partialorder %v4476, 0.0
        %vm4584 = vcmp.ge.f32.partialorder %v4481, 0.0
        %vm4585 = vcmp.ge.f32.partialorder %v4484, 0.0
        %vm4586 = vcmp.ge.f32.partialorder %v4489, 0.0
        %vm4587 = vcmp.ge.f32.partialorder %v4492, 0.0
        %vm4588 = vcmp.ge.f32.partialorder %v4497, 0.0
        %vm4589 = vcmp.ge.f32.partialorder %v4500, 0.0
        %vm4590 = vcmp.ge.f32.partialorder %v4505, 0.0
        %vm4591 = vcmp.ge.f32.partialorder %v4508, 0.0
        %vm4592 = vcmp.ge.f32.partialorder %v4513, 0.0
        %vm4593 = vcmp.ge.f32.partialorder %v4516, 0.0
        %vm4594 = vcmp.ge.f32.partialorder %v4521, 0.0
        %vm4595 = vcmp.ge.f32.partialorder %v4524, 0.0
        %vm4596 = vcmp.ge.f32.partialorder %v4529, 0.0
        %vm4597 = vcmp.ge.f32.partialorder %v4532, 0.0
        %vm4598 = vcmp.ge.f32.partialorder %v4537, 0.0
        %vm4599 = vcmp.ge.f32.partialorder %v4540, 0.0
        %vm4600 = vcmp.ge.f32.partialorder %v4545, 0.0
        %vm4601 = vcmp.ge.f32.partialorder %v4548, 0.0
        %vm4602 = vcmp.ge.f32.partialorder %v4553, 0.0
        %vm4603 = vcmp.ge.f32.partialorder %v4556, 0.0
        %vm4604 = vcmp.ge.f32.partialorder %v4561, 0.0
        %vm4605 = vcmp.ge.f32.partialorder %v4564, 0.0
        %vm4606 = vcmp.ge.f32.partialorder %v4569, 0.0
        %vm4607 = vcmp.ge.f32.partialorder %v4572, 0.0
        %v4609 = vlaneseq
        %v4610 = vshrl.u32 %v4609, 7
        %v4611 = vsub.s32 0, %v4610
        %v4612 = vrot.slane %v4575, %v4611
        %v4614 = vmul.f32 %v4612, %v4449
        %v4615 = vmul.f32 %v4612, %v4452
        %v4616 = vmul.f32 %v4612, %v4457
        %v4617 = vmul.f32 %v4612, %v4460
        %v4618 = vmul.f32 %v4612, %v4465
        %v4619 = vmul.f32 %v4612, %v4468
        %v4620 = vmul.f32 %v4612, %v4473
        %v4621 = vmul.f32 %v4612, %v4476
        %v4622 = vmul.f32 %v4612, %v4481
        %v4623 = vmul.f32 %v4612, %v4484
        %v4624 = vmul.f32 %v4612, %v4489
        %v4625 = vmul.f32 %v4612, %v4492
        %v4626 = vmul.f32 %v4612, %v4497
        %v4627 = vmul.f32 %v4612, %v4500
        %v4628 = vmul.f32 %v4612, %v4505
        %v4629 = vmul.f32 %v4612, %v4508
        %v4630 = vmul.f32 %v4612, %v4513
        %v4631 = vmul.f32 %v4612, %v4516
        %v4632 = vmul.f32 %v4612, %v4521
        %v4633 = vmul.f32 %v4612, %v4524
        %v4634 = vmul.f32 %v4612, %v4529
        %v4635 = vmul.f32 %v4612, %v4532
        %v4636 = vmul.f32 %v4612, %v4537
        %v4637 = vmul.f32 %v4612, %v4540
        %v4638 = vmul.f32 %v4612, %v4545
        %v4639 = vmul.f32 %v4612, %v4548
        %v4640 = vmul.f32 %v4612, %v4553
        %v4641 = vmul.f32 %v4612, %v4556
        %v4642 = vmul.f32 %v4612, %v4561
        %v4643 = vmul.f32 %v4612, %v4564
        %v4644 = vmul.f32 %v4612, %v4569
        %v4645 = vmul.f32 %v4612, %v4572
        %v4646 = vsel %vm4576, %v4449, %v4614
        %v4647 = vsel %vm4577, %v4452, %v4615
        %v4648 = vsel %vm4578, %v4457, %v4616
        %v4649 = vsel %vm4579, %v4460, %v4617
        %v4650 = vsel %vm4580, %v4465, %v4618
        %v4651 = vsel %vm4581, %v4468, %v4619
        %v4652 = vsel %vm4582, %v4473, %v4620
        %v4653 = vsel %vm4583, %v4476, %v4621
        %v4654 = vsel %vm4584, %v4481, %v4622
        %v4655 = vsel %vm4585, %v4484, %v4623
        %v4656 = vsel %vm4586, %v4489, %v4624
        %v4657 = vsel %vm4587, %v4492, %v4625
        %v4658 = vsel %vm4588, %v4497, %v4626
        %v4659 = vsel %vm4589, %v4500, %v4627
        %v4660 = vsel %vm4590, %v4505, %v4628
        %v4661 = vsel %vm4591, %v4508, %v4629
        %v4662 = vsel %vm4592, %v4513, %v4630
        %v4663 = vsel %vm4593, %v4516, %v4631
        %v4664 = vsel %vm4594, %v4521, %v4632
        %v4665 = vsel %vm4595, %v4524, %v4633
        %v4666 = vsel %vm4596, %v4529, %v4634
        %v4667 = vsel %vm4597, %v4532, %v4635
        %v4668 = vsel %vm4598, %v4537, %v4636
        %v4669 = vsel %vm4599, %v4540, %v4637
        %v4670 = vsel %vm4600, %v4545, %v4638
        %v4671 = vsel %vm4601, %v4548, %v4639
        %v4672 = vsel %vm4602, %v4553, %v4640
        %v4673 = vsel %vm4603, %v4556, %v4641
        %v4674 = vsel %vm4604, %v4561, %v4642
        %v4675 = vsel %vm4605, %v4564, %v4643
        %v4676 = vsel %vm4606, %v4569, %v4644
        %v4677 = vsel %vm4607, %v4572, %v4645
        %4678 = vst.msk [vmem:[%s645 + $0x1] sm:$0xff] %vm503, %v4646
        %4679 = vst.msk [vmem:[%s645 + $0x9] sm:$0xff] %vm503, %v4647
        %4680 = vst.msk [vmem:[%s645 + $0x19] sm:$0xff] %vm503, %v4648
        %4681 = vst.msk [vmem:[%s645 + $0x21] sm:$0xff] %vm503, %v4649
        %4682 = vst.msk [vmem:[%s645 + $0x31] sm:$0xff] %vm503, %v4650
        %4683 = vst.msk [vmem:[%s645 + $0x39] sm:$0xff] %vm503, %v4651
        %4684 = vst.msk [vmem:[%s645 + $0x49] sm:$0xff] %vm503, %v4652
        %4685 = vst.msk [vmem:[%s645 + $0x51] sm:$0xff] %vm503, %v4653
        %4686 = vst.msk [vmem:[%s645 + $0x61] sm:$0xff] %vm503, %v4654
        %4687 = vst.msk [vmem:[%s645 + $0x69] sm:$0xff] %vm503, %v4655
        %4688 = vst.msk [vmem:[%s645 + $0x79] sm:$0xff] %vm503, %v4656
        %4689 = vst.msk [vmem:[%s645 + $0x81] sm:$0xff] %vm503, %v4657
        %4690 = vst.msk [vmem:[%s645 + $0x91] sm:$0xff] %vm503, %v4658
        %4691 = vst.msk [vmem:[%s645 + $0x99] sm:$0xff] %vm503, %v4659
        %4692 = vst.msk [vmem:[%s645 + $0xa9] sm:$0xff] %vm503, %v4660
        %4693 = vst.msk [vmem:[%s645 + $0xb1] sm:$0xff] %vm503, %v4661
        %4694 = vst.msk [vmem:[%s645 + $0xc1] sm:$0xff] %vm503, %v4662
        %4695 = vst.msk [vmem:[%s645 + $0xc9] sm:$0xff] %vm503, %v4663
        %4696 = vst.msk [vmem:[%s645 + $0xd9] sm:$0xff] %vm503, %v4664
        %4697 = vst.msk [vmem:[%s645 + $0xe1] sm:$0xff] %vm503, %v4665
        %4698 = vst.msk [vmem:[%s645 + $0xf1] sm:$0xff] %vm503, %v4666
        %4699 = vst.msk [vmem:[%s645 + $0xf9] sm:$0xff] %vm503, %v4667
        %4700 = vst.msk [vmem:[%s645 + $0x109] sm:$0xff] %vm503, %v4668
        %4701 = vst.msk [vmem:[%s645 + $0x111] sm:$0xff] %vm503, %v4669
        %4702 = vst.msk [vmem:[%s645 + $0x121] sm:$0xff] %vm503, %v4670
        %4703 = vst.msk [vmem:[%s645 + $0x129] sm:$0xff] %vm503, %v4671
        %4704 = vst.msk [vmem:[%s645 + $0x139] sm:$0xff] %vm503, %v4672
        %4705 = vst.msk [vmem:[%s645 + $0x141] sm:$0xff] %vm503, %v4673
        %4706 = vst.msk [vmem:[%s645 + $0x151] sm:$0xff] %vm503, %v4674
        %4707 = vst.msk [vmem:[%s645 + $0x159] sm:$0xff] %vm503, %v4675
        %4708 = vst.msk [vmem:[%s645 + $0x169] sm:$0xff] %vm503, %v4676
        %4709 = vst.msk [vmem:[%s645 + $0x171] sm:$0xff] %vm503, %v4677
        %v4710 = vld [vmem:[#allocation2] sm:$0xff]
        %v4711 = vld [vmem:[#allocation2 + $0x8] sm:$0xff]
        %v4712 = vld [vmem:[#allocation2 + $0x18] sm:$0xff]
        %v4713 = vld [vmem:[#allocation2 + $0x20] sm:$0xff]
        %v4714 = vld [vmem:[#allocation2 + $0x30] sm:$0xff]
        %v4715 = vld [vmem:[#allocation2 + $0x38] sm:$0xff]
        %v4716 = vld [vmem:[#allocation2 + $0x48] sm:$0xff]
        %v4717 = vld [vmem:[#allocation2 + $0x50] sm:$0xff]
        %v4718 = vld [vmem:[#allocation2 + $0x60] sm:$0xff]
        %v4719 = vld [vmem:[#allocation2 + $0x68] sm:$0xff]
        %v4720 = vld [vmem:[#allocation2 + $0x78] sm:$0xff]
        %v4721 = vld [vmem:[#allocation2 + $0x80] sm:$0xff]
        %v4722 = vld [vmem:[#allocation2 + $0x90] sm:$0xff]
        %v4723 = vld [vmem:[#allocation2 + $0x98] sm:$0xff]
        %v4724 = vld [vmem:[#allocation2 + $0xa8] sm:$0xff]
        %v4725 = vld [vmem:[#allocation2 + $0xb0] sm:$0xff]
        %v4726 = vld [vmem:[#allocation2 + $0xc0] sm:$0xff]
        %v4727 = vld [vmem:[#allocation2 + $0xc8] sm:$0xff]
        %v4728 = vld [vmem:[#allocation2 + $0xd8] sm:$0xff]
        %v4729 = vld [vmem:[#allocation2 + $0xe0] sm:$0xff]
        %v4730 = vld [vmem:[#allocation2 + $0xf0] sm:$0xff]
        %v4731 = vld [vmem:[#allocation2 + $0xf8] sm:$0xff]
        %v4732 = vld [vmem:[#allocation2 + $0x108] sm:$0xff]
        %v4733 = vld [vmem:[#allocation2 + $0x110] sm:$0xff]
        %v4734 = vld [vmem:[#allocation2 + $0x120] sm:$0xff]
        %v4735 = vld [vmem:[#allocation2 + $0x128] sm:$0xff]
        %v4736 = vld [vmem:[#allocation2 + $0x138] sm:$0xff]
        %v4737 = vld [vmem:[#allocation2 + $0x140] sm:$0xff]
        %v4738 = vld [vmem:[#allocation2 + $0x150] sm:$0xff]
        %v4739 = vld [vmem:[#allocation2 + $0x158] sm:$0xff]
        %v4740 = vld [vmem:[#allocation2 + $0x168] sm:$0xff]
        %v4741 = vld [vmem:[#allocation2 + $0x170] sm:$0xff]
        %4742 = vst.msk [vmem:[#allocation4] sm:$0xff] %vm503, %v4710
        %4743 = vst.msk [vmem:[#allocation4 + $0x10] sm:$0xff] %vm503, %v4711
        %4744 = vst.msk [vmem:[#allocation4 + $0x20] sm:$0xff] %vm503, %v4712
        %4745 = vst.msk [vmem:[#allocation4 + $0x30] sm:$0xff] %vm503, %v4713
        %4746 = vst.msk [vmem:[#allocation4 + $0x40] sm:$0xff] %vm503, %v4714
        %4747 = vst.msk [vmem:[#allocation4 + $0x50] sm:$0xff] %vm503, %v4715
        %4748 = vst.msk [vmem:[#allocation4 + $0x60] sm:$0xff] %vm503, %v4716
        %4749 = vst.msk [vmem:[#allocation4 + $0x70] sm:$0xff] %vm503, %v4717
        %4750 = vst.msk [vmem:[#allocation4 + $0x80] sm:$0xff] %vm503, %v4718
        %4751 = vst.msk [vmem:[#allocation4 + $0x90] sm:$0xff] %vm503, %v4719
        %4752 = vst.msk [vmem:[#allocation4 + $0xa0] sm:$0xff] %vm503, %v4720
        %4753 = vst.msk [vmem:[#allocation4 + $0xb0] sm:$0xff] %vm503, %v4721
        %4754 = vst.msk [vmem:[#allocation4 + $0xc0] sm:$0xff] %vm503, %v4722
        %4755 = vst.msk [vmem:[#allocation4 + $0xd0] sm:$0xff] %vm503, %v4723
        %4756 = vst.msk [vmem:[#allocation4 + $0xe0] sm:$0xff] %vm503, %v4724
        %4757 = vst.msk [vmem:[#allocation4 + $0xf0] sm:$0xff] %vm503, %v4725
        %4758 = vst.msk [vmem:[#allocation4 + $0x100] sm:$0xff] %vm503, %v4726
        %4759 = vst.msk [vmem:[#allocation4 + $0x110] sm:$0xff] %vm503, %v4727
        %4760 = vst.msk [vmem:[#allocation4 + $0x120] sm:$0xff] %vm503, %v4728
        %4761 = vst.msk [vmem:[#allocation4 + $0x130] sm:$0xff] %vm503, %v4729
        %4762 = vst.msk [vmem:[#allocation4 + $0x140] sm:$0xff] %vm503, %v4730
        %4763 = vst.msk [vmem:[#allocation4 + $0x150] sm:$0xff] %vm503, %v4731
        %4764 = vst.msk [vmem:[#allocation4 + $0x160] sm:$0xff] %vm503, %v4732
        %4765 = vst.msk [vmem:[#allocation4 + $0x170] sm:$0xff] %vm503, %v4733
        %4766 = vst.msk [vmem:[#allocation4 + $0x180] sm:$0xff] %vm503, %v4734
        %4767 = vst.msk [vmem:[#allocation4 + $0x190] sm:$0xff] %vm503, %v4735
        %4768 = vst.msk [vmem:[#allocation4 + $0x1a0] sm:$0xff] %vm503, %v4736
        %4769 = vst.msk [vmem:[#allocation4 + $0x1b0] sm:$0xff] %vm503, %v4737
        %4770 = vst.msk [vmem:[#allocation4 + $0x1c0] sm:$0xff] %vm503, %v4738
        %4771 = vst.msk [vmem:[#allocation4 + $0x1d0] sm:$0xff] %vm503, %v4739
        %4772 = vst.msk [vmem:[#allocation4 + $0x1e0] sm:$0xff] %vm503, %v4740
        %4773 = vst.msk [vmem:[#allocation4 + $0x1f0] sm:$0xff] %vm503, %v4741
        %v4774 = vld [vmem:[#allocation2 + $0x1] sm:$0xff]
        %v4775 = vld [vmem:[#allocation2 + $0x9] sm:$0xff]
        %v4776 = vld [vmem:[#allocation2 + $0x19] sm:$0xff]
        %v4777 = vld [vmem:[#allocation2 + $0x21] sm:$0xff]
        %v4778 = vld [vmem:[#allocation2 + $0x31] sm:$0xff]
        %v4779 = vld [vmem:[#allocation2 + $0x39] sm:$0xff]
        %v4780 = vld [vmem:[#allocation2 + $0x49] sm:$0xff]
        %v4781 = vld [vmem:[#allocation2 + $0x51] sm:$0xff]
        %v4782 = vld [vmem:[#allocation2 + $0x61] sm:$0xff]
        %v4783 = vld [vmem:[#allocation2 + $0x69] sm:$0xff]
        %v4784 = vld [vmem:[#allocation2 + $0x79] sm:$0xff]
        %v4785 = vld [vmem:[#allocation2 + $0x81] sm:$0xff]
        %v4786 = vld [vmem:[#allocation2 + $0x91] sm:$0xff]
        %v4787 = vld [vmem:[#allocation2 + $0x99] sm:$0xff]
        %v4788 = vld [vmem:[#allocation2 + $0xa9] sm:$0xff]
        %v4789 = vld [vmem:[#allocation2 + $0xb1] sm:$0xff]
        %v4790 = vld [vmem:[#allocation2 + $0xc1] sm:$0xff]
        %v4791 = vld [vmem:[#allocation2 + $0xc9] sm:$0xff]
        %v4792 = vld [vmem:[#allocation2 + $0xd9] sm:$0xff]
        %v4793 = vld [vmem:[#allocation2 + $0xe1] sm:$0xff]
        %v4794 = vld [vmem:[#allocation2 + $0xf1] sm:$0xff]
        %v4795 = vld [vmem:[#allocation2 + $0xf9] sm:$0xff]
        %v4796 = vld [vmem:[#allocation2 + $0x109] sm:$0xff]
        %v4797 = vld [vmem:[#allocation2 + $0x111] sm:$0xff]
        %v4798 = vld [vmem:[#allocation2 + $0x121] sm:$0xff]
        %v4799 = vld [vmem:[#allocation2 + $0x129] sm:$0xff]
        %v4800 = vld [vmem:[#allocation2 + $0x139] sm:$0xff]
        %v4801 = vld [vmem:[#allocation2 + $0x141] sm:$0xff]
        %v4802 = vld [vmem:[#allocation2 + $0x151] sm:$0xff]
        %v4803 = vld [vmem:[#allocation2 + $0x159] sm:$0xff]
        %v4804 = vld [vmem:[#allocation2 + $0x169] sm:$0xff]
        %v4805 = vld [vmem:[#allocation2 + $0x171] sm:$0xff]
        %4838 = vrot.lane.b32.xlu0 %v4774, 16
        %v4839 = vpop.permute.xlu0 %4838
        %4840 = vrot.lane.b32.xlu0 %v4775, 16
        %v4841 = vpop.permute.xlu0 %4840
        %4842 = vrot.lane.b32.xlu0 %v4776, 16
        %v4843 = vpop.permute.xlu0 %4842
        %4844 = vrot.lane.b32.xlu0 %v4777, 16
        %v4845 = vpop.permute.xlu0 %4844
        %4846 = vrot.lane.b32.xlu0 %v4778, 16
        %v4847 = vpop.permute.xlu0 %4846
        %4848 = vrot.lane.b32.xlu0 %v4779, 16
        %v4849 = vpop.permute.xlu0 %4848
        %4850 = vrot.lane.b32.xlu0 %v4780, 16
        %v4851 = vpop.permute.xlu0 %4850
        %4852 = vrot.lane.b32.xlu0 %v4781, 16
        %v4853 = vpop.permute.xlu0 %4852
        %4854 = vrot.lane.b32.xlu0 %v4782, 16
        %v4855 = vpop.permute.xlu0 %4854
        %4856 = vrot.lane.b32.xlu0 %v4783, 16
        %v4857 = vpop.permute.xlu0 %4856
        %4858 = vrot.lane.b32.xlu0 %v4784, 16
        %v4859 = vpop.permute.xlu0 %4858
        %4860 = vrot.lane.b32.xlu0 %v4785, 16
        %v4861 = vpop.permute.xlu0 %4860
        %4862 = vrot.lane.b32.xlu0 %v4786, 16
        %v4863 = vpop.permute.xlu0 %4862
        %4864 = vrot.lane.b32.xlu0 %v4787, 16
        %v4865 = vpop.permute.xlu0 %4864
        %4866 = vrot.lane.b32.xlu0 %v4788, 16
        %v4867 = vpop.permute.xlu0 %4866
        %4868 = vrot.lane.b32.xlu0 %v4789, 16
        %v4869 = vpop.permute.xlu0 %4868
        %4870 = vrot.lane.b32.xlu0 %v4790, 16
        %v4871 = vpop.permute.xlu0 %4870
        %4872 = vrot.lane.b32.xlu0 %v4791, 16
        %v4873 = vpop.permute.xlu0 %4872
        %4874 = vrot.lane.b32.xlu0 %v4792, 16
        %v4875 = vpop.permute.xlu0 %4874
        %4876 = vrot.lane.b32.xlu0 %v4793, 16
        %v4877 = vpop.permute.xlu0 %4876
        %4878 = vrot.lane.b32.xlu0 %v4794, 16
        %v4879 = vpop.permute.xlu0 %4878
        %4880 = vrot.lane.b32.xlu0 %v4795, 16
        %v4881 = vpop.permute.xlu0 %4880
        %4882 = vrot.lane.b32.xlu0 %v4796, 16
        %v4883 = vpop.permute.xlu0 %4882
        %4884 = vrot.lane.b32.xlu0 %v4797, 16
        %v4885 = vpop.permute.xlu0 %4884
        %4886 = vrot.lane.b32.xlu0 %v4798, 16
        %v4887 = vpop.permute.xlu0 %4886
        %4888 = vrot.lane.b32.xlu0 %v4799, 16
        %v4889 = vpop.permute.xlu0 %4888
        %4890 = vrot.lane.b32.xlu0 %v4800, 16
        %v4891 = vpop.permute.xlu0 %4890
        %4892 = vrot.lane.b32.xlu0 %v4801, 16
        %v4893 = vpop.permute.xlu0 %4892
        %4894 = vrot.lane.b32.xlu0 %v4802, 16
        %v4895 = vpop.permute.xlu0 %4894
        %4896 = vrot.lane.b32.xlu0 %v4803, 16
        %v4897 = vpop.permute.xlu0 %4896
        %4898 = vrot.lane.b32.xlu0 %v4804, 16
        %v4899 = vpop.permute.xlu0 %4898
        %4900 = vrot.lane.b32.xlu0 %v4805, 16
        %v4901 = vpop.permute.xlu0 %4900
        %4934 = vst.msk [vmem:[#allocation4] sm:$0xff] %vm2935, %v4839
        %4935 = vst.msk [vmem:[#allocation4 + $0x10] sm:$0xff] %vm2935, %v4841
        %4936 = vst.msk [vmem:[#allocation4 + $0x20] sm:$0xff] %vm2935, %v4843
        %4937 = vst.msk [vmem:[#allocation4 + $0x30] sm:$0xff] %vm2935, %v4845
        %4938 = vst.msk [vmem:[#allocation4 + $0x40] sm:$0xff] %vm2935, %v4847
        %4939 = vst.msk [vmem:[#allocation4 + $0x50] sm:$0xff] %vm2935, %v4849
        %4940 = vst.msk [vmem:[#allocation4 + $0x60] sm:$0xff] %vm2935, %v4851
        %4941 = vst.msk [vmem:[#allocation4 + $0x70] sm:$0xff] %vm2935, %v4853
        %4942 = vst.msk [vmem:[#allocation4 + $0x80] sm:$0xff] %vm2935, %v4855
        %4943 = vst.msk [vmem:[#allocation4 + $0x90] sm:$0xff] %vm2935, %v4857
        %4944 = vst.msk [vmem:[#allocation4 + $0xa0] sm:$0xff] %vm2935, %v4859
        %4945 = vst.msk [vmem:[#allocation4 + $0xb0] sm:$0xff] %vm2935, %v4861
        %4946 = vst.msk [vmem:[#allocation4 + $0xc0] sm:$0xff] %vm2935, %v4863
        %4947 = vst.msk [vmem:[#allocation4 + $0xd0] sm:$0xff] %vm2935, %v4865
        %4948 = vst.msk [vmem:[#allocation4 + $0xe0] sm:$0xff] %vm2935, %v4867
        %4949 = vst.msk [vmem:[#allocation4 + $0xf0] sm:$0xff] %vm2935, %v4869
        %4950 = vst.msk [vmem:[#allocation4 + $0x100] sm:$0xff] %vm2935, %v4871
        %4951 = vst.msk [vmem:[#allocation4 + $0x110] sm:$0xff] %vm2935, %v4873
        %4952 = vst.msk [vmem:[#allocation4 + $0x120] sm:$0xff] %vm2935, %v4875
        %4953 = vst.msk [vmem:[#allocation4 + $0x130] sm:$0xff] %vm2935, %v4877
        %4954 = vst.msk [vmem:[#allocation4 + $0x140] sm:$0xff] %vm2935, %v4879
        %4955 = vst.msk [vmem:[#allocation4 + $0x150] sm:$0xff] %vm2935, %v4881
        %4956 = vst.msk [vmem:[#allocation4 + $0x160] sm:$0xff] %vm2935, %v4883
        %4957 = vst.msk [vmem:[#allocation4 + $0x170] sm:$0xff] %vm2935, %v4885
        %4958 = vst.msk [vmem:[#allocation4 + $0x180] sm:$0xff] %vm2935, %v4887
        %4959 = vst.msk [vmem:[#allocation4 + $0x190] sm:$0xff] %vm2935, %v4889
        %4960 = vst.msk [vmem:[#allocation4 + $0x1a0] sm:$0xff] %vm2935, %v4891
        %4961 = vst.msk [vmem:[#allocation4 + $0x1b0] sm:$0xff] %vm2935, %v4893
        %4962 = vst.msk [vmem:[#allocation4 + $0x1c0] sm:$0xff] %vm2935, %v4895
        %4963 = vst.msk [vmem:[#allocation4 + $0x1d0] sm:$0xff] %vm2935, %v4897
        %4964 = vst.msk [vmem:[#allocation4 + $0x1e0] sm:$0xff] %vm2935, %v4899
        %4965 = vst.msk [vmem:[#allocation4 + $0x1f0] sm:$0xff] %vm2935, %v4901
        %v4966 = vld [vmem:[#allocation2 + $0x2] sm:$0xff]
        %v4967 = vld [vmem:[#allocation2 + $0xa] sm:$0xff]
        %v4968 = vld [vmem:[#allocation2 + $0x1a] sm:$0xff]
        %v4969 = vld [vmem:[#allocation2 + $0x22] sm:$0xff]
        %v4970 = vld [vmem:[#allocation2 + $0x32] sm:$0xff]
        %v4971 = vld [vmem:[#allocation2 + $0x3a] sm:$0xff]
        %v4972 = vld [vmem:[#allocation2 + $0x4a] sm:$0xff]
        %v4973 = vld [vmem:[#allocation2 + $0x52] sm:$0xff]
        %v4974 = vld [vmem:[#allocation2 + $0x62] sm:$0xff]
        %v4975 = vld [vmem:[#allocation2 + $0x6a] sm:$0xff]
        %v4976 = vld [vmem:[#allocation2 + $0x7a] sm:$0xff]
        %v4977 = vld [vmem:[#allocation2 + $0x82] sm:$0xff]
        %v4978 = vld [vmem:[#allocation2 + $0x92] sm:$0xff]
        %v4979 = vld [vmem:[#allocation2 + $0x9a] sm:$0xff]
        %v4980 = vld [vmem:[#allocation2 + $0xaa] sm:$0xff]
        %v4981 = vld [vmem:[#allocation2 + $0xb2] sm:$0xff]
        %v4982 = vld [vmem:[#allocation2 + $0xc2] sm:$0xff]
        %v4983 = vld [vmem:[#allocation2 + $0xca] sm:$0xff]
        %v4984 = vld [vmem:[#allocation2 + $0xda] sm:$0xff]
        %v4985 = vld [vmem:[#allocation2 + $0xe2] sm:$0xff]
        %v4986 = vld [vmem:[#allocation2 + $0xf2] sm:$0xff]
        %v4987 = vld [vmem:[#allocation2 + $0xfa] sm:$0xff]
        %v4988 = vld [vmem:[#allocation2 + $0x10a] sm:$0xff]
        %v4989 = vld [vmem:[#allocation2 + $0x112] sm:$0xff]
        %v4990 = vld [vmem:[#allocation2 + $0x122] sm:$0xff]
        %v4991 = vld [vmem:[#allocation2 + $0x12a] sm:$0xff]
        %v4992 = vld [vmem:[#allocation2 + $0x13a] sm:$0xff]
        %v4993 = vld [vmem:[#allocation2 + $0x142] sm:$0xff]
        %v4994 = vld [vmem:[#allocation2 + $0x152] sm:$0xff]
        %v4995 = vld [vmem:[#allocation2 + $0x15a] sm:$0xff]
        %v4996 = vld [vmem:[#allocation2 + $0x16a] sm:$0xff]
        %v4997 = vld [vmem:[#allocation2 + $0x172] sm:$0xff]
        %5030 = vrot.lane.b32.xlu0 %v4966, 32
        %v5031 = vpop.permute.xlu0 %5030
        %5032 = vrot.lane.b32.xlu0 %v4967, 32
        %v5033 = vpop.permute.xlu0 %5032
        %5034 = vrot.lane.b32.xlu0 %v4968, 32
        %v5035 = vpop.permute.xlu0 %5034
        %5036 = vrot.lane.b32.xlu0 %v4969, 32
        %v5037 = vpop.permute.xlu0 %5036
        %5038 = vrot.lane.b32.xlu0 %v4970, 32
        %v5039 = vpop.permute.xlu0 %5038
        %5040 = vrot.lane.b32.xlu0 %v4971, 32
        %v5041 = vpop.permute.xlu0 %5040
        %5042 = vrot.lane.b32.xlu0 %v4972, 32
        %v5043 = vpop.permute.xlu0 %5042
        %5044 = vrot.lane.b32.xlu0 %v4973, 32
        %v5045 = vpop.permute.xlu0 %5044
        %5046 = vrot.lane.b32.xlu0 %v4974, 32
        %v5047 = vpop.permute.xlu0 %5046
        %5048 = vrot.lane.b32.xlu0 %v4975, 32
        %v5049 = vpop.permute.xlu0 %5048
        %5050 = vrot.lane.b32.xlu0 %v4976, 32
        %v5051 = vpop.permute.xlu0 %5050
        %5052 = vrot.lane.b32.xlu0 %v4977, 32
        %v5053 = vpop.permute.xlu0 %5052
        %5054 = vrot.lane.b32.xlu0 %v4978, 32
        %v5055 = vpop.permute.xlu0 %5054
        %5056 = vrot.lane.b32.xlu0 %v4979, 32
        %v5057 = vpop.permute.xlu0 %5056
        %5058 = vrot.lane.b32.xlu0 %v4980, 32
        %v5059 = vpop.permute.xlu0 %5058
        %5060 = vrot.lane.b32.xlu0 %v4981, 32
        %v5061 = vpop.permute.xlu0 %5060
        %5062 = vrot.lane.b32.xlu0 %v4982, 32
        %v5063 = vpop.permute.xlu0 %5062
        %5064 = vrot.lane.b32.xlu0 %v4983, 32
        %v5065 = vpop.permute.xlu0 %5064
        %5066 = vrot.lane.b32.xlu0 %v4984, 32
        %v5067 = vpop.permute.xlu0 %5066
        %5068 = vrot.lane.b32.xlu0 %v4985, 32
        %v5069 = vpop.permute.xlu0 %5068
        %5070 = vrot.lane.b32.xlu0 %v4986, 32
        %v5071 = vpop.permute.xlu0 %5070
        %5072 = vrot.lane.b32.xlu0 %v4987, 32
        %v5073 = vpop.permute.xlu0 %5072
        %5074 = vrot.lane.b32.xlu0 %v4988, 32
        %v5075 = vpop.permute.xlu0 %5074
        %5076 = vrot.lane.b32.xlu0 %v4989, 32
        %v5077 = vpop.permute.xlu0 %5076
        %5078 = vrot.lane.b32.xlu0 %v4990, 32
        %v5079 = vpop.permute.xlu0 %5078
        %5080 = vrot.lane.b32.xlu0 %v4991, 32
        %v5081 = vpop.permute.xlu0 %5080
        %5082 = vrot.lane.b32.xlu0 %v4992, 32
        %v5083 = vpop.permute.xlu0 %5082
        %5084 = vrot.lane.b32.xlu0 %v4993, 32
        %v5085 = vpop.permute.xlu0 %5084
        %5086 = vrot.lane.b32.xlu0 %v4994, 32
        %v5087 = vpop.permute.xlu0 %5086
        %5088 = vrot.lane.b32.xlu0 %v4995, 32
        %v5089 = vpop.permute.xlu0 %5088
        %5090 = vrot.lane.b32.xlu0 %v4996, 32
        %v5091 = vpop.permute.xlu0 %5090
        %5092 = vrot.lane.b32.xlu0 %v4997, 32
        %v5093 = vpop.permute.xlu0 %5092
        %5126 = vst.msk [vmem:[#allocation4] sm:$0xff] %vm3128, %v5031
        %5127 = vst.msk [vmem:[#allocation4 + $0x10] sm:$0xff] %vm3128, %v5033
        %5128 = vst.msk [vmem:[#allocation4 + $0x20] sm:$0xff] %vm3128, %v5035
        %5129 = vst.msk [vmem:[#allocation4 + $0x30] sm:$0xff] %vm3128, %v5037
        %5130 = vst.msk [vmem:[#allocation4 + $0x40] sm:$0xff] %vm3128, %v5039
        %5131 = vst.msk [vmem:[#allocation4 + $0x50] sm:$0xff] %vm3128, %v5041
        %5132 = vst.msk [vmem:[#allocation4 + $0x60] sm:$0xff] %vm3128, %v5043
        %5133 = vst.msk [vmem:[#allocation4 + $0x70] sm:$0xff] %vm3128, %v5045
        %5134 = vst.msk [vmem:[#allocation4 + $0x80] sm:$0xff] %vm3128, %v5047
        %5135 = vst.msk [vmem:[#allocation4 + $0x90] sm:$0xff] %vm3128, %v5049
        %5136 = vst.msk [vmem:[#allocation4 + $0xa0] sm:$0xff] %vm3128, %v5051
        %5137 = vst.msk [vmem:[#allocation4 + $0xb0] sm:$0xff] %vm3128, %v5053
        %5138 = vst.msk [vmem:[#allocation4 + $0xc0] sm:$0xff] %vm3128, %v5055
        %5139 = vst.msk [vmem:[#allocation4 + $0xd0] sm:$0xff] %vm3128, %v5057
        %5140 = vst.msk [vmem:[#allocation4 + $0xe0] sm:$0xff] %vm3128, %v5059
        %5141 = vst.msk [vmem:[#allocation4 + $0xf0] sm:$0xff] %vm3128, %v5061
        %5142 = vst.msk [vmem:[#allocation4 + $0x100] sm:$0xff] %vm3128, %v5063
        %5143 = vst.msk [vmem:[#allocation4 + $0x110] sm:$0xff] %vm3128, %v5065
        %5144 = vst.msk [vmem:[#allocation4 + $0x120] sm:$0xff] %vm3128, %v5067
        %5145 = vst.msk [vmem:[#allocation4 + $0x130] sm:$0xff] %vm3128, %v5069
        %5146 = vst.msk [vmem:[#allocation4 + $0x140] sm:$0xff] %vm3128, %v5071
        %5147 = vst.msk [vmem:[#allocation4 + $0x150] sm:$0xff] %vm3128, %v5073
        %5148 = vst.msk [vmem:[#allocation4 + $0x160] sm:$0xff] %vm3128, %v5075
        %5149 = vst.msk [vmem:[#allocation4 + $0x170] sm:$0xff] %vm3128, %v5077
        %5150 = vst.msk [vmem:[#allocation4 + $0x180] sm:$0xff] %vm3128, %v5079
        %5151 = vst.msk [vmem:[#allocation4 + $0x190] sm:$0xff] %vm3128, %v5081
        %5152 = vst.msk [vmem:[#allocation4 + $0x1a0] sm:$0xff] %vm3128, %v5083
        %5153 = vst.msk [vmem:[#allocation4 + $0x1b0] sm:$0xff] %vm3128, %v5085
        %5154 = vst.msk [vmem:[#allocation4 + $0x1c0] sm:$0xff] %vm3128, %v5087
        %5155 = vst.msk [vmem:[#allocation4 + $0x1d0] sm:$0xff] %vm3128, %v5089
        %5156 = vst.msk [vmem:[#allocation4 + $0x1e0] sm:$0xff] %vm3128, %v5091
        %5157 = vst.msk [vmem:[#allocation4 + $0x1f0] sm:$0xff] %vm3128, %v5093
        %v5158 = vld [vmem:[%s645] sm:$0xff]
        %v5159 = vld [vmem:[%s645 + $0x8] sm:$0xff]
        %v5160 = vld [vmem:[%s645 + $0x18] sm:$0xff]
        %v5161 = vld [vmem:[%s645 + $0x20] sm:$0xff]
        %v5162 = vld [vmem:[%s645 + $0x30] sm:$0xff]
        %v5163 = vld [vmem:[%s645 + $0x38] sm:$0xff]
        %v5164 = vld [vmem:[%s645 + $0x48] sm:$0xff]
        %v5165 = vld [vmem:[%s645 + $0x50] sm:$0xff]
        %v5166 = vld [vmem:[%s645 + $0x60] sm:$0xff]
        %v5167 = vld [vmem:[%s645 + $0x68] sm:$0xff]
        %v5168 = vld [vmem:[%s645 + $0x78] sm:$0xff]
        %v5169 = vld [vmem:[%s645 + $0x80] sm:$0xff]
        %v5170 = vld [vmem:[%s645 + $0x90] sm:$0xff]
        %v5171 = vld [vmem:[%s645 + $0x98] sm:$0xff]
        %v5172 = vld [vmem:[%s645 + $0xa8] sm:$0xff]
        %v5173 = vld [vmem:[%s645 + $0xb0] sm:$0xff]
        %v5174 = vld [vmem:[%s645 + $0xc0] sm:$0xff]
        %v5175 = vld [vmem:[%s645 + $0xc8] sm:$0xff]
        %v5176 = vld [vmem:[%s645 + $0xd8] sm:$0xff]
        %v5177 = vld [vmem:[%s645 + $0xe0] sm:$0xff]
        %v5178 = vld [vmem:[%s645 + $0xf0] sm:$0xff]
        %v5179 = vld [vmem:[%s645 + $0xf8] sm:$0xff]
        %v5180 = vld [vmem:[%s645 + $0x108] sm:$0xff]
        %v5181 = vld [vmem:[%s645 + $0x110] sm:$0xff]
        %v5182 = vld [vmem:[%s645 + $0x120] sm:$0xff]
        %v5183 = vld [vmem:[%s645 + $0x128] sm:$0xff]
        %v5184 = vld [vmem:[%s645 + $0x138] sm:$0xff]
        %v5185 = vld [vmem:[%s645 + $0x140] sm:$0xff]
        %v5186 = vld [vmem:[%s645 + $0x150] sm:$0xff]
        %v5187 = vld [vmem:[%s645 + $0x158] sm:$0xff]
        %v5188 = vld [vmem:[%s645 + $0x168] sm:$0xff]
        %v5189 = vld [vmem:[%s645 + $0x170] sm:$0xff]
        %5222 = vrot.lane.b32.xlu0 %v5158, 48
        %v5223 = vpop.permute.xlu0 %5222
        %5224 = vrot.lane.b32.xlu0 %v5159, 48
        %v5225 = vpop.permute.xlu0 %5224
        %5226 = vrot.lane.b32.xlu0 %v5160, 48
        %v5227 = vpop.permute.xlu0 %5226
        %5228 = vrot.lane.b32.xlu0 %v5161, 48
        %v5229 = vpop.permute.xlu0 %5228
        %5230 = vrot.lane.b32.xlu0 %v5162, 48
        %v5231 = vpop.permute.xlu0 %5230
        %5232 = vrot.lane.b32.xlu0 %v5163, 48
        %v5233 = vpop.permute.xlu0 %5232
        %5234 = vrot.lane.b32.xlu0 %v5164, 48
        %v5235 = vpop.permute.xlu0 %5234
        %5236 = vrot.lane.b32.xlu0 %v5165, 48
        %v5237 = vpop.permute.xlu0 %5236
        %5238 = vrot.lane.b32.xlu0 %v5166, 48
        %v5239 = vpop.permute.xlu0 %5238
        %5240 = vrot.lane.b32.xlu0 %v5167, 48
        %v5241 = vpop.permute.xlu0 %5240
        %5242 = vrot.lane.b32.xlu0 %v5168, 48
        %v5243 = vpop.permute.xlu0 %5242
        %5244 = vrot.lane.b32.xlu0 %v5169, 48
        %v5245 = vpop.permute.xlu0 %5244
        %5246 = vrot.lane.b32.xlu0 %v5170, 48
        %v5247 = vpop.permute.xlu0 %5246
        %5248 = vrot.lane.b32.xlu0 %v5171, 48
        %v5249 = vpop.permute.xlu0 %5248
        %5250 = vrot.lane.b32.xlu0 %v5172, 48
        %v5251 = vpop.permute.xlu0 %5250
        %5252 = vrot.lane.b32.xlu0 %v5173, 48
        %v5253 = vpop.permute.xlu0 %5252
        %5254 = vrot.lane.b32.xlu0 %v5174, 48
        %v5255 = vpop.permute.xlu0 %5254
        %5256 = vrot.lane.b32.xlu0 %v5175, 48
        %v5257 = vpop.permute.xlu0 %5256
        %5258 = vrot.lane.b32.xlu0 %v5176, 48
        %v5259 = vpop.permute.xlu0 %5258
        %5260 = vrot.lane.b32.xlu0 %v5177, 48
        %v5261 = vpop.permute.xlu0 %5260
        %5262 = vrot.lane.b32.xlu0 %v5178, 48
        %v5263 = vpop.permute.xlu0 %5262
        %5264 = vrot.lane.b32.xlu0 %v5179, 48
        %v5265 = vpop.permute.xlu0 %5264
        %5266 = vrot.lane.b32.xlu0 %v5180, 48
        %v5267 = vpop.permute.xlu0 %5266
        %5268 = vrot.lane.b32.xlu0 %v5181, 48
        %v5269 = vpop.permute.xlu0 %5268
        %5270 = vrot.lane.b32.xlu0 %v5182, 48
        %v5271 = vpop.permute.xlu0 %5270
        %5272 = vrot.lane.b32.xlu0 %v5183, 48
        %v5273 = vpop.permute.xlu0 %5272
        %5274 = vrot.lane.b32.xlu0 %v5184, 48
        %v5275 = vpop.permute.xlu0 %5274
        %5276 = vrot.lane.b32.xlu0 %v5185, 48
        %v5277 = vpop.permute.xlu0 %5276
        %5278 = vrot.lane.b32.xlu0 %v5186, 48
        %v5279 = vpop.permute.xlu0 %5278
        %5280 = vrot.lane.b32.xlu0 %v5187, 48
        %v5281 = vpop.permute.xlu0 %5280
        %5282 = vrot.lane.b32.xlu0 %v5188, 48
        %v5283 = vpop.permute.xlu0 %5282
        %5284 = vrot.lane.b32.xlu0 %v5189, 48
        %v5285 = vpop.permute.xlu0 %5284
        %5318 = vst.msk [vmem:[#allocation4] sm:$0xff] %vm3321, %v5223
        %5319 = vst.msk [vmem:[#allocation4 + $0x10] sm:$0xff] %vm3321, %v5225
        %5320 = vst.msk [vmem:[#allocation4 + $0x20] sm:$0xff] %vm3321, %v5227
        %5321 = vst.msk [vmem:[#allocation4 + $0x30] sm:$0xff] %vm3321, %v5229
        %5322 = vst.msk [vmem:[#allocation4 + $0x40] sm:$0xff] %vm3321, %v5231
        %5323 = vst.msk [vmem:[#allocation4 + $0x50] sm:$0xff] %vm3321, %v5233
        %5324 = vst.msk [vmem:[#allocation4 + $0x60] sm:$0xff] %vm3321, %v5235
        %5325 = vst.msk [vmem:[#allocation4 + $0x70] sm:$0xff] %vm3321, %v5237
        %5326 = vst.msk [vmem:[#allocation4 + $0x80] sm:$0xff] %vm3321, %v5239
        %5327 = vst.msk [vmem:[#allocation4 + $0x90] sm:$0xff] %vm3321, %v5241
        %5328 = vst.msk [vmem:[#allocation4 + $0xa0] sm:$0xff] %vm3321, %v5243
        %5329 = vst.msk [vmem:[#allocation4 + $0xb0] sm:$0xff] %vm3321, %v5245
        %5330 = vst.msk [vmem:[#allocation4 + $0xc0] sm:$0xff] %vm3321, %v5247
        %5331 = vst.msk [vmem:[#allocation4 + $0xd0] sm:$0xff] %vm3321, %v5249
        %5332 = vst.msk [vmem:[#allocation4 + $0xe0] sm:$0xff] %vm3321, %v5251
        %5333 = vst.msk [vmem:[#allocation4 + $0xf0] sm:$0xff] %vm3321, %v5253
        %5334 = vst.msk [vmem:[#allocation4 + $0x100] sm:$0xff] %vm3321, %v5255
        %5335 = vst.msk [vmem:[#allocation4 + $0x110] sm:$0xff] %vm3321, %v5257
        %5336 = vst.msk [vmem:[#allocation4 + $0x120] sm:$0xff] %vm3321, %v5259
        %5337 = vst.msk [vmem:[#allocation4 + $0x130] sm:$0xff] %vm3321, %v5261
        %5338 = vst.msk [vmem:[#allocation4 + $0x140] sm:$0xff] %vm3321, %v5263
        %5339 = vst.msk [vmem:[#allocation4 + $0x150] sm:$0xff] %vm3321, %v5265
        %5340 = vst.msk [vmem:[#allocation4 + $0x160] sm:$0xff] %vm3321, %v5267
        %5341 = vst.msk [vmem:[#allocation4 + $0x170] sm:$0xff] %vm3321, %v5269
        %5342 = vst.msk [vmem:[#allocation4 + $0x180] sm:$0xff] %vm3321, %v5271
        %5343 = vst.msk [vmem:[#allocation4 + $0x190] sm:$0xff] %vm3321, %v5273
        %5344 = vst.msk [vmem:[#allocation4 + $0x1a0] sm:$0xff] %vm3321, %v5275
        %5345 = vst.msk [vmem:[#allocation4 + $0x1b0] sm:$0xff] %vm3321, %v5277
        %5346 = vst.msk [vmem:[#allocation4 + $0x1c0] sm:$0xff] %vm3321, %v5279
        %5347 = vst.msk [vmem:[#allocation4 + $0x1d0] sm:$0xff] %vm3321, %v5281
        %5348 = vst.msk [vmem:[#allocation4 + $0x1e0] sm:$0xff] %vm3321, %v5283
        %5349 = vst.msk [vmem:[#allocation4 + $0x1f0] sm:$0xff] %vm3321, %v5285
        %v5350 = vld [vmem:[%s645 + $0x1] sm:$0xff]
        %v5351 = vld [vmem:[%s645 + $0x9] sm:$0xff]
        %v5352 = vld [vmem:[%s645 + $0x19] sm:$0xff]
        %v5353 = vld [vmem:[%s645 + $0x21] sm:$0xff]
        %v5354 = vld [vmem:[%s645 + $0x31] sm:$0xff]
        %v5355 = vld [vmem:[%s645 + $0x39] sm:$0xff]
        %v5356 = vld [vmem:[%s645 + $0x49] sm:$0xff]
        %v5357 = vld [vmem:[%s645 + $0x51] sm:$0xff]
        %v5358 = vld [vmem:[%s645 + $0x61] sm:$0xff]
        %v5359 = vld [vmem:[%s645 + $0x69] sm:$0xff]
        %v5360 = vld [vmem:[%s645 + $0x79] sm:$0xff]
        %v5361 = vld [vmem:[%s645 + $0x81] sm:$0xff]
        %v5362 = vld [vmem:[%s645 + $0x91] sm:$0xff]
        %v5363 = vld [vmem:[%s645 + $0x99] sm:$0xff]
        %v5364 = vld [vmem:[%s645 + $0xa9] sm:$0xff]
        %v5365 = vld [vmem:[%s645 + $0xb1] sm:$0xff]
        %v5366 = vld [vmem:[%s645 + $0xc1] sm:$0xff]
        %v5367 = vld [vmem:[%s645 + $0xc9] sm:$0xff]
        %v5368 = vld [vmem:[%s645 + $0xd9] sm:$0xff]
        %v5369 = vld [vmem:[%s645 + $0xe1] sm:$0xff]
        %v5370 = vld [vmem:[%s645 + $0xf1] sm:$0xff]
        %v5371 = vld [vmem:[%s645 + $0xf9] sm:$0xff]
        %v5372 = vld [vmem:[%s645 + $0x109] sm:$0xff]
        %v5373 = vld [vmem:[%s645 + $0x111] sm:$0xff]
        %v5374 = vld [vmem:[%s645 + $0x121] sm:$0xff]
        %v5375 = vld [vmem:[%s645 + $0x129] sm:$0xff]
        %v5376 = vld [vmem:[%s645 + $0x139] sm:$0xff]
        %v5377 = vld [vmem:[%s645 + $0x141] sm:$0xff]
        %v5378 = vld [vmem:[%s645 + $0x151] sm:$0xff]
        %v5379 = vld [vmem:[%s645 + $0x159] sm:$0xff]
        %v5380 = vld [vmem:[%s645 + $0x169] sm:$0xff]
        %v5381 = vld [vmem:[%s645 + $0x171] sm:$0xff]
        %5414 = vrot.lane.b32.xlu0 %v5350, 64
        %v5415 = vpop.permute.xlu0 %5414
        %5416 = vrot.lane.b32.xlu0 %v5351, 64
        %v5417 = vpop.permute.xlu0 %5416
        %5418 = vrot.lane.b32.xlu0 %v5352, 64
        %v5419 = vpop.permute.xlu0 %5418
        %5420 = vrot.lane.b32.xlu0 %v5353, 64
        %v5421 = vpop.permute.xlu0 %5420
        %5422 = vrot.lane.b32.xlu0 %v5354, 64
        %v5423 = vpop.permute.xlu0 %5422
        %5424 = vrot.lane.b32.xlu0 %v5355, 64
        %v5425 = vpop.permute.xlu0 %5424
        %5426 = vrot.lane.b32.xlu0 %v5356, 64
        %v5427 = vpop.permute.xlu0 %5426
        %5428 = vrot.lane.b32.xlu0 %v5357, 64
        %v5429 = vpop.permute.xlu0 %5428
        %5430 = vrot.lane.b32.xlu0 %v5358, 64
        %v5431 = vpop.permute.xlu0 %5430
        %5432 = vrot.lane.b32.xlu0 %v5359, 64
        %v5433 = vpop.permute.xlu0 %5432
        %5434 = vrot.lane.b32.xlu0 %v5360, 64
        %v5435 = vpop.permute.xlu0 %5434
        %5436 = vrot.lane.b32.xlu0 %v5361, 64
        %v5437 = vpop.permute.xlu0 %5436
        %5438 = vrot.lane.b32.xlu0 %v5362, 64
        %v5439 = vpop.permute.xlu0 %5438
        %5440 = vrot.lane.b32.xlu0 %v5363, 64
        %v5441 = vpop.permute.xlu0 %5440
        %5442 = vrot.lane.b32.xlu0 %v5364, 64
        %v5443 = vpop.permute.xlu0 %5442
        %5444 = vrot.lane.b32.xlu0 %v5365, 64
        %v5445 = vpop.permute.xlu0 %5444
        %5446 = vrot.lane.b32.xlu0 %v5366, 64
        %v5447 = vpop.permute.xlu0 %5446
        %5448 = vrot.lane.b32.xlu0 %v5367, 64
        %v5449 = vpop.permute.xlu0 %5448
        %5450 = vrot.lane.b32.xlu0 %v5368, 64
        %v5451 = vpop.permute.xlu0 %5450
        %5452 = vrot.lane.b32.xlu0 %v5369, 64
        %v5453 = vpop.permute.xlu0 %5452
        %5454 = vrot.lane.b32.xlu0 %v5370, 64
        %v5455 = vpop.permute.xlu0 %5454
        %5456 = vrot.lane.b32.xlu0 %v5371, 64
        %v5457 = vpop.permute.xlu0 %5456
        %5458 = vrot.lane.b32.xlu0 %v5372, 64
        %v5459 = vpop.permute.xlu0 %5458
        %5460 = vrot.lane.b32.xlu0 %v5373, 64
        %v5461 = vpop.permute.xlu0 %5460
        %5462 = vrot.lane.b32.xlu0 %v5374, 64
        %v5463 = vpop.permute.xlu0 %5462
        %5464 = vrot.lane.b32.xlu0 %v5375, 64
        %v5465 = vpop.permute.xlu0 %5464
        %5466 = vrot.lane.b32.xlu0 %v5376, 64
        %v5467 = vpop.permute.xlu0 %5466
        %5468 = vrot.lane.b32.xlu0 %v5377, 64
        %v5469 = vpop.permute.xlu0 %5468
        %5470 = vrot.lane.b32.xlu0 %v5378, 64
        %v5471 = vpop.permute.xlu0 %5470
        %5472 = vrot.lane.b32.xlu0 %v5379, 64
        %v5473 = vpop.permute.xlu0 %5472
        %5474 = vrot.lane.b32.xlu0 %v5380, 64
        %v5475 = vpop.permute.xlu0 %5474
        %5476 = vrot.lane.b32.xlu0 %v5381, 64
        %v5477 = vpop.permute.xlu0 %5476
        %5510 = vst.msk [vmem:[#allocation4] sm:$0xff] %vm3514, %v5415
        %5511 = vst.msk [vmem:[#allocation4 + $0x10] sm:$0xff] %vm3514, %v5417
        %5512 = vst.msk [vmem:[#allocation4 + $0x20] sm:$0xff] %vm3514, %v5419
        %5513 = vst.msk [vmem:[#allocation4 + $0x30] sm:$0xff] %vm3514, %v5421
        %5514 = vst.msk [vmem:[#allocation4 + $0x40] sm:$0xff] %vm3514, %v5423
        %5515 = vst.msk [vmem:[#allocation4 + $0x50] sm:$0xff] %vm3514, %v5425
        %5516 = vst.msk [vmem:[#allocation4 + $0x60] sm:$0xff] %vm3514, %v5427
        %5517 = vst.msk [vmem:[#allocation4 + $0x70] sm:$0xff] %vm3514, %v5429
        %5518 = vst.msk [vmem:[#allocation4 + $0x80] sm:$0xff] %vm3514, %v5431
        %5519 = vst.msk [vmem:[#allocation4 + $0x90] sm:$0xff] %vm3514, %v5433
        %5520 = vst.msk [vmem:[#allocation4 + $0xa0] sm:$0xff] %vm3514, %v5435
        %5521 = vst.msk [vmem:[#allocation4 + $0xb0] sm:$0xff] %vm3514, %v5437
        %5522 = vst.msk [vmem:[#allocation4 + $0xc0] sm:$0xff] %vm3514, %v5439
        %5523 = vst.msk [vmem:[#allocation4 + $0xd0] sm:$0xff] %vm3514, %v5441
        %5524 = vst.msk [vmem:[#allocation4 + $0xe0] sm:$0xff] %vm3514, %v5443
        %5525 = vst.msk [vmem:[#allocation4 + $0xf0] sm:$0xff] %vm3514, %v5445
        %5526 = vst.msk [vmem:[#allocation4 + $0x100] sm:$0xff] %vm3514, %v5447
        %5527 = vst.msk [vmem:[#allocation4 + $0x110] sm:$0xff] %vm3514, %v5449
        %5528 = vst.msk [vmem:[#allocation4 + $0x120] sm:$0xff] %vm3514, %v5451
        %5529 = vst.msk [vmem:[#allocation4 + $0x130] sm:$0xff] %vm3514, %v5453
        %5530 = vst.msk [vmem:[#allocation4 + $0x140] sm:$0xff] %vm3514, %v5455
        %5531 = vst.msk [vmem:[#allocation4 + $0x150] sm:$0xff] %vm3514, %v5457
        %5532 = vst.msk [vmem:[#allocation4 + $0x160] sm:$0xff] %vm3514, %v5459
        %5533 = vst.msk [vmem:[#allocation4 + $0x170] sm:$0xff] %vm3514, %v5461
        %5534 = vst.msk [vmem:[#allocation4 + $0x180] sm:$0xff] %vm3514, %v5463
        %5535 = vst.msk [vmem:[#allocation4 + $0x190] sm:$0xff] %vm3514, %v5465
        %5536 = vst.msk [vmem:[#allocation4 + $0x1a0] sm:$0xff] %vm3514, %v5467
        %5537 = vst.msk [vmem:[#allocation4 + $0x1b0] sm:$0xff] %vm3514, %v5469
        %5538 = vst.msk [vmem:[#allocation4 + $0x1c0] sm:$0xff] %vm3514, %v5471
        %5539 = vst.msk [vmem:[#allocation4 + $0x1d0] sm:$0xff] %vm3514, %v5473
        %5540 = vst.msk [vmem:[#allocation4 + $0x1e0] sm:$0xff] %vm3514, %v5475
        %5541 = vst.msk [vmem:[#allocation4 + $0x1f0] sm:$0xff] %vm3514, %v5477
        %v5542 = vld [vmem:[%s645 + $0x2] sm:$0xff]
        %v5543 = vld [vmem:[%s645 + $0xa] sm:$0xff]
        %v5544 = vld [vmem:[%s645 + $0x1a] sm:$0xff]
        %v5545 = vld [vmem:[%s645 + $0x22] sm:$0xff]
        %v5546 = vld [vmem:[%s645 + $0x32] sm:$0xff]
        %v5547 = vld [vmem:[%s645 + $0x3a] sm:$0xff]
        %v5548 = vld [vmem:[%s645 + $0x4a] sm:$0xff]
        %v5549 = vld [vmem:[%s645 + $0x52] sm:$0xff]
        %v5550 = vld [vmem:[%s645 + $0x62] sm:$0xff]
        %v5551 = vld [vmem:[%s645 + $0x6a] sm:$0xff]
        %v5552 = vld [vmem:[%s645 + $0x7a] sm:$0xff]
        %v5553 = vld [vmem:[%s645 + $0x82] sm:$0xff]
        %v5554 = vld [vmem:[%s645 + $0x92] sm:$0xff]
        %v5555 = vld [vmem:[%s645 + $0x9a] sm:$0xff]
        %v5556 = vld [vmem:[%s645 + $0xaa] sm:$0xff]
        %v5557 = vld [vmem:[%s645 + $0xb2] sm:$0xff]
        %v5558 = vld [vmem:[%s645 + $0xc2] sm:$0xff]
        %v5559 = vld [vmem:[%s645 + $0xca] sm:$0xff]
        %v5560 = vld [vmem:[%s645 + $0xda] sm:$0xff]
        %v5561 = vld [vmem:[%s645 + $0xe2] sm:$0xff]
        %v5562 = vld [vmem:[%s645 + $0xf2] sm:$0xff]
        %v5563 = vld [vmem:[%s645 + $0xfa] sm:$0xff]
        %v5564 = vld [vmem:[%s645 + $0x10a] sm:$0xff]
        %v5565 = vld [vmem:[%s645 + $0x112] sm:$0xff]
        %v5566 = vld [vmem:[%s645 + $0x122] sm:$0xff]
        %v5567 = vld [vmem:[%s645 + $0x12a] sm:$0xff]
        %v5568 = vld [vmem:[%s645 + $0x13a] sm:$0xff]
        %v5569 = vld [vmem:[%s645 + $0x142] sm:$0xff]
        %v5570 = vld [vmem:[%s645 + $0x152] sm:$0xff]
        %v5571 = vld [vmem:[%s645 + $0x15a] sm:$0xff]
        %v5572 = vld [vmem:[%s645 + $0x16a] sm:$0xff]
        %v5573 = vld [vmem:[%s645 + $0x172] sm:$0xff]
        %5606 = vrot.lane.b32.xlu0 %v5542, 80
        %v5607 = vpop.permute.xlu0 %5606
        %5608 = vrot.lane.b32.xlu0 %v5543, 80
        %v5609 = vpop.permute.xlu0 %5608
        %5610 = vrot.lane.b32.xlu0 %v5544, 80
        %v5611 = vpop.permute.xlu0 %5610
        %5612 = vrot.lane.b32.xlu0 %v5545, 80
        %v5613 = vpop.permute.xlu0 %5612
        %5614 = vrot.lane.b32.xlu0 %v5546, 80
        %v5615 = vpop.permute.xlu0 %5614
        %5616 = vrot.lane.b32.xlu0 %v5547, 80
        %v5617 = vpop.permute.xlu0 %5616
        %5618 = vrot.lane.b32.xlu0 %v5548, 80
        %v5619 = vpop.permute.xlu0 %5618
        %5620 = vrot.lane.b32.xlu0 %v5549, 80
        %v5621 = vpop.permute.xlu0 %5620
        %5622 = vrot.lane.b32.xlu0 %v5550, 80
        %v5623 = vpop.permute.xlu0 %5622
        %5624 = vrot.lane.b32.xlu0 %v5551, 80
        %v5625 = vpop.permute.xlu0 %5624
        %5626 = vrot.lane.b32.xlu0 %v5552, 80
        %v5627 = vpop.permute.xlu0 %5626
        %5628 = vrot.lane.b32.xlu0 %v5553, 80
        %v5629 = vpop.permute.xlu0 %5628
        %5630 = vrot.lane.b32.xlu0 %v5554, 80
        %v5631 = vpop.permute.xlu0 %5630
        %5632 = vrot.lane.b32.xlu0 %v5555, 80
        %v5633 = vpop.permute.xlu0 %5632
        %5634 = vrot.lane.b32.xlu0 %v5556, 80
        %v5635 = vpop.permute.xlu0 %5634
        %5636 = vrot.lane.b32.xlu0 %v5557, 80
        %v5637 = vpop.permute.xlu0 %5636
        %5638 = vrot.lane.b32.xlu0 %v5558, 80
        %v5639 = vpop.permute.xlu0 %5638
        %5640 = vrot.lane.b32.xlu0 %v5559, 80
        %v5641 = vpop.permute.xlu0 %5640
        %5642 = vrot.lane.b32.xlu0 %v5560, 80
        %v5643 = vpop.permute.xlu0 %5642
        %5644 = vrot.lane.b32.xlu0 %v5561, 80
        %v5645 = vpop.permute.xlu0 %5644
        %5646 = vrot.lane.b32.xlu0 %v5562, 80
        %v5647 = vpop.permute.xlu0 %5646
        %5648 = vrot.lane.b32.xlu0 %v5563, 80
        %v5649 = vpop.permute.xlu0 %5648
        %5650 = vrot.lane.b32.xlu0 %v5564, 80
        %v5651 = vpop.permute.xlu0 %5650
        %5652 = vrot.lane.b32.xlu0 %v5565, 80
        %v5653 = vpop.permute.xlu0 %5652
        %5654 = vrot.lane.b32.xlu0 %v5566, 80
        %v5655 = vpop.permute.xlu0 %5654
        %5656 = vrot.lane.b32.xlu0 %v5567, 80
        %v5657 = vpop.permute.xlu0 %5656
        %5658 = vrot.lane.b32.xlu0 %v5568, 80
        %v5659 = vpop.permute.xlu0 %5658
        %5660 = vrot.lane.b32.xlu0 %v5569, 80
        %v5661 = vpop.permute.xlu0 %5660
        %5662 = vrot.lane.b32.xlu0 %v5570, 80
        %v5663 = vpop.permute.xlu0 %5662
        %5664 = vrot.lane.b32.xlu0 %v5571, 80
        %v5665 = vpop.permute.xlu0 %5664
        %5666 = vrot.lane.b32.xlu0 %v5572, 80
        %v5667 = vpop.permute.xlu0 %5666
        %5668 = vrot.lane.b32.xlu0 %v5573, 80
        %v5669 = vpop.permute.xlu0 %5668
        %5702 = vst.msk [vmem:[#allocation4] sm:$0xff] %vm3707, %v5607
        %5703 = vst.msk [vmem:[#allocation4 + $0x10] sm:$0xff] %vm3707, %v5609
        %5704 = vst.msk [vmem:[#allocation4 + $0x20] sm:$0xff] %vm3707, %v5611
        %5705 = vst.msk [vmem:[#allocation4 + $0x30] sm:$0xff] %vm3707, %v5613
        %5706 = vst.msk [vmem:[#allocation4 + $0x40] sm:$0xff] %vm3707, %v5615
        %5707 = vst.msk [vmem:[#allocation4 + $0x50] sm:$0xff] %vm3707, %v5617
        %5708 = vst.msk [vmem:[#allocation4 + $0x60] sm:$0xff] %vm3707, %v5619
        %5709 = vst.msk [vmem:[#allocation4 + $0x70] sm:$0xff] %vm3707, %v5621
        %5710 = vst.msk [vmem:[#allocation4 + $0x80] sm:$0xff] %vm3707, %v5623
        %5711 = vst.msk [vmem:[#allocation4 + $0x90] sm:$0xff] %vm3707, %v5625
        %5712 = vst.msk [vmem:[#allocation4 + $0xa0] sm:$0xff] %vm3707, %v5627
        %5713 = vst.msk [vmem:[#allocation4 + $0xb0] sm:$0xff] %vm3707, %v5629
        %5714 = vst.msk [vmem:[#allocation4 + $0xc0] sm:$0xff] %vm3707, %v5631
        %5715 = vst.msk [vmem:[#allocation4 + $0xd0] sm:$0xff] %vm3707, %v5633
        %5716 = vst.msk [vmem:[#allocation4 + $0xe0] sm:$0xff] %vm3707, %v5635
        %5717 = vst.msk [vmem:[#allocation4 + $0xf0] sm:$0xff] %vm3707, %v5637
        %5718 = vst.msk [vmem:[#allocation4 + $0x100] sm:$0xff] %vm3707, %v5639
        %5719 = vst.msk [vmem:[#allocation4 + $0x110] sm:$0xff] %vm3707, %v5641
        %5720 = vst.msk [vmem:[#allocation4 + $0x120] sm:$0xff] %vm3707, %v5643
        %5721 = vst.msk [vmem:[#allocation4 + $0x130] sm:$0xff] %vm3707, %v5645
        %5722 = vst.msk [vmem:[#allocation4 + $0x140] sm:$0xff] %vm3707, %v5647
        %5723 = vst.msk [vmem:[#allocation4 + $0x150] sm:$0xff] %vm3707, %v5649
        %5724 = vst.msk [vmem:[#allocation4 + $0x160] sm:$0xff] %vm3707, %v5651
        %5725 = vst.msk [vmem:[#allocation4 + $0x170] sm:$0xff] %vm3707, %v5653
        %5726 = vst.msk [vmem:[#allocation4 + $0x180] sm:$0xff] %vm3707, %v5655
        %5727 = vst.msk [vmem:[#allocation4 + $0x190] sm:$0xff] %vm3707, %v5657
        %5728 = vst.msk [vmem:[#allocation4 + $0x1a0] sm:$0xff] %vm3707, %v5659
        %5729 = vst.msk [vmem:[#allocation4 + $0x1b0] sm:$0xff] %vm3707, %v5661
        %5730 = vst.msk [vmem:[#allocation4 + $0x1c0] sm:$0xff] %vm3707, %v5663
        %5731 = vst.msk [vmem:[#allocation4 + $0x1d0] sm:$0xff] %vm3707, %v5665
        %5732 = vst.msk [vmem:[#allocation4 + $0x1e0] sm:$0xff] %vm3707, %v5667
        %5733 = vst.msk [vmem:[#allocation4 + $0x1f0] sm:$0xff] %vm3707, %v5669
        %v5734 = vld [vmem:[%s1708] sm:$0xff]
        %v5735 = vld [vmem:[%s1708 + $0x8] sm:$0xff]
        %v5736 = vld [vmem:[%s1708 + $0x18] sm:$0xff]
        %v5737 = vld [vmem:[%s1708 + $0x20] sm:$0xff]
        %v5738 = vld [vmem:[%s1708 + $0x30] sm:$0xff]
        %v5739 = vld [vmem:[%s1708 + $0x38] sm:$0xff]
        %v5740 = vld [vmem:[%s1708 + $0x48] sm:$0xff]
        %v5741 = vld [vmem:[%s1708 + $0x50] sm:$0xff]
        %v5742 = vld [vmem:[%s1708 + $0x60] sm:$0xff]
        %v5743 = vld [vmem:[%s1708 + $0x68] sm:$0xff]
        %v5744 = vld [vmem:[%s1708 + $0x78] sm:$0xff]
        %v5745 = vld [vmem:[%s1708 + $0x80] sm:$0xff]
        %v5746 = vld [vmem:[%s1708 + $0x90] sm:$0xff]
        %v5747 = vld [vmem:[%s1708 + $0x98] sm:$0xff]
        %v5748 = vld [vmem:[%s1708 + $0xa8] sm:$0xff]
        %v5749 = vld [vmem:[%s1708 + $0xb0] sm:$0xff]
        %v5750 = vld [vmem:[%s1708 + $0xc0] sm:$0xff]
        %v5751 = vld [vmem:[%s1708 + $0xc8] sm:$0xff]
        %v5752 = vld [vmem:[%s1708 + $0xd8] sm:$0xff]
        %v5753 = vld [vmem:[%s1708 + $0xe0] sm:$0xff]
        %v5754 = vld [vmem:[%s1708 + $0xf0] sm:$0xff]
        %v5755 = vld [vmem:[%s1708 + $0xf8] sm:$0xff]
        %v5756 = vld [vmem:[%s1708 + $0x108] sm:$0xff]
        %v5757 = vld [vmem:[%s1708 + $0x110] sm:$0xff]
        %v5758 = vld [vmem:[%s1708 + $0x120] sm:$0xff]
        %v5759 = vld [vmem:[%s1708 + $0x128] sm:$0xff]
        %v5760 = vld [vmem:[%s1708 + $0x138] sm:$0xff]
        %v5761 = vld [vmem:[%s1708 + $0x140] sm:$0xff]
        %v5762 = vld [vmem:[%s1708 + $0x150] sm:$0xff]
        %v5763 = vld [vmem:[%s1708 + $0x158] sm:$0xff]
        %v5764 = vld [vmem:[%s1708 + $0x168] sm:$0xff]
        %v5765 = vld [vmem:[%s1708 + $0x170] sm:$0xff]
        %5798 = vrot.lane.b32.xlu0 %v5734, 96
        %v5799 = vpop.permute.xlu0 %5798
        %5800 = vrot.lane.b32.xlu0 %v5735, 96
        %v5801 = vpop.permute.xlu0 %5800
        %5802 = vrot.lane.b32.xlu0 %v5736, 96
        %v5803 = vpop.permute.xlu0 %5802
        %5804 = vrot.lane.b32.xlu0 %v5737, 96
        %v5805 = vpop.permute.xlu0 %5804
        %5806 = vrot.lane.b32.xlu0 %v5738, 96
        %v5807 = vpop.permute.xlu0 %5806
        %5808 = vrot.lane.b32.xlu0 %v5739, 96
        %v5809 = vpop.permute.xlu0 %5808
        %5810 = vrot.lane.b32.xlu0 %v5740, 96
        %v5811 = vpop.permute.xlu0 %5810
        %5812 = vrot.lane.b32.xlu0 %v5741, 96
        %v5813 = vpop.permute.xlu0 %5812
        %5814 = vrot.lane.b32.xlu0 %v5742, 96
        %v5815 = vpop.permute.xlu0 %5814
        %5816 = vrot.lane.b32.xlu0 %v5743, 96
        %v5817 = vpop.permute.xlu0 %5816
        %5818 = vrot.lane.b32.xlu0 %v5744, 96
        %v5819 = vpop.permute.xlu0 %5818
        %5820 = vrot.lane.b32.xlu0 %v5745, 96
        %v5821 = vpop.permute.xlu0 %5820
        %5822 = vrot.lane.b32.xlu0 %v5746, 96
        %v5823 = vpop.permute.xlu0 %5822
        %5824 = vrot.lane.b32.xlu0 %v5747, 96
        %v5825 = vpop.permute.xlu0 %5824
        %5826 = vrot.lane.b32.xlu0 %v5748, 96
        %v5827 = vpop.permute.xlu0 %5826
        %5828 = vrot.lane.b32.xlu0 %v5749, 96
        %v5829 = vpop.permute.xlu0 %5828
        %5830 = vrot.lane.b32.xlu0 %v5750, 96
        %v5831 = vpop.permute.xlu0 %5830
        %5832 = vrot.lane.b32.xlu0 %v5751, 96
        %v5833 = vpop.permute.xlu0 %5832
        %5834 = vrot.lane.b32.xlu0 %v5752, 96
        %v5835 = vpop.permute.xlu0 %5834
        %5836 = vrot.lane.b32.xlu0 %v5753, 96
        %v5837 = vpop.permute.xlu0 %5836
        %5838 = vrot.lane.b32.xlu0 %v5754, 96
        %v5839 = vpop.permute.xlu0 %5838
        %5840 = vrot.lane.b32.xlu0 %v5755, 96
        %v5841 = vpop.permute.xlu0 %5840
        %5842 = vrot.lane.b32.xlu0 %v5756, 96
        %v5843 = vpop.permute.xlu0 %5842
        %5844 = vrot.lane.b32.xlu0 %v5757, 96
        %v5845 = vpop.permute.xlu0 %5844
        %5846 = vrot.lane.b32.xlu0 %v5758, 96
        %v5847 = vpop.permute.xlu0 %5846
        %5848 = vrot.lane.b32.xlu0 %v5759, 96
        %v5849 = vpop.permute.xlu0 %5848
        %5850 = vrot.lane.b32.xlu0 %v5760, 96
        %v5851 = vpop.permute.xlu0 %5850
        %5852 = vrot.lane.b32.xlu0 %v5761, 96
        %v5853 = vpop.permute.xlu0 %5852
        %5854 = vrot.lane.b32.xlu0 %v5762, 96
        %v5855 = vpop.permute.xlu0 %5854
        %5856 = vrot.lane.b32.xlu0 %v5763, 96
        %v5857 = vpop.permute.xlu0 %5856
        %5858 = vrot.lane.b32.xlu0 %v5764, 96
        %v5859 = vpop.permute.xlu0 %5858
        %5860 = vrot.lane.b32.xlu0 %v5765, 96
        %v5861 = vpop.permute.xlu0 %5860
        %5894 = vst.msk [vmem:[#allocation4] sm:$0xff] %vm3901, %v5799
        %5895 = vst.msk [vmem:[#allocation4 + $0x10] sm:$0xff] %vm3901, %v5801
        %5896 = vst.msk [vmem:[#allocation4 + $0x20] sm:$0xff] %vm3901, %v5803
        %5897 = vst.msk [vmem:[#allocation4 + $0x30] sm:$0xff] %vm3901, %v5805
        %5898 = vst.msk [vmem:[#allocation4 + $0x40] sm:$0xff] %vm3901, %v5807
        %5899 = vst.msk [vmem:[#allocation4 + $0x50] sm:$0xff] %vm3901, %v5809
        %5900 = vst.msk [vmem:[#allocation4 + $0x60] sm:$0xff] %vm3901, %v5811
        %5901 = vst.msk [vmem:[#allocation4 + $0x70] sm:$0xff] %vm3901, %v5813
        %5902 = vst.msk [vmem:[#allocation4 + $0x80] sm:$0xff] %vm3901, %v5815
        %5903 = vst.msk [vmem:[#allocation4 + $0x90] sm:$0xff] %vm3901, %v5817
        %5904 = vst.msk [vmem:[#allocation4 + $0xa0] sm:$0xff] %vm3901, %v5819
        %5905 = vst.msk [vmem:[#allocation4 + $0xb0] sm:$0xff] %vm3901, %v5821
        %5906 = vst.msk [vmem:[#allocation4 + $0xc0] sm:$0xff] %vm3901, %v5823
        %5907 = vst.msk [vmem:[#allocation4 + $0xd0] sm:$0xff] %vm3901, %v5825
        %5908 = vst.msk [vmem:[#allocation4 + $0xe0] sm:$0xff] %vm3901, %v5827
        %5909 = vst.msk [vmem:[#allocation4 + $0xf0] sm:$0xff] %vm3901, %v5829
        %5910 = vst.msk [vmem:[#allocation4 + $0x100] sm:$0xff] %vm3901, %v5831
        %5911 = vst.msk [vmem:[#allocation4 + $0x110] sm:$0xff] %vm3901, %v5833
        %5912 = vst.msk [vmem:[#allocation4 + $0x120] sm:$0xff] %vm3901, %v5835
        %5913 = vst.msk [vmem:[#allocation4 + $0x130] sm:$0xff] %vm3901, %v5837
        %5914 = vst.msk [vmem:[#allocation4 + $0x140] sm:$0xff] %vm3901, %v5839
        %5915 = vst.msk [vmem:[#allocation4 + $0x150] sm:$0xff] %vm3901, %v5841
        %5916 = vst.msk [vmem:[#allocation4 + $0x160] sm:$0xff] %vm3901, %v5843
        %5917 = vst.msk [vmem:[#allocation4 + $0x170] sm:$0xff] %vm3901, %v5845
        %5918 = vst.msk [vmem:[#allocation4 + $0x180] sm:$0xff] %vm3901, %v5847
        %5919 = vst.msk [vmem:[#allocation4 + $0x190] sm:$0xff] %vm3901, %v5849
        %5920 = vst.msk [vmem:[#allocation4 + $0x1a0] sm:$0xff] %vm3901, %v5851
        %5921 = vst.msk [vmem:[#allocation4 + $0x1b0] sm:$0xff] %vm3901, %v5853
        %5922 = vst.msk [vmem:[#allocation4 + $0x1c0] sm:$0xff] %vm3901, %v5855
        %5923 = vst.msk [vmem:[#allocation4 + $0x1d0] sm:$0xff] %vm3901, %v5857
        %5924 = vst.msk [vmem:[#allocation4 + $0x1e0] sm:$0xff] %vm3901, %v5859
        %5925 = vst.msk [vmem:[#allocation4 + $0x1f0] sm:$0xff] %vm3901, %v5861
        %v5926 = vld [vmem:[%s1708 + $0x1] sm:$0xff]
        %v5927 = vld [vmem:[%s1708 + $0x9] sm:$0xff]
        %v5928 = vld [vmem:[%s1708 + $0x19] sm:$0xff]
        %v5929 = vld [vmem:[%s1708 + $0x21] sm:$0xff]
        %v5930 = vld [vmem:[%s1708 + $0x31] sm:$0xff]
        %v5931 = vld [vmem:[%s1708 + $0x39] sm:$0xff]
        %v5932 = vld [vmem:[%s1708 + $0x49] sm:$0xff]
        %v5933 = vld [vmem:[%s1708 + $0x51] sm:$0xff]
        %v5934 = vld [vmem:[%s1708 + $0x61] sm:$0xff]
        %v5935 = vld [vmem:[%s1708 + $0x69] sm:$0xff]
        %v5936 = vld [vmem:[%s1708 + $0x79] sm:$0xff]
        %v5937 = vld [vmem:[%s1708 + $0x81] sm:$0xff]
        %v5938 = vld [vmem:[%s1708 + $0x91] sm:$0xff]
        %v5939 = vld [vmem:[%s1708 + $0x99] sm:$0xff]
        %v5940 = vld [vmem:[%s1708 + $0xa9] sm:$0xff]
        %v5941 = vld [vmem:[%s1708 + $0xb1] sm:$0xff]
        %v5942 = vld [vmem:[%s1708 + $0xc1] sm:$0xff]
        %v5943 = vld [vmem:[%s1708 + $0xc9] sm:$0xff]
        %v5944 = vld [vmem:[%s1708 + $0xd9] sm:$0xff]
        %v5945 = vld [vmem:[%s1708 + $0xe1] sm:$0xff]
        %v5946 = vld [vmem:[%s1708 + $0xf1] sm:$0xff]
        %v5947 = vld [vmem:[%s1708 + $0xf9] sm:$0xff]
        %v5948 = vld [vmem:[%s1708 + $0x109] sm:$0xff]
        %v5949 = vld [vmem:[%s1708 + $0x111] sm:$0xff]
        %v5950 = vld [vmem:[%s1708 + $0x121] sm:$0xff]
        %v5951 = vld [vmem:[%s1708 + $0x129] sm:$0xff]
        %v5952 = vld [vmem:[%s1708 + $0x139] sm:$0xff]
        %v5953 = vld [vmem:[%s1708 + $0x141] sm:$0xff]
        %v5954 = vld [vmem:[%s1708 + $0x151] sm:$0xff]
        %v5955 = vld [vmem:[%s1708 + $0x159] sm:$0xff]
        %v5956 = vld [vmem:[%s1708 + $0x169] sm:$0xff]
        %v5957 = vld [vmem:[%s1708 + $0x171] sm:$0xff]
        %5990 = vrot.lane.b32.xlu0 %v5926, 112
        %v5991 = vpop.permute.xlu0 %5990
        %5992 = vrot.lane.b32.xlu0 %v5927, 112
        %v5993 = vpop.permute.xlu0 %5992
        %5994 = vrot.lane.b32.xlu0 %v5928, 112
        %v5995 = vpop.permute.xlu0 %5994
        %5996 = vrot.lane.b32.xlu0 %v5929, 112
        %v5997 = vpop.permute.xlu0 %5996
        %5998 = vrot.lane.b32.xlu0 %v5930, 112
        %v5999 = vpop.permute.xlu0 %5998
        %6000 = vrot.lane.b32.xlu0 %v5931, 112
        %v6001 = vpop.permute.xlu0 %6000
        %6002 = vrot.lane.b32.xlu0 %v5932, 112
        %v6003 = vpop.permute.xlu0 %6002
        %6004 = vrot.lane.b32.xlu0 %v5933, 112
        %v6005 = vpop.permute.xlu0 %6004
        %6006 = vrot.lane.b32.xlu0 %v5934, 112
        %v6007 = vpop.permute.xlu0 %6006
        %6008 = vrot.lane.b32.xlu0 %v5935, 112
        %v6009 = vpop.permute.xlu0 %6008
        %6010 = vrot.lane.b32.xlu0 %v5936, 112
        %v6011 = vpop.permute.xlu0 %6010
        %6012 = vrot.lane.b32.xlu0 %v5937, 112
        %v6013 = vpop.permute.xlu0 %6012
        %6014 = vrot.lane.b32.xlu0 %v5938, 112
        %v6015 = vpop.permute.xlu0 %6014
        %6016 = vrot.lane.b32.xlu0 %v5939, 112
        %v6017 = vpop.permute.xlu0 %6016
        %6018 = vrot.lane.b32.xlu0 %v5940, 112
        %v6019 = vpop.permute.xlu0 %6018
        %6020 = vrot.lane.b32.xlu0 %v5941, 112
        %v6021 = vpop.permute.xlu0 %6020
        %6022 = vrot.lane.b32.xlu0 %v5942, 112
        %v6023 = vpop.permute.xlu0 %6022
        %6024 = vrot.lane.b32.xlu0 %v5943, 112
        %v6025 = vpop.permute.xlu0 %6024
        %6026 = vrot.lane.b32.xlu0 %v5944, 112
        %v6027 = vpop.permute.xlu0 %6026
        %6028 = vrot.lane.b32.xlu0 %v5945, 112
        %v6029 = vpop.permute.xlu0 %6028
        %6030 = vrot.lane.b32.xlu0 %v5946, 112
        %v6031 = vpop.permute.xlu0 %6030
        %6032 = vrot.lane.b32.xlu0 %v5947, 112
        %v6033 = vpop.permute.xlu0 %6032
        %6034 = vrot.lane.b32.xlu0 %v5948, 112
        %v6035 = vpop.permute.xlu0 %6034
        %6036 = vrot.lane.b32.xlu0 %v5949, 112
        %v6037 = vpop.permute.xlu0 %6036
        %6038 = vrot.lane.b32.xlu0 %v5950, 112
        %v6039 = vpop.permute.xlu0 %6038
        %6040 = vrot.lane.b32.xlu0 %v5951, 112
        %v6041 = vpop.permute.xlu0 %6040
        %6042 = vrot.lane.b32.xlu0 %v5952, 112
        %v6043 = vpop.permute.xlu0 %6042
        %6044 = vrot.lane.b32.xlu0 %v5953, 112
        %v6045 = vpop.permute.xlu0 %6044
        %6046 = vrot.lane.b32.xlu0 %v5954, 112
        %v6047 = vpop.permute.xlu0 %6046
        %6048 = vrot.lane.b32.xlu0 %v5955, 112
        %v6049 = vpop.permute.xlu0 %6048
        %6050 = vrot.lane.b32.xlu0 %v5956, 112
        %v6051 = vpop.permute.xlu0 %6050
        %6052 = vrot.lane.b32.xlu0 %v5957, 112
        %v6053 = vpop.permute.xlu0 %6052
        %6086 = vst.msk [vmem:[#allocation4] sm:$0xff] %vm4094, %v5991
        %6087 = vst.msk [vmem:[#allocation4 + $0x10] sm:$0xff] %vm4094, %v5993
        %6088 = vst.msk [vmem:[#allocation4 + $0x20] sm:$0xff] %vm4094, %v5995
        %6089 = vst.msk [vmem:[#allocation4 + $0x30] sm:$0xff] %vm4094, %v5997
        %6090 = vst.msk [vmem:[#allocation4 + $0x40] sm:$0xff] %vm4094, %v5999
        %6091 = vst.msk [vmem:[#allocation4 + $0x50] sm:$0xff] %vm4094, %v6001
        %6092 = vst.msk [vmem:[#allocation4 + $0x60] sm:$0xff] %vm4094, %v6003
        %6093 = vst.msk [vmem:[#allocation4 + $0x70] sm:$0xff] %vm4094, %v6005
        %6094 = vst.msk [vmem:[#allocation4 + $0x80] sm:$0xff] %vm4094, %v6007
        %6095 = vst.msk [vmem:[#allocation4 + $0x90] sm:$0xff] %vm4094, %v6009
        %6096 = vst.msk [vmem:[#allocation4 + $0xa0] sm:$0xff] %vm4094, %v6011
        %6097 = vst.msk [vmem:[#allocation4 + $0xb0] sm:$0xff] %vm4094, %v6013
        %6098 = vst.msk [vmem:[#allocation4 + $0xc0] sm:$0xff] %vm4094, %v6015
        %6099 = vst.msk [vmem:[#allocation4 + $0xd0] sm:$0xff] %vm4094, %v6017
        %6100 = vst.msk [vmem:[#allocation4 + $0xe0] sm:$0xff] %vm4094, %v6019
        %6101 = vst.msk [vmem:[#allocation4 + $0xf0] sm:$0xff] %vm4094, %v6021
        %6102 = vst.msk [vmem:[#allocation4 + $0x100] sm:$0xff] %vm4094, %v6023
        %6103 = vst.msk [vmem:[#allocation4 + $0x110] sm:$0xff] %vm4094, %v6025
        %6104 = vst.msk [vmem:[#allocation4 + $0x120] sm:$0xff] %vm4094, %v6027
        %6105 = vst.msk [vmem:[#allocation4 + $0x130] sm:$0xff] %vm4094, %v6029
        %6106 = vst.msk [vmem:[#allocation4 + $0x140] sm:$0xff] %vm4094, %v6031
        %6107 = vst.msk [vmem:[#allocation4 + $0x150] sm:$0xff] %vm4094, %v6033
        %6108 = vst.msk [vmem:[#allocation4 + $0x160] sm:$0xff] %vm4094, %v6035
        %6109 = vst.msk [vmem:[#allocation4 + $0x170] sm:$0xff] %vm4094, %v6037
        %6110 = vst.msk [vmem:[#allocation4 + $0x180] sm:$0xff] %vm4094, %v6039
        %6111 = vst.msk [vmem:[#allocation4 + $0x190] sm:$0xff] %vm4094, %v6041
        %6112 = vst.msk [vmem:[#allocation4 + $0x1a0] sm:$0xff] %vm4094, %v6043
        %6113 = vst.msk [vmem:[#allocation4 + $0x1b0] sm:$0xff] %vm4094, %v6045
        %6114 = vst.msk [vmem:[#allocation4 + $0x1c0] sm:$0xff] %vm4094, %v6047
        %6115 = vst.msk [vmem:[#allocation4 + $0x1d0] sm:$0xff] %vm4094, %v6049
        %6116 = vst.msk [vmem:[#allocation4 + $0x1e0] sm:$0xff] %vm4094, %v6051
        %6117 = vst.msk [vmem:[#allocation4 + $0x1f0] sm:$0xff] %vm4094, %v6053
        %v6118 = vld [vmem:[%s1708 + $0x2] sm:$0xff]
        %v6119 = vld [vmem:[%s1708 + $0xa] sm:$0xff]
        %v6120 = vld [vmem:[%s1708 + $0x1a] sm:$0xff]
        %v6121 = vld [vmem:[%s1708 + $0x22] sm:$0xff]
        %v6122 = vld [vmem:[%s1708 + $0x32] sm:$0xff]
        %v6123 = vld [vmem:[%s1708 + $0x3a] sm:$0xff]
        %v6124 = vld [vmem:[%s1708 + $0x4a] sm:$0xff]
        %v6125 = vld [vmem:[%s1708 + $0x52] sm:$0xff]
        %v6126 = vld [vmem:[%s1708 + $0x62] sm:$0xff]
        %v6127 = vld [vmem:[%s1708 + $0x6a] sm:$0xff]
        %v6128 = vld [vmem:[%s1708 + $0x7a] sm:$0xff]
        %v6129 = vld [vmem:[%s1708 + $0x82] sm:$0xff]
        %v6130 = vld [vmem:[%s1708 + $0x92] sm:$0xff]
        %v6131 = vld [vmem:[%s1708 + $0x9a] sm:$0xff]
        %v6132 = vld [vmem:[%s1708 + $0xaa] sm:$0xff]
        %v6133 = vld [vmem:[%s1708 + $0xb2] sm:$0xff]
        %v6134 = vld [vmem:[%s1708 + $0xc2] sm:$0xff]
        %v6135 = vld [vmem:[%s1708 + $0xca] sm:$0xff]
        %v6136 = vld [vmem:[%s1708 + $0xda] sm:$0xff]
        %v6137 = vld [vmem:[%s1708 + $0xe2] sm:$0xff]
        %v6138 = vld [vmem:[%s1708 + $0xf2] sm:$0xff]
        %v6139 = vld [vmem:[%s1708 + $0xfa] sm:$0xff]
        %v6140 = vld [vmem:[%s1708 + $0x10a] sm:$0xff]
        %v6141 = vld [vmem:[%s1708 + $0x112] sm:$0xff]
        %v6142 = vld [vmem:[%s1708 + $0x122] sm:$0xff]
        %v6143 = vld [vmem:[%s1708 + $0x12a] sm:$0xff]
        %v6144 = vld [vmem:[%s1708 + $0x13a] sm:$0xff]
        %v6145 = vld [vmem:[%s1708 + $0x142] sm:$0xff]
        %v6146 = vld [vmem:[%s1708 + $0x152] sm:$0xff]
        %v6147 = vld [vmem:[%s1708 + $0x15a] sm:$0xff]
        %v6148 = vld [vmem:[%s1708 + $0x16a] sm:$0xff]
        %v6149 = vld [vmem:[%s1708 + $0x172] sm:$0xff]
        %6150 = vst.msk [vmem:[#allocation4 + $0x8] sm:$0xff] %vm503, %v6118
        %6151 = vst.msk [vmem:[#allocation4 + $0x18] sm:$0xff] %vm503, %v6119
        %6152 = vst.msk [vmem:[#allocation4 + $0x28] sm:$0xff] %vm503, %v6120
        %6153 = vst.msk [vmem:[#allocation4 + $0x38] sm:$0xff] %vm503, %v6121
        %6154 = vst.msk [vmem:[#allocation4 + $0x48] sm:$0xff] %vm503, %v6122
        %6155 = vst.msk [vmem:[#allocation4 + $0x58] sm:$0xff] %vm503, %v6123
        %6156 = vst.msk [vmem:[#allocation4 + $0x68] sm:$0xff] %vm503, %v6124
        %6157 = vst.msk [vmem:[#allocation4 + $0x78] sm:$0xff] %vm503, %v6125
        %6158 = vst.msk [vmem:[#allocation4 + $0x88] sm:$0xff] %vm503, %v6126
        %6159 = vst.msk [vmem:[#allocation4 + $0x98] sm:$0xff] %vm503, %v6127
        %6160 = vst.msk [vmem:[#allocation4 + $0xa8] sm:$0xff] %vm503, %v6128
        %6161 = vst.msk [vmem:[#allocation4 + $0xb8] sm:$0xff] %vm503, %v6129
        %6162 = vst.msk [vmem:[#allocation4 + $0xc8] sm:$0xff] %vm503, %v6130
        %6163 = vst.msk [vmem:[#allocation4 + $0xd8] sm:$0xff] %vm503, %v6131
        %6164 = vst.msk [vmem:[#allocation4 + $0xe8] sm:$0xff] %vm503, %v6132
        %6165 = vst.msk [vmem:[#allocation4 + $0xf8] sm:$0xff] %vm503, %v6133
        %6166 = vst.msk [vmem:[#allocation4 + $0x108] sm:$0xff] %vm503, %v6134
        %6167 = vst.msk [vmem:[#allocation4 + $0x118] sm:$0xff] %vm503, %v6135
        %6168 = vst.msk [vmem:[#allocation4 + $0x128] sm:$0xff] %vm503, %v6136
        %6169 = vst.msk [vmem:[#allocation4 + $0x138] sm:$0xff] %vm503, %v6137
        %6170 = vst.msk [vmem:[#allocation4 + $0x148] sm:$0xff] %vm503, %v6138
        %6171 = vst.msk [vmem:[#allocation4 + $0x158] sm:$0xff] %vm503, %v6139
        %6172 = vst.msk [vmem:[#allocation4 + $0x168] sm:$0xff] %vm503, %v6140
        %6173 = vst.msk [vmem:[#allocation4 + $0x178] sm:$0xff] %vm503, %v6141
        %6174 = vst.msk [vmem:[#allocation4 + $0x188] sm:$0xff] %vm503, %v6142
        %6175 = vst.msk [vmem:[#allocation4 + $0x198] sm:$0xff] %vm503, %v6143
        %6176 = vst.msk [vmem:[#allocation4 + $0x1a8] sm:$0xff] %vm503, %v6144
        %6177 = vst.msk [vmem:[#allocation4 + $0x1b8] sm:$0xff] %vm503, %v6145
        %6178 = vst.msk [vmem:[#allocation4 + $0x1c8] sm:$0xff] %vm503, %v6146
        %6179 = vst.msk [vmem:[#allocation4 + $0x1d8] sm:$0xff] %vm503, %v6147
        %6180 = vst.msk [vmem:[#allocation4 + $0x1e8] sm:$0xff] %vm503, %v6148
        %6181 = vst.msk [vmem:[#allocation4 + $0x1f8] sm:$0xff] %vm503, %v6149
        %v6182 = vld [vmem:[#allocation4] sm:$0xff]
        %v6183 = vld [vmem:[#allocation4 + $0x8] sm:$0xff]
        %v6184 = vld [vmem:[#allocation4 + $0x10] sm:$0xff]
        %v6185 = vld [vmem:[#allocation4 + $0x18] sm:$0xff]
        %v6186 = vld [vmem:[#allocation4 + $0x20] sm:$0xff]
        %v6187 = vld [vmem:[#allocation4 + $0x28] sm:$0xff]
        %v6188 = vld [vmem:[#allocation4 + $0x30] sm:$0xff]
        %v6189 = vld [vmem:[#allocation4 + $0x38] sm:$0xff]
        %v6190 = vld [vmem:[#allocation4 + $0x40] sm:$0xff]
        %v6191 = vld [vmem:[#allocation4 + $0x48] sm:$0xff]
        %v6192 = vld [vmem:[#allocation4 + $0x50] sm:$0xff]
        %v6193 = vld [vmem:[#allocation4 + $0x58] sm:$0xff]
        %v6194 = vld [vmem:[#allocation4 + $0x60] sm:$0xff]
        %v6195 = vld [vmem:[#allocation4 + $0x68] sm:$0xff]
        %v6196 = vld [vmem:[#allocation4 + $0x70] sm:$0xff]
        %v6197 = vld [vmem:[#allocation4 + $0x78] sm:$0xff]
        %v6198 = vld [vmem:[#allocation4 + $0x80] sm:$0xff]
        %v6199 = vld [vmem:[#allocation4 + $0x88] sm:$0xff]
        %v6200 = vld [vmem:[#allocation4 + $0x90] sm:$0xff]
        %v6201 = vld [vmem:[#allocation4 + $0x98] sm:$0xff]
        %v6202 = vld [vmem:[#allocation4 + $0xa0] sm:$0xff]
        %v6203 = vld [vmem:[#allocation4 + $0xa8] sm:$0xff]
        %v6204 = vld [vmem:[#allocation4 + $0xb0] sm:$0xff]
        %v6205 = vld [vmem:[#allocation4 + $0xb8] sm:$0xff]
        %v6206 = vld [vmem:[#allocation4 + $0xc0] sm:$0xff]
        %v6207 = vld [vmem:[#allocation4 + $0xc8] sm:$0xff]
        %v6208 = vld [vmem:[#allocation4 + $0xd0] sm:$0xff]
        %v6209 = vld [vmem:[#allocation4 + $0xd8] sm:$0xff]
        %v6210 = vld [vmem:[#allocation4 + $0xe0] sm:$0xff]
        %v6211 = vld [vmem:[#allocation4 + $0xe8] sm:$0xff]
        %v6212 = vld [vmem:[#allocation4 + $0xf0] sm:$0xff]
        %v6213 = vld [vmem:[#allocation4 + $0xf8] sm:$0xff]
        %v6214 = vld [vmem:[#allocation4 + $0x100] sm:$0xff]
        %v6215 = vld [vmem:[#allocation4 + $0x108] sm:$0xff]
        %v6216 = vld [vmem:[#allocation4 + $0x110] sm:$0xff]
        %v6217 = vld [vmem:[#allocation4 + $0x118] sm:$0xff]
        %v6218 = vld [vmem:[#allocation4 + $0x120] sm:$0xff]
        %v6219 = vld [vmem:[#allocation4 + $0x128] sm:$0xff]
        %v6220 = vld [vmem:[#allocation4 + $0x130] sm:$0xff]
        %v6221 = vld [vmem:[#allocation4 + $0x138] sm:$0xff]
        %v6222 = vld [vmem:[#allocation4 + $0x140] sm:$0xff]
        %v6223 = vld [vmem:[#allocation4 + $0x148] sm:$0xff]
        %v6224 = vld [vmem:[#allocation4 + $0x150] sm:$0xff]
        %v6225 = vld [vmem:[#allocation4 + $0x158] sm:$0xff]
        %v6226 = vld [vmem:[#allocation4 + $0x160] sm:$0xff]
        %v6227 = vld [vmem:[#allocation4 + $0x168] sm:$0xff]
        %v6228 = vld [vmem:[#allocation4 + $0x170] sm:$0xff]
        %v6229 = vld [vmem:[#allocation4 + $0x178] sm:$0xff]
        %v6230 = vld [vmem:[#allocation4 + $0x180] sm:$0xff]
        %v6231 = vld [vmem:[#allocation4 + $0x188] sm:$0xff]
        %v6232 = vld [vmem:[#allocation4 + $0x190] sm:$0xff]
        %v6233 = vld [vmem:[#allocation4 + $0x198] sm:$0xff]
        %v6234 = vld [vmem:[#allocation4 + $0x1a0] sm:$0xff]
        %v6235 = vld [vmem:[#allocation4 + $0x1a8] sm:$0xff]
        %v6236 = vld [vmem:[#allocation4 + $0x1b0] sm:$0xff]
        %v6237 = vld [vmem:[#allocation4 + $0x1b8] sm:$0xff]
        %v6238 = vld [vmem:[#allocation4 + $0x1c0] sm:$0xff]
        %v6239 = vld [vmem:[#allocation4 + $0x1c8] sm:$0xff]
        %v6240 = vld [vmem:[#allocation4 + $0x1d0] sm:$0xff]
        %v6241 = vld [vmem:[#allocation4 + $0x1d8] sm:$0xff]
        %v6242 = vld [vmem:[#allocation4 + $0x1e0] sm:$0xff]
        %v6243 = vld [vmem:[#allocation4 + $0x1e8] sm:$0xff]
        %v6244 = vld [vmem:[#allocation4 + $0x1f0] sm:$0xff]
        %v6245 = vld [vmem:[#allocation4 + $0x1f8] sm:$0xff]
        %v6246 = vpack.c.bf16 %v6184, %v6182
        %v6247 = vpack.c.bf16 %v6185, %v6183
        %v6248 = vpack.c.bf16 %v6188, %v6186
        %v6249 = vpack.c.bf16 %v6189, %v6187
        %v6250 = vpack.c.bf16 %v6192, %v6190
        %v6251 = vpack.c.bf16 %v6193, %v6191
        %v6252 = vpack.c.bf16 %v6196, %v6194
        %v6253 = vpack.c.bf16 %v6197, %v6195
        %v6254 = vpack.c.bf16 %v6200, %v6198
        %v6255 = vpack.c.bf16 %v6201, %v6199
        %v6256 = vpack.c.bf16 %v6204, %v6202
        %v6257 = vpack.c.bf16 %v6205, %v6203
        %v6258 = vpack.c.bf16 %v6208, %v6206
        %v6259 = vpack.c.bf16 %v6209, %v6207
        %v6260 = vpack.c.bf16 %v6212, %v6210
        %v6261 = vpack.c.bf16 %v6213, %v6211
        %v6262 = vpack.c.bf16 %v6216, %v6214
        %v6263 = vpack.c.bf16 %v6217, %v6215
        %v6264 = vpack.c.bf16 %v6220, %v6218
        %v6265 = vpack.c.bf16 %v6221, %v6219
        %v6266 = vpack.c.bf16 %v6224, %v6222
        %v6267 = vpack.c.bf16 %v6225, %v6223
        %v6268 = vpack.c.bf16 %v6228, %v6226
        %v6269 = vpack.c.bf16 %v6229, %v6227
        %v6270 = vpack.c.bf16 %v6232, %v6230
        %v6271 = vpack.c.bf16 %v6233, %v6231
        %v6272 = vpack.c.bf16 %v6236, %v6234
        %v6273 = vpack.c.bf16 %v6237, %v6235
        %v6274 = vpack.c.bf16 %v6240, %v6238
        %v6275 = vpack.c.bf16 %v6241, %v6239
        %v6276 = vpack.c.bf16 %v6244, %v6242
        %v6277 = vpack.c.bf16 %v6245, %v6243
        %v6278 = vld [vmem:[%s7] sm:$0xf]
        %v6279 = vld [vmem:[%s7 + $0x4] sm:$0xf]
        %v6280 = vld [vmem:[%s7 + $0x8] sm:$0xf]
        %v6281 = vld [vmem:[%s7 + $0xc] sm:$0xf]
        %v6282 = vld [vmem:[%s7 + $0x10] sm:$0xf]
        %v6283 = vld [vmem:[%s7 + $0x14] sm:$0xf]
        %v6284 = vld [vmem:[%s7 + $0x18] sm:$0xf]
        %v6285 = vld [vmem:[%s7 + $0x1c] sm:$0xf]
        %v6286 = vld [vmem:[%s7 + $0x20] sm:$0xf]
        %v6287 = vld [vmem:[%s7 + $0x24] sm:$0xf]
        %v6288 = vld [vmem:[%s7 + $0x28] sm:$0xf]
        %v6289 = vld [vmem:[%s7 + $0x2c] sm:$0xf]
        %v6290 = vld [vmem:[%s7 + $0x30] sm:$0xf]
        %v6291 = vld [vmem:[%s7 + $0x34] sm:$0xf]
        %v6292 = vld [vmem:[%s7 + $0x38] sm:$0xf]
        %v6293 = vld [vmem:[%s7 + $0x3c] sm:$0xf]
        %v6294 = vld [vmem:[%s7 + $0x40] sm:$0xf]
        %v6295 = vld [vmem:[%s7 + $0x44] sm:$0xf]
        %v6296 = vld [vmem:[#allocation12] sm:$0x1]
        %v6298 = vlaneseq
        %v6299 = vshrl.u32 %v6298, 7
        %v6300 = vsub.s32 0, %v6299
        %v6301 = vrot.slane %v6296, %v6300
        %v6321 = vunpack.c.l.b16 %v6278
        %v6322 = vunpack.c.l.b16 %v6279
        %v6323 = vunpack.c.l.b16 %v6280
        %v6324 = vunpack.c.l.b16 %v6281
        %v6325 = vunpack.c.l.b16 %v6282
        %v6326 = vunpack.c.l.b16 %v6283
        %v6327 = vunpack.c.l.b16 %v6284
        %v6328 = vunpack.c.l.b16 %v6285
        %v6329 = vunpack.c.l.b16 %v6286
        %v6330 = vunpack.c.l.b16 %v6287
        %v6331 = vunpack.c.l.b16 %v6288
        %v6332 = vunpack.c.l.b16 %v6289
        %v6333 = vunpack.c.l.b16 %v6290
        %v6334 = vunpack.c.l.b16 %v6291
        %v6335 = vunpack.c.l.b16 %v6292
        %v6336 = vunpack.c.l.b16 %v6293
        %v6337 = vunpack.c.l.b16 %v6294
        %v6338 = vunpack.c.l.b16 %v6295
        %v6339 = vpack.c.b16 %v6322, %v6321
        %v6340 = vpack.c.b16 %v6324, %v6323
        %v6341 = vpack.c.b16 %v6326, %v6325
        %v6342 = vpack.c.b16 %v6328, %v6327
        %v6343 = vpack.c.b16 %v6330, %v6329
        %v6344 = vpack.c.b16 %v6332, %v6331
        %v6345 = vpack.c.b16 %v6334, %v6333
        %v6346 = vpack.c.b16 %v6336, %v6335
        %v6347 = vpack.c.b16 %v6338, %v6337
        %v6358 = vsel %vm503, %v6247, 0
        %v6361 = vsel %vm503, %v6249, 0
        %v6364 = vsel %vm503, %v6251, 0
        %v6367 = vsel %vm503, %v6253, 0
        %v6370 = vsel %vm503, %v6255, 0
        %v6373 = vsel %vm503, %v6257, 0
        %v6376 = vsel %vm503, %v6259, 0
        %v6379 = vsel %vm503, %v6261, 0
        %v6382 = vsel %vm503, %v6263, 0
        %v6385 = vsel %vm503, %v6265, 0
        %v6388 = vsel %vm503, %v6267, 0
        %v6391 = vsel %vm503, %v6269, 0
        %v6394 = vsel %vm503, %v6271, 0
        %v6397 = vsel %vm503, %v6273, 0
        %v6400 = vsel %vm503, %v6275, 0
        %v6403 = vsel %vm503, %v6277, 0
        %6405 = vmatprep.subr.bf16.mxu0 0
        %6406 = vmatpush1.bf16.msra.mxu0 %v6346
        %6407 = vmatprep.subr.bf16.mxu0 0
        %6408 = vmatpush1.bf16.msra.mxu0 %v6345
        %6409 = vmatprep.subr.bf16.mxu0 0
        %6410 = vmatpush1.bf16.msra.mxu0 %v6344
        %6411 = vmatprep.subr.bf16.mxu0 0
        %6412 = vmatpush1.bf16.msra.mxu0 %v6343
        %6413 = vmatprep.subr.bf16.mxu0 0
        %6414 = vmatpush1.bf16.msra.mxu0 %v6342
        %6415 = vmatprep.subr.bf16.mxu0 0
        %6416 = vmatpush1.bf16.msra.mxu0 %v6341
        %6417 = vmatprep.subr.bf16.mxu0 0
        %6418 = vmatpush1.bf16.msra.mxu0 %v6340
        %6419 = vmatprep.subr.bf16.mxu0 0
        %6420 = vmatpush1.bf16.msra.mxu0 %v6339
        %6421 = vmatprep.subr.bf16.mxu0 0
        %6422 = vmatpush2.bf16.msra.mxu0 0
        %6423 = vmatprep.subr.bf16.mxu0 0
        %6424 = vmatpush2.bf16.msra.mxu0 0
        %6425 = vmatprep.subr.bf16.mxu0 0
        %6426 = vmatpush2.bf16.msra.mxu0 0
        %6427 = vmatprep.subr.bf16.mxu0 0
        %6428 = vmatpush2.bf16.msra.mxu0 0
        %6429 = vmatprep.subr.bf16.mxu0 0
        %6430 = vmatpush2.bf16.msra.mxu0 0
        %6431 = vmatprep.subr.bf16.mxu0 0
        %6432 = vmatpush2.bf16.msra.mxu0 0
        %6433 = vmatprep.subr.bf16.mxu0 0
        %6434 = vmatpush2.bf16.msra.mxu0 0
        %6435 = vmatprep.subr.bf16.mxu0 0
        %6436 = vmatpush2.bf16.msra.mxu0 %v6347
        %6437 = vmatprep.mubr.bf16.mxu0 %v6358
        %6438 = vmatmul.mubr.bf16.gmra.mxu0 %v6246
        %v6439 = vpop.f32.mrf.mxu0
        %v6440 = vadd.f32 %v6301, %v6439
        %v6441 = vpop.f32.mrf.mxu0
        %v6442 = vpop.f32.mrf.mxu0
        %v6443 = vadd.f32 %v6301, %v6442
        %v6444 = vpop.f32.mrf.mxu0
        %6445 = vmatprep.mubr.bf16.mxu0 %v6361
        %6446 = vmatmul.mubr.bf16.gmra.mxu0 %v6248
        %v6447 = vpop.f32.mrf.mxu0
        %v6448 = vadd.f32 %v6301, %v6447
        %v6449 = vpop.f32.mrf.mxu0
        %v6450 = vpop.f32.mrf.mxu0
        %v6451 = vadd.f32 %v6301, %v6450
        %v6452 = vpop.f32.mrf.mxu0
        %6453 = vmatprep.mubr.bf16.mxu0 %v6364
        %6454 = vmatmul.mubr.bf16.gmra.mxu0 %v6250
        %v6455 = vpop.f32.mrf.mxu0
        %v6456 = vadd.f32 %v6301, %v6455
        %v6457 = vpop.f32.mrf.mxu0
        %v6458 = vpop.f32.mrf.mxu0
        %v6459 = vadd.f32 %v6301, %v6458
        %v6460 = vpop.f32.mrf.mxu0
        %6461 = vmatprep.mubr.bf16.mxu0 %v6367
        %6462 = vmatmul.mubr.bf16.gmra.mxu0 %v6252
        %v6463 = vpop.f32.mrf.mxu0
        %v6464 = vadd.f32 %v6301, %v6463
        %v6465 = vpop.f32.mrf.mxu0
        %v6466 = vpop.f32.mrf.mxu0
        %v6467 = vadd.f32 %v6301, %v6466
        %v6468 = vpop.f32.mrf.mxu0
        %6469 = vmatprep.mubr.bf16.mxu0 %v6370
        %6470 = vmatmul.mubr.bf16.gmra.mxu0 %v6254
        %v6471 = vpop.f32.mrf.mxu0
        %v6472 = vadd.f32 %v6301, %v6471
        %v6473 = vpop.f32.mrf.mxu0
        %v6474 = vpop.f32.mrf.mxu0
        %v6475 = vadd.f32 %v6301, %v6474
        %v6476 = vpop.f32.mrf.mxu0
        %6477 = vmatprep.mubr.bf16.mxu0 %v6373
        %6478 = vmatmul.mubr.bf16.gmra.mxu0 %v6256
        %v6479 = vpop.f32.mrf.mxu0
        %v6480 = vadd.f32 %v6301, %v6479
        %v6481 = vpop.f32.mrf.mxu0
        %v6482 = vpop.f32.mrf.mxu0
        %v6483 = vadd.f32 %v6301, %v6482
        %v6484 = vpop.f32.mrf.mxu0
        %6485 = vmatprep.mubr.bf16.mxu0 %v6376
        %6486 = vmatmul.mubr.bf16.gmra.mxu0 %v6258
        %v6487 = vpop.f32.mrf.mxu0
        %v6488 = vadd.f32 %v6301, %v6487
        %v6489 = vpop.f32.mrf.mxu0
        %v6490 = vpop.f32.mrf.mxu0
        %v6491 = vadd.f32 %v6301, %v6490
        %v6492 = vpop.f32.mrf.mxu0
        %6493 = vmatprep.mubr.bf16.mxu0 %v6379
        %6494 = vmatmul.mubr.bf16.gmra.mxu0 %v6260
        %v6495 = vpop.f32.mrf.mxu0
        %v6496 = vadd.f32 %v6301, %v6495
        %v6497 = vpop.f32.mrf.mxu0
        %v6498 = vpop.f32.mrf.mxu0
        %v6499 = vadd.f32 %v6301, %v6498
        %v6500 = vpop.f32.mrf.mxu0
        %6501 = vmatprep.mubr.bf16.mxu0 %v6382
        %6502 = vmatmul.mubr.bf16.gmra.mxu0 %v6262
        %v6503 = vpop.f32.mrf.mxu0
        %v6504 = vadd.f32 %v6301, %v6503
        %v6505 = vpop.f32.mrf.mxu0
        %v6506 = vpop.f32.mrf.mxu0
        %v6507 = vadd.f32 %v6301, %v6506
        %v6508 = vpop.f32.mrf.mxu0
        %6509 = vmatprep.mubr.bf16.mxu0 %v6385
        %6510 = vmatmul.mubr.bf16.gmra.mxu0 %v6264
        %v6511 = vpop.f32.mrf.mxu0
        %v6512 = vadd.f32 %v6301, %v6511
        %v6513 = vpop.f32.mrf.mxu0
        %v6514 = vpop.f32.mrf.mxu0
        %v6515 = vadd.f32 %v6301, %v6514
        %v6516 = vpop.f32.mrf.mxu0
        %6517 = vmatprep.mubr.bf16.mxu0 %v6388
        %6518 = vmatmul.mubr.bf16.gmra.mxu0 %v6266
        %v6519 = vpop.f32.mrf.mxu0
        %v6520 = vadd.f32 %v6301, %v6519
        %v6521 = vpop.f32.mrf.mxu0
        %v6522 = vpop.f32.mrf.mxu0
        %v6523 = vadd.f32 %v6301, %v6522
        %v6524 = vpop.f32.mrf.mxu0
        %6525 = vmatprep.mubr.bf16.mxu0 %v6391
        %6526 = vmatmul.mubr.bf16.gmra.mxu0 %v6268
        %v6527 = vpop.f32.mrf.mxu0
        %v6528 = vadd.f32 %v6301, %v6527
        %v6529 = vpop.f32.mrf.mxu0
        %v6530 = vpop.f32.mrf.mxu0
        %v6531 = vadd.f32 %v6301, %v6530
        %v6532 = vpop.f32.mrf.mxu0
        %6533 = vmatprep.mubr.bf16.mxu0 %v6394
        %6534 = vmatmul.mubr.bf16.gmra.mxu0 %v6270
        %v6535 = vpop.f32.mrf.mxu0
        %v6536 = vadd.f32 %v6301, %v6535
        %v6537 = vpop.f32.mrf.mxu0
        %v6538 = vpop.f32.mrf.mxu0
        %v6539 = vadd.f32 %v6301, %v6538
        %v6540 = vpop.f32.mrf.mxu0
        %6541 = vmatprep.mubr.bf16.mxu0 %v6397
        %6542 = vmatmul.mubr.bf16.gmra.mxu0 %v6272
        %v6543 = vpop.f32.mrf.mxu0
        %v6544 = vadd.f32 %v6301, %v6543
        %v6545 = vpop.f32.mrf.mxu0
        %v6546 = vpop.f32.mrf.mxu0
        %v6547 = vadd.f32 %v6301, %v6546
        %v6548 = vpop.f32.mrf.mxu0
        %6549 = vmatprep.mubr.bf16.mxu0 %v6400
        %6550 = vmatmul.mubr.bf16.gmra.mxu0 %v6274
        %v6551 = vpop.f32.mrf.mxu0
        %v6552 = vadd.f32 %v6301, %v6551
        %v6553 = vpop.f32.mrf.mxu0
        %v6554 = vpop.f32.mrf.mxu0
        %v6555 = vadd.f32 %v6301, %v6554
        %v6556 = vpop.f32.mrf.mxu0
        %6557 = vmatprep.mubr.bf16.mxu0 %v6403
        %6558 = vmatmul.mubr.bf16.gmra.mxu0 %v6276
        %v6559 = vpop.f32.mrf.mxu0
        %v6560 = vadd.f32 %v6301, %v6559
        %v6561 = vpop.f32.mrf.mxu0
        %v6562 = vpop.f32.mrf.mxu0
        %v6563 = vadd.f32 %v6301, %v6562
        %v6564 = vpop.f32.mrf.mxu0
        %6565 = vdwg.mxu0
        %v6566 = vld [vmem:[#allocation13] sm:$0x1]
        %vm6567 = vcmp.ge.f32.partialorder %v6440, 0.0
        %vm6568 = vcmp.ge.f32.partialorder %v6443, 0.0
        %vm6569 = vcmp.ge.f32.partialorder %v6448, 0.0
        %vm6570 = vcmp.ge.f32.partialorder %v6451, 0.0
        %vm6571 = vcmp.ge.f32.partialorder %v6456, 0.0
        %vm6572 = vcmp.ge.f32.partialorder %v6459, 0.0
        %vm6573 = vcmp.ge.f32.partialorder %v6464, 0.0
        %vm6574 = vcmp.ge.f32.partialorder %v6467, 0.0
        %vm6575 = vcmp.ge.f32.partialorder %v6472, 0.0
        %vm6576 = vcmp.ge.f32.partialorder %v6475, 0.0
        %vm6577 = vcmp.ge.f32.partialorder %v6480, 0.0
        %vm6578 = vcmp.ge.f32.partialorder %v6483, 0.0
        %vm6579 = vcmp.ge.f32.partialorder %v6488, 0.0
        %vm6580 = vcmp.ge.f32.partialorder %v6491, 0.0
        %vm6581 = vcmp.ge.f32.partialorder %v6496, 0.0
        %vm6582 = vcmp.ge.f32.partialorder %v6499, 0.0
        %vm6583 = vcmp.ge.f32.partialorder %v6504, 0.0
        %vm6584 = vcmp.ge.f32.partialorder %v6507, 0.0
        %vm6585 = vcmp.ge.f32.partialorder %v6512, 0.0
        %vm6586 = vcmp.ge.f32.partialorder %v6515, 0.0
        %vm6587 = vcmp.ge.f32.partialorder %v6520, 0.0
        %vm6588 = vcmp.ge.f32.partialorder %v6523, 0.0
        %vm6589 = vcmp.ge.f32.partialorder %v6528, 0.0
        %vm6590 = vcmp.ge.f32.partialorder %v6531, 0.0
        %vm6591 = vcmp.ge.f32.partialorder %v6536, 0.0
        %vm6592 = vcmp.ge.f32.partialorder %v6539, 0.0
        %vm6593 = vcmp.ge.f32.partialorder %v6544, 0.0
        %vm6594 = vcmp.ge.f32.partialorder %v6547, 0.0
        %vm6595 = vcmp.ge.f32.partialorder %v6552, 0.0
        %vm6596 = vcmp.ge.f32.partialorder %v6555, 0.0
        %vm6597 = vcmp.ge.f32.partialorder %v6560, 0.0
        %vm6598 = vcmp.ge.f32.partialorder %v6563, 0.0
        %v6600 = vlaneseq
        %v6601 = vshrl.u32 %v6600, 7
        %v6602 = vsub.s32 0, %v6601
        %v6603 = vrot.slane %v6566, %v6602
        %v6605 = vmul.f32 %v6603, %v6440
        %v6606 = vmul.f32 %v6603, %v6443
        %v6607 = vmul.f32 %v6603, %v6448
        %v6608 = vmul.f32 %v6603, %v6451
        %v6609 = vmul.f32 %v6603, %v6456
        %v6610 = vmul.f32 %v6603, %v6459
        %v6611 = vmul.f32 %v6603, %v6464
        %v6612 = vmul.f32 %v6603, %v6467
        %v6613 = vmul.f32 %v6603, %v6472
        %v6614 = vmul.f32 %v6603, %v6475
        %v6615 = vmul.f32 %v6603, %v6480
        %v6616 = vmul.f32 %v6603, %v6483
        %v6617 = vmul.f32 %v6603, %v6488
        %v6618 = vmul.f32 %v6603, %v6491
        %v6619 = vmul.f32 %v6603, %v6496
        %v6620 = vmul.f32 %v6603, %v6499
        %v6621 = vmul.f32 %v6603, %v6504
        %v6622 = vmul.f32 %v6603, %v6507
        %v6623 = vmul.f32 %v6603, %v6512
        %v6624 = vmul.f32 %v6603, %v6515
        %v6625 = vmul.f32 %v6603, %v6520
        %v6626 = vmul.f32 %v6603, %v6523
        %v6627 = vmul.f32 %v6603, %v6528
        %v6628 = vmul.f32 %v6603, %v6531
        %v6629 = vmul.f32 %v6603, %v6536
        %v6630 = vmul.f32 %v6603, %v6539
        %v6631 = vmul.f32 %v6603, %v6544
        %v6632 = vmul.f32 %v6603, %v6547
        %v6633 = vmul.f32 %v6603, %v6552
        %v6634 = vmul.f32 %v6603, %v6555
        %v6635 = vmul.f32 %v6603, %v6560
        %v6636 = vmul.f32 %v6603, %v6563
        %v6637 = vsel %vm6567, %v6440, %v6605
        %v6638 = vsel %vm6568, %v6443, %v6606
        %v6639 = vsel %vm6569, %v6448, %v6607
        %v6640 = vsel %vm6570, %v6451, %v6608
        %v6641 = vsel %vm6571, %v6456, %v6609
        %v6642 = vsel %vm6572, %v6459, %v6610
        %v6643 = vsel %vm6573, %v6464, %v6611
        %v6644 = vsel %vm6574, %v6467, %v6612
        %v6645 = vsel %vm6575, %v6472, %v6613
        %v6646 = vsel %vm6576, %v6475, %v6614
        %v6647 = vsel %vm6577, %v6480, %v6615
        %v6648 = vsel %vm6578, %v6483, %v6616
        %v6649 = vsel %vm6579, %v6488, %v6617
        %v6650 = vsel %vm6580, %v6491, %v6618
        %v6651 = vsel %vm6581, %v6496, %v6619
        %v6652 = vsel %vm6582, %v6499, %v6620
        %v6653 = vsel %vm6583, %v6504, %v6621
        %v6654 = vsel %vm6584, %v6507, %v6622
        %v6655 = vsel %vm6585, %v6512, %v6623
        %v6656 = vsel %vm6586, %v6515, %v6624
        %v6657 = vsel %vm6587, %v6520, %v6625
        %v6658 = vsel %vm6588, %v6523, %v6626
        %v6659 = vsel %vm6589, %v6528, %v6627
        %v6660 = vsel %vm6590, %v6531, %v6628
        %v6661 = vsel %vm6591, %v6536, %v6629
        %v6662 = vsel %vm6592, %v6539, %v6630
        %v6663 = vsel %vm6593, %v6544, %v6631
        %v6664 = vsel %vm6594, %v6547, %v6632
        %v6665 = vsel %vm6595, %v6552, %v6633
        %v6666 = vsel %vm6596, %v6555, %v6634
        %v6667 = vsel %vm6597, %v6560, %v6635
        %v6668 = vsel %vm6598, %v6563, %v6636
        %6669 = vst.msk [vmem:[%s2678 + $0x1] sm:$0xff] %vm503, %v6637
        %6670 = vst.msk [vmem:[%s2678 + $0x9] sm:$0xff] %vm503, %v6638
        %6671 = vst.msk [vmem:[%s2678 + $0x19] sm:$0xff] %vm503, %v6639
        %6672 = vst.msk [vmem:[%s2678 + $0x21] sm:$0xff] %vm503, %v6640
        %6673 = vst.msk [vmem:[%s2678 + $0x31] sm:$0xff] %vm503, %v6641
        %6674 = vst.msk [vmem:[%s2678 + $0x39] sm:$0xff] %vm503, %v6642
        %6675 = vst.msk [vmem:[%s2678 + $0x49] sm:$0xff] %vm503, %v6643
        %6676 = vst.msk [vmem:[%s2678 + $0x51] sm:$0xff] %vm503, %v6644
        %6677 = vst.msk [vmem:[%s2678 + $0x61] sm:$0xff] %vm503, %v6645
        %6678 = vst.msk [vmem:[%s2678 + $0x69] sm:$0xff] %vm503, %v6646
        %6679 = vst.msk [vmem:[%s2678 + $0x79] sm:$0xff] %vm503, %v6647
        %6680 = vst.msk [vmem:[%s2678 + $0x81] sm:$0xff] %vm503, %v6648
        %6681 = vst.msk [vmem:[%s2678 + $0x91] sm:$0xff] %vm503, %v6649
        %6682 = vst.msk [vmem:[%s2678 + $0x99] sm:$0xff] %vm503, %v6650
        %6683 = vst.msk [vmem:[%s2678 + $0xa9] sm:$0xff] %vm503, %v6651
        %6684 = vst.msk [vmem:[%s2678 + $0xb1] sm:$0xff] %vm503, %v6652
        %6685 = vst.msk [vmem:[%s2678 + $0xc1] sm:$0xff] %vm503, %v6653
        %6686 = vst.msk [vmem:[%s2678 + $0xc9] sm:$0xff] %vm503, %v6654
        %6687 = vst.msk [vmem:[%s2678 + $0xd9] sm:$0xff] %vm503, %v6655
        %6688 = vst.msk [vmem:[%s2678 + $0xe1] sm:$0xff] %vm503, %v6656
        %6689 = vst.msk [vmem:[%s2678 + $0xf1] sm:$0xff] %vm503, %v6657
        %6690 = vst.msk [vmem:[%s2678 + $0xf9] sm:$0xff] %vm503, %v6658
        %6691 = vst.msk [vmem:[%s2678 + $0x109] sm:$0xff] %vm503, %v6659
        %6692 = vst.msk [vmem:[%s2678 + $0x111] sm:$0xff] %vm503, %v6660
        %6693 = vst.msk [vmem:[%s2678 + $0x121] sm:$0xff] %vm503, %v6661
        %6694 = vst.msk [vmem:[%s2678 + $0x129] sm:$0xff] %vm503, %v6662
        %6695 = vst.msk [vmem:[%s2678 + $0x139] sm:$0xff] %vm503, %v6663
        %6696 = vst.msk [vmem:[%s2678 + $0x141] sm:$0xff] %vm503, %v6664
        %6697 = vst.msk [vmem:[%s2678 + $0x151] sm:$0xff] %vm503, %v6665
        %6698 = vst.msk [vmem:[%s2678 + $0x159] sm:$0xff] %vm503, %v6666
        %6699 = vst.msk [vmem:[%s2678 + $0x169] sm:$0xff] %vm503, %v6667
        %6700 = vst.msk [vmem:[%s2678 + $0x171] sm:$0xff] %vm503, %v6668
        %v6701 = vld [vmem:[#allocation3] sm:$0xff]
        %v6702 = vld [vmem:[#allocation3 + $0x8] sm:$0xff]
        %v6703 = vld [vmem:[#allocation3 + $0x18] sm:$0xff]
        %v6704 = vld [vmem:[#allocation3 + $0x20] sm:$0xff]
        %v6705 = vld [vmem:[#allocation3 + $0x30] sm:$0xff]
        %v6706 = vld [vmem:[#allocation3 + $0x38] sm:$0xff]
        %v6707 = vld [vmem:[#allocation3 + $0x48] sm:$0xff]
        %v6708 = vld [vmem:[#allocation3 + $0x50] sm:$0xff]
        %v6709 = vld [vmem:[#allocation3 + $0x60] sm:$0xff]
        %v6710 = vld [vmem:[#allocation3 + $0x68] sm:$0xff]
        %v6711 = vld [vmem:[#allocation3 + $0x78] sm:$0xff]
        %v6712 = vld [vmem:[#allocation3 + $0x80] sm:$0xff]
        %v6713 = vld [vmem:[#allocation3 + $0x90] sm:$0xff]
        %v6714 = vld [vmem:[#allocation3 + $0x98] sm:$0xff]
        %v6715 = vld [vmem:[#allocation3 + $0xa8] sm:$0xff]
        %v6716 = vld [vmem:[#allocation3 + $0xb0] sm:$0xff]
        %v6717 = vld [vmem:[#allocation3 + $0xc0] sm:$0xff]
        %v6718 = vld [vmem:[#allocation3 + $0xc8] sm:$0xff]
        %v6719 = vld [vmem:[#allocation3 + $0xd8] sm:$0xff]
        %v6720 = vld [vmem:[#allocation3 + $0xe0] sm:$0xff]
        %v6721 = vld [vmem:[#allocation3 + $0xf0] sm:$0xff]
        %v6722 = vld [vmem:[#allocation3 + $0xf8] sm:$0xff]
        %v6723 = vld [vmem:[#allocation3 + $0x108] sm:$0xff]
        %v6724 = vld [vmem:[#allocation3 + $0x110] sm:$0xff]
        %v6725 = vld [vmem:[#allocation3 + $0x120] sm:$0xff]
        %v6726 = vld [vmem:[#allocation3 + $0x128] sm:$0xff]
        %v6727 = vld [vmem:[#allocation3 + $0x138] sm:$0xff]
        %v6728 = vld [vmem:[#allocation3 + $0x140] sm:$0xff]
        %v6729 = vld [vmem:[#allocation3 + $0x150] sm:$0xff]
        %v6730 = vld [vmem:[#allocation3 + $0x158] sm:$0xff]
        %v6731 = vld [vmem:[#allocation3 + $0x168] sm:$0xff]
        %v6732 = vld [vmem:[#allocation3 + $0x170] sm:$0xff]
        %6733 = vst.msk [vmem:[#allocation4] sm:$0xff] %vm503, %v6701
        %6734 = vst.msk [vmem:[#allocation4 + $0x10] sm:$0xff] %vm503, %v6702
        %6735 = vst.msk [vmem:[#allocation4 + $0x20] sm:$0xff] %vm503, %v6703
        %6736 = vst.msk [vmem:[#allocation4 + $0x30] sm:$0xff] %vm503, %v6704
        %6737 = vst.msk [vmem:[#allocation4 + $0x40] sm:$0xff] %vm503, %v6705
        %6738 = vst.msk [vmem:[#allocation4 + $0x50] sm:$0xff] %vm503, %v6706
        %6739 = vst.msk [vmem:[#allocation4 + $0x60] sm:$0xff] %vm503, %v6707
        %6740 = vst.msk [vmem:[#allocation4 + $0x70] sm:$0xff] %vm503, %v6708
        %6741 = vst.msk [vmem:[#allocation4 + $0x80] sm:$0xff] %vm503, %v6709
        %6742 = vst.msk [vmem:[#allocation4 + $0x90] sm:$0xff] %vm503, %v6710
        %6743 = vst.msk [vmem:[#allocation4 + $0xa0] sm:$0xff] %vm503, %v6711
        %6744 = vst.msk [vmem:[#allocation4 + $0xb0] sm:$0xff] %vm503, %v6712
        %6745 = vst.msk [vmem:[#allocation4 + $0xc0] sm:$0xff] %vm503, %v6713
        %6746 = vst.msk [vmem:[#allocation4 + $0xd0] sm:$0xff] %vm503, %v6714
        %6747 = vst.msk [vmem:[#allocation4 + $0xe0] sm:$0xff] %vm503, %v6715
        %6748 = vst.msk [vmem:[#allocation4 + $0xf0] sm:$0xff] %vm503, %v6716
        %6749 = vst.msk [vmem:[#allocation4 + $0x100] sm:$0xff] %vm503, %v6717
        %6750 = vst.msk [vmem:[#allocation4 + $0x110] sm:$0xff] %vm503, %v6718
        %6751 = vst.msk [vmem:[#allocation4 + $0x120] sm:$0xff] %vm503, %v6719
        %6752 = vst.msk [vmem:[#allocation4 + $0x130] sm:$0xff] %vm503, %v6720
        %6753 = vst.msk [vmem:[#allocation4 + $0x140] sm:$0xff] %vm503, %v6721
        %6754 = vst.msk [vmem:[#allocation4 + $0x150] sm:$0xff] %vm503, %v6722
        %6755 = vst.msk [vmem:[#allocation4 + $0x160] sm:$0xff] %vm503, %v6723
        %6756 = vst.msk [vmem:[#allocation4 + $0x170] sm:$0xff] %vm503, %v6724
        %6757 = vst.msk [vmem:[#allocation4 + $0x180] sm:$0xff] %vm503, %v6725
        %6758 = vst.msk [vmem:[#allocation4 + $0x190] sm:$0xff] %vm503, %v6726
        %6759 = vst.msk [vmem:[#allocation4 + $0x1a0] sm:$0xff] %vm503, %v6727
        %6760 = vst.msk [vmem:[#allocation4 + $0x1b0] sm:$0xff] %vm503, %v6728
        %6761 = vst.msk [vmem:[#allocation4 + $0x1c0] sm:$0xff] %vm503, %v6729
        %6762 = vst.msk [vmem:[#allocation4 + $0x1d0] sm:$0xff] %vm503, %v6730
        %6763 = vst.msk [vmem:[#allocation4 + $0x1e0] sm:$0xff] %vm503, %v6731
        %6764 = vst.msk [vmem:[#allocation4 + $0x1f0] sm:$0xff] %vm503, %v6732
        %v6765 = vld [vmem:[#allocation3 + $0x1] sm:$0xff]
        %v6766 = vld [vmem:[#allocation3 + $0x9] sm:$0xff]
        %v6767 = vld [vmem:[#allocation3 + $0x19] sm:$0xff]
        %v6768 = vld [vmem:[#allocation3 + $0x21] sm:$0xff]
        %v6769 = vld [vmem:[#allocation3 + $0x31] sm:$0xff]
        %v6770 = vld [vmem:[#allocation3 + $0x39] sm:$0xff]
        %v6771 = vld [vmem:[#allocation3 + $0x49] sm:$0xff]
        %v6772 = vld [vmem:[#allocation3 + $0x51] sm:$0xff]
        %v6773 = vld [vmem:[#allocation3 + $0x61] sm:$0xff]
        %v6774 = vld [vmem:[#allocation3 + $0x69] sm:$0xff]
        %v6775 = vld [vmem:[#allocation3 + $0x79] sm:$0xff]
        %v6776 = vld [vmem:[#allocation3 + $0x81] sm:$0xff]
        %v6777 = vld [vmem:[#allocation3 + $0x91] sm:$0xff]
        %v6778 = vld [vmem:[#allocation3 + $0x99] sm:$0xff]
        %v6779 = vld [vmem:[#allocation3 + $0xa9] sm:$0xff]
        %v6780 = vld [vmem:[#allocation3 + $0xb1] sm:$0xff]
        %v6781 = vld [vmem:[#allocation3 + $0xc1] sm:$0xff]
        %v6782 = vld [vmem:[#allocation3 + $0xc9] sm:$0xff]
        %v6783 = vld [vmem:[#allocation3 + $0xd9] sm:$0xff]
        %v6784 = vld [vmem:[#allocation3 + $0xe1] sm:$0xff]
        %v6785 = vld [vmem:[#allocation3 + $0xf1] sm:$0xff]
        %v6786 = vld [vmem:[#allocation3 + $0xf9] sm:$0xff]
        %v6787 = vld [vmem:[#allocation3 + $0x109] sm:$0xff]
        %v6788 = vld [vmem:[#allocation3 + $0x111] sm:$0xff]
        %v6789 = vld [vmem:[#allocation3 + $0x121] sm:$0xff]
        %v6790 = vld [vmem:[#allocation3 + $0x129] sm:$0xff]
        %v6791 = vld [vmem:[#allocation3 + $0x139] sm:$0xff]
        %v6792 = vld [vmem:[#allocation3 + $0x141] sm:$0xff]
        %v6793 = vld [vmem:[#allocation3 + $0x151] sm:$0xff]
        %v6794 = vld [vmem:[#allocation3 + $0x159] sm:$0xff]
        %v6795 = vld [vmem:[#allocation3 + $0x169] sm:$0xff]
        %v6796 = vld [vmem:[#allocation3 + $0x171] sm:$0xff]
        %6829 = vrot.lane.b32.xlu0 %v6765, 16
        %v6830 = vpop.permute.xlu0 %6829
        %6831 = vrot.lane.b32.xlu0 %v6766, 16
        %v6832 = vpop.permute.xlu0 %6831
        %6833 = vrot.lane.b32.xlu0 %v6767, 16
        %v6834 = vpop.permute.xlu0 %6833
        %6835 = vrot.lane.b32.xlu0 %v6768, 16
        %v6836 = vpop.permute.xlu0 %6835
        %6837 = vrot.lane.b32.xlu0 %v6769, 16
        %v6838 = vpop.permute.xlu0 %6837
        %6839 = vrot.lane.b32.xlu0 %v6770, 16
        %v6840 = vpop.permute.xlu0 %6839
        %6841 = vrot.lane.b32.xlu0 %v6771, 16
        %v6842 = vpop.permute.xlu0 %6841
        %6843 = vrot.lane.b32.xlu0 %v6772, 16
        %v6844 = vpop.permute.xlu0 %6843
        %6845 = vrot.lane.b32.xlu0 %v6773, 16
        %v6846 = vpop.permute.xlu0 %6845
        %6847 = vrot.lane.b32.xlu0 %v6774, 16
        %v6848 = vpop.permute.xlu0 %6847
        %6849 = vrot.lane.b32.xlu0 %v6775, 16
        %v6850 = vpop.permute.xlu0 %6849
        %6851 = vrot.lane.b32.xlu0 %v6776, 16
        %v6852 = vpop.permute.xlu0 %6851
        %6853 = vrot.lane.b32.xlu0 %v6777, 16
        %v6854 = vpop.permute.xlu0 %6853
        %6855 = vrot.lane.b32.xlu0 %v6778, 16
        %v6856 = vpop.permute.xlu0 %6855
        %6857 = vrot.lane.b32.xlu0 %v6779, 16
        %v6858 = vpop.permute.xlu0 %6857
        %6859 = vrot.lane.b32.xlu0 %v6780, 16
        %v6860 = vpop.permute.xlu0 %6859
        %6861 = vrot.lane.b32.xlu0 %v6781, 16
        %v6862 = vpop.permute.xlu0 %6861
        %6863 = vrot.lane.b32.xlu0 %v6782, 16
        %v6864 = vpop.permute.xlu0 %6863
        %6865 = vrot.lane.b32.xlu0 %v6783, 16
        %v6866 = vpop.permute.xlu0 %6865
        %6867 = vrot.lane.b32.xlu0 %v6784, 16
        %v6868 = vpop.permute.xlu0 %6867
        %6869 = vrot.lane.b32.xlu0 %v6785, 16
        %v6870 = vpop.permute.xlu0 %6869
        %6871 = vrot.lane.b32.xlu0 %v6786, 16
        %v6872 = vpop.permute.xlu0 %6871
        %6873 = vrot.lane.b32.xlu0 %v6787, 16
        %v6874 = vpop.permute.xlu0 %6873
        %6875 = vrot.lane.b32.xlu0 %v6788, 16
        %v6876 = vpop.permute.xlu0 %6875
        %6877 = vrot.lane.b32.xlu0 %v6789, 16
        %v6878 = vpop.permute.xlu0 %6877
        %6879 = vrot.lane.b32.xlu0 %v6790, 16
        %v6880 = vpop.permute.xlu0 %6879
        %6881 = vrot.lane.b32.xlu0 %v6791, 16
        %v6882 = vpop.permute.xlu0 %6881
        %6883 = vrot.lane.b32.xlu0 %v6792, 16
        %v6884 = vpop.permute.xlu0 %6883
        %6885 = vrot.lane.b32.xlu0 %v6793, 16
        %v6886 = vpop.permute.xlu0 %6885
        %6887 = vrot.lane.b32.xlu0 %v6794, 16
        %v6888 = vpop.permute.xlu0 %6887
        %6889 = vrot.lane.b32.xlu0 %v6795, 16
        %v6890 = vpop.permute.xlu0 %6889
        %6891 = vrot.lane.b32.xlu0 %v6796, 16
        %v6892 = vpop.permute.xlu0 %6891
        %6925 = vst.msk [vmem:[#allocation4] sm:$0xff] %vm2935, %v6830
        %6926 = vst.msk [vmem:[#allocation4 + $0x10] sm:$0xff] %vm2935, %v6832
        %6927 = vst.msk [vmem:[#allocation4 + $0x20] sm:$0xff] %vm2935, %v6834
        %6928 = vst.msk [vmem:[#allocation4 + $0x30] sm:$0xff] %vm2935, %v6836
        %6929 = vst.msk [vmem:[#allocation4 + $0x40] sm:$0xff] %vm2935, %v6838
        %6930 = vst.msk [vmem:[#allocation4 + $0x50] sm:$0xff] %vm2935, %v6840
        %6931 = vst.msk [vmem:[#allocation4 + $0x60] sm:$0xff] %vm2935, %v6842
        %6932 = vst.msk [vmem:[#allocation4 + $0x70] sm:$0xff] %vm2935, %v6844
        %6933 = vst.msk [vmem:[#allocation4 + $0x80] sm:$0xff] %vm2935, %v6846
        %6934 = vst.msk [vmem:[#allocation4 + $0x90] sm:$0xff] %vm2935, %v6848
        %6935 = vst.msk [vmem:[#allocation4 + $0xa0] sm:$0xff] %vm2935, %v6850
        %6936 = vst.msk [vmem:[#allocation4 + $0xb0] sm:$0xff] %vm2935, %v6852
        %6937 = vst.msk [vmem:[#allocation4 + $0xc0] sm:$0xff] %vm2935, %v6854
        %6938 = vst.msk [vmem:[#allocation4 + $0xd0] sm:$0xff] %vm2935, %v6856
        %6939 = vst.msk [vmem:[#allocation4 + $0xe0] sm:$0xff] %vm2935, %v6858
        %6940 = vst.msk [vmem:[#allocation4 + $0xf0] sm:$0xff] %vm2935, %v6860
        %6941 = vst.msk [vmem:[#allocation4 + $0x100] sm:$0xff] %vm2935, %v6862
        %6942 = vst.msk [vmem:[#allocation4 + $0x110] sm:$0xff] %vm2935, %v6864
        %6943 = vst.msk [vmem:[#allocation4 + $0x120] sm:$0xff] %vm2935, %v6866
        %6944 = vst.msk [vmem:[#allocation4 + $0x130] sm:$0xff] %vm2935, %v6868
        %6945 = vst.msk [vmem:[#allocation4 + $0x140] sm:$0xff] %vm2935, %v6870
        %6946 = vst.msk [vmem:[#allocation4 + $0x150] sm:$0xff] %vm2935, %v6872
        %6947 = vst.msk [vmem:[#allocation4 + $0x160] sm:$0xff] %vm2935, %v6874
        %6948 = vst.msk [vmem:[#allocation4 + $0x170] sm:$0xff] %vm2935, %v6876
        %6949 = vst.msk [vmem:[#allocation4 + $0x180] sm:$0xff] %vm2935, %v6878
        %6950 = vst.msk [vmem:[#allocation4 + $0x190] sm:$0xff] %vm2935, %v6880
        %6951 = vst.msk [vmem:[#allocation4 + $0x1a0] sm:$0xff] %vm2935, %v6882
        %6952 = vst.msk [vmem:[#allocation4 + $0x1b0] sm:$0xff] %vm2935, %v6884
        %6953 = vst.msk [vmem:[#allocation4 + $0x1c0] sm:$0xff] %vm2935, %v6886
        %6954 = vst.msk [vmem:[#allocation4 + $0x1d0] sm:$0xff] %vm2935, %v6888
        %6955 = vst.msk [vmem:[#allocation4 + $0x1e0] sm:$0xff] %vm2935, %v6890
        %6956 = vst.msk [vmem:[#allocation4 + $0x1f0] sm:$0xff] %vm2935, %v6892
        %v6957 = vld [vmem:[#allocation3 + $0x2] sm:$0xff]
        %v6958 = vld [vmem:[#allocation3 + $0xa] sm:$0xff]
        %v6959 = vld [vmem:[#allocation3 + $0x1a] sm:$0xff]
        %v6960 = vld [vmem:[#allocation3 + $0x22] sm:$0xff]
        %v6961 = vld [vmem:[#allocation3 + $0x32] sm:$0xff]
        %v6962 = vld [vmem:[#allocation3 + $0x3a] sm:$0xff]
        %v6963 = vld [vmem:[#allocation3 + $0x4a] sm:$0xff]
        %v6964 = vld [vmem:[#allocation3 + $0x52] sm:$0xff]
        %v6965 = vld [vmem:[#allocation3 + $0x62] sm:$0xff]
        %v6966 = vld [vmem:[#allocation3 + $0x6a] sm:$0xff]
        %v6967 = vld [vmem:[#allocation3 + $0x7a] sm:$0xff]
        %v6968 = vld [vmem:[#allocation3 + $0x82] sm:$0xff]
        %v6969 = vld [vmem:[#allocation3 + $0x92] sm:$0xff]
        %v6970 = vld [vmem:[#allocation3 + $0x9a] sm:$0xff]
        %v6971 = vld [vmem:[#allocation3 + $0xaa] sm:$0xff]
        %v6972 = vld [vmem:[#allocation3 + $0xb2] sm:$0xff]
        %v6973 = vld [vmem:[#allocation3 + $0xc2] sm:$0xff]
        %v6974 = vld [vmem:[#allocation3 + $0xca] sm:$0xff]
        %v6975 = vld [vmem:[#allocation3 + $0xda] sm:$0xff]
        %v6976 = vld [vmem:[#allocation3 + $0xe2] sm:$0xff]
        %v6977 = vld [vmem:[#allocation3 + $0xf2] sm:$0xff]
        %v6978 = vld [vmem:[#allocation3 + $0xfa] sm:$0xff]
        %v6979 = vld [vmem:[#allocation3 + $0x10a] sm:$0xff]
        %v6980 = vld [vmem:[#allocation3 + $0x112] sm:$0xff]
        %v6981 = vld [vmem:[#allocation3 + $0x122] sm:$0xff]
        %v6982 = vld [vmem:[#allocation3 + $0x12a] sm:$0xff]
        %v6983 = vld [vmem:[#allocation3 + $0x13a] sm:$0xff]
        %v6984 = vld [vmem:[#allocation3 + $0x142] sm:$0xff]
        %v6985 = vld [vmem:[#allocation3 + $0x152] sm:$0xff]
        %v6986 = vld [vmem:[#allocation3 + $0x15a] sm:$0xff]
        %v6987 = vld [vmem:[#allocation3 + $0x16a] sm:$0xff]
        %v6988 = vld [vmem:[#allocation3 + $0x172] sm:$0xff]
        %7021 = vrot.lane.b32.xlu0 %v6957, 32
        %v7022 = vpop.permute.xlu0 %7021
        %7023 = vrot.lane.b32.xlu0 %v6958, 32
        %v7024 = vpop.permute.xlu0 %7023
        %7025 = vrot.lane.b32.xlu0 %v6959, 32
        %v7026 = vpop.permute.xlu0 %7025
        %7027 = vrot.lane.b32.xlu0 %v6960, 32
        %v7028 = vpop.permute.xlu0 %7027
        %7029 = vrot.lane.b32.xlu0 %v6961, 32
        %v7030 = vpop.permute.xlu0 %7029
        %7031 = vrot.lane.b32.xlu0 %v6962, 32
        %v7032 = vpop.permute.xlu0 %7031
        %7033 = vrot.lane.b32.xlu0 %v6963, 32
        %v7034 = vpop.permute.xlu0 %7033
        %7035 = vrot.lane.b32.xlu0 %v6964, 32
        %v7036 = vpop.permute.xlu0 %7035
        %7037 = vrot.lane.b32.xlu0 %v6965, 32
        %v7038 = vpop.permute.xlu0 %7037
        %7039 = vrot.lane.b32.xlu0 %v6966, 32
        %v7040 = vpop.permute.xlu0 %7039
        %7041 = vrot.lane.b32.xlu0 %v6967, 32
        %v7042 = vpop.permute.xlu0 %7041
        %7043 = vrot.lane.b32.xlu0 %v6968, 32
        %v7044 = vpop.permute.xlu0 %7043
        %7045 = vrot.lane.b32.xlu0 %v6969, 32
        %v7046 = vpop.permute.xlu0 %7045
        %7047 = vrot.lane.b32.xlu0 %v6970, 32
        %v7048 = vpop.permute.xlu0 %7047
        %7049 = vrot.lane.b32.xlu0 %v6971, 32
        %v7050 = vpop.permute.xlu0 %7049
        %7051 = vrot.lane.b32.xlu0 %v6972, 32
        %v7052 = vpop.permute.xlu0 %7051
        %7053 = vrot.lane.b32.xlu0 %v6973, 32
        %v7054 = vpop.permute.xlu0 %7053
        %7055 = vrot.lane.b32.xlu0 %v6974, 32
        %v7056 = vpop.permute.xlu0 %7055
        %7057 = vrot.lane.b32.xlu0 %v6975, 32
        %v7058 = vpop.permute.xlu0 %7057
        %7059 = vrot.lane.b32.xlu0 %v6976, 32
        %v7060 = vpop.permute.xlu0 %7059
        %7061 = vrot.lane.b32.xlu0 %v6977, 32
        %v7062 = vpop.permute.xlu0 %7061
        %7063 = vrot.lane.b32.xlu0 %v6978, 32
        %v7064 = vpop.permute.xlu0 %7063
        %7065 = vrot.lane.b32.xlu0 %v6979, 32
        %v7066 = vpop.permute.xlu0 %7065
        %7067 = vrot.lane.b32.xlu0 %v6980, 32
        %v7068 = vpop.permute.xlu0 %7067
        %7069 = vrot.lane.b32.xlu0 %v6981, 32
        %v7070 = vpop.permute.xlu0 %7069
        %7071 = vrot.lane.b32.xlu0 %v6982, 32
        %v7072 = vpop.permute.xlu0 %7071
        %7073 = vrot.lane.b32.xlu0 %v6983, 32
        %v7074 = vpop.permute.xlu0 %7073
        %7075 = vrot.lane.b32.xlu0 %v6984, 32
        %v7076 = vpop.permute.xlu0 %7075
        %7077 = vrot.lane.b32.xlu0 %v6985, 32
        %v7078 = vpop.permute.xlu0 %7077
        %7079 = vrot.lane.b32.xlu0 %v6986, 32
        %v7080 = vpop.permute.xlu0 %7079
        %7081 = vrot.lane.b32.xlu0 %v6987, 32
        %v7082 = vpop.permute.xlu0 %7081
        %7083 = vrot.lane.b32.xlu0 %v6988, 32
        %v7084 = vpop.permute.xlu0 %7083
        %7117 = vst.msk [vmem:[#allocation4] sm:$0xff] %vm3128, %v7022
        %7118 = vst.msk [vmem:[#allocation4 + $0x10] sm:$0xff] %vm3128, %v7024
        %7119 = vst.msk [vmem:[#allocation4 + $0x20] sm:$0xff] %vm3128, %v7026
        %7120 = vst.msk [vmem:[#allocation4 + $0x30] sm:$0xff] %vm3128, %v7028
        %7121 = vst.msk [vmem:[#allocation4 + $0x40] sm:$0xff] %vm3128, %v7030
        %7122 = vst.msk [vmem:[#allocation4 + $0x50] sm:$0xff] %vm3128, %v7032
        %7123 = vst.msk [vmem:[#allocation4 + $0x60] sm:$0xff] %vm3128, %v7034
        %7124 = vst.msk [vmem:[#allocation4 + $0x70] sm:$0xff] %vm3128, %v7036
        %7125 = vst.msk [vmem:[#allocation4 + $0x80] sm:$0xff] %vm3128, %v7038
        %7126 = vst.msk [vmem:[#allocation4 + $0x90] sm:$0xff] %vm3128, %v7040
        %7127 = vst.msk [vmem:[#allocation4 + $0xa0] sm:$0xff] %vm3128, %v7042
        %7128 = vst.msk [vmem:[#allocation4 + $0xb0] sm:$0xff] %vm3128, %v7044
        %7129 = vst.msk [vmem:[#allocation4 + $0xc0] sm:$0xff] %vm3128, %v7046
        %7130 = vst.msk [vmem:[#allocation4 + $0xd0] sm:$0xff] %vm3128, %v7048
        %7131 = vst.msk [vmem:[#allocation4 + $0xe0] sm:$0xff] %vm3128, %v7050
        %7132 = vst.msk [vmem:[#allocation4 + $0xf0] sm:$0xff] %vm3128, %v7052
        %7133 = vst.msk [vmem:[#allocation4 + $0x100] sm:$0xff] %vm3128, %v7054
        %7134 = vst.msk [vmem:[#allocation4 + $0x110] sm:$0xff] %vm3128, %v7056
        %7135 = vst.msk [vmem:[#allocation4 + $0x120] sm:$0xff] %vm3128, %v7058
        %7136 = vst.msk [vmem:[#allocation4 + $0x130] sm:$0xff] %vm3128, %v7060
        %7137 = vst.msk [vmem:[#allocation4 + $0x140] sm:$0xff] %vm3128, %v7062
        %7138 = vst.msk [vmem:[#allocation4 + $0x150] sm:$0xff] %vm3128, %v7064
        %7139 = vst.msk [vmem:[#allocation4 + $0x160] sm:$0xff] %vm3128, %v7066
        %7140 = vst.msk [vmem:[#allocation4 + $0x170] sm:$0xff] %vm3128, %v7068
        %7141 = vst.msk [vmem:[#allocation4 + $0x180] sm:$0xff] %vm3128, %v7070
        %7142 = vst.msk [vmem:[#allocation4 + $0x190] sm:$0xff] %vm3128, %v7072
        %7143 = vst.msk [vmem:[#allocation4 + $0x1a0] sm:$0xff] %vm3128, %v7074
        %7144 = vst.msk [vmem:[#allocation4 + $0x1b0] sm:$0xff] %vm3128, %v7076
        %7145 = vst.msk [vmem:[#allocation4 + $0x1c0] sm:$0xff] %vm3128, %v7078
        %7146 = vst.msk [vmem:[#allocation4 + $0x1d0] sm:$0xff] %vm3128, %v7080
        %7147 = vst.msk [vmem:[#allocation4 + $0x1e0] sm:$0xff] %vm3128, %v7082
        %7148 = vst.msk [vmem:[#allocation4 + $0x1f0] sm:$0xff] %vm3128, %v7084
        %v7149 = vld [vmem:[%s2678] sm:$0xff]
        %v7150 = vld [vmem:[%s2678 + $0x8] sm:$0xff]
        %v7151 = vld [vmem:[%s2678 + $0x18] sm:$0xff]
        %v7152 = vld [vmem:[%s2678 + $0x20] sm:$0xff]
        %v7153 = vld [vmem:[%s2678 + $0x30] sm:$0xff]
        %v7154 = vld [vmem:[%s2678 + $0x38] sm:$0xff]
        %v7155 = vld [vmem:[%s2678 + $0x48] sm:$0xff]
        %v7156 = vld [vmem:[%s2678 + $0x50] sm:$0xff]
        %v7157 = vld [vmem:[%s2678 + $0x60] sm:$0xff]
        %v7158 = vld [vmem:[%s2678 + $0x68] sm:$0xff]
        %v7159 = vld [vmem:[%s2678 + $0x78] sm:$0xff]
        %v7160 = vld [vmem:[%s2678 + $0x80] sm:$0xff]
        %v7161 = vld [vmem:[%s2678 + $0x90] sm:$0xff]
        %v7162 = vld [vmem:[%s2678 + $0x98] sm:$0xff]
        %v7163 = vld [vmem:[%s2678 + $0xa8] sm:$0xff]
        %v7164 = vld [vmem:[%s2678 + $0xb0] sm:$0xff]
        %v7165 = vld [vmem:[%s2678 + $0xc0] sm:$0xff]
        %v7166 = vld [vmem:[%s2678 + $0xc8] sm:$0xff]
        %v7167 = vld [vmem:[%s2678 + $0xd8] sm:$0xff]
        %v7168 = vld [vmem:[%s2678 + $0xe0] sm:$0xff]
        %v7169 = vld [vmem:[%s2678 + $0xf0] sm:$0xff]
        %v7170 = vld [vmem:[%s2678 + $0xf8] sm:$0xff]
        %v7171 = vld [vmem:[%s2678 + $0x108] sm:$0xff]
        %v7172 = vld [vmem:[%s2678 + $0x110] sm:$0xff]
        %v7173 = vld [vmem:[%s2678 + $0x120] sm:$0xff]
        %v7174 = vld [vmem:[%s2678 + $0x128] sm:$0xff]
        %v7175 = vld [vmem:[%s2678 + $0x138] sm:$0xff]
        %v7176 = vld [vmem:[%s2678 + $0x140] sm:$0xff]
        %v7177 = vld [vmem:[%s2678 + $0x150] sm:$0xff]
        %v7178 = vld [vmem:[%s2678 + $0x158] sm:$0xff]
        %v7179 = vld [vmem:[%s2678 + $0x168] sm:$0xff]
        %v7180 = vld [vmem:[%s2678 + $0x170] sm:$0xff]
        %7213 = vrot.lane.b32.xlu0 %v7149, 48
        %v7214 = vpop.permute.xlu0 %7213
        %7215 = vrot.lane.b32.xlu0 %v7150, 48
        %v7216 = vpop.permute.xlu0 %7215
        %7217 = vrot.lane.b32.xlu0 %v7151, 48
        %v7218 = vpop.permute.xlu0 %7217
        %7219 = vrot.lane.b32.xlu0 %v7152, 48
        %v7220 = vpop.permute.xlu0 %7219
        %7221 = vrot.lane.b32.xlu0 %v7153, 48
        %v7222 = vpop.permute.xlu0 %7221
        %7223 = vrot.lane.b32.xlu0 %v7154, 48
        %v7224 = vpop.permute.xlu0 %7223
        %7225 = vrot.lane.b32.xlu0 %v7155, 48
        %v7226 = vpop.permute.xlu0 %7225
        %7227 = vrot.lane.b32.xlu0 %v7156, 48
        %v7228 = vpop.permute.xlu0 %7227
        %7229 = vrot.lane.b32.xlu0 %v7157, 48
        %v7230 = vpop.permute.xlu0 %7229
        %7231 = vrot.lane.b32.xlu0 %v7158, 48
        %v7232 = vpop.permute.xlu0 %7231
        %7233 = vrot.lane.b32.xlu0 %v7159, 48
        %v7234 = vpop.permute.xlu0 %7233
        %7235 = vrot.lane.b32.xlu0 %v7160, 48
        %v7236 = vpop.permute.xlu0 %7235
        %7237 = vrot.lane.b32.xlu0 %v7161, 48
        %v7238 = vpop.permute.xlu0 %7237
        %7239 = vrot.lane.b32.xlu0 %v7162, 48
        %v7240 = vpop.permute.xlu0 %7239
        %7241 = vrot.lane.b32.xlu0 %v7163, 48
        %v7242 = vpop.permute.xlu0 %7241
        %7243 = vrot.lane.b32.xlu0 %v7164, 48
        %v7244 = vpop.permute.xlu0 %7243
        %7245 = vrot.lane.b32.xlu0 %v7165, 48
        %v7246 = vpop.permute.xlu0 %7245
        %7247 = vrot.lane.b32.xlu0 %v7166, 48
        %v7248 = vpop.permute.xlu0 %7247
        %7249 = vrot.lane.b32.xlu0 %v7167, 48
        %v7250 = vpop.permute.xlu0 %7249
        %7251 = vrot.lane.b32.xlu0 %v7168, 48
        %v7252 = vpop.permute.xlu0 %7251
        %7253 = vrot.lane.b32.xlu0 %v7169, 48
        %v7254 = vpop.permute.xlu0 %7253
        %7255 = vrot.lane.b32.xlu0 %v7170, 48
        %v7256 = vpop.permute.xlu0 %7255
        %7257 = vrot.lane.b32.xlu0 %v7171, 48
        %v7258 = vpop.permute.xlu0 %7257
        %7259 = vrot.lane.b32.xlu0 %v7172, 48
        %v7260 = vpop.permute.xlu0 %7259
        %7261 = vrot.lane.b32.xlu0 %v7173, 48
        %v7262 = vpop.permute.xlu0 %7261
        %7263 = vrot.lane.b32.xlu0 %v7174, 48
        %v7264 = vpop.permute.xlu0 %7263
        %7265 = vrot.lane.b32.xlu0 %v7175, 48
        %v7266 = vpop.permute.xlu0 %7265
        %7267 = vrot.lane.b32.xlu0 %v7176, 48
        %v7268 = vpop.permute.xlu0 %7267
        %7269 = vrot.lane.b32.xlu0 %v7177, 48
        %v7270 = vpop.permute.xlu0 %7269
        %7271 = vrot.lane.b32.xlu0 %v7178, 48
        %v7272 = vpop.permute.xlu0 %7271
        %7273 = vrot.lane.b32.xlu0 %v7179, 48
        %v7274 = vpop.permute.xlu0 %7273
        %7275 = vrot.lane.b32.xlu0 %v7180, 48
        %v7276 = vpop.permute.xlu0 %7275
        %7309 = vst.msk [vmem:[#allocation4] sm:$0xff] %vm3321, %v7214
        %7310 = vst.msk [vmem:[#allocation4 + $0x10] sm:$0xff] %vm3321, %v7216
        %7311 = vst.msk [vmem:[#allocation4 + $0x20] sm:$0xff] %vm3321, %v7218
        %7312 = vst.msk [vmem:[#allocation4 + $0x30] sm:$0xff] %vm3321, %v7220
        %7313 = vst.msk [vmem:[#allocation4 + $0x40] sm:$0xff] %vm3321, %v7222
        %7314 = vst.msk [vmem:[#allocation4 + $0x50] sm:$0xff] %vm3321, %v7224
        %7315 = vst.msk [vmem:[#allocation4 + $0x60] sm:$0xff] %vm3321, %v7226
        %7316 = vst.msk [vmem:[#allocation4 + $0x70] sm:$0xff] %vm3321, %v7228
        %7317 = vst.msk [vmem:[#allocation4 + $0x80] sm:$0xff] %vm3321, %v7230
        %7318 = vst.msk [vmem:[#allocation4 + $0x90] sm:$0xff] %vm3321, %v7232
        %7319 = vst.msk [vmem:[#allocation4 + $0xa0] sm:$0xff] %vm3321, %v7234
        %7320 = vst.msk [vmem:[#allocation4 + $0xb0] sm:$0xff] %vm3321, %v7236
        %7321 = vst.msk [vmem:[#allocation4 + $0xc0] sm:$0xff] %vm3321, %v7238
        %7322 = vst.msk [vmem:[#allocation4 + $0xd0] sm:$0xff] %vm3321, %v7240
        %7323 = vst.msk [vmem:[#allocation4 + $0xe0] sm:$0xff] %vm3321, %v7242
        %7324 = vst.msk [vmem:[#allocation4 + $0xf0] sm:$0xff] %vm3321, %v7244
        %7325 = vst.msk [vmem:[#allocation4 + $0x100] sm:$0xff] %vm3321, %v7246
        %7326 = vst.msk [vmem:[#allocation4 + $0x110] sm:$0xff] %vm3321, %v7248
        %7327 = vst.msk [vmem:[#allocation4 + $0x120] sm:$0xff] %vm3321, %v7250
        %7328 = vst.msk [vmem:[#allocation4 + $0x130] sm:$0xff] %vm3321, %v7252
        %7329 = vst.msk [vmem:[#allocation4 + $0x140] sm:$0xff] %vm3321, %v7254
        %7330 = vst.msk [vmem:[#allocation4 + $0x150] sm:$0xff] %vm3321, %v7256
        %7331 = vst.msk [vmem:[#allocation4 + $0x160] sm:$0xff] %vm3321, %v7258
        %7332 = vst.msk [vmem:[#allocation4 + $0x170] sm:$0xff] %vm3321, %v7260
        %7333 = vst.msk [vmem:[#allocation4 + $0x180] sm:$0xff] %vm3321, %v7262
        %7334 = vst.msk [vmem:[#allocation4 + $0x190] sm:$0xff] %vm3321, %v7264
        %7335 = vst.msk [vmem:[#allocation4 + $0x1a0] sm:$0xff] %vm3321, %v7266
        %7336 = vst.msk [vmem:[#allocation4 + $0x1b0] sm:$0xff] %vm3321, %v7268
        %7337 = vst.msk [vmem:[#allocation4 + $0x1c0] sm:$0xff] %vm3321, %v7270
        %7338 = vst.msk [vmem:[#allocation4 + $0x1d0] sm:$0xff] %vm3321, %v7272
        %7339 = vst.msk [vmem:[#allocation4 + $0x1e0] sm:$0xff] %vm3321, %v7274
        %7340 = vst.msk [vmem:[#allocation4 + $0x1f0] sm:$0xff] %vm3321, %v7276
        %v7341 = vld [vmem:[%s2678 + $0x1] sm:$0xff]
        %v7342 = vld [vmem:[%s2678 + $0x9] sm:$0xff]
        %v7343 = vld [vmem:[%s2678 + $0x19] sm:$0xff]
        %v7344 = vld [vmem:[%s2678 + $0x21] sm:$0xff]
        %v7345 = vld [vmem:[%s2678 + $0x31] sm:$0xff]
        %v7346 = vld [vmem:[%s2678 + $0x39] sm:$0xff]
        %v7347 = vld [vmem:[%s2678 + $0x49] sm:$0xff]
        %v7348 = vld [vmem:[%s2678 + $0x51] sm:$0xff]
        %v7349 = vld [vmem:[%s2678 + $0x61] sm:$0xff]
        %v7350 = vld [vmem:[%s2678 + $0x69] sm:$0xff]
        %v7351 = vld [vmem:[%s2678 + $0x79] sm:$0xff]
        %v7352 = vld [vmem:[%s2678 + $0x81] sm:$0xff]
        %v7353 = vld [vmem:[%s2678 + $0x91] sm:$0xff]
        %v7354 = vld [vmem:[%s2678 + $0x99] sm:$0xff]
        %v7355 = vld [vmem:[%s2678 + $0xa9] sm:$0xff]
        %v7356 = vld [vmem:[%s2678 + $0xb1] sm:$0xff]
        %v7357 = vld [vmem:[%s2678 + $0xc1] sm:$0xff]
        %v7358 = vld [vmem:[%s2678 + $0xc9] sm:$0xff]
        %v7359 = vld [vmem:[%s2678 + $0xd9] sm:$0xff]
        %v7360 = vld [vmem:[%s2678 + $0xe1] sm:$0xff]
        %v7361 = vld [vmem:[%s2678 + $0xf1] sm:$0xff]
        %v7362 = vld [vmem:[%s2678 + $0xf9] sm:$0xff]
        %v7363 = vld [vmem:[%s2678 + $0x109] sm:$0xff]
        %v7364 = vld [vmem:[%s2678 + $0x111] sm:$0xff]
        %v7365 = vld [vmem:[%s2678 + $0x121] sm:$0xff]
        %v7366 = vld [vmem:[%s2678 + $0x129] sm:$0xff]
        %v7367 = vld [vmem:[%s2678 + $0x139] sm:$0xff]
        %v7368 = vld [vmem:[%s2678 + $0x141] sm:$0xff]
        %v7369 = vld [vmem:[%s2678 + $0x151] sm:$0xff]
        %v7370 = vld [vmem:[%s2678 + $0x159] sm:$0xff]
        %v7371 = vld [vmem:[%s2678 + $0x169] sm:$0xff]
        %v7372 = vld [vmem:[%s2678 + $0x171] sm:$0xff]
        %7405 = vrot.lane.b32.xlu0 %v7341, 64
        %v7406 = vpop.permute.xlu0 %7405
        %7407 = vrot.lane.b32.xlu0 %v7342, 64
        %v7408 = vpop.permute.xlu0 %7407
        %7409 = vrot.lane.b32.xlu0 %v7343, 64
        %v7410 = vpop.permute.xlu0 %7409
        %7411 = vrot.lane.b32.xlu0 %v7344, 64
        %v7412 = vpop.permute.xlu0 %7411
        %7413 = vrot.lane.b32.xlu0 %v7345, 64
        %v7414 = vpop.permute.xlu0 %7413
        %7415 = vrot.lane.b32.xlu0 %v7346, 64
        %v7416 = vpop.permute.xlu0 %7415
        %7417 = vrot.lane.b32.xlu0 %v7347, 64
        %v7418 = vpop.permute.xlu0 %7417
        %7419 = vrot.lane.b32.xlu0 %v7348, 64
        %v7420 = vpop.permute.xlu0 %7419
        %7421 = vrot.lane.b32.xlu0 %v7349, 64
        %v7422 = vpop.permute.xlu0 %7421
        %7423 = vrot.lane.b32.xlu0 %v7350, 64
        %v7424 = vpop.permute.xlu0 %7423
        %7425 = vrot.lane.b32.xlu0 %v7351, 64
        %v7426 = vpop.permute.xlu0 %7425
        %7427 = vrot.lane.b32.xlu0 %v7352, 64
        %v7428 = vpop.permute.xlu0 %7427
        %7429 = vrot.lane.b32.xlu0 %v7353, 64
        %v7430 = vpop.permute.xlu0 %7429
        %7431 = vrot.lane.b32.xlu0 %v7354, 64
        %v7432 = vpop.permute.xlu0 %7431
        %7433 = vrot.lane.b32.xlu0 %v7355, 64
        %v7434 = vpop.permute.xlu0 %7433
        %7435 = vrot.lane.b32.xlu0 %v7356, 64
        %v7436 = vpop.permute.xlu0 %7435
        %7437 = vrot.lane.b32.xlu0 %v7357, 64
        %v7438 = vpop.permute.xlu0 %7437
        %7439 = vrot.lane.b32.xlu0 %v7358, 64
        %v7440 = vpop.permute.xlu0 %7439
        %7441 = vrot.lane.b32.xlu0 %v7359, 64
        %v7442 = vpop.permute.xlu0 %7441
        %7443 = vrot.lane.b32.xlu0 %v7360, 64
        %v7444 = vpop.permute.xlu0 %7443
        %7445 = vrot.lane.b32.xlu0 %v7361, 64
        %v7446 = vpop.permute.xlu0 %7445
        %7447 = vrot.lane.b32.xlu0 %v7362, 64
        %v7448 = vpop.permute.xlu0 %7447
        %7449 = vrot.lane.b32.xlu0 %v7363, 64
        %v7450 = vpop.permute.xlu0 %7449
        %7451 = vrot.lane.b32.xlu0 %v7364, 64
        %v7452 = vpop.permute.xlu0 %7451
        %7453 = vrot.lane.b32.xlu0 %v7365, 64
        %v7454 = vpop.permute.xlu0 %7453
        %7455 = vrot.lane.b32.xlu0 %v7366, 64
        %v7456 = vpop.permute.xlu0 %7455
        %7457 = vrot.lane.b32.xlu0 %v7367, 64
        %v7458 = vpop.permute.xlu0 %7457
        %7459 = vrot.lane.b32.xlu0 %v7368, 64
        %v7460 = vpop.permute.xlu0 %7459
        %7461 = vrot.lane.b32.xlu0 %v7369, 64
        %v7462 = vpop.permute.xlu0 %7461
        %7463 = vrot.lane.b32.xlu0 %v7370, 64
        %v7464 = vpop.permute.xlu0 %7463
        %7465 = vrot.lane.b32.xlu0 %v7371, 64
        %v7466 = vpop.permute.xlu0 %7465
        %7467 = vrot.lane.b32.xlu0 %v7372, 64
        %v7468 = vpop.permute.xlu0 %7467
        %7501 = vst.msk [vmem:[#allocation4] sm:$0xff] %vm3514, %v7406
        %7502 = vst.msk [vmem:[#allocation4 + $0x10] sm:$0xff] %vm3514, %v7408
        %7503 = vst.msk [vmem:[#allocation4 + $0x20] sm:$0xff] %vm3514, %v7410
        %7504 = vst.msk [vmem:[#allocation4 + $0x30] sm:$0xff] %vm3514, %v7412
        %7505 = vst.msk [vmem:[#allocation4 + $0x40] sm:$0xff] %vm3514, %v7414
        %7506 = vst.msk [vmem:[#allocation4 + $0x50] sm:$0xff] %vm3514, %v7416
        %7507 = vst.msk [vmem:[#allocation4 + $0x60] sm:$0xff] %vm3514, %v7418
        %7508 = vst.msk [vmem:[#allocation4 + $0x70] sm:$0xff] %vm3514, %v7420
        %7509 = vst.msk [vmem:[#allocation4 + $0x80] sm:$0xff] %vm3514, %v7422
        %7510 = vst.msk [vmem:[#allocation4 + $0x90] sm:$0xff] %vm3514, %v7424
        %7511 = vst.msk [vmem:[#allocation4 + $0xa0] sm:$0xff] %vm3514, %v7426
        %7512 = vst.msk [vmem:[#allocation4 + $0xb0] sm:$0xff] %vm3514, %v7428
        %7513 = vst.msk [vmem:[#allocation4 + $0xc0] sm:$0xff] %vm3514, %v7430
        %7514 = vst.msk [vmem:[#allocation4 + $0xd0] sm:$0xff] %vm3514, %v7432
        %7515 = vst.msk [vmem:[#allocation4 + $0xe0] sm:$0xff] %vm3514, %v7434
        %7516 = vst.msk [vmem:[#allocation4 + $0xf0] sm:$0xff] %vm3514, %v7436
        %7517 = vst.msk [vmem:[#allocation4 + $0x100] sm:$0xff] %vm3514, %v7438
        %7518 = vst.msk [vmem:[#allocation4 + $0x110] sm:$0xff] %vm3514, %v7440
        %7519 = vst.msk [vmem:[#allocation4 + $0x120] sm:$0xff] %vm3514, %v7442
        %7520 = vst.msk [vmem:[#allocation4 + $0x130] sm:$0xff] %vm3514, %v7444
        %7521 = vst.msk [vmem:[#allocation4 + $0x140] sm:$0xff] %vm3514, %v7446
        %7522 = vst.msk [vmem:[#allocation4 + $0x150] sm:$0xff] %vm3514, %v7448
        %7523 = vst.msk [vmem:[#allocation4 + $0x160] sm:$0xff] %vm3514, %v7450
        %7524 = vst.msk [vmem:[#allocation4 + $0x170] sm:$0xff] %vm3514, %v7452
        %7525 = vst.msk [vmem:[#allocation4 + $0x180] sm:$0xff] %vm3514, %v7454
        %7526 = vst.msk [vmem:[#allocation4 + $0x190] sm:$0xff] %vm3514, %v7456
        %7527 = vst.msk [vmem:[#allocation4 + $0x1a0] sm:$0xff] %vm3514, %v7458
        %7528 = vst.msk [vmem:[#allocation4 + $0x1b0] sm:$0xff] %vm3514, %v7460
        %7529 = vst.msk [vmem:[#allocation4 + $0x1c0] sm:$0xff] %vm3514, %v7462
        %7530 = vst.msk [vmem:[#allocation4 + $0x1d0] sm:$0xff] %vm3514, %v7464
        %7531 = vst.msk [vmem:[#allocation4 + $0x1e0] sm:$0xff] %vm3514, %v7466
        %7532 = vst.msk [vmem:[#allocation4 + $0x1f0] sm:$0xff] %vm3514, %v7468
        %v7533 = vld [vmem:[%s2678 + $0x2] sm:$0xff]
        %v7534 = vld [vmem:[%s2678 + $0xa] sm:$0xff]
        %v7535 = vld [vmem:[%s2678 + $0x1a] sm:$0xff]
        %v7536 = vld [vmem:[%s2678 + $0x22] sm:$0xff]
        %v7537 = vld [vmem:[%s2678 + $0x32] sm:$0xff]
        %v7538 = vld [vmem:[%s2678 + $0x3a] sm:$0xff]
        %v7539 = vld [vmem:[%s2678 + $0x4a] sm:$0xff]
        %v7540 = vld [vmem:[%s2678 + $0x52] sm:$0xff]
        %v7541 = vld [vmem:[%s2678 + $0x62] sm:$0xff]
        %v7542 = vld [vmem:[%s2678 + $0x6a] sm:$0xff]
        %v7543 = vld [vmem:[%s2678 + $0x7a] sm:$0xff]
        %v7544 = vld [vmem:[%s2678 + $0x82] sm:$0xff]
        %v7545 = vld [vmem:[%s2678 + $0x92] sm:$0xff]
        %v7546 = vld [vmem:[%s2678 + $0x9a] sm:$0xff]
        %v7547 = vld [vmem:[%s2678 + $0xaa] sm:$0xff]
        %v7548 = vld [vmem:[%s2678 + $0xb2] sm:$0xff]
        %v7549 = vld [vmem:[%s2678 + $0xc2] sm:$0xff]
        %v7550 = vld [vmem:[%s2678 + $0xca] sm:$0xff]
        %v7551 = vld [vmem:[%s2678 + $0xda] sm:$0xff]
        %v7552 = vld [vmem:[%s2678 + $0xe2] sm:$0xff]
        %v7553 = vld [vmem:[%s2678 + $0xf2] sm:$0xff]
        %v7554 = vld [vmem:[%s2678 + $0xfa] sm:$0xff]
        %v7555 = vld [vmem:[%s2678 + $0x10a] sm:$0xff]
        %v7556 = vld [vmem:[%s2678 + $0x112] sm:$0xff]
        %v7557 = vld [vmem:[%s2678 + $0x122] sm:$0xff]
        %v7558 = vld [vmem:[%s2678 + $0x12a] sm:$0xff]
        %v7559 = vld [vmem:[%s2678 + $0x13a] sm:$0xff]
        %v7560 = vld [vmem:[%s2678 + $0x142] sm:$0xff]
        %v7561 = vld [vmem:[%s2678 + $0x152] sm:$0xff]
        %v7562 = vld [vmem:[%s2678 + $0x15a] sm:$0xff]
        %v7563 = vld [vmem:[%s2678 + $0x16a] sm:$0xff]
        %v7564 = vld [vmem:[%s2678 + $0x172] sm:$0xff]
        %7597 = vrot.lane.b32.xlu0 %v7533, 80
        %v7598 = vpop.permute.xlu0 %7597
        %7599 = vrot.lane.b32.xlu0 %v7534, 80
        %v7600 = vpop.permute.xlu0 %7599
        %7601 = vrot.lane.b32.xlu0 %v7535, 80
        %v7602 = vpop.permute.xlu0 %7601
        %7603 = vrot.lane.b32.xlu0 %v7536, 80
        %v7604 = vpop.permute.xlu0 %7603
        %7605 = vrot.lane.b32.xlu0 %v7537, 80
        %v7606 = vpop.permute.xlu0 %7605
        %7607 = vrot.lane.b32.xlu0 %v7538, 80
        %v7608 = vpop.permute.xlu0 %7607
        %7609 = vrot.lane.b32.xlu0 %v7539, 80
        %v7610 = vpop.permute.xlu0 %7609
        %7611 = vrot.lane.b32.xlu0 %v7540, 80
        %v7612 = vpop.permute.xlu0 %7611
        %7613 = vrot.lane.b32.xlu0 %v7541, 80
        %v7614 = vpop.permute.xlu0 %7613
        %7615 = vrot.lane.b32.xlu0 %v7542, 80
        %v7616 = vpop.permute.xlu0 %7615
        %7617 = vrot.lane.b32.xlu0 %v7543, 80
        %v7618 = vpop.permute.xlu0 %7617
        %7619 = vrot.lane.b32.xlu0 %v7544, 80
        %v7620 = vpop.permute.xlu0 %7619
        %7621 = vrot.lane.b32.xlu0 %v7545, 80
        %v7622 = vpop.permute.xlu0 %7621
        %7623 = vrot.lane.b32.xlu0 %v7546, 80
        %v7624 = vpop.permute.xlu0 %7623
        %7625 = vrot.lane.b32.xlu0 %v7547, 80
        %v7626 = vpop.permute.xlu0 %7625
        %7627 = vrot.lane.b32.xlu0 %v7548, 80
        %v7628 = vpop.permute.xlu0 %7627
        %7629 = vrot.lane.b32.xlu0 %v7549, 80
        %v7630 = vpop.permute.xlu0 %7629
        %7631 = vrot.lane.b32.xlu0 %v7550, 80
        %v7632 = vpop.permute.xlu0 %7631
        %7633 = vrot.lane.b32.xlu0 %v7551, 80
        %v7634 = vpop.permute.xlu0 %7633
        %7635 = vrot.lane.b32.xlu0 %v7552, 80
        %v7636 = vpop.permute.xlu0 %7635
        %7637 = vrot.lane.b32.xlu0 %v7553, 80
        %v7638 = vpop.permute.xlu0 %7637
        %7639 = vrot.lane.b32.xlu0 %v7554, 80
        %v7640 = vpop.permute.xlu0 %7639
        %7641 = vrot.lane.b32.xlu0 %v7555, 80
        %v7642 = vpop.permute.xlu0 %7641
        %7643 = vrot.lane.b32.xlu0 %v7556, 80
        %v7644 = vpop.permute.xlu0 %7643
        %7645 = vrot.lane.b32.xlu0 %v7557, 80
        %v7646 = vpop.permute.xlu0 %7645
        %7647 = vrot.lane.b32.xlu0 %v7558, 80
        %v7648 = vpop.permute.xlu0 %7647
        %7649 = vrot.lane.b32.xlu0 %v7559, 80
        %v7650 = vpop.permute.xlu0 %7649
        %7651 = vrot.lane.b32.xlu0 %v7560, 80
        %v7652 = vpop.permute.xlu0 %7651
        %7653 = vrot.lane.b32.xlu0 %v7561, 80
        %v7654 = vpop.permute.xlu0 %7653
        %7655 = vrot.lane.b32.xlu0 %v7562, 80
        %v7656 = vpop.permute.xlu0 %7655
        %7657 = vrot.lane.b32.xlu0 %v7563, 80
        %v7658 = vpop.permute.xlu0 %7657
        %7659 = vrot.lane.b32.xlu0 %v7564, 80
        %v7660 = vpop.permute.xlu0 %7659
        %7693 = vst.msk [vmem:[#allocation4] sm:$0xff] %vm3707, %v7598
        %7694 = vst.msk [vmem:[#allocation4 + $0x10] sm:$0xff] %vm3707, %v7600
        %7695 = vst.msk [vmem:[#allocation4 + $0x20] sm:$0xff] %vm3707, %v7602
        %7696 = vst.msk [vmem:[#allocation4 + $0x30] sm:$0xff] %vm3707, %v7604
        %7697 = vst.msk [vmem:[#allocation4 + $0x40] sm:$0xff] %vm3707, %v7606
        %7698 = vst.msk [vmem:[#allocation4 + $0x50] sm:$0xff] %vm3707, %v7608
        %7699 = vst.msk [vmem:[#allocation4 + $0x60] sm:$0xff] %vm3707, %v7610
        %7700 = vst.msk [vmem:[#allocation4 + $0x70] sm:$0xff] %vm3707, %v7612
        %7701 = vst.msk [vmem:[#allocation4 + $0x80] sm:$0xff] %vm3707, %v7614
        %7702 = vst.msk [vmem:[#allocation4 + $0x90] sm:$0xff] %vm3707, %v7616
        %7703 = vst.msk [vmem:[#allocation4 + $0xa0] sm:$0xff] %vm3707, %v7618
        %7704 = vst.msk [vmem:[#allocation4 + $0xb0] sm:$0xff] %vm3707, %v7620
        %7705 = vst.msk [vmem:[#allocation4 + $0xc0] sm:$0xff] %vm3707, %v7622
        %7706 = vst.msk [vmem:[#allocation4 + $0xd0] sm:$0xff] %vm3707, %v7624
        %7707 = vst.msk [vmem:[#allocation4 + $0xe0] sm:$0xff] %vm3707, %v7626
        %7708 = vst.msk [vmem:[#allocation4 + $0xf0] sm:$0xff] %vm3707, %v7628
        %7709 = vst.msk [vmem:[#allocation4 + $0x100] sm:$0xff] %vm3707, %v7630
        %7710 = vst.msk [vmem:[#allocation4 + $0x110] sm:$0xff] %vm3707, %v7632
        %7711 = vst.msk [vmem:[#allocation4 + $0x120] sm:$0xff] %vm3707, %v7634
        %7712 = vst.msk [vmem:[#allocation4 + $0x130] sm:$0xff] %vm3707, %v7636
        %7713 = vst.msk [vmem:[#allocation4 + $0x140] sm:$0xff] %vm3707, %v7638
        %7714 = vst.msk [vmem:[#allocation4 + $0x150] sm:$0xff] %vm3707, %v7640
        %7715 = vst.msk [vmem:[#allocation4 + $0x160] sm:$0xff] %vm3707, %v7642
        %7716 = vst.msk [vmem:[#allocation4 + $0x170] sm:$0xff] %vm3707, %v7644
        %7717 = vst.msk [vmem:[#allocation4 + $0x180] sm:$0xff] %vm3707, %v7646
        %7718 = vst.msk [vmem:[#allocation4 + $0x190] sm:$0xff] %vm3707, %v7648
        %7719 = vst.msk [vmem:[#allocation4 + $0x1a0] sm:$0xff] %vm3707, %v7650
        %7720 = vst.msk [vmem:[#allocation4 + $0x1b0] sm:$0xff] %vm3707, %v7652
        %7721 = vst.msk [vmem:[#allocation4 + $0x1c0] sm:$0xff] %vm3707, %v7654
        %7722 = vst.msk [vmem:[#allocation4 + $0x1d0] sm:$0xff] %vm3707, %v7656
        %7723 = vst.msk [vmem:[#allocation4 + $0x1e0] sm:$0xff] %vm3707, %v7658
        %7724 = vst.msk [vmem:[#allocation4 + $0x1f0] sm:$0xff] %vm3707, %v7660
        %v7725 = vld [vmem:[%s3740] sm:$0xff]
        %v7726 = vld [vmem:[%s3740 + $0x8] sm:$0xff]
        %v7727 = vld [vmem:[%s3740 + $0x18] sm:$0xff]
        %v7728 = vld [vmem:[%s3740 + $0x20] sm:$0xff]
        %v7729 = vld [vmem:[%s3740 + $0x30] sm:$0xff]
        %v7730 = vld [vmem:[%s3740 + $0x38] sm:$0xff]
        %v7731 = vld [vmem:[%s3740 + $0x48] sm:$0xff]
        %v7732 = vld [vmem:[%s3740 + $0x50] sm:$0xff]
        %v7733 = vld [vmem:[%s3740 + $0x60] sm:$0xff]
        %v7734 = vld [vmem:[%s3740 + $0x68] sm:$0xff]
        %v7735 = vld [vmem:[%s3740 + $0x78] sm:$0xff]
        %v7736 = vld [vmem:[%s3740 + $0x80] sm:$0xff]
        %v7737 = vld [vmem:[%s3740 + $0x90] sm:$0xff]
        %v7738 = vld [vmem:[%s3740 + $0x98] sm:$0xff]
        %v7739 = vld [vmem:[%s3740 + $0xa8] sm:$0xff]
        %v7740 = vld [vmem:[%s3740 + $0xb0] sm:$0xff]
        %v7741 = vld [vmem:[%s3740 + $0xc0] sm:$0xff]
        %v7742 = vld [vmem:[%s3740 + $0xc8] sm:$0xff]
        %v7743 = vld [vmem:[%s3740 + $0xd8] sm:$0xff]
        %v7744 = vld [vmem:[%s3740 + $0xe0] sm:$0xff]
        %v7745 = vld [vmem:[%s3740 + $0xf0] sm:$0xff]
        %v7746 = vld [vmem:[%s3740 + $0xf8] sm:$0xff]
        %v7747 = vld [vmem:[%s3740 + $0x108] sm:$0xff]
        %v7748 = vld [vmem:[%s3740 + $0x110] sm:$0xff]
        %v7749 = vld [vmem:[%s3740 + $0x120] sm:$0xff]
        %v7750 = vld [vmem:[%s3740 + $0x128] sm:$0xff]
        %v7751 = vld [vmem:[%s3740 + $0x138] sm:$0xff]
        %v7752 = vld [vmem:[%s3740 + $0x140] sm:$0xff]
        %v7753 = vld [vmem:[%s3740 + $0x150] sm:$0xff]
        %v7754 = vld [vmem:[%s3740 + $0x158] sm:$0xff]
        %v7755 = vld [vmem:[%s3740 + $0x168] sm:$0xff]
        %v7756 = vld [vmem:[%s3740 + $0x170] sm:$0xff]
        %7789 = vrot.lane.b32.xlu0 %v7725, 96
        %v7790 = vpop.permute.xlu0 %7789
        %7791 = vrot.lane.b32.xlu0 %v7726, 96
        %v7792 = vpop.permute.xlu0 %7791
        %7793 = vrot.lane.b32.xlu0 %v7727, 96
        %v7794 = vpop.permute.xlu0 %7793
        %7795 = vrot.lane.b32.xlu0 %v7728, 96
        %v7796 = vpop.permute.xlu0 %7795
        %7797 = vrot.lane.b32.xlu0 %v7729, 96
        %v7798 = vpop.permute.xlu0 %7797
        %7799 = vrot.lane.b32.xlu0 %v7730, 96
        %v7800 = vpop.permute.xlu0 %7799
        %7801 = vrot.lane.b32.xlu0 %v7731, 96
        %v7802 = vpop.permute.xlu0 %7801
        %7803 = vrot.lane.b32.xlu0 %v7732, 96
        %v7804 = vpop.permute.xlu0 %7803
        %7805 = vrot.lane.b32.xlu0 %v7733, 96
        %v7806 = vpop.permute.xlu0 %7805
        %7807 = vrot.lane.b32.xlu0 %v7734, 96
        %v7808 = vpop.permute.xlu0 %7807
        %7809 = vrot.lane.b32.xlu0 %v7735, 96
        %v7810 = vpop.permute.xlu0 %7809
        %7811 = vrot.lane.b32.xlu0 %v7736, 96
        %v7812 = vpop.permute.xlu0 %7811
        %7813 = vrot.lane.b32.xlu0 %v7737, 96
        %v7814 = vpop.permute.xlu0 %7813
        %7815 = vrot.lane.b32.xlu0 %v7738, 96
        %v7816 = vpop.permute.xlu0 %7815
        %7817 = vrot.lane.b32.xlu0 %v7739, 96
        %v7818 = vpop.permute.xlu0 %7817
        %7819 = vrot.lane.b32.xlu0 %v7740, 96
        %v7820 = vpop.permute.xlu0 %7819
        %7821 = vrot.lane.b32.xlu0 %v7741, 96
        %v7822 = vpop.permute.xlu0 %7821
        %7823 = vrot.lane.b32.xlu0 %v7742, 96
        %v7824 = vpop.permute.xlu0 %7823
        %7825 = vrot.lane.b32.xlu0 %v7743, 96
        %v7826 = vpop.permute.xlu0 %7825
        %7827 = vrot.lane.b32.xlu0 %v7744, 96
        %v7828 = vpop.permute.xlu0 %7827
        %7829 = vrot.lane.b32.xlu0 %v7745, 96
        %v7830 = vpop.permute.xlu0 %7829
        %7831 = vrot.lane.b32.xlu0 %v7746, 96
        %v7832 = vpop.permute.xlu0 %7831
        %7833 = vrot.lane.b32.xlu0 %v7747, 96
        %v7834 = vpop.permute.xlu0 %7833
        %7835 = vrot.lane.b32.xlu0 %v7748, 96
        %v7836 = vpop.permute.xlu0 %7835
        %7837 = vrot.lane.b32.xlu0 %v7749, 96
        %v7838 = vpop.permute.xlu0 %7837
        %7839 = vrot.lane.b32.xlu0 %v7750, 96
        %v7840 = vpop.permute.xlu0 %7839
        %7841 = vrot.lane.b32.xlu0 %v7751, 96
        %v7842 = vpop.permute.xlu0 %7841
        %7843 = vrot.lane.b32.xlu0 %v7752, 96
        %v7844 = vpop.permute.xlu0 %7843
        %7845 = vrot.lane.b32.xlu0 %v7753, 96
        %v7846 = vpop.permute.xlu0 %7845
        %7847 = vrot.lane.b32.xlu0 %v7754, 96
        %v7848 = vpop.permute.xlu0 %7847
        %7849 = vrot.lane.b32.xlu0 %v7755, 96
        %v7850 = vpop.permute.xlu0 %7849
        %7851 = vrot.lane.b32.xlu0 %v7756, 96
        %v7852 = vpop.permute.xlu0 %7851
        %7885 = vst.msk [vmem:[#allocation4] sm:$0xff] %vm3901, %v7790
        %7886 = vst.msk [vmem:[#allocation4 + $0x10] sm:$0xff] %vm3901, %v7792
        %7887 = vst.msk [vmem:[#allocation4 + $0x20] sm:$0xff] %vm3901, %v7794
        %7888 = vst.msk [vmem:[#allocation4 + $0x30] sm:$0xff] %vm3901, %v7796
        %7889 = vst.msk [vmem:[#allocation4 + $0x40] sm:$0xff] %vm3901, %v7798
        %7890 = vst.msk [vmem:[#allocation4 + $0x50] sm:$0xff] %vm3901, %v7800
        %7891 = vst.msk [vmem:[#allocation4 + $0x60] sm:$0xff] %vm3901, %v7802
        %7892 = vst.msk [vmem:[#allocation4 + $0x70] sm:$0xff] %vm3901, %v7804
        %7893 = vst.msk [vmem:[#allocation4 + $0x80] sm:$0xff] %vm3901, %v7806
        %7894 = vst.msk [vmem:[#allocation4 + $0x90] sm:$0xff] %vm3901, %v7808
        %7895 = vst.msk [vmem:[#allocation4 + $0xa0] sm:$0xff] %vm3901, %v7810
        %7896 = vst.msk [vmem:[#allocation4 + $0xb0] sm:$0xff] %vm3901, %v7812
        %7897 = vst.msk [vmem:[#allocation4 + $0xc0] sm:$0xff] %vm3901, %v7814
        %7898 = vst.msk [vmem:[#allocation4 + $0xd0] sm:$0xff] %vm3901, %v7816
        %7899 = vst.msk [vmem:[#allocation4 + $0xe0] sm:$0xff] %vm3901, %v7818
        %7900 = vst.msk [vmem:[#allocation4 + $0xf0] sm:$0xff] %vm3901, %v7820
        %7901 = vst.msk [vmem:[#allocation4 + $0x100] sm:$0xff] %vm3901, %v7822
        %7902 = vst.msk [vmem:[#allocation4 + $0x110] sm:$0xff] %vm3901, %v7824
        %7903 = vst.msk [vmem:[#allocation4 + $0x120] sm:$0xff] %vm3901, %v7826
        %7904 = vst.msk [vmem:[#allocation4 + $0x130] sm:$0xff] %vm3901, %v7828
        %7905 = vst.msk [vmem:[#allocation4 + $0x140] sm:$0xff] %vm3901, %v7830
        %7906 = vst.msk [vmem:[#allocation4 + $0x150] sm:$0xff] %vm3901, %v7832
        %7907 = vst.msk [vmem:[#allocation4 + $0x160] sm:$0xff] %vm3901, %v7834
        %7908 = vst.msk [vmem:[#allocation4 + $0x170] sm:$0xff] %vm3901, %v7836
        %7909 = vst.msk [vmem:[#allocation4 + $0x180] sm:$0xff] %vm3901, %v7838
        %7910 = vst.msk [vmem:[#allocation4 + $0x190] sm:$0xff] %vm3901, %v7840
        %7911 = vst.msk [vmem:[#allocation4 + $0x1a0] sm:$0xff] %vm3901, %v7842
        %7912 = vst.msk [vmem:[#allocation4 + $0x1b0] sm:$0xff] %vm3901, %v7844
        %7913 = vst.msk [vmem:[#allocation4 + $0x1c0] sm:$0xff] %vm3901, %v7846
        %7914 = vst.msk [vmem:[#allocation4 + $0x1d0] sm:$0xff] %vm3901, %v7848
        %7915 = vst.msk [vmem:[#allocation4 + $0x1e0] sm:$0xff] %vm3901, %v7850
        %7916 = vst.msk [vmem:[#allocation4 + $0x1f0] sm:$0xff] %vm3901, %v7852
        %v7917 = vld [vmem:[%s3740 + $0x1] sm:$0xff]
        %v7918 = vld [vmem:[%s3740 + $0x9] sm:$0xff]
        %v7919 = vld [vmem:[%s3740 + $0x19] sm:$0xff]
        %v7920 = vld [vmem:[%s3740 + $0x21] sm:$0xff]
        %v7921 = vld [vmem:[%s3740 + $0x31] sm:$0xff]
        %v7922 = vld [vmem:[%s3740 + $0x39] sm:$0xff]
        %v7923 = vld [vmem:[%s3740 + $0x49] sm:$0xff]
        %v7924 = vld [vmem:[%s3740 + $0x51] sm:$0xff]
        %v7925 = vld [vmem:[%s3740 + $0x61] sm:$0xff]
        %v7926 = vld [vmem:[%s3740 + $0x69] sm:$0xff]
        %v7927 = vld [vmem:[%s3740 + $0x79] sm:$0xff]
        %v7928 = vld [vmem:[%s3740 + $0x81] sm:$0xff]
        %v7929 = vld [vmem:[%s3740 + $0x91] sm:$0xff]
        %v7930 = vld [vmem:[%s3740 + $0x99] sm:$0xff]
        %v7931 = vld [vmem:[%s3740 + $0xa9] sm:$0xff]
        %v7932 = vld [vmem:[%s3740 + $0xb1] sm:$0xff]
        %v7933 = vld [vmem:[%s3740 + $0xc1] sm:$0xff]
        %v7934 = vld [vmem:[%s3740 + $0xc9] sm:$0xff]
        %v7935 = vld [vmem:[%s3740 + $0xd9] sm:$0xff]
        %v7936 = vld [vmem:[%s3740 + $0xe1] sm:$0xff]
        %v7937 = vld [vmem:[%s3740 + $0xf1] sm:$0xff]
        %v7938 = vld [vmem:[%s3740 + $0xf9] sm:$0xff]
        %v7939 = vld [vmem:[%s3740 + $0x109] sm:$0xff]
        %v7940 = vld [vmem:[%s3740 + $0x111] sm:$0xff]
        %v7941 = vld [vmem:[%s3740 + $0x121] sm:$0xff]
        %v7942 = vld [vmem:[%s3740 + $0x129] sm:$0xff]
        %v7943 = vld [vmem:[%s3740 + $0x139] sm:$0xff]
        %v7944 = vld [vmem:[%s3740 + $0x141] sm:$0xff]
        %v7945 = vld [vmem:[%s3740 + $0x151] sm:$0xff]
        %v7946 = vld [vmem:[%s3740 + $0x159] sm:$0xff]
        %v7947 = vld [vmem:[%s3740 + $0x169] sm:$0xff]
        %v7948 = vld [vmem:[%s3740 + $0x171] sm:$0xff]
        %7981 = vrot.lane.b32.xlu0 %v7917, 112
        %v7982 = vpop.permute.xlu0 %7981
        %7983 = vrot.lane.b32.xlu0 %v7918, 112
        %v7984 = vpop.permute.xlu0 %7983
        %7985 = vrot.lane.b32.xlu0 %v7919, 112
        %v7986 = vpop.permute.xlu0 %7985
        %7987 = vrot.lane.b32.xlu0 %v7920, 112
        %v7988 = vpop.permute.xlu0 %7987
        %7989 = vrot.lane.b32.xlu0 %v7921, 112
        %v7990 = vpop.permute.xlu0 %7989
        %7991 = vrot.lane.b32.xlu0 %v7922, 112
        %v7992 = vpop.permute.xlu0 %7991
        %7993 = vrot.lane.b32.xlu0 %v7923, 112
        %v7994 = vpop.permute.xlu0 %7993
        %7995 = vrot.lane.b32.xlu0 %v7924, 112
        %v7996 = vpop.permute.xlu0 %7995
        %7997 = vrot.lane.b32.xlu0 %v7925, 112
        %v7998 = vpop.permute.xlu0 %7997
        %7999 = vrot.lane.b32.xlu0 %v7926, 112
        %v8000 = vpop.permute.xlu0 %7999
        %8001 = vrot.lane.b32.xlu0 %v7927, 112
        %v8002 = vpop.permute.xlu0 %8001
        %8003 = vrot.lane.b32.xlu0 %v7928, 112
        %v8004 = vpop.permute.xlu0 %8003
        %8005 = vrot.lane.b32.xlu0 %v7929, 112
        %v8006 = vpop.permute.xlu0 %8005
        %8007 = vrot.lane.b32.xlu0 %v7930, 112
        %v8008 = vpop.permute.xlu0 %8007
        %8009 = vrot.lane.b32.xlu0 %v7931, 112
        %v8010 = vpop.permute.xlu0 %8009
        %8011 = vrot.lane.b32.xlu0 %v7932, 112
        %v8012 = vpop.permute.xlu0 %8011
        %8013 = vrot.lane.b32.xlu0 %v7933, 112
        %v8014 = vpop.permute.xlu0 %8013
        %8015 = vrot.lane.b32.xlu0 %v7934, 112
        %v8016 = vpop.permute.xlu0 %8015
        %8017 = vrot.lane.b32.xlu0 %v7935, 112
        %v8018 = vpop.permute.xlu0 %8017
        %8019 = vrot.lane.b32.xlu0 %v7936, 112
        %v8020 = vpop.permute.xlu0 %8019
        %8021 = vrot.lane.b32.xlu0 %v7937, 112
        %v8022 = vpop.permute.xlu0 %8021
        %8023 = vrot.lane.b32.xlu0 %v7938, 112
        %v8024 = vpop.permute.xlu0 %8023
        %8025 = vrot.lane.b32.xlu0 %v7939, 112
        %v8026 = vpop.permute.xlu0 %8025
        %8027 = vrot.lane.b32.xlu0 %v7940, 112
        %v8028 = vpop.permute.xlu0 %8027
        %8029 = vrot.lane.b32.xlu0 %v7941, 112
        %v8030 = vpop.permute.xlu0 %8029
        %8031 = vrot.lane.b32.xlu0 %v7942, 112
        %v8032 = vpop.permute.xlu0 %8031
        %8033 = vrot.lane.b32.xlu0 %v7943, 112
        %v8034 = vpop.permute.xlu0 %8033
        %8035 = vrot.lane.b32.xlu0 %v7944, 112
        %v8036 = vpop.permute.xlu0 %8035
        %8037 = vrot.lane.b32.xlu0 %v7945, 112
        %v8038 = vpop.permute.xlu0 %8037
        %8039 = vrot.lane.b32.xlu0 %v7946, 112
        %v8040 = vpop.permute.xlu0 %8039
        %8041 = vrot.lane.b32.xlu0 %v7947, 112
        %v8042 = vpop.permute.xlu0 %8041
        %8043 = vrot.lane.b32.xlu0 %v7948, 112
        %v8044 = vpop.permute.xlu0 %8043
        %8077 = vst.msk [vmem:[#allocation4] sm:$0xff] %vm4094, %v7982
        %8078 = vst.msk [vmem:[#allocation4 + $0x10] sm:$0xff] %vm4094, %v7984
        %8079 = vst.msk [vmem:[#allocation4 + $0x20] sm:$0xff] %vm4094, %v7986
        %8080 = vst.msk [vmem:[#allocation4 + $0x30] sm:$0xff] %vm4094, %v7988
        %8081 = vst.msk [vmem:[#allocation4 + $0x40] sm:$0xff] %vm4094, %v7990
        %8082 = vst.msk [vmem:[#allocation4 + $0x50] sm:$0xff] %vm4094, %v7992
        %8083 = vst.msk [vmem:[#allocation4 + $0x60] sm:$0xff] %vm4094, %v7994
        %8084 = vst.msk [vmem:[#allocation4 + $0x70] sm:$0xff] %vm4094, %v7996
        %8085 = vst.msk [vmem:[#allocation4 + $0x80] sm:$0xff] %vm4094, %v7998
        %8086 = vst.msk [vmem:[#allocation4 + $0x90] sm:$0xff] %vm4094, %v8000
        %8087 = vst.msk [vmem:[#allocation4 + $0xa0] sm:$0xff] %vm4094, %v8002
        %8088 = vst.msk [vmem:[#allocation4 + $0xb0] sm:$0xff] %vm4094, %v8004
        %8089 = vst.msk [vmem:[#allocation4 + $0xc0] sm:$0xff] %vm4094, %v8006
        %8090 = vst.msk [vmem:[#allocation4 + $0xd0] sm:$0xff] %vm4094, %v8008
        %8091 = vst.msk [vmem:[#allocation4 + $0xe0] sm:$0xff] %vm4094, %v8010
        %8092 = vst.msk [vmem:[#allocation4 + $0xf0] sm:$0xff] %vm4094, %v8012
        %8093 = vst.msk [vmem:[#allocation4 + $0x100] sm:$0xff] %vm4094, %v8014
        %8094 = vst.msk [vmem:[#allocation4 + $0x110] sm:$0xff] %vm4094, %v8016
        %8095 = vst.msk [vmem:[#allocation4 + $0x120] sm:$0xff] %vm4094, %v8018
        %8096 = vst.msk [vmem:[#allocation4 + $0x130] sm:$0xff] %vm4094, %v8020
        %8097 = vst.msk [vmem:[#allocation4 + $0x140] sm:$0xff] %vm4094, %v8022
        %8098 = vst.msk [vmem:[#allocation4 + $0x150] sm:$0xff] %vm4094, %v8024
        %8099 = vst.msk [vmem:[#allocation4 + $0x160] sm:$0xff] %vm4094, %v8026
        %8100 = vst.msk [vmem:[#allocation4 + $0x170] sm:$0xff] %vm4094, %v8028
        %8101 = vst.msk [vmem:[#allocation4 + $0x180] sm:$0xff] %vm4094, %v8030
        %8102 = vst.msk [vmem:[#allocation4 + $0x190] sm:$0xff] %vm4094, %v8032
        %8103 = vst.msk [vmem:[#allocation4 + $0x1a0] sm:$0xff] %vm4094, %v8034
        %8104 = vst.msk [vmem:[#allocation4 + $0x1b0] sm:$0xff] %vm4094, %v8036
        %8105 = vst.msk [vmem:[#allocation4 + $0x1c0] sm:$0xff] %vm4094, %v8038
        %8106 = vst.msk [vmem:[#allocation4 + $0x1d0] sm:$0xff] %vm4094, %v8040
        %8107 = vst.msk [vmem:[#allocation4 + $0x1e0] sm:$0xff] %vm4094, %v8042
        %8108 = vst.msk [vmem:[#allocation4 + $0x1f0] sm:$0xff] %vm4094, %v8044
        %v8109 = vld [vmem:[%s3740 + $0x2] sm:$0xff]
        %v8110 = vld [vmem:[%s3740 + $0xa] sm:$0xff]
        %v8111 = vld [vmem:[%s3740 + $0x1a] sm:$0xff]
        %v8112 = vld [vmem:[%s3740 + $0x22] sm:$0xff]
        %v8113 = vld [vmem:[%s3740 + $0x32] sm:$0xff]
        %v8114 = vld [vmem:[%s3740 + $0x3a] sm:$0xff]
        %v8115 = vld [vmem:[%s3740 + $0x4a] sm:$0xff]
        %v8116 = vld [vmem:[%s3740 + $0x52] sm:$0xff]
        %v8117 = vld [vmem:[%s3740 + $0x62] sm:$0xff]
        %v8118 = vld [vmem:[%s3740 + $0x6a] sm:$0xff]
        %v8119 = vld [vmem:[%s3740 + $0x7a] sm:$0xff]
        %v8120 = vld [vmem:[%s3740 + $0x82] sm:$0xff]
        %v8121 = vld [vmem:[%s3740 + $0x92] sm:$0xff]
        %v8122 = vld [vmem:[%s3740 + $0x9a] sm:$0xff]
        %v8123 = vld [vmem:[%s3740 + $0xaa] sm:$0xff]
        %v8124 = vld [vmem:[%s3740 + $0xb2] sm:$0xff]
        %v8125 = vld [vmem:[%s3740 + $0xc2] sm:$0xff]
        %v8126 = vld [vmem:[%s3740 + $0xca] sm:$0xff]
        %v8127 = vld [vmem:[%s3740 + $0xda] sm:$0xff]
        %v8128 = vld [vmem:[%s3740 + $0xe2] sm:$0xff]
        %v8129 = vld [vmem:[%s3740 + $0xf2] sm:$0xff]
        %v8130 = vld [vmem:[%s3740 + $0xfa] sm:$0xff]
        %v8131 = vld [vmem:[%s3740 + $0x10a] sm:$0xff]
        %v8132 = vld [vmem:[%s3740 + $0x112] sm:$0xff]
        %v8133 = vld [vmem:[%s3740 + $0x122] sm:$0xff]
        %v8134 = vld [vmem:[%s3740 + $0x12a] sm:$0xff]
        %v8135 = vld [vmem:[%s3740 + $0x13a] sm:$0xff]
        %v8136 = vld [vmem:[%s3740 + $0x142] sm:$0xff]
        %v8137 = vld [vmem:[%s3740 + $0x152] sm:$0xff]
        %v8138 = vld [vmem:[%s3740 + $0x15a] sm:$0xff]
        %v8139 = vld [vmem:[%s3740 + $0x16a] sm:$0xff]
        %v8140 = vld [vmem:[%s3740 + $0x172] sm:$0xff]
        %8141 = vst.msk [vmem:[#allocation4 + $0x8] sm:$0xff] %vm503, %v8109
        %8142 = vst.msk [vmem:[#allocation4 + $0x18] sm:$0xff] %vm503, %v8110
        %8143 = vst.msk [vmem:[#allocation4 + $0x28] sm:$0xff] %vm503, %v8111
        %8144 = vst.msk [vmem:[#allocation4 + $0x38] sm:$0xff] %vm503, %v8112
        %8145 = vst.msk [vmem:[#allocation4 + $0x48] sm:$0xff] %vm503, %v8113
        %8146 = vst.msk [vmem:[#allocation4 + $0x58] sm:$0xff] %vm503, %v8114
        %8147 = vst.msk [vmem:[#allocation4 + $0x68] sm:$0xff] %vm503, %v8115
        %8148 = vst.msk [vmem:[#allocation4 + $0x78] sm:$0xff] %vm503, %v8116
        %8149 = vst.msk [vmem:[#allocation4 + $0x88] sm:$0xff] %vm503, %v8117
        %8150 = vst.msk [vmem:[#allocation4 + $0x98] sm:$0xff] %vm503, %v8118
        %8151 = vst.msk [vmem:[#allocation4 + $0xa8] sm:$0xff] %vm503, %v8119
        %8152 = vst.msk [vmem:[#allocation4 + $0xb8] sm:$0xff] %vm503, %v8120
        %8153 = vst.msk [vmem:[#allocation4 + $0xc8] sm:$0xff] %vm503, %v8121
        %8154 = vst.msk [vmem:[#allocation4 + $0xd8] sm:$0xff] %vm503, %v8122
        %8155 = vst.msk [vmem:[#allocation4 + $0xe8] sm:$0xff] %vm503, %v8123
        %8156 = vst.msk [vmem:[#allocation4 + $0xf8] sm:$0xff] %vm503, %v8124
        %8157 = vst.msk [vmem:[#allocation4 + $0x108] sm:$0xff] %vm503, %v8125
        %8158 = vst.msk [vmem:[#allocation4 + $0x118] sm:$0xff] %vm503, %v8126
        %8159 = vst.msk [vmem:[#allocation4 + $0x128] sm:$0xff] %vm503, %v8127
        %8160 = vst.msk [vmem:[#allocation4 + $0x138] sm:$0xff] %vm503, %v8128
        %8161 = vst.msk [vmem:[#allocation4 + $0x148] sm:$0xff] %vm503, %v8129
        %8162 = vst.msk [vmem:[#allocation4 + $0x158] sm:$0xff] %vm503, %v8130
        %8163 = vst.msk [vmem:[#allocation4 + $0x168] sm:$0xff] %vm503, %v8131
        %8164 = vst.msk [vmem:[#allocation4 + $0x178] sm:$0xff] %vm503, %v8132
        %8165 = vst.msk [vmem:[#allocation4 + $0x188] sm:$0xff] %vm503, %v8133
        %8166 = vst.msk [vmem:[#allocation4 + $0x198] sm:$0xff] %vm503, %v8134
        %8167 = vst.msk [vmem:[#allocation4 + $0x1a8] sm:$0xff] %vm503, %v8135
        %8168 = vst.msk [vmem:[#allocation4 + $0x1b8] sm:$0xff] %vm503, %v8136
        %8169 = vst.msk [vmem:[#allocation4 + $0x1c8] sm:$0xff] %vm503, %v8137
        %8170 = vst.msk [vmem:[#allocation4 + $0x1d8] sm:$0xff] %vm503, %v8138
        %8171 = vst.msk [vmem:[#allocation4 + $0x1e8] sm:$0xff] %vm503, %v8139
        %8172 = vst.msk [vmem:[#allocation4 + $0x1f8] sm:$0xff] %vm503, %v8140
        %v8173 = vld [vmem:[#allocation4] sm:$0xff]
        %v8174 = vld [vmem:[#allocation4 + $0x8] sm:$0xff]
        %v8175 = vld [vmem:[#allocation4 + $0x10] sm:$0xff]
        %v8176 = vld [vmem:[#allocation4 + $0x18] sm:$0xff]
        %v8177 = vld [vmem:[#allocation4 + $0x20] sm:$0xff]
        %v8178 = vld [vmem:[#allocation4 + $0x28] sm:$0xff]
        %v8179 = vld [vmem:[#allocation4 + $0x30] sm:$0xff]
        %v8180 = vld [vmem:[#allocation4 + $0x38] sm:$0xff]
        %v8181 = vld [vmem:[#allocation4 + $0x40] sm:$0xff]
        %v8182 = vld [vmem:[#allocation4 + $0x48] sm:$0xff]
        %v8183 = vld [vmem:[#allocation4 + $0x50] sm:$0xff]
        %v8184 = vld [vmem:[#allocation4 + $0x58] sm:$0xff]
        %v8185 = vld [vmem:[#allocation4 + $0x60] sm:$0xff]
        %v8186 = vld [vmem:[#allocation4 + $0x68] sm:$0xff]
        %v8187 = vld [vmem:[#allocation4 + $0x70] sm:$0xff]
        %v8188 = vld [vmem:[#allocation4 + $0x78] sm:$0xff]
        %v8189 = vld [vmem:[#allocation4 + $0x80] sm:$0xff]
        %v8190 = vld [vmem:[#allocation4 + $0x88] sm:$0xff]
        %v8191 = vld [vmem:[#allocation4 + $0x90] sm:$0xff]
        %v8192 = vld [vmem:[#allocation4 + $0x98] sm:$0xff]
        %v8193 = vld [vmem:[#allocation4 + $0xa0] sm:$0xff]
        %v8194 = vld [vmem:[#allocation4 + $0xa8] sm:$0xff]
        %v8195 = vld [vmem:[#allocation4 + $0xb0] sm:$0xff]
        %v8196 = vld [vmem:[#allocation4 + $0xb8] sm:$0xff]
        %v8197 = vld [vmem:[#allocation4 + $0xc0] sm:$0xff]
        %v8198 = vld [vmem:[#allocation4 + $0xc8] sm:$0xff]
        %v8199 = vld [vmem:[#allocation4 + $0xd0] sm:$0xff]
        %v8200 = vld [vmem:[#allocation4 + $0xd8] sm:$0xff]
        %v8201 = vld [vmem:[#allocation4 + $0xe0] sm:$0xff]
        %v8202 = vld [vmem:[#allocation4 + $0xe8] sm:$0xff]
        %v8203 = vld [vmem:[#allocation4 + $0xf0] sm:$0xff]
        %v8204 = vld [vmem:[#allocation4 + $0xf8] sm:$0xff]
        %v8205 = vld [vmem:[#allocation4 + $0x100] sm:$0xff]
        %v8206 = vld [vmem:[#allocation4 + $0x108] sm:$0xff]
        %v8207 = vld [vmem:[#allocation4 + $0x110] sm:$0xff]
        %v8208 = vld [vmem:[#allocation4 + $0x118] sm:$0xff]
        %v8209 = vld [vmem:[#allocation4 + $0x120] sm:$0xff]
        %v8210 = vld [vmem:[#allocation4 + $0x128] sm:$0xff]
        %v8211 = vld [vmem:[#allocation4 + $0x130] sm:$0xff]
        %v8212 = vld [vmem:[#allocation4 + $0x138] sm:$0xff]
        %v8213 = vld [vmem:[#allocation4 + $0x140] sm:$0xff]
        %v8214 = vld [vmem:[#allocation4 + $0x148] sm:$0xff]
        %v8215 = vld [vmem:[#allocation4 + $0x150] sm:$0xff]
        %v8216 = vld [vmem:[#allocation4 + $0x158] sm:$0xff]
        %v8217 = vld [vmem:[#allocation4 + $0x160] sm:$0xff]
        %v8218 = vld [vmem:[#allocation4 + $0x168] sm:$0xff]
        %v8219 = vld [vmem:[#allocation4 + $0x170] sm:$0xff]
        %v8220 = vld [vmem:[#allocation4 + $0x178] sm:$0xff]
        %v8221 = vld [vmem:[#allocation4 + $0x180] sm:$0xff]
        %v8222 = vld [vmem:[#allocation4 + $0x188] sm:$0xff]
        %v8223 = vld [vmem:[#allocation4 + $0x190] sm:$0xff]
        %v8224 = vld [vmem:[#allocation4 + $0x198] sm:$0xff]
        %v8225 = vld [vmem:[#allocation4 + $0x1a0] sm:$0xff]
        %v8226 = vld [vmem:[#allocation4 + $0x1a8] sm:$0xff]
        %v8227 = vld [vmem:[#allocation4 + $0x1b0] sm:$0xff]
        %v8228 = vld [vmem:[#allocation4 + $0x1b8] sm:$0xff]
        %v8229 = vld [vmem:[#allocation4 + $0x1c0] sm:$0xff]
        %v8230 = vld [vmem:[#allocation4 + $0x1c8] sm:$0xff]
        %v8231 = vld [vmem:[#allocation4 + $0x1d0] sm:$0xff]
        %v8232 = vld [vmem:[#allocation4 + $0x1d8] sm:$0xff]
        %v8233 = vld [vmem:[#allocation4 + $0x1e0] sm:$0xff]
        %v8234 = vld [vmem:[#allocation4 + $0x1e8] sm:$0xff]
        %v8235 = vld [vmem:[#allocation4 + $0x1f0] sm:$0xff]
        %v8236 = vld [vmem:[#allocation4 + $0x1f8] sm:$0xff]
        %v8237 = vpack.c.bf16 %v8175, %v8173
        %v8238 = vpack.c.bf16 %v8176, %v8174
        %v8239 = vpack.c.bf16 %v8179, %v8177
        %v8240 = vpack.c.bf16 %v8180, %v8178
        %v8241 = vpack.c.bf16 %v8183, %v8181
        %v8242 = vpack.c.bf16 %v8184, %v8182
        %v8243 = vpack.c.bf16 %v8187, %v8185
        %v8244 = vpack.c.bf16 %v8188, %v8186
        %v8245 = vpack.c.bf16 %v8191, %v8189
        %v8246 = vpack.c.bf16 %v8192, %v8190
        %v8247 = vpack.c.bf16 %v8195, %v8193
        %v8248 = vpack.c.bf16 %v8196, %v8194
        %v8249 = vpack.c.bf16 %v8199, %v8197
        %v8250 = vpack.c.bf16 %v8200, %v8198
        %v8251 = vpack.c.bf16 %v8203, %v8201
        %v8252 = vpack.c.bf16 %v8204, %v8202
        %v8253 = vpack.c.bf16 %v8207, %v8205
        %v8254 = vpack.c.bf16 %v8208, %v8206
        %v8255 = vpack.c.bf16 %v8211, %v8209
        %v8256 = vpack.c.bf16 %v8212, %v8210
        %v8257 = vpack.c.bf16 %v8215, %v8213
        %v8258 = vpack.c.bf16 %v8216, %v8214
        %v8259 = vpack.c.bf16 %v8219, %v8217
        %v8260 = vpack.c.bf16 %v8220, %v8218
        %v8261 = vpack.c.bf16 %v8223, %v8221
        %v8262 = vpack.c.bf16 %v8224, %v8222
        %v8263 = vpack.c.bf16 %v8227, %v8225
        %v8264 = vpack.c.bf16 %v8228, %v8226
        %v8265 = vpack.c.bf16 %v8231, %v8229
        %v8266 = vpack.c.bf16 %v8232, %v8230
        %v8267 = vpack.c.bf16 %v8235, %v8233
        %v8268 = vpack.c.bf16 %v8236, %v8234
        %v8269 = vld [vmem:[%s10] sm:$0xf]
        %v8270 = vld [vmem:[%s10 + $0x4] sm:$0xf]
        %v8271 = vld [vmem:[%s10 + $0x8] sm:$0xf]
        %v8272 = vld [vmem:[%s10 + $0xc] sm:$0xf]
        %v8273 = vld [vmem:[%s10 + $0x10] sm:$0xf]
        %v8274 = vld [vmem:[%s10 + $0x14] sm:$0xf]
        %v8275 = vld [vmem:[%s10 + $0x18] sm:$0xf]
        %v8276 = vld [vmem:[%s10 + $0x1c] sm:$0xf]
        %v8277 = vld [vmem:[%s10 + $0x20] sm:$0xf]
        %v8278 = vld [vmem:[%s10 + $0x24] sm:$0xf]
        %v8279 = vld [vmem:[%s10 + $0x28] sm:$0xf]
        %v8280 = vld [vmem:[%s10 + $0x2c] sm:$0xf]
        %v8281 = vld [vmem:[%s10 + $0x30] sm:$0xf]
        %v8282 = vld [vmem:[%s10 + $0x34] sm:$0xf]
        %v8283 = vld [vmem:[%s10 + $0x38] sm:$0xf]
        %v8284 = vld [vmem:[%s10 + $0x3c] sm:$0xf]
        %v8285 = vld [vmem:[%s10 + $0x40] sm:$0xf]
        %v8286 = vld [vmem:[%s10 + $0x44] sm:$0xf]
        %v8287 = vld [vmem:[#allocation15] sm:$0x1]
        %v8289 = vlaneseq
        %v8290 = vshrl.u32 %v8289, 7
        %v8291 = vsub.s32 0, %v8290
        %v8292 = vrot.slane %v8287, %v8291
        %v8312 = vunpack.c.l.b16 %v8269
        %v8313 = vunpack.c.l.b16 %v8270
        %v8314 = vunpack.c.l.b16 %v8271
        %v8315 = vunpack.c.l.b16 %v8272
        %v8316 = vunpack.c.l.b16 %v8273
        %v8317 = vunpack.c.l.b16 %v8274
        %v8318 = vunpack.c.l.b16 %v8275
        %v8319 = vunpack.c.l.b16 %v8276
        %v8320 = vunpack.c.l.b16 %v8277
        %v8321 = vunpack.c.l.b16 %v8278
        %v8322 = vunpack.c.l.b16 %v8279
        %v8323 = vunpack.c.l.b16 %v8280
        %v8324 = vunpack.c.l.b16 %v8281
        %v8325 = vunpack.c.l.b16 %v8282
        %v8326 = vunpack.c.l.b16 %v8283
        %v8327 = vunpack.c.l.b16 %v8284
        %v8328 = vunpack.c.l.b16 %v8285
        %v8329 = vunpack.c.l.b16 %v8286
        %v8330 = vpack.c.b16 %v8313, %v8312
        %v8331 = vpack.c.b16 %v8315, %v8314
        %v8332 = vpack.c.b16 %v8317, %v8316
        %v8333 = vpack.c.b16 %v8319, %v8318
        %v8334 = vpack.c.b16 %v8321, %v8320
        %v8335 = vpack.c.b16 %v8323, %v8322
        %v8336 = vpack.c.b16 %v8325, %v8324
        %v8337 = vpack.c.b16 %v8327, %v8326
        %v8338 = vpack.c.b16 %v8329, %v8328
        %v8349 = vsel %vm503, %v8238, 0
        %v8352 = vsel %vm503, %v8240, 0
        %v8355 = vsel %vm503, %v8242, 0
        %v8358 = vsel %vm503, %v8244, 0
        %v8361 = vsel %vm503, %v8246, 0
        %v8364 = vsel %vm503, %v8248, 0
        %v8367 = vsel %vm503, %v8250, 0
        %v8370 = vsel %vm503, %v8252, 0
        %v8373 = vsel %vm503, %v8254, 0
        %v8376 = vsel %vm503, %v8256, 0
        %v8379 = vsel %vm503, %v8258, 0
        %v8382 = vsel %vm503, %v8260, 0
        %v8385 = vsel %vm503, %v8262, 0
        %v8388 = vsel %vm503, %v8264, 0
        %v8391 = vsel %vm503, %v8266, 0
        %v8394 = vsel %vm503, %v8268, 0
        %8396 = vmatprep.subr.bf16.mxu0 0
        %8397 = vmatpush1.bf16.msra.mxu0 %v8337
        %8398 = vmatprep.subr.bf16.mxu0 0
        %8399 = vmatpush1.bf16.msra.mxu0 %v8336
        %8400 = vmatprep.subr.bf16.mxu0 0
        %8401 = vmatpush1.bf16.msra.mxu0 %v8335
        %8402 = vmatprep.subr.bf16.mxu0 0
        %8403 = vmatpush1.bf16.msra.mxu0 %v8334
        %8404 = vmatprep.subr.bf16.mxu0 0
        %8405 = vmatpush1.bf16.msra.mxu0 %v8333
        %8406 = vmatprep.subr.bf16.mxu0 0
        %8407 = vmatpush1.bf16.msra.mxu0 %v8332
        %8408 = vmatprep.subr.bf16.mxu0 0
        %8409 = vmatpush1.bf16.msra.mxu0 %v8331
        %8410 = vmatprep.subr.bf16.mxu0 0
        %8411 = vmatpush1.bf16.msra.mxu0 %v8330
        %8412 = vmatprep.subr.bf16.mxu0 0
        %8413 = vmatpush2.bf16.msra.mxu0 0
        %8414 = vmatprep.subr.bf16.mxu0 0
        %8415 = vmatpush2.bf16.msra.mxu0 0
        %8416 = vmatprep.subr.bf16.mxu0 0
        %8417 = vmatpush2.bf16.msra.mxu0 0
        %8418 = vmatprep.subr.bf16.mxu0 0
        %8419 = vmatpush2.bf16.msra.mxu0 0
        %8420 = vmatprep.subr.bf16.mxu0 0
        %8421 = vmatpush2.bf16.msra.mxu0 0
        %8422 = vmatprep.subr.bf16.mxu0 0
        %8423 = vmatpush2.bf16.msra.mxu0 0
        %8424 = vmatprep.subr.bf16.mxu0 0
        %8425 = vmatpush2.bf16.msra.mxu0 0
        %8426 = vmatprep.subr.bf16.mxu0 0
        %8427 = vmatpush2.bf16.msra.mxu0 %v8338
        %8428 = vmatprep.mubr.bf16.mxu0 %v8349
        %8429 = vmatmul.mubr.bf16.gmra.mxu0 %v8237
        %v8430 = vpop.f32.mrf.mxu0
        %v8431 = vadd.f32 %v8292, %v8430
        %v8432 = vpop.f32.mrf.mxu0
        %v8433 = vpop.f32.mrf.mxu0
        %v8434 = vadd.f32 %v8292, %v8433
        %v8435 = vpop.f32.mrf.mxu0
        %8436 = vmatprep.mubr.bf16.mxu0 %v8352
        %8437 = vmatmul.mubr.bf16.gmra.mxu0 %v8239
        %v8438 = vpop.f32.mrf.mxu0
        %v8439 = vadd.f32 %v8292, %v8438
        %v8440 = vpop.f32.mrf.mxu0
        %v8441 = vpop.f32.mrf.mxu0
        %v8442 = vadd.f32 %v8292, %v8441
        %v8443 = vpop.f32.mrf.mxu0
        %8444 = vmatprep.mubr.bf16.mxu0 %v8355
        %8445 = vmatmul.mubr.bf16.gmra.mxu0 %v8241
        %v8446 = vpop.f32.mrf.mxu0
        %v8447 = vadd.f32 %v8292, %v8446
        %v8448 = vpop.f32.mrf.mxu0
        %v8449 = vpop.f32.mrf.mxu0
        %v8450 = vadd.f32 %v8292, %v8449
        %v8451 = vpop.f32.mrf.mxu0
        %8452 = vmatprep.mubr.bf16.mxu0 %v8358
        %8453 = vmatmul.mubr.bf16.gmra.mxu0 %v8243
        %v8454 = vpop.f32.mrf.mxu0
        %v8455 = vadd.f32 %v8292, %v8454
        %v8456 = vpop.f32.mrf.mxu0
        %v8457 = vpop.f32.mrf.mxu0
        %v8458 = vadd.f32 %v8292, %v8457
        %v8459 = vpop.f32.mrf.mxu0
        %8460 = vmatprep.mubr.bf16.mxu0 %v8361
        %8461 = vmatmul.mubr.bf16.gmra.mxu0 %v8245
        %v8462 = vpop.f32.mrf.mxu0
        %v8463 = vadd.f32 %v8292, %v8462
        %v8464 = vpop.f32.mrf.mxu0
        %v8465 = vpop.f32.mrf.mxu0
        %v8466 = vadd.f32 %v8292, %v8465
        %v8467 = vpop.f32.mrf.mxu0
        %8468 = vmatprep.mubr.bf16.mxu0 %v8364
        %8469 = vmatmul.mubr.bf16.gmra.mxu0 %v8247
        %v8470 = vpop.f32.mrf.mxu0
        %v8471 = vadd.f32 %v8292, %v8470
        %v8472 = vpop.f32.mrf.mxu0
        %v8473 = vpop.f32.mrf.mxu0
        %v8474 = vadd.f32 %v8292, %v8473
        %v8475 = vpop.f32.mrf.mxu0
        %8476 = vmatprep.mubr.bf16.mxu0 %v8367
        %8477 = vmatmul.mubr.bf16.gmra.mxu0 %v8249
        %v8478 = vpop.f32.mrf.mxu0
        %v8479 = vadd.f32 %v8292, %v8478
        %v8480 = vpop.f32.mrf.mxu0
        %v8481 = vpop.f32.mrf.mxu0
        %v8482 = vadd.f32 %v8292, %v8481
        %v8483 = vpop.f32.mrf.mxu0
        %8484 = vmatprep.mubr.bf16.mxu0 %v8370
        %8485 = vmatmul.mubr.bf16.gmra.mxu0 %v8251
        %v8486 = vpop.f32.mrf.mxu0
        %v8487 = vadd.f32 %v8292, %v8486
        %v8488 = vpop.f32.mrf.mxu0
        %v8489 = vpop.f32.mrf.mxu0
        %v8490 = vadd.f32 %v8292, %v8489
        %v8491 = vpop.f32.mrf.mxu0
        %8492 = vmatprep.mubr.bf16.mxu0 %v8373
        %8493 = vmatmul.mubr.bf16.gmra.mxu0 %v8253
        %v8494 = vpop.f32.mrf.mxu0
        %v8495 = vadd.f32 %v8292, %v8494
        %v8496 = vpop.f32.mrf.mxu0
        %v8497 = vpop.f32.mrf.mxu0
        %v8498 = vadd.f32 %v8292, %v8497
        %v8499 = vpop.f32.mrf.mxu0
        %8500 = vmatprep.mubr.bf16.mxu0 %v8376
        %8501 = vmatmul.mubr.bf16.gmra.mxu0 %v8255
        %v8502 = vpop.f32.mrf.mxu0
        %v8503 = vadd.f32 %v8292, %v8502
        %v8504 = vpop.f32.mrf.mxu0
        %v8505 = vpop.f32.mrf.mxu0
        %v8506 = vadd.f32 %v8292, %v8505
        %v8507 = vpop.f32.mrf.mxu0
        %8508 = vmatprep.mubr.bf16.mxu0 %v8379
        %8509 = vmatmul.mubr.bf16.gmra.mxu0 %v8257
        %v8510 = vpop.f32.mrf.mxu0
        %v8511 = vadd.f32 %v8292, %v8510
        %v8512 = vpop.f32.mrf.mxu0
        %v8513 = vpop.f32.mrf.mxu0
        %v8514 = vadd.f32 %v8292, %v8513
        %v8515 = vpop.f32.mrf.mxu0
        %8516 = vmatprep.mubr.bf16.mxu0 %v8382
        %8517 = vmatmul.mubr.bf16.gmra.mxu0 %v8259
        %v8518 = vpop.f32.mrf.mxu0
        %v8519 = vadd.f32 %v8292, %v8518
        %v8520 = vpop.f32.mrf.mxu0
        %v8521 = vpop.f32.mrf.mxu0
        %v8522 = vadd.f32 %v8292, %v8521
        %v8523 = vpop.f32.mrf.mxu0
        %8524 = vmatprep.mubr.bf16.mxu0 %v8385
        %8525 = vmatmul.mubr.bf16.gmra.mxu0 %v8261
        %v8526 = vpop.f32.mrf.mxu0
        %v8527 = vadd.f32 %v8292, %v8526
        %v8528 = vpop.f32.mrf.mxu0
        %v8529 = vpop.f32.mrf.mxu0
        %v8530 = vadd.f32 %v8292, %v8529
        %v8531 = vpop.f32.mrf.mxu0
        %8532 = vmatprep.mubr.bf16.mxu0 %v8388
        %8533 = vmatmul.mubr.bf16.gmra.mxu0 %v8263
        %v8534 = vpop.f32.mrf.mxu0
        %v8535 = vadd.f32 %v8292, %v8534
        %v8536 = vpop.f32.mrf.mxu0
        %v8537 = vpop.f32.mrf.mxu0
        %v8538 = vadd.f32 %v8292, %v8537
        %v8539 = vpop.f32.mrf.mxu0
        %8540 = vmatprep.mubr.bf16.mxu0 %v8391
        %8541 = vmatmul.mubr.bf16.gmra.mxu0 %v8265
        %v8542 = vpop.f32.mrf.mxu0
        %v8543 = vadd.f32 %v8292, %v8542
        %v8544 = vpop.f32.mrf.mxu0
        %v8545 = vpop.f32.mrf.mxu0
        %v8546 = vadd.f32 %v8292, %v8545
        %v8547 = vpop.f32.mrf.mxu0
        %8548 = vmatprep.mubr.bf16.mxu0 %v8394
        %8549 = vmatmul.mubr.bf16.gmra.mxu0 %v8267
        %v8550 = vpop.f32.mrf.mxu0
        %v8551 = vadd.f32 %v8292, %v8550
        %v8552 = vpop.f32.mrf.mxu0
        %v8553 = vpop.f32.mrf.mxu0
        %v8554 = vadd.f32 %v8292, %v8553
        %v8555 = vpop.f32.mrf.mxu0
        %8556 = vdwg.mxu0
        %vm8557 = vcmask 97280
        %8558 = vst.msk [vmem:[%s501] sm:$0xff] %vm8557, %v8431
        %8559 = vst.msk [vmem:[%s501 + $0x8] sm:$0xff] %vm8557, %v8434
        %8560 = vst.msk [vmem:[%s501 + $0x10] sm:$0xff] %vm8557, %v8439
        %8561 = vst.msk [vmem:[%s501 + $0x18] sm:$0xff] %vm8557, %v8442
        %8562 = vst.msk [vmem:[%s501 + $0x20] sm:$0xff] %vm8557, %v8447
        %8563 = vst.msk [vmem:[%s501 + $0x28] sm:$0xff] %vm8557, %v8450
        %8564 = vst.msk [vmem:[%s501 + $0x30] sm:$0xff] %vm8557, %v8455
        %8565 = vst.msk [vmem:[%s501 + $0x38] sm:$0xff] %vm8557, %v8458
        %8566 = vst.msk [vmem:[%s501 + $0x40] sm:$0xff] %vm8557, %v8463
        %8567 = vst.msk [vmem:[%s501 + $0x48] sm:$0xff] %vm8557, %v8466
        %8568 = vst.msk [vmem:[%s501 + $0x50] sm:$0xff] %vm8557, %v8471
        %8569 = vst.msk [vmem:[%s501 + $0x58] sm:$0xff] %vm8557, %v8474
        %8570 = vst.msk [vmem:[%s501 + $0x60] sm:$0xff] %vm8557, %v8479
        %8571 = vst.msk [vmem:[%s501 + $0x68] sm:$0xff] %vm8557, %v8482
        %8572 = vst.msk [vmem:[%s501 + $0x70] sm:$0xff] %vm8557, %v8487
        %8573 = vst.msk [vmem:[%s501 + $0x78] sm:$0xff] %vm8557, %v8490
        %8574 = vst.msk [vmem:[%s501 + $0x80] sm:$0xff] %vm8557, %v8495
        %8575 = vst.msk [vmem:[%s501 + $0x88] sm:$0xff] %vm8557, %v8498
        %8576 = vst.msk [vmem:[%s501 + $0x90] sm:$0xff] %vm8557, %v8503
        %8577 = vst.msk [vmem:[%s501 + $0x98] sm:$0xff] %vm8557, %v8506
        %8578 = vst.msk [vmem:[%s501 + $0xa0] sm:$0xff] %vm8557, %v8511
        %8579 = vst.msk [vmem:[%s501 + $0xa8] sm:$0xff] %vm8557, %v8514
        %8580 = vst.msk [vmem:[%s501 + $0xb0] sm:$0xff] %vm8557, %v8519
        %8581 = vst.msk [vmem:[%s501 + $0xb8] sm:$0xff] %vm8557, %v8522
        %8582 = vst.msk [vmem:[%s501 + $0xc0] sm:$0xff] %vm8557, %v8527
        %8583 = vst.msk [vmem:[%s501 + $0xc8] sm:$0xff] %vm8557, %v8530
        %8584 = vst.msk [vmem:[%s501 + $0xd0] sm:$0xff] %vm8557, %v8535
        %8585 = vst.msk [vmem:[%s501 + $0xd8] sm:$0xff] %vm8557, %v8538
        %8586 = vst.msk [vmem:[%s501 + $0xe0] sm:$0xff] %vm8557, %v8543
        %8587 = vst.msk [vmem:[%s501 + $0xe8] sm:$0xff] %vm8557, %v8546
        %8588 = vst.msk [vmem:[%s501 + $0xf0] sm:$0xff] %vm8557, %v8551
        %8589 = vst.msk [vmem:[%s501 + $0xf8] sm:$0xff] %vm8557, %v8554
        %p8590 = scmp.lt.s32.totalorder %s27, 1
        %s8591 = scalar_select %p8590, %s27, 1
        %s8592 = smul.addr %s8591, 32
        %s8593 = smul.addr %s8592, 8
        %s8594 = scalar_lea.vmem %s12, %s8593
        // Predicated region
        $region97: #{srvgg_forward.1} parent=67 // pred_check
          %p8595 = pneg %p302
        $region98: #{srvgg_forward.1} parent=67 // pred_check_branch
          %8597 = sbr.rel (%p8595) target = $region100
        $region99: #{srvgg_forward.1} parent=67 // pred_region
          _
        $region100: #{srvgg_forward.1} parent=67 // pred_fallthru
          _
      $region68: #{srvgg_forward.1} parent=5 // pred_fallthru
        _
      %p8598 = scmp.le.s32.totalorder 2, %s22
      // Predicated region
      $region101: #{srvgg_forward.1} parent=5 // pred_check
        %p8599 = pneg %p8598
      $region102: #{srvgg_forward.1} parent=5 // pred_check_branch
        %8601 = sbr.rel (%p8599) target = $region104
      $region103: #{srvgg_forward.1} parent=5 // pred_region
        %s8602 = ssub.s32 %s22, 2
        // Predicated region
        $region105: #{srvgg_forward.1} parent=103 // pred_check
          %p8603 = pneg %p308
        $region106: #{srvgg_forward.1} parent=103 // pred_check_branch
          %8605 = sbr.rel (%p8603) target = $region108
        $region107: #{srvgg_forward.1} parent=103 // pred_region
          %p8606 = scmp.lt.s32.totalorder %s28, 1
          %s8607 = scalar_select %p8606, %s28, 1
          %s8608 = smul.addr %s8607, 32
          %s8609 = smul.addr %s8608, 8
          %s8610 = scalar_lea.vmem %s12, %s8609
        $region108: #{srvgg_forward.1} parent=103 // pred_fallthru
          _
      $region104: #{srvgg_forward.1} parent=5 // pred_fallthru
        _
    $region6: #{srvgg_forward.1} parent=1 // loop_footer
      %s26 = sadd.s32 1, %s22
    $region7: #{srvgg_forward.1} parent=1 // loop_footer_branch
      %21 = sbr.rel target = $region3
    $region8: #{srvgg_forward.1} parent=1 // loop_exit
      _
    %8611 = vsyncpa [#allocation6], 1
    %s8612 = scalar_lea.sflag [#allocation6], 1
    %8613 = vsyncpa %s8612, 1
    %8614 = vsyncpa [#allocation8], 1
    %8615 = vsyncpa [#allocation11], 1
    %8616 = vsyncpa [#allocation14], 1

</llo_original>
